<compile_context>
chip_gen: v7x
topology: tpu7x:2x2x1
jax: 0.10.0
libtpu: 0.0.40
codegen_flags: <defaults>
</compile_context>

<pallas_src>
import math
import functools

import jax
import jax.numpy as jnp
from jax.experimental import pallas as pl
from jax.experimental.pallas import tpu as pltpu

HIDDEN = 64        # RNNModel hidden_size (per network)
N_LAYERS = 3       # nn.LSTM num_layers
MLP_HIDDEN = 128   # get_mlp n_hidden (per network)
OUT_PAD = 128      # lane-dense padded output width of the fused kernel
BN_EPS = 1e-5


def _batchnorm_train(x2d):
    # x2d: (N, C). torch BatchNorm1d training mode: batch mean, biased variance,
    # affine params at default init (gamma=1, beta=0) are a no-op.
    mean = jnp.mean(x2d, axis=0, keepdims=True)
    var = jnp.mean(jnp.square(x2d - mean), axis=0, keepdims=True)
    return (x2d - mean) * jax.lax.rsqrt(var + BN_EPS)


# ---------------------------------------------------------------------------
# Fused kernel: both RNNModels (policy + value) in one pass.
# Fused state width H2 = 2*HIDDEN = 128: columns [:64] policy, [64:] value.
# ---------------------------------------------------------------------------
def fused_rnn_kernel(x_ref, h0_ref, c0_ref,
                     wih0_ref, whh0_ref, b0_ref,
                     wih1_ref, whh1_ref, b1_ref,
                     wih2_ref, whh2_ref, b2_ref,
                     w1_ref, bm1_ref, w2_ref, bm2_ref,
                     out_ref, hN_ref, cN_ref):
    T, B, F = x_ref.shape
    H2 = hN_ref.shape[-1]                                    # 2 * HIDDEN = 128

    # --- shared input BatchNorm (both nets see the same x and same batch stats,
    #     so it is computed exactly once), time-major (T*B, F) ---
    x2d = _batchnorm_train(x_ref[...].reshape(T * B, F))

    wihs = (wih0_ref[...], wih1_ref[...], wih2_ref[...])
    whhs = (whh0_ref[...], whh1_ref[...], whh2_ref[...])
    bs = (b0_ref[...], b1_ref[...], b2_ref[...])

    layer_in = x2d                                           # (T*B, in_l), time-major
    for l in range(N_LAYERS):
        # Hoisted input projection: ONE matmul + ONE bias add per layer
        # instead of T tiny matmuls + T broadcast bias adds.
        gates_x = jnp.dot(layer_in, wihs[l],
                          preferred_element_type=jnp.float32) + bs[l]   # (T*B, 4*H2)
        h = h0_ref[l]                                        # (B, H2)
        c = c0_ref[l]
        whh = whhs[l]
        outs = []
        for t in range(T):
            gates = gates_x[t * B:(t + 1) * B, :] + jnp.dot(
                h, whh, preferred_element_type=jnp.float32)  # (B, 4*H2)
            # 128-lane-aligned gate slices: [i_pol|i_val], [f_pol|f_val], ...
            i = jax.nn.sigmoid(gates[:, 0 * H2:1 * H2])
            f = jax.nn.sigmoid(gates[:, 1 * H2:2 * H2])
            g = jnp.tanh(gates[:, 2 * H2:3 * H2])
            o = jax.nn.sigmoid(gates[:, 3 * H2:4 * H2])
            c = f * c + i * g
            h = o * jnp.tanh(c)
            outs.append(h)
        hN_ref[l] = h
        cN_ref[l] = c
        layer_in = jnp.concatenate(outs, axis=0)             # (T*B, H2), time-major

    # --- fused MLP head: Linear -> MyBatchNorm -> ReLU -> Linear (lane-dense out)
    z = jnp.dot(layer_in, w1_ref[...], preferred_element_type=jnp.float32) + bm1_ref[...]
    z = jnp.maximum(_batchnorm_train(z), 0.0)
    out_ref[...] = jnp.dot(z, w2_ref[...],
                           preferred_element_type=jnp.float32) + bm2_ref[...]


def fused_forward(x_tm, h0, c0, p):
    """x_tm: (T, B, F) time-major; h0/c0: (L, B, 2H) fused state."""
    T, B, _ = x_tm.shape
    H2 = 2 * HIDDEN
    vmem = pl.BlockSpec(memory_space=pltpu.MemorySpace.VMEM)
    inputs = (x_tm, h0, c0,
              p['wih0'], p['whh0'], p['b0'],
              p['wih1'], p['whh1'], p['b1'],
              p['wih2'], p['whh2'], p['b2'],
              p['w1'], p['bm1'], p['w2'], p['bm2'])
    out_shapes = (jax.ShapeDtypeStruct((T * B, OUT_PAD), jnp.float32),
                  jax.ShapeDtypeStruct((N_LAYERS, B, H2), jnp.float32),
                  jax.ShapeDtypeStruct((N_LAYERS, B, H2), jnp.float32))
    return pl.pallas_call(
        fused_rnn_kernel,
        out_shape=out_shapes,
        in_specs=[vmem] * len(inputs),
        out_specs=(vmem, vmem, vmem),
    )(*inputs)


def rl_model_forward(obs_array, done_array, states, fused_params, num_actions):
    """RLModel.forward (use_target=False path), policy+value fused.
    obs_array: (B, T, prod(obs_shape)*n_buffer)   done_array: (B, T)
    states: ((ph0, pc0), (vh0, vc0)) each (B, L, H)  -- torch zero_state layout.
    """
    B, T = done_array.shape
    obs = obs_array.reshape(B, T, -1).astype(jnp.float32)
    done = done_array.reshape(B, T, 1).astype(jnp.float32)
    x = jnp.concatenate([obs, done], axis=2)                 # (B, T, F)
    x_tm = jnp.transpose(x, (1, 0, 2))                       # (T, B, F) time-major

    (ph, pc), (vh, vc) = states                              # each (B, L, H)
    h0 = jnp.transpose(jnp.concatenate([ph, vh], axis=2), (1, 0, 2))   # (L, B, 2H)
    c0 = jnp.transpose(jnp.concatenate([pc, vc], axis=2), (1, 0, 2))

    out, hN, cN = fused_forward(x_tm, h0, c0, fused_params)

    out_bt = jnp.transpose(out.reshape(T, B, OUT_PAD), (1, 0, 2))      # (B, T, 128)
    logits = out_bt[..., :num_actions]
    value = out_bt[..., num_actions:num_actions + 1]

    H = HIDDEN
    hN_blh = jnp.transpose(hN, (1, 0, 2))                    # (B, L, 2H)
    cN_blh = jnp.transpose(cN, (1, 0, 2))
    final_states = ((hN_blh[..., :H], cN_blh[..., :H]),      # policy (h, c)
                    (hN_blh[..., H:], cN_blh[..., H:]))      # value  (h, c)
    return logits, value, final_states


# ---------------------------------------------------------------------------
# Parameter construction / packing
# ---------------------------------------------------------------------------
def init_rnnmodel_params(key, input_size, output_size,
                         hidden=HIDDEN, mlp_hidden=MLP_HIDDEN):
    """Deterministic synthetic init matching torch parameter shapes.
    nn.LSTM / nn.Linear init: U(-1/sqrt(fan), 1/sqrt(fan)). Matmul weights
    are pre-transposed to (in_features, out_features)."""
    params = {}
    keys = iter(jax.random.split(key, 4 * N_LAYERS + 4))
    k_lstm = 1.0 / math.sqrt(hidden)
    for l in range(N_LAYERS):
        in_l = input_size if l == 0 else hidden
        w_ih = jax.random.uniform(next(keys), (4 * hidden, in_l), jnp.float32, -k_lstm, k_lstm)
        w_hh = jax.random.uniform(next(keys), (4 * hidden, hidden), jnp.float32, -k_lstm, k_lstm)
        b_ih = jax.random.uniform(next(keys), (4 * hidden,), jnp.float32, -k_lstm, k_lstm)
        b_hh = jax.random.uniform(next(keys), (4 * hidden,), jnp.float32, -k_lstm, k_lstm)
        params[f'wih{l}'] = w_ih.T                            # (in_l, 4H)
        params[f'whh{l}'] = w_hh.T                            # (H, 4H)
        params[f'b{l}'] = (b_ih + b_hh).reshape(1, 4 * hidden)
    k1 = 1.0 / math.sqrt(hidden)
    w1 = jax.random.uniform(next(keys), (mlp_hidden, hidden), jnp.float32, -k1, k1)
    b1 = jax.random.uniform(next(keys), (mlp_hidden,), jnp.float32, -k1, k1)
    k2 = 1.0 / math.sqrt(mlp_hidden)
    w2 = jax.random.uniform(next(keys), (output_size, mlp_hidden), jnp.float32, -k2, k2)
    b2 = jax.random.uniform(next(keys), (output_size,), jnp.float32, -k2, k2)
    params['w1'] = w1.T                                       # (H, 128)
    params['bm1'] = b1.reshape(1, -1)
    params['w2'] = w2.T                                       # (128, n_out)
    params['bm2'] = b2.reshape(1, -1)
    return params


def _block_diag(a, b):
    ra, ca = a.shape
    rb, cb = b.shape
    top = jnp.concatenate([a, jnp.zeros((ra, cb), a.dtype)], axis=1)
    bot = jnp.concatenate([jnp.zeros((rb, ca), b.dtype), b], axis=1)
    return jnp.concatenate([top, bot], axis=0)


def _gate_split(w, h):
    # w: (in, 4H) columns in torch gate order [i, f, g, o]
    return [w[:, k * h:(k + 1) * h] for k in range(4)]


def pack_fused_params(pp, vp, num_actions):
    """Pack policy (pp) and value (vp) RNNModel params into one fused set:
    gate-interleaved columns [i_p|i_v|f_p|f_v|g_p|g_v|o_p|o_v], block-diagonal
    where the layer input is the fused [h_pol | h_val] state."""
    H = HIDDEN
    fused = {}
    for l in range(N_LAYERS):
        gih_p = _gate_split(pp[f'wih{l}'], H)
        gih_v = _gate_split(vp[f'wih{l}'], H)
        ghh_p = _gate_split(pp[f'whh{l}'], H)
        ghh_v = _gate_split(vp[f'whh{l}'], H)
        if l == 0:
            # both nets consume the same input x -> just concat columns per gate
            wih = jnp.concatenate(
                [jnp.concatenate([gih_p[k], gih_v[k]], axis=1) for k in range(4)], axis=1)
        else:
            # input is the fused [h_pol | h_val] -> block-diagonal per gate
            wih = jnp.concatenate([_block_diag(gih_p[k], gih_v[k]) for k in range(4)], axis=1)
        whh = jnp.concatenate([_block_diag(ghh_p[k], ghh_v[k]) for k in range(4)], axis=1)
        b_p, b_v = pp[f'b{l}'][0], vp[f'b{l}'][0]
        b = jnp.concatenate(
            [jnp.concatenate([b_p[k * H:(k + 1) * H], b_v[k * H:(k + 1) * H]]) for k in range(4)])
        fused[f'wih{l}'] = wih                                # (in_0, 512) / (128, 512)
        fused[f'whh{l}'] = whh                                # (128, 512)
        fused[f'b{l}'] = b.reshape(1, 8 * H)
    # MLP head
    fused['w1'] = _block_diag(pp['w1'], vp['w1'])             # (128, 256)
    fused['bm1'] = jnp.concatenate([pp['bm1'][0], vp['bm1'][0]]).reshape(1, -1)
    w2 = jnp.zeros((2 * MLP_HIDDEN, OUT_PAD), jnp.float32)    # lane-dense padded head
    w2 = w2.at[:MLP_HIDDEN, :num_actions].set(pp['w2'])
    w2 = w2.at[MLP_HIDDEN:, num_actions:num_actions + 1].set(vp['w2'])
    bm2 = jnp.zeros((OUT_PAD,), jnp.float32)
    bm2 = bm2.at[:num_actions].set(pp['bm2'][0])
    bm2 = bm2.at[num_actions:num_actions + 1].set(vp['bm2'][0])
    fused['w2'] = w2
    fused['bm2'] = bm2.reshape(1, OUT_PAD)
    return fused


# ---------------------------------------------------------------------------
# Pure-JAX unfused reference (one RNNModel) for correctness checking
# ---------------------------------------------------------------------------
def rnnmodel_reference(x, h0, c0, params):
    B, T, F = x.shape
    H = HIDDEN
    xf = _batchnorm_train(x.reshape(B * T, F)).reshape(B, T, F)
    layer_in = xf
    hs, cs = [], []
    for l in range(N_LAYERS):
        h, c = h0[l], c0[l]
        outs = []
        for t in range(T):
            gates = (layer_in[:, t, :] @ params[f'wih{l}']
                     + h @ params[f'whh{l}'] + params[f'b{l}'])
            i = jax.nn.sigmoid(gates[:, :H])
            f = jax.nn.sigmoid(gates[:, H:2 * H])
            g = jnp.tanh(gates[:, 2 * H:3 * H])
            o = jax.nn.sigmoid(gates[:, 3 * H:])
            c = f * c + i * g
            h = o * jnp.tanh(c)
            outs.append(h)
        hs.append(h)
        cs.append(c)
        layer_in = jnp.stack(outs, axis=1)
    y = layer_in.reshape(B * T, H)
    z = y @ params['w1'] + params['bm1']
    z = jnp.maximum(_batchnorm_train(z), 0.0)
    o = z @ params['w2'] + params['bm2']
    return o.reshape(B, T, -1), jnp.stack(hs), jnp.stack(cs)


if __name__ == "__main__":
    # RLModel(observation_shape=(4,), n_observation_buffer=2, num_actions=4)
    observation_shape = (4,)
    n_observation_buffer = 2
    num_actions = 4
    B, T = 2, 8
    obs_feat = math.prod(observation_shape) * n_observation_buffer
    input_size = obs_feat + 1                                  # = 9

    key = jax.random.PRNGKey(0)
    k_obs, k_done, k_pol, k_val = jax.random.split(key, 4)

    obs_array = jax.random.normal(k_obs, (B, T, obs_feat), jnp.float32)
    done_array = (jax.random.uniform(k_done, (B, T)) < 0.1).astype(jnp.float32)

    params_policy = init_rnnmodel_params(k_pol, input_size, num_actions)
    params_value = init_rnnmodel_params(k_val, input_size, 1)
    fused_params = pack_fused_params(params_policy, params_value, num_actions)

    # RLModel.zero_state layout: (B, num_layers, hidden)
    zero_state = lambda: (jnp.zeros((B, N_LAYERS, HIDDEN), jnp.float32),
                          jnp.zeros((B, N_LAYERS, HIDDEN), jnp.float32))
    states = (zero_state(), zero_state())

    fwd = jax.jit(functools.partial(rl_model_forward, num_actions=num_actions))
    logits, value, final_states = fwd(obs_array, done_array, states, fused_params)
    jax.block_until_ready((logits, value, final_states))

    assert logits.shape == (B, T, num_actions)
    assert value.shape == (B, T, 1)
    (ph, pc), (vh, vc) = final_states
    assert ph.shape == (B, N_LAYERS, HIDDEN) and vc.shape == (B, N_LAYERS, HIDDEN)
    assert bool(jnp.all(jnp.isfinite(logits))) and bool(jnp.all(jnp.isfinite(value)))

    # Correctness check vs. unfused pure-JAX reference (validates the fused
    # block-diagonal weight packing and the kernel itself).
    x = jnp.concatenate([obs_array.reshape(B, T, -1),
                         done_array.reshape(B, T, 1).astype(jnp.float32)], axis=2)
    z_lbh = jnp.zeros((N_LAYERS, B, HIDDEN), jnp.float32)
    ref_logits, ph_r, pc_r = rnnmodel_reference(x, z_lbh, z_lbh, params_policy)
    ref_value, vh_r, vc_r = rnnmodel_reference(x, z_lbh, z_lbh, params_value)
    tol = dict(rtol=5e-3, atol=5e-3)
    assert bool(jnp.allclose(logits, ref_logits, **tol))
    assert bool(jnp.allclose(value, ref_value, **tol))
    assert bool(jnp.allclose(ph, jnp.transpose(ph_r, (1, 0, 2)), **tol))
    assert bool(jnp.allclose(pc, jnp.transpose(pc_r, (1, 0, 2)), **tol))
    assert bool(jnp.allclose(vh, jnp.transpose(vh_r, (1, 0, 2)), **tol))
    assert bool(jnp.allclose(vc, jnp.transpose(vc_r, (1, 0, 2)), **tol))

    # TODO(synk): use_target=True branch (get_target_network_fn indirection),
    # save/load file I/O, loss/advantage math, and done-triggered state resets
    # (not performed by the torch forward either) are host-side, not kernel work.
    print("KERNEL_OK")
</pallas_src>

<mosaic_0001>
module attributes {stable_mosaic.version = 11 : i64} {
  func.func @fused_rnn_kernel(%arg0: memref<8x2x9xf32, #tpu.memory_space<vmem>>, %arg1: memref<3x2x128xf32, #tpu.memory_space<vmem>>, %arg2: memref<3x2x128xf32, #tpu.memory_space<vmem>>, %arg3: memref<9x512xf32, #tpu.memory_space<vmem>>, %arg4: memref<128x512xf32, #tpu.memory_space<vmem>>, %arg5: memref<1x512xf32, #tpu.memory_space<vmem>>, %arg6: memref<128x512xf32, #tpu.memory_space<vmem>>, %arg7: memref<128x512xf32, #tpu.memory_space<vmem>>, %arg8: memref<1x512xf32, #tpu.memory_space<vmem>>, %arg9: memref<128x512xf32, #tpu.memory_space<vmem>>, %arg10: memref<128x512xf32, #tpu.memory_space<vmem>>, %arg11: memref<1x512xf32, #tpu.memory_space<vmem>>, %arg12: memref<128x256xf32, #tpu.memory_space<vmem>>, %arg13: memref<1x256xf32, #tpu.memory_space<vmem>>, %arg14: memref<256x128xf32, #tpu.memory_space<vmem>>, %arg15: memref<1x128xf32, #tpu.memory_space<vmem>>, %arg16: memref<16x128xf32, #tpu.memory_space<vmem>>, %arg17: memref<3x2x128xf32, #tpu.memory_space<vmem>>, %arg18: memref<3x2x128xf32, #tpu.memory_space<vmem>>) attributes {dimension_semantics = [], scalar_prefetch = 0 : i64, scratch_operands = 0 : i64, tpu.core_type = #tpu.core_type<tc>} {
    %c0 = arith.constant 0 : index
    %c0_0 = arith.constant 0 : index
    %c0_1 = arith.constant 0 : index
    %0 = vector.load %arg0[%c0, %c0_0, %c0_1] : memref<8x2x9xf32, #tpu.memory_space<vmem>>, vector<8x2x9xf32>
    %1 = vector.shape_cast %0 : vector<8x2x9xf32> to vector<16x9xf32>
    %cst = arith.constant dense<0.000000e+00> : vector<9xf32>
    %2 = vector.multi_reduction <add>, %1, %cst [0] : vector<16x9xf32> to vector<9xf32>
    %3 = vector.shape_cast %2 : vector<9xf32> to vector<1x9xf32>
    %cst_2 = arith.constant 1.600000e+01 : f32
    %4 = vector.broadcast %cst_2 : f32 to vector<1x9xf32>
    %5 = arith.divf %3, %4 : vector<1x9xf32>
    %6 = vector.broadcast %5 : vector<1x9xf32> to vector<16x9xf32>
    %7 = arith.subf %1, %6 : vector<16x9xf32>
    %8 = arith.mulf %7, %7 : vector<16x9xf32>
    %cst_3 = arith.constant dense<0.000000e+00> : vector<9xf32>
    %9 = vector.multi_reduction <add>, %8, %cst_3 [0] : vector<16x9xf32> to vector<9xf32>
    %10 = vector.shape_cast %9 : vector<9xf32> to vector<1x9xf32>
    %cst_4 = arith.constant 1.600000e+01 : f32
    %11 = vector.broadcast %cst_4 : f32 to vector<1x9xf32>
    %12 = arith.divf %10, %11 : vector<1x9xf32>
    %13 = vector.broadcast %5 : vector<1x9xf32> to vector<16x9xf32>
    %14 = arith.subf %1, %13 : vector<16x9xf32>
    %cst_5 = arith.constant 9.99999974E-6 : f32
    %15 = vector.broadcast %cst_5 : f32 to vector<1x9xf32>
    %16 = arith.addf %12, %15 : vector<1x9xf32>
    %17 = math.rsqrt %16 : vector<1x9xf32>
    %18 = vector.broadcast %17 : vector<1x9xf32> to vector<16x9xf32>
    %19 = arith.mulf %14, %18 : vector<16x9xf32>
    %c0_6 = arith.constant 0 : index
    %c0_7 = arith.constant 0 : index
    %20 = vector.load %arg3[%c0_6, %c0_7] : memref<9x512xf32, #tpu.memory_space<vmem>>, vector<9x512xf32>
    %c0_8 = arith.constant 0 : index
    %c0_9 = arith.constant 0 : index
    %21 = vector.load %arg6[%c0_8, %c0_9] : memref<128x512xf32, #tpu.memory_space<vmem>>, vector<128x512xf32>
    %c0_10 = arith.constant 0 : index
    %c0_11 = arith.constant 0 : index
    %22 = vector.load %arg9[%c0_10, %c0_11] : memref<128x512xf32, #tpu.memory_space<vmem>>, vector<128x512xf32>
    %c0_12 = arith.constant 0 : index
    %c0_13 = arith.constant 0 : index
    %23 = vector.load %arg4[%c0_12, %c0_13] : memref<128x512xf32, #tpu.memory_space<vmem>>, vector<128x512xf32>
    %c0_14 = arith.constant 0 : index
    %c0_15 = arith.constant 0 : index
    %24 = vector.load %arg7[%c0_14, %c0_15] : memref<128x512xf32, #tpu.memory_space<vmem>>, vector<128x512xf32>
    %c0_16 = arith.constant 0 : index
    %c0_17 = arith.constant 0 : index
    %25 = vector.load %arg10[%c0_16, %c0_17] : memref<128x512xf32, #tpu.memory_space<vmem>>, vector<128x512xf32>
    %c0_18 = arith.constant 0 : index
    %c0_19 = arith.constant 0 : index
    %26 = vector.load %arg5[%c0_18, %c0_19] : memref<1x512xf32, #tpu.memory_space<vmem>>, vector<1x512xf32>
    %c0_20 = arith.constant 0 : index
    %c0_21 = arith.constant 0 : index
    %27 = vector.load %arg8[%c0_20, %c0_21] : memref<1x512xf32, #tpu.memory_space<vmem>>, vector<1x512xf32>
    %c0_22 = arith.constant 0 : index
    %c0_23 = arith.constant 0 : index
    %28 = vector.load %arg11[%c0_22, %c0_23] : memref<1x512xf32, #tpu.memory_space<vmem>>, vector<1x512xf32>
    %cst_24 = arith.constant dense<0.000000e+00> : vector<16x512xf32>
    %29 = tpu.matmul %19, %20, %cst_24 {dimension_numbers = #tpu.dot_dimension_numbers<[1], [0], [0], [1], [0, 0, 1, 1], [], []>} : vector<16x9xf32>, vector<9x512xf32>, vector<16x512xf32> -> vector<16x512xf32>
    %30 = vector.broadcast %26 : vector<1x512xf32> to vector<16x512xf32>
    %31 = arith.addf %29, %30 : vector<16x512xf32>
    %c0_25 = arith.constant 0 : index
    %c0_26 = arith.constant 0 : index
    %c0_27 = arith.constant 0 : index
    %32 = vector.load %arg1[%c0_25, %c0_26, %c0_27] : memref<3x2x128xf32, #tpu.memory_space<vmem>>, vector<1x2x128xf32>
    %33 = vector.shape_cast %32 : vector<1x2x128xf32> to vector<2x128xf32>
    %c0_28 = arith.constant 0 : index
    %c0_29 = arith.constant 0 : index
    %c0_30 = arith.constant 0 : index
    %34 = vector.load %arg2[%c0_28, %c0_29, %c0_30] : memref<3x2x128xf32, #tpu.memory_space<vmem>>, vector<1x2x128xf32>
    %35 = vector.shape_cast %34 : vector<1x2x128xf32> to vector<2x128xf32>
    %36 = vector.extract_strided_slice %31 {offsets = [0, 0], sizes = [2, 512], strides = [1, 1]} : vector<16x512xf32> to vector<2x512xf32>
    %cst_31 = arith.constant dense<0.000000e+00> : vector<2x512xf32>
    %37 = tpu.matmul %33, %23, %cst_31 {dimension_numbers = #tpu.dot_dimension_numbers<[1], [0], [0], [1], [0, 0, 1, 1], [], []>} : vector<2x128xf32>, vector<128x512xf32>, vector<2x512xf32> -> vector<2x512xf32>
    %38 = arith.addf %36, %37 : vector<2x512xf32>
    %39 = vector.extract_strided_slice %38 {offsets = [0, 0], sizes = [2, 128], strides = [1, 1]} : vector<2x512xf32> to vector<2x128xf32>
    %40 = arith.negf %39 : vector<2x128xf32>
    %41 = math.exp %40 : vector<2x128xf32>
    %cst_32 = arith.constant 1.000000e+00 : f32
    %42 = vector.broadcast %cst_32 : f32 to vector<2x128xf32>
    %43 = arith.addf %42, %41 : vector<2x128xf32>
    %44 = arith.divf %42, %43 : vector<2x128xf32>
    %45 = vector.extract_strided_slice %38 {offsets = [0, 128], sizes = [2, 128], strides = [1, 1]} : vector<2x512xf32> to vector<2x128xf32>
    %46 = arith.negf %45 : vector<2x128xf32>
    %47 = math.exp %46 : vector<2x128xf32>
    %cst_33 = arith.constant 1.000000e+00 : f32
    %48 = vector.broadcast %cst_33 : f32 to vector<2x128xf32>
    %49 = arith.addf %48, %47 : vector<2x128xf32>
    %50 = arith.divf %48, %49 : vector<2x128xf32>
    %51 = vector.extract_strided_slice %38 {offsets = [0, 256], sizes = [2, 128], strides = [1, 1]} : vector<2x512xf32> to vector<2x128xf32>
    %52 = math.tanh %51 : vector<2x128xf32>
    %53 = vector.extract_strided_slice %38 {offsets = [0, 384], sizes = [2, 128], strides = [1, 1]} : vector<2x512xf32> to vector<2x128xf32>
    %54 = arith.negf %53 : vector<2x128xf32>
    %55 = math.exp %54 : vector<2x128xf32>
    %cst_34 = arith.constant 1.000000e+00 : f32
    %56 = vector.broadcast %cst_34 : f32 to vector<2x128xf32>
    %57 = arith.addf %56, %55 : vector<2x128xf32>
    %58 = arith.divf %56, %57 : vector<2x128xf32>
    %59 = arith.mulf %50, %35 : vector<2x128xf32>
    %60 = arith.mulf %44, %52 : vector<2x128xf32>
    %61 = arith.addf %59, %60 : vector<2x128xf32>
    %62 = math.tanh %61 : vector<2x128xf32>
    %63 = arith.mulf %58, %62 : vector<2x128xf32>
    %64 = vector.extract_strided_slice %31 {offsets = [2, 0], sizes = [2, 512], strides = [1, 1]} : vector<16x512xf32> to vector<2x512xf32>
    %cst_35 = arith.constant dense<0.000000e+00> : vector<2x512xf32>
    %65 = tpu.matmul %63, %23, %cst_35 {dimension_numbers = #tpu.dot_dimension_numbers<[1], [0], [0], [1], [0, 0, 1, 1], [], []>} : vector<2x128xf32>, vector<128x512xf32>, vector<2x512xf32> -> vector<2x512xf32>
    %66 = arith.addf %64, %65 : vector<2x512xf32>
    %67 = vector.extract_strided_slice %66 {offsets = [0, 0], sizes = [2, 128], strides = [1, 1]} : vector<2x512xf32> to vector<2x128xf32>
    %68 = arith.negf %67 : vector<2x128xf32>
    %69 = math.exp %68 : vector<2x128xf32>
    %cst_36 = arith.constant 1.000000e+00 : f32
    %70 = vector.broadcast %cst_36 : f32 to vector<2x128xf32>
    %71 = arith.addf %70, %69 : vector<2x128xf32>
    %72 = arith.divf %70, %71 : vector<2x128xf32>
    %73 = vector.extract_strided_slice %66 {offsets = [0, 128], sizes = [2, 128], strides = [1, 1]} : vector<2x512xf32> to vector<2x128xf32>
    %74 = arith.negf %73 : vector<2x128xf32>
    %75 = math.exp %74 : vector<2x128xf32>
    %cst_37 = arith.constant 1.000000e+00 : f32
    %76 = vector.broadcast %cst_37 : f32 to vector<2x128xf32>
    %77 = arith.addf %76, %75 : vector<2x128xf32>
    %78 = arith.divf %76, %77 : vector<2x128xf32>
    %79 = vector.extract_strided_slice %66 {offsets = [0, 256], sizes = [2, 128], strides = [1, 1]} : vector<2x512xf32> to vector<2x128xf32>
    %80 = math.tanh %79 : vector<2x128xf32>
    %81 = vector.extract_strided_slice %66 {offsets = [0, 384], sizes = [2, 128], strides = [1, 1]} : vector<2x512xf32> to vector<2x128xf32>
    %82 = arith.negf %81 : vector<2x128xf32>
    %83 = math.exp %82 : vector<2x128xf32>
    %cst_38 = arith.constant 1.000000e+00 : f32
    %84 = vector.broadcast %cst_38 : f32 to vector<2x128xf32>
    %85 = arith.addf %84, %83 : vector<2x128xf32>
    %86 = arith.divf %84, %85 : vector<2x128xf32>
    %87 = arith.mulf %78, %61 : vector<2x128xf32>
    %88 = arith.mulf %72, %80 : vector<2x128xf32>
    %89 = arith.addf %87, %88 : vector<2x128xf32>
    %90 = math.tanh %89 : vector<2x128xf32>
    %91 = arith.mulf %86, %90 : vector<2x128xf32>
    %92 = vector.extract_strided_slice %31 {offsets = [4, 0], sizes = [2, 512], strides = [1, 1]} : vector<16x512xf32> to vector<2x512xf32>
    %cst_39 = arith.constant dense<0.000000e+00> : vector<2x512xf32>
    %93 = tpu.matmul %91, %23, %cst_39 {dimension_numbers = #tpu.dot_dimension_numbers<[1], [0], [0], [1], [0, 0, 1, 1], [], []>} : vector<2x128xf32>, vector<128x512xf32>, vector<2x512xf32> -> vector<2x512xf32>
    %94 = arith.addf %92, %93 : vector<2x512xf32>
    %95 = vector.extract_strided_slice %94 {offsets = [0, 0], sizes = [2, 128], strides = [1, 1]} : vector<2x512xf32> to vector<2x128xf32>
    %96 = arith.negf %95 : vector<2x128xf32>
    %97 = math.exp %96 : vector<2x128xf32>
    %cst_40 = arith.constant 1.000000e+00 : f32
    %98 = vector.broadcast %cst_40 : f32 to vector<2x128xf32>
    %99 = arith.addf %98, %97 : vector<2x128xf32>
    %100 = arith.divf %98, %99 : vector<2x128xf32>
    %101 = vector.extract_strided_slice %94 {offsets = [0, 128], sizes = [2, 128], strides = [1, 1]} : vector<2x512xf32> to vector<2x128xf32>
    %102 = arith.negf %101 : vector<2x128xf32>
    %103 = math.exp %102 : vector<2x128xf32>
    %cst_41 = arith.constant 1.000000e+00 : f32
    %104 = vector.broadcast %cst_41 : f32 to vector<2x128xf32>
    %105 = arith.addf %104, %103 : vector<2x128xf32>
    %106 = arith.divf %104, %105 : vector<2x128xf32>
    %107 = vector.extract_strided_slice %94 {offsets = [0, 256], sizes = [2, 128], strides = [1, 1]} : vector<2x512xf32> to vector<2x128xf32>
    %108 = math.tanh %107 : vector<2x128xf32>
    %109 = vector.extract_strided_slice %94 {offsets = [0, 384], sizes = [2, 128], strides = [1, 1]} : vector<2x512xf32> to vector<2x128xf32>
    %110 = arith.negf %109 : vector<2x128xf32>
    %111 = math.exp %110 : vector<2x128xf32>
    %cst_42 = arith.constant 1.000000e+00 : f32
    %112 = vector.broadcast %cst_42 : f32 to vector<2x128xf32>
    %113 = arith.addf %112, %111 : vector<2x128xf32>
    %114 = arith.divf %112, %113 : vector<2x128xf32>
    %115 = arith.mulf %106, %89 : vector<2x128xf32>
    %116 = arith.mulf %100, %108 : vector<2x128xf32>
    %117 = arith.addf %115, %116 : vector<2x128xf32>
    %118 = math.tanh %117 : vector<2x128xf32>
    %119 = arith.mulf %114, %118 : vector<2x128xf32>
    %120 = vector.extract_strided_slice %31 {offsets = [6, 0], sizes = [2, 512], strides = [1, 1]} : vector<16x512xf32> to vector<2x512xf32>
    %cst_43 = arith.constant dense<0.000000e+00> : vector<2x512xf32>
    %121 = tpu.matmul %119, %23, %cst_43 {dimension_numbers = #tpu.dot_dimension_numbers<[1], [0], [0], [1], [0, 0, 1, 1], [], []>} : vector<2x128xf32>, vector<128x512xf32>, vector<2x512xf32> -> vector<2x512xf32>
    %122 = arith.addf %120, %121 : vector<2x512xf32>
    %123 = vector.extract_strided_slice %122 {offsets = [0, 0], sizes = [2, 128], strides = [1, 1]} : vector<2x512xf32> to vector<2x128xf32>
    %124 = arith.negf %123 : vector<2x128xf32>
    %125 = math.exp %124 : vector<2x128xf32>
    %cst_44 = arith.constant 1.000000e+00 : f32
    %126 = vector.broadcast %cst_44 : f32 to vector<2x128xf32>
    %127 = arith.addf %126, %125 : vector<2x128xf32>
    %128 = arith.divf %126, %127 : vector<2x128xf32>
    %129 = vector.extract_strided_slice %122 {offsets = [0, 128], sizes = [2, 128], strides = [1, 1]} : vector<2x512xf32> to vector<2x128xf32>
    %130 = arith.negf %129 : vector<2x128xf32>
    %131 = math.exp %130 : vector<2x128xf32>
    %cst_45 = arith.constant 1.000000e+00 : f32
    %132 = vector.broadcast %cst_45 : f32 to vector<2x128xf32>
    %133 = arith.addf %132, %131 : vector<2x128xf32>
    %134 = arith.divf %132, %133 : vector<2x128xf32>
    %135 = vector.extract_strided_slice %122 {offsets = [0, 256], sizes = [2, 128], strides = [1, 1]} : vector<2x512xf32> to vector<2x128xf32>
    %136 = math.tanh %135 : vector<2x128xf32>
    %137 = vector.extract_strided_slice %122 {offsets = [0, 384], sizes = [2, 128], strides = [1, 1]} : vector<2x512xf32> to vector<2x128xf32>
    %138 = arith.negf %137 : vector<2x128xf32>
    %139 = math.exp %138 : vector<2x128xf32>
    %cst_46 = arith.constant 1.000000e+00 : f32
    %140 = vector.broadcast %cst_46 : f32 to vector<2x128xf32>
    %141 = arith.addf %140, %139 : vector<2x128xf32>
    %142 = arith.divf %140, %141 : vector<2x128xf32>
    %143 = arith.mulf %134, %117 : vector<2x128xf32>
    %144 = arith.mulf %128, %136 : vector<2x128xf32>
    %145 = arith.addf %143, %144 : vector<2x128xf32>
    %146 = math.tanh %145 : vector<2x128xf32>
    %147 = arith.mulf %142, %146 : vector<2x128xf32>
    %148 = vector.extract_strided_slice %31 {offsets = [8, 0], sizes = [2, 512], strides = [1, 1]} : vector<16x512xf32> to vector<2x512xf32>
    %cst_47 = arith.constant dense<0.000000e+00> : vector<2x512xf32>
    %149 = tpu.matmul %147, %23, %cst_47 {dimension_numbers = #tpu.dot_dimension_numbers<[1], [0], [0], [1], [0, 0, 1, 1], [], []>} : vector<2x128xf32>, vector<128x512xf32>, vector<2x512xf32> -> vector<2x512xf32>
    %150 = arith.addf %148, %149 : vector<2x512xf32>
    %151 = vector.extract_strided_slice %150 {offsets = [0, 0], sizes = [2, 128], strides = [1, 1]} : vector<2x512xf32> to vector<2x128xf32>
    %152 = arith.negf %151 : vector<2x128xf32>
    %153 = math.exp %152 : vector<2x128xf32>
    %cst_48 = arith.constant 1.000000e+00 : f32
    %154 = vector.broadcast %cst_48 : f32 to vector<2x128xf32>
    %155 = arith.addf %154, %153 : vector<2x128xf32>
    %156 = arith.divf %154, %155 : vector<2x128xf32>
    %157 = vector.extract_strided_slice %150 {offsets = [0, 128], sizes = [2, 128], strides = [1, 1]} : vector<2x512xf32> to vector<2x128xf32>
    %158 = arith.negf %157 : vector<2x128xf32>
    %159 = math.exp %158 : vector<2x128xf32>
    %cst_49 = arith.constant 1.000000e+00 : f32
    %160 = vector.broadcast %cst_49 : f32 to vector<2x128xf32>
    %161 = arith.addf %160, %159 : vector<2x128xf32>
    %162 = arith.divf %160, %161 : vector<2x128xf32>
    %163 = vector.extract_strided_slice %150 {offsets = [0, 256], sizes = [2, 128], strides = [1, 1]} : vector<2x512xf32> to vector<2x128xf32>
    %164 = math.tanh %163 : vector<2x128xf32>
    %165 = vector.extract_strided_slice %150 {offsets = [0, 384], sizes = [2, 128], strides = [1, 1]} : vector<2x512xf32> to vector<2x128xf32>
    %166 = arith.negf %165 : vector<2x128xf32>
    %167 = math.exp %166 : vector<2x128xf32>
    %cst_50 = arith.constant 1.000000e+00 : f32
    %168 = vector.broadcast %cst_50 : f32 to vector<2x128xf32>
    %169 = arith.addf %168, %167 : vector<2x128xf32>
    %170 = arith.divf %168, %169 : vector<2x128xf32>
    %171 = arith.mulf %162, %145 : vector<2x128xf32>
    %172 = arith.mulf %156, %164 : vector<2x128xf32>
    %173 = arith.addf %171, %172 : vector<2x128xf32>
    %174 = math.tanh %173 : vector<2x128xf32>
    %175 = arith.mulf %170, %174 : vector<2x128xf32>
    %176 = vector.extract_strided_slice %31 {offsets = [10, 0], sizes = [2, 512], strides = [1, 1]} : vector<16x512xf32> to vector<2x512xf32>
    %cst_51 = arith.constant dense<0.000000e+00> : vector<2x512xf32>
    %177 = tpu.matmul %175, %23, %cst_51 {dimension_numbers = #tpu.dot_dimension_numbers<[1], [0], [0], [1], [0, 0, 1, 1], [], []>} : vector<2x128xf32>, vector<128x512xf32>, vector<2x512xf32> -> vector<2x512xf32>
    %178 = arith.addf %176, %177 : vector<2x512xf32>
    %179 = vector.extract_strided_slice %178 {offsets = [0, 0], sizes = [2, 128], strides = [1, 1]} : vector<2x512xf32> to vector<2x128xf32>
    %180 = arith.negf %179 : vector<2x128xf32>
    %181 = math.exp %180 : vector<2x128xf32>
    %cst_52 = arith.constant 1.000000e+00 : f32
    %182 = vector.broadcast %cst_52 : f32 to vector<2x128xf32>
    %183 = arith.addf %182, %181 : vector<2x128xf32>
    %184 = arith.divf %182, %183 : vector<2x128xf32>
    %185 = vector.extract_strided_slice %178 {offsets = [0, 128], sizes = [2, 128], strides = [1, 1]} : vector<2x512xf32> to vector<2x128xf32>
    %186 = arith.negf %185 : vector<2x128xf32>
    %187 = math.exp %186 : vector<2x128xf32>
    %cst_53 = arith.constant 1.000000e+00 : f32
    %188 = vector.broadcast %cst_53 : f32 to vector<2x128xf32>
    %189 = arith.addf %188, %187 : vector<2x128xf32>
    %190 = arith.divf %188, %189 : vector<2x128xf32>
    %191 = vector.extract_strided_slice %178 {offsets = [0, 256], sizes = [2, 128], strides = [1, 1]} : vector<2x512xf32> to vector<2x128xf32>
    %192 = math.tanh %191 : vector<2x128xf32>
    %193 = vector.extract_strided_slice %178 {offsets = [0, 384], sizes = [2, 128], strides = [1, 1]} : vector<2x512xf32> to vector<2x128xf32>
    %194 = arith.negf %193 : vector<2x128xf32>
    %195 = math.exp %194 : vector<2x128xf32>
    %cst_54 = arith.constant 1.000000e+00 : f32
    %196 = vector.broadcast %cst_54 : f32 to vector<2x128xf32>
    %197 = arith.addf %196, %195 : vector<2x128xf32>
    %198 = arith.divf %196, %197 : vector<2x128xf32>
    %199 = arith.mulf %190, %173 : vector<2x128xf32>
    %200 = arith.mulf %184, %192 : vector<2x128xf32>
    %201 = arith.addf %199, %200 : vector<2x128xf32>
    %202 = math.tanh %201 : vector<2x128xf32>
    %203 = arith.mulf %198, %202 : vector<2x128xf32>
    %204 = vector.extract_strided_slice %31 {offsets = [12, 0], sizes = [2, 512], strides = [1, 1]} : vector<16x512xf32> to vector<2x512xf32>
    %cst_55 = arith.constant dense<0.000000e+00> : vector<2x512xf32>
    %205 = tpu.matmul %203, %23, %cst_55 {dimension_numbers = #tpu.dot_dimension_numbers<[1], [0], [0], [1], [0, 0, 1, 1], [], []>} : vector<2x128xf32>, vector<128x512xf32>, vector<2x512xf32> -> vector<2x512xf32>
    %206 = arith.addf %204, %205 : vector<2x512xf32>
    %207 = vector.extract_strided_slice %206 {offsets = [0, 0], sizes = [2, 128], strides = [1, 1]} : vector<2x512xf32> to vector<2x128xf32>
    %208 = arith.negf %207 : vector<2x128xf32>
    %209 = math.exp %208 : vector<2x128xf32>
    %cst_56 = arith.constant 1.000000e+00 : f32
    %210 = vector.broadcast %cst_56 : f32 to vector<2x128xf32>
    %211 = arith.addf %210, %209 : vector<2x128xf32>
    %212 = arith.divf %210, %211 : vector<2x128xf32>
    %213 = vector.extract_strided_slice %206 {offsets = [0, 128], sizes = [2, 128], strides = [1, 1]} : vector<2x512xf32> to vector<2x128xf32>
    %214 = arith.negf %213 : vector<2x128xf32>
    %215 = math.exp %214 : vector<2x128xf32>
    %cst_57 = arith.constant 1.000000e+00 : f32
    %216 = vector.broadcast %cst_57 : f32 to vector<2x128xf32>
    %217 = arith.addf %216, %215 : vector<2x128xf32>
    %218 = arith.divf %216, %217 : vector<2x128xf32>
    %219 = vector.extract_strided_slice %206 {offsets = [0, 256], sizes = [2, 128], strides = [1, 1]} : vector<2x512xf32> to vector<2x128xf32>
    %220 = math.tanh %219 : vector<2x128xf32>
    %221 = vector.extract_strided_slice %206 {offsets = [0, 384], sizes = [2, 128], strides = [1, 1]} : vector<2x512xf32> to vector<2x128xf32>
    %222 = arith.negf %221 : vector<2x128xf32>
    %223 = math.exp %222 : vector<2x128xf32>
    %cst_58 = arith.constant 1.000000e+00 : f32
    %224 = vector.broadcast %cst_58 : f32 to vector<2x128xf32>
    %225 = arith.addf %224, %223 : vector<2x128xf32>
    %226 = arith.divf %224, %225 : vector<2x128xf32>
    %227 = arith.mulf %218, %201 : vector<2x128xf32>
    %228 = arith.mulf %212, %220 : vector<2x128xf32>
    %229 = arith.addf %227, %228 : vector<2x128xf32>
    %230 = math.tanh %229 : vector<2x128xf32>
    %231 = arith.mulf %226, %230 : vector<2x128xf32>
    %232 = vector.extract_strided_slice %31 {offsets = [14, 0], sizes = [2, 512], strides = [1, 1]} : vector<16x512xf32> to vector<2x512xf32>
    %cst_59 = arith.constant dense<0.000000e+00> : vector<2x512xf32>
    %233 = tpu.matmul %231, %23, %cst_59 {dimension_numbers = #tpu.dot_dimension_numbers<[1], [0], [0], [1], [0, 0, 1, 1], [], []>} : vector<2x128xf32>, vector<128x512xf32>, vector<2x512xf32> -> vector<2x512xf32>
    %234 = arith.addf %232, %233 : vector<2x512xf32>
    %235 = vector.extract_strided_slice %234 {offsets = [0, 0], sizes = [2, 128], strides = [1, 1]} : vector<2x512xf32> to vector<2x128xf32>
    %236 = arith.negf %235 : vector<2x128xf32>
    %237 = math.exp %236 : vector<2x128xf32>
    %cst_60 = arith.constant 1.000000e+00 : f32
    %238 = vector.broadcast %cst_60 : f32 to vector<2x128xf32>
    %239 = arith.addf %238, %237 : vector<2x128xf32>
    %240 = arith.divf %238, %239 : vector<2x128xf32>
    %241 = vector.extract_strided_slice %234 {offsets = [0, 128], sizes = [2, 128], strides = [1, 1]} : vector<2x512xf32> to vector<2x128xf32>
    %242 = arith.negf %241 : vector<2x128xf32>
    %243 = math.exp %242 : vector<2x128xf32>
    %cst_61 = arith.constant 1.000000e+00 : f32
    %244 = vector.broadcast %cst_61 : f32 to vector<2x128xf32>
    %245 = arith.addf %244, %243 : vector<2x128xf32>
    %246 = arith.divf %244, %245 : vector<2x128xf32>
    %247 = vector.extract_strided_slice %234 {offsets = [0, 256], sizes = [2, 128], strides = [1, 1]} : vector<2x512xf32> to vector<2x128xf32>
    %248 = math.tanh %247 : vector<2x128xf32>
    %249 = vector.extract_strided_slice %234 {offsets = [0, 384], sizes = [2, 128], strides = [1, 1]} : vector<2x512xf32> to vector<2x128xf32>
    %250 = arith.negf %249 : vector<2x128xf32>
    %251 = math.exp %250 : vector<2x128xf32>
    %cst_62 = arith.constant 1.000000e+00 : f32
    %252 = vector.broadcast %cst_62 : f32 to vector<2x128xf32>
    %253 = arith.addf %252, %251 : vector<2x128xf32>
    %254 = arith.divf %252, %253 : vector<2x128xf32>
    %255 = arith.mulf %246, %229 : vector<2x128xf32>
    %256 = arith.mulf %240, %248 : vector<2x128xf32>
    %257 = arith.addf %255, %256 : vector<2x128xf32>
    %258 = math.tanh %257 : vector<2x128xf32>
    %259 = arith.mulf %254, %258 : vector<2x128xf32>
    %c0_63 = arith.constant 0 : index
    %c0_64 = arith.constant 0 : index
    %c0_65 = arith.constant 0 : index
    %260 = vector.load %arg17[%c0_63, %c0_64, %c0_65] : memref<3x2x128xf32, #tpu.memory_space<vmem>>, vector<1x2x128xf32>
    %261 = vector.shape_cast %260 : vector<1x2x128xf32> to vector<2x128xf32>
    %262 = vector.shape_cast %259 : vector<2x128xf32> to vector<1x2x128xf32>
    tpu.vector_store %arg17[%c0_63, %c0_64, %c0_65], %262 {strides = array<i32>} : memref<3x2x128xf32, #tpu.memory_space<vmem>>, vector<1x2x128xf32>,
    %c0_66 = arith.constant 0 : index
    %c0_67 = arith.constant 0 : index
    %c0_68 = arith.constant 0 : index
    %263 = vector.load %arg18[%c0_66, %c0_67, %c0_68] : memref<3x2x128xf32, #tpu.memory_space<vmem>>, vector<1x2x128xf32>
    %264 = vector.shape_cast %263 : vector<1x2x128xf32> to vector<2x128xf32>
    %265 = vector.shape_cast %257 : vector<2x128xf32> to vector<1x2x128xf32>
    tpu.vector_store %arg18[%c0_66, %c0_67, %c0_68], %265 {strides = array<i32>} : memref<3x2x128xf32, #tpu.memory_space<vmem>>, vector<1x2x128xf32>,
    %266 = tpu.concatenate %63, %91, %119, %147, %175, %203, %231, %259 in 0 : vector<2x128xf32>, vector<2x128xf32>, vector<2x128xf32>, vector<2x128xf32>, vector<2x128xf32>, vector<2x128xf32>, vector<2x128xf32>, vector<2x128xf32> -> vector<16x128xf32>
    %cst_69 = arith.constant dense<0.000000e+00> : vector<16x512xf32>
    %267 = tpu.matmul %266, %21, %cst_69 {dimension_numbers = #tpu.dot_dimension_numbers<[1], [0], [0], [1], [0, 0, 1, 1], [], []>} : vector<16x128xf32>, vector<128x512xf32>, vector<16x512xf32> -> vector<16x512xf32>
    %268 = vector.broadcast %27 : vector<1x512xf32> to vector<16x512xf32>
    %269 = arith.addf %267, %268 : vector<16x512xf32>
    %c1 = arith.constant 1 : index
    %c0_70 = arith.constant 0 : index
    %c0_71 = arith.constant 0 : index
    %270 = vector.load %arg1[%c1, %c0_70, %c0_71] : memref<3x2x128xf32, #tpu.memory_space<vmem>>, vector<1x2x128xf32>
    %271 = vector.shape_cast %270 : vector<1x2x128xf32> to vector<2x128xf32>
    %c1_72 = arith.constant 1 : index
    %c0_73 = arith.constant 0 : index
    %c0_74 = arith.constant 0 : index
    %272 = vector.load %arg2[%c1_72, %c0_73, %c0_74] : memref<3x2x128xf32, #tpu.memory_space<vmem>>, vector<1x2x128xf32>
    %273 = vector.shape_cast %272 : vector<1x2x128xf32> to vector<2x128xf32>
    %274 = vector.extract_strided_slice %269 {offsets = [0, 0], sizes = [2, 512], strides = [1, 1]} : vector<16x512xf32> to vector<2x512xf32>
    %cst_75 = arith.constant dense<0.000000e+00> : vector<2x512xf32>
    %275 = tpu.matmul %271, %24, %cst_75 {dimension_numbers = #tpu.dot_dimension_numbers<[1], [0], [0], [1], [0, 0, 1, 1], [], []>} : vector<2x128xf32>, vector<128x512xf32>, vector<2x512xf32> -> vector<2x512xf32>
    %276 = arith.addf %274, %275 : vector<2x512xf32>
    %277 = vector.extract_strided_slice %276 {offsets = [0, 0], sizes = [2, 128], strides = [1, 1]} : vector<2x512xf32> to vector<2x128xf32>
    %278 = arith.negf %277 : vector<2x128xf32>
    %279 = math.exp %278 : vector<2x128xf32>
    %cst_76 = arith.constant 1.000000e+00 : f32
    %280 = vector.broadcast %cst_76 : f32 to vector<2x128xf32>
    %281 = arith.addf %280, %279 : vector<2x128xf32>
    %282 = arith.divf %280, %281 : vector<2x128xf32>
    %283 = vector.extract_strided_slice %276 {offsets = [0, 128], sizes = [2, 128], strides = [1, 1]} : vector<2x512xf32> to vector<2x128xf32>
    %284 = arith.negf %283 : vector<2x128xf32>
    %285 = math.exp %284 : vector<2x128xf32>
    %cst_77 = arith.constant 1.000000e+00 : f32
    %286 = vector.broadcast %cst_77 : f32 to vector<2x128xf32>
    %287 = arith.addf %286, %285 : vector<2x128xf32>
    %288 = arith.divf %286, %287 : vector<2x128xf32>
    %289 = vector.extract_strided_slice %276 {offsets = [0, 256], sizes = [2, 128], strides = [1, 1]} : vector<2x512xf32> to vector<2x128xf32>
    %290 = math.tanh %289 : vector<2x128xf32>
    %291 = vector.extract_strided_slice %276 {offsets = [0, 384], sizes = [2, 128], strides = [1, 1]} : vector<2x512xf32> to vector<2x128xf32>
    %292 = arith.negf %291 : vector<2x128xf32>
    %293 = math.exp %292 : vector<2x128xf32>
    %cst_78 = arith.constant 1.000000e+00 : f32
    %294 = vector.broadcast %cst_78 : f32 to vector<2x128xf32>
    %295 = arith.addf %294, %293 : vector<2x128xf32>
    %296 = arith.divf %294, %295 : vector<2x128xf32>
    %297 = arith.mulf %288, %273 : vector<2x128xf32>
    %298 = arith.mulf %282, %290 : vector<2x128xf32>
    %299 = arith.addf %297, %298 : vector<2x128xf32>
    %300 = math.tanh %299 : vector<2x128xf32>
    %301 = arith.mulf %296, %300 : vector<2x128xf32>
    %302 = vector.extract_strided_slice %269 {offsets = [2, 0], sizes = [2, 512], strides = [1, 1]} : vector<16x512xf32> to vector<2x512xf32>
    %cst_79 = arith.constant dense<0.000000e+00> : vector<2x512xf32>
    %303 = tpu.matmul %301, %24, %cst_79 {dimension_numbers = #tpu.dot_dimension_numbers<[1], [0], [0], [1], [0, 0, 1, 1], [], []>} : vector<2x128xf32>, vector<128x512xf32>, vector<2x512xf32> -> vector<2x512xf32>
    %304 = arith.addf %302, %303 : vector<2x512xf32>
    %305 = vector.extract_strided_slice %304 {offsets = [0, 0], sizes = [2, 128], strides = [1, 1]} : vector<2x512xf32> to vector<2x128xf32>
    %306 = arith.negf %305 : vector<2x128xf32>
    %307 = math.exp %306 : vector<2x128xf32>
    %cst_80 = arith.constant 1.000000e+00 : f32
    %308 = vector.broadcast %cst_80 : f32 to vector<2x128xf32>
    %309 = arith.addf %308, %307 : vector<2x128xf32>
    %310 = arith.divf %308, %309 : vector<2x128xf32>
    %311 = vector.extract_strided_slice %304 {offsets = [0, 128], sizes = [2, 128], strides = [1, 1]} : vector<2x512xf32> to vector<2x128xf32>
    %312 = arith.negf %311 : vector<2x128xf32>
    %313 = math.exp %312 : vector<2x128xf32>
    %cst_81 = arith.constant 1.000000e+00 : f32
    %314 = vector.broadcast %cst_81 : f32 to vector<2x128xf32>
    %315 = arith.addf %314, %313 : vector<2x128xf32>
    %316 = arith.divf %314, %315 : vector<2x128xf32>
    %317 = vector.extract_strided_slice %304 {offsets = [0, 256], sizes = [2, 128], strides = [1, 1]} : vector<2x512xf32> to vector<2x128xf32>
    %318 = math.tanh %317 : vector<2x128xf32>
    %319 = vector.extract_strided_slice %304 {offsets = [0, 384], sizes = [2, 128], strides = [1, 1]} : vector<2x512xf32> to vector<2x128xf32>
    %320 = arith.negf %319 : vector<2x128xf32>
    %321 = math.exp %320 : vector<2x128xf32>
    %cst_82 = arith.constant 1.000000e+00 : f32
    %322 = vector.broadcast %cst_82 : f32 to vector<2x128xf32>
    %323 = arith.addf %322, %321 : vector<2x128xf32>
    %324 = arith.divf %322, %323 : vector<2x128xf32>
    %325 = arith.mulf %316, %299 : vector<2x128xf32>
    %326 = arith.mulf %310, %318 : vector<2x128xf32>
    %327 = arith.addf %325, %326 : vector<2x128xf32>
    %328 = math.tanh %327 : vector<2x128xf32>
    %329 = arith.mulf %324, %328 : vector<2x128xf32>
    %330 = vector.extract_strided_slice %269 {offsets = [4, 0], sizes = [2, 512], strides = [1, 1]} : vector<16x512xf32> to vector<2x512xf32>
    %cst_83 = arith.constant dense<0.000000e+00> : vector<2x512xf32>
    %331 = tpu.matmul %329, %24, %cst_83 {dimension_numbers = #tpu.dot_dimension_numbers<[1], [0], [0], [1], [0, 0, 1, 1], [], []>} : vector<2x128xf32>, vector<128x512xf32>, vector<2x512xf32> -> vector<2x512xf32>
    %332 = arith.addf %330, %331 : vector<2x512xf32>
    %333 = vector.extract_strided_slice %332 {offsets = [0, 0], sizes = [2, 128], strides = [1, 1]} : vector<2x512xf32> to vector<2x128xf32>
    %334 = arith.negf %333 : vector<2x128xf32>
    %335 = math.exp %334 : vector<2x128xf32>
    %cst_84 = arith.constant 1.000000e+00 : f32
    %336 = vector.broadcast %cst_84 : f32 to vector<2x128xf32>
    %337 = arith.addf %336, %335 : vector<2x128xf32>
    %338 = arith.divf %336, %337 : vector<2x128xf32>
    %339 = vector.extract_strided_slice %332 {offsets = [0, 128], sizes = [2, 128], strides = [1, 1]} : vector<2x512xf32> to vector<2x128xf32>
    %340 = arith.negf %339 : vector<2x128xf32>
    %341 = math.exp %340 : vector<2x128xf32>
    %cst_85 = arith.constant 1.000000e+00 : f32
    %342 = vector.broadcast %cst_85 : f32 to vector<2x128xf32>
    %343 = arith.addf %342, %341 : vector<2x128xf32>
    %344 = arith.divf %342, %343 : vector<2x128xf32>
    %345 = vector.extract_strided_slice %332 {offsets = [0, 256], sizes = [2, 128], strides = [1, 1]} : vector<2x512xf32> to vector<2x128xf32>
    %346 = math.tanh %345 : vector<2x128xf32>
    %347 = vector.extract_strided_slice %332 {offsets = [0, 384], sizes = [2, 128], strides = [1, 1]} : vector<2x512xf32> to vector<2x128xf32>
    %348 = arith.negf %347 : vector<2x128xf32>
    %349 = math.exp %348 : vector<2x128xf32>
    %cst_86 = arith.constant 1.000000e+00 : f32
    %350 = vector.broadcast %cst_86 : f32 to vector<2x128xf32>
    %351 = arith.addf %350, %349 : vector<2x128xf32>
    %352 = arith.divf %350, %351 : vector<2x128xf32>
    %353 = arith.mulf %344, %327 : vector<2x128xf32>
    %354 = arith.mulf %338, %346 : vector<2x128xf32>
    %355 = arith.addf %353, %354 : vector<2x128xf32>
    %356 = math.tanh %355 : vector<2x128xf32>
    %357 = arith.mulf %352, %356 : vector<2x128xf32>
    %358 = vector.extract_strided_slice %269 {offsets = [6, 0], sizes = [2, 512], strides = [1, 1]} : vector<16x512xf32> to vector<2x512xf32>
    %cst_87 = arith.constant dense<0.000000e+00> : vector<2x512xf32>
    %359 = tpu.matmul %357, %24, %cst_87 {dimension_numbers = #tpu.dot_dimension_numbers<[1], [0], [0], [1], [0, 0, 1, 1], [], []>} : vector<2x128xf32>, vector<128x512xf32>, vector<2x512xf32> -> vector<2x512xf32>
    %360 = arith.addf %358, %359 : vector<2x512xf32>
    %361 = vector.extract_strided_slice %360 {offsets = [0, 0], sizes = [2, 128], strides = [1, 1]} : vector<2x512xf32> to vector<2x128xf32>
    %362 = arith.negf %361 : vector<2x128xf32>
    %363 = math.exp %362 : vector<2x128xf32>
    %cst_88 = arith.constant 1.000000e+00 : f32
    %364 = vector.broadcast %cst_88 : f32 to vector<2x128xf32>
    %365 = arith.addf %364, %363 : vector<2x128xf32>
    %366 = arith.divf %364, %365 : vector<2x128xf32>
    %367 = vector.extract_strided_slice %360 {offsets = [0, 128], sizes = [2, 128], strides = [1, 1]} : vector<2x512xf32> to vector<2x128xf32>
    %368 = arith.negf %367 : vector<2x128xf32>
    %369 = math.exp %368 : vector<2x128xf32>
    %cst_89 = arith.constant 1.000000e+00 : f32
    %370 = vector.broadcast %cst_89 : f32 to vector<2x128xf32>
    %371 = arith.addf %370, %369 : vector<2x128xf32>
    %372 = arith.divf %370, %371 : vector<2x128xf32>
    %373 = vector.extract_strided_slice %360 {offsets = [0, 256], sizes = [2, 128], strides = [1, 1]} : vector<2x512xf32> to vector<2x128xf32>
    %374 = math.tanh %373 : vector<2x128xf32>
    %375 = vector.extract_strided_slice %360 {offsets = [0, 384], sizes = [2, 128], strides = [1, 1]} : vector<2x512xf32> to vector<2x128xf32>
    %376 = arith.negf %375 : vector<2x128xf32>
    %377 = math.exp %376 : vector<2x128xf32>
    %cst_90 = arith.constant 1.000000e+00 : f32
    %378 = vector.broadcast %cst_90 : f32 to vector<2x128xf32>
    %379 = arith.addf %378, %377 : vector<2x128xf32>
    %380 = arith.divf %378, %379 : vector<2x128xf32>
    %381 = arith.mulf %372, %355 : vector<2x128xf32>
    %382 = arith.mulf %366, %374 : vector<2x128xf32>
    %383 = arith.addf %381, %382 : vector<2x128xf32>
    %384 = math.tanh %383 : vector<2x128xf32>
    %385 = arith.mulf %380, %384 : vector<2x128xf32>
    %386 = vector.extract_strided_slice %269 {offsets = [8, 0], sizes = [2, 512], strides = [1, 1]} : vector<16x512xf32> to vector<2x512xf32>
    %cst_91 = arith.constant dense<0.000000e+00> : vector<2x512xf32>
    %387 = tpu.matmul %385, %24, %cst_91 {dimension_numbers = #tpu.dot_dimension_numbers<[1], [0], [0], [1], [0, 0, 1, 1], [], []>} : vector<2x128xf32>, vector<128x512xf32>, vector<2x512xf32> -> vector<2x512xf32>
    %388 = arith.addf %386, %387 : vector<2x512xf32>
    %389 = vector.extract_strided_slice %388 {offsets = [0, 0], sizes = [2, 128], strides = [1, 1]} : vector<2x512xf32> to vector<2x128xf32>
    %390 = arith.negf %389 : vector<2x128xf32>
    %391 = math.exp %390 : vector<2x128xf32>
    %cst_92 = arith.constant 1.000000e+00 : f32
    %392 = vector.broadcast %cst_92 : f32 to vector<2x128xf32>
    %393 = arith.addf %392, %391 : vector<2x128xf32>
    %394 = arith.divf %392, %393 : vector<2x128xf32>
    %395 = vector.extract_strided_slice %388 {offsets = [0, 128], sizes = [2, 128], strides = [1, 1]} : vector<2x512xf32> to vector<2x128xf32>
    %396 = arith.negf %395 : vector<2x128xf32>
    %397 = math.exp %396 : vector<2x128xf32>
    %cst_93 = arith.constant 1.000000e+00 : f32
    %398 = vector.broadcast %cst_93 : f32 to vector<2x128xf32>
    %399 = arith.addf %398, %397 : vector<2x128xf32>
    %400 = arith.divf %398, %399 : vector<2x128xf32>
    %401 = vector.extract_strided_slice %388 {offsets = [0, 256], sizes = [2, 128], strides = [1, 1]} : vector<2x512xf32> to vector<2x128xf32>
    %402 = math.tanh %401 : vector<2x128xf32>
    %403 = vector.extract_strided_slice %388 {offsets = [0, 384], sizes = [2, 128], strides = [1, 1]} : vector<2x512xf32> to vector<2x128xf32>
    %404 = arith.negf %403 : vector<2x128xf32>
    %405 = math.exp %404 : vector<2x128xf32>
    %cst_94 = arith.constant 1.000000e+00 : f32
    %406 = vector.broadcast %cst_94 : f32 to vector<2x128xf32>
    %407 = arith.addf %406, %405 : vector<2x128xf32>
    %408 = arith.divf %406, %407 : vector<2x128xf32>
    %409 = arith.mulf %400, %383 : vector<2x128xf32>
    %410 = arith.mulf %394, %402 : vector<2x128xf32>
    %411 = arith.addf %409, %410 : vector<2x128xf32>
    %412 = math.tanh %411 : vector<2x128xf32>
    %413 = arith.mulf %408, %412 : vector<2x128xf32>
    %414 = vector.extract_strided_slice %269 {offsets = [10, 0], sizes = [2, 512], strides = [1, 1]} : vector<16x512xf32> to vector<2x512xf32>
    %cst_95 = arith.constant dense<0.000000e+00> : vector<2x512xf32>
    %415 = tpu.matmul %413, %24, %cst_95 {dimension_numbers = #tpu.dot_dimension_numbers<[1], [0], [0], [1], [0, 0, 1, 1], [], []>} : vector<2x128xf32>, vector<128x512xf32>, vector<2x512xf32> -> vector<2x512xf32>
    %416 = arith.addf %414, %415 : vector<2x512xf32>
    %417 = vector.extract_strided_slice %416 {offsets = [0, 0], sizes = [2, 128], strides = [1, 1]} : vector<2x512xf32> to vector<2x128xf32>
    %418 = arith.negf %417 : vector<2x128xf32>
    %419 = math.exp %418 : vector<2x128xf32>
    %cst_96 = arith.constant 1.000000e+00 : f32
    %420 = vector.broadcast %cst_96 : f32 to vector<2x128xf32>
    %421 = arith.addf %420, %419 : vector<2x128xf32>
    %422 = arith.divf %420, %421 : vector<2x128xf32>
    %423 = vector.extract_strided_slice %416 {offsets = [0, 128], sizes = [2, 128], strides = [1, 1]} : vector<2x512xf32> to vector<2x128xf32>
    %424 = arith.negf %423 : vector<2x128xf32>
    %425 = math.exp %424 : vector<2x128xf32>
    %cst_97 = arith.constant 1.000000e+00 : f32
    %426 = vector.broadcast %cst_97 : f32 to vector<2x128xf32>
    %427 = arith.addf %426, %425 : vector<2x128xf32>
    %428 = arith.divf %426, %427 : vector<2x128xf32>
    %429 = vector.extract_strided_slice %416 {offsets = [0, 256], sizes = [2, 128], strides = [1, 1]} : vector<2x512xf32> to vector<2x128xf32>
    %430 = math.tanh %429 : vector<2x128xf32>
    %431 = vector.extract_strided_slice %416 {offsets = [0, 384], sizes = [2, 128], strides = [1, 1]} : vector<2x512xf32> to vector<2x128xf32>
    %432 = arith.negf %431 : vector<2x128xf32>
    %433 = math.exp %432 : vector<2x128xf32>
    %cst_98 = arith.constant 1.000000e+00 : f32
    %434 = vector.broadcast %cst_98 : f32 to vector<2x128xf32>
    %435 = arith.addf %434, %433 : vector<2x128xf32>
    %436 = arith.divf %434, %435 : vector<2x128xf32>
    %437 = arith.mulf %428, %411 : vector<2x128xf32>
    %438 = arith.mulf %422, %430 : vector<2x128xf32>
    %439 = arith.addf %437, %438 : vector<2x128xf32>
    %440 = math.tanh %439 : vector<2x128xf32>
    %441 = arith.mulf %436, %440 : vector<2x128xf32>
    %442 = vector.extract_strided_slice %269 {offsets = [12, 0], sizes = [2, 512], strides = [1, 1]} : vector<16x512xf32> to vector<2x512xf32>
    %cst_99 = arith.constant dense<0.000000e+00> : vector<2x512xf32>
    %443 = tpu.matmul %441, %24, %cst_99 {dimension_numbers = #tpu.dot_dimension_numbers<[1], [0], [0], [1], [0, 0, 1, 1], [], []>} : vector<2x128xf32>, vector<128x512xf32>, vector<2x512xf32> -> vector<2x512xf32>
    %444 = arith.addf %442, %443 : vector<2x512xf32>
    %445 = vector.extract_strided_slice %444 {offsets = [0, 0], sizes = [2, 128], strides = [1, 1]} : vector<2x512xf32> to vector<2x128xf32>
    %446 = arith.negf %445 : vector<2x128xf32>
    %447 = math.exp %446 : vector<2x128xf32>
    %cst_100 = arith.constant 1.000000e+00 : f32
    %448 = vector.broadcast %cst_100 : f32 to vector<2x128xf32>
    %449 = arith.addf %448, %447 : vector<2x128xf32>
    %450 = arith.divf %448, %449 : vector<2x128xf32>
    %451 = vector.extract_strided_slice %444 {offsets = [0, 128], sizes = [2, 128], strides = [1, 1]} : vector<2x512xf32> to vector<2x128xf32>
    %452 = arith.negf %451 : vector<2x128xf32>
    %453 = math.exp %452 : vector<2x128xf32>
    %cst_101 = arith.constant 1.000000e+00 : f32
    %454 = vector.broadcast %cst_101 : f32 to vector<2x128xf32>
    %455 = arith.addf %454, %453 : vector<2x128xf32>
    %456 = arith.divf %454, %455 : vector<2x128xf32>
    %457 = vector.extract_strided_slice %444 {offsets = [0, 256], sizes = [2, 128], strides = [1, 1]} : vector<2x512xf32> to vector<2x128xf32>
    %458 = math.tanh %457 : vector<2x128xf32>
    %459 = vector.extract_strided_slice %444 {offsets = [0, 384], sizes = [2, 128], strides = [1, 1]} : vector<2x512xf32> to vector<2x128xf32>
    %460 = arith.negf %459 : vector<2x128xf32>
    %461 = math.exp %460 : vector<2x128xf32>
    %cst_102 = arith.constant 1.000000e+00 : f32
    %462 = vector.broadcast %cst_102 : f32 to vector<2x128xf32>
    %463 = arith.addf %462, %461 : vector<2x128xf32>
    %464 = arith.divf %462, %463 : vector<2x128xf32>
    %465 = arith.mulf %456, %439 : vector<2x128xf32>
    %466 = arith.mulf %450, %458 : vector<2x128xf32>
    %467 = arith.addf %465, %466 : vector<2x128xf32>
    %468 = math.tanh %467 : vector<2x128xf32>
    %469 = arith.mulf %464, %468 : vector<2x128xf32>
    %470 = vector.extract_strided_slice %269 {offsets = [14, 0], sizes = [2, 512], strides = [1, 1]} : vector<16x512xf32> to vector<2x512xf32>
    %cst_103 = arith.constant dense<0.000000e+00> : vector<2x512xf32>
    %471 = tpu.matmul %469, %24, %cst_103 {dimension_numbers = #tpu.dot_dimension_numbers<[1], [0], [0], [1], [0, 0, 1, 1], [], []>} : vector<2x128xf32>, vector<128x512xf32>, vector<2x512xf32> -> vector<2x512xf32>
    %472 = arith.addf %470, %471 : vector<2x512xf32>
    %473 = vector.extract_strided_slice %472 {offsets = [0, 0], sizes = [2, 128], strides = [1, 1]} : vector<2x512xf32> to vector<2x128xf32>
    %474 = arith.negf %473 : vector<2x128xf32>
    %475 = math.exp %474 : vector<2x128xf32>
    %cst_104 = arith.constant 1.000000e+00 : f32
    %476 = vector.broadcast %cst_104 : f32 to vector<2x128xf32>
    %477 = arith.addf %476, %475 : vector<2x128xf32>
    %478 = arith.divf %476, %477 : vector<2x128xf32>
    %479 = vector.extract_strided_slice %472 {offsets = [0, 128], sizes = [2, 128], strides = [1, 1]} : vector<2x512xf32> to vector<2x128xf32>
    %480 = arith.negf %479 : vector<2x128xf32>
    %481 = math.exp %480 : vector<2x128xf32>
    %cst_105 = arith.constant 1.000000e+00 : f32
    %482 = vector.broadcast %cst_105 : f32 to vector<2x128xf32>
    %483 = arith.addf %482, %481 : vector<2x128xf32>
    %484 = arith.divf %482, %483 : vector<2x128xf32>
    %485 = vector.extract_strided_slice %472 {offsets = [0, 256], sizes = [2, 128], strides = [1, 1]} : vector<2x512xf32> to vector<2x128xf32>
    %486 = math.tanh %485 : vector<2x128xf32>
    %487 = vector.extract_strided_slice %472 {offsets = [0, 384], sizes = [2, 128], strides = [1, 1]} : vector<2x512xf32> to vector<2x128xf32>
    %488 = arith.negf %487 : vector<2x128xf32>
    %489 = math.exp %488 : vector<2x128xf32>
    %cst_106 = arith.constant 1.000000e+00 : f32
    %490 = vector.broadcast %cst_106 : f32 to vector<2x128xf32>
    %491 = arith.addf %490, %489 : vector<2x128xf32>
    %492 = arith.divf %490, %491 : vector<2x128xf32>
    %493 = arith.mulf %484, %467 : vector<2x128xf32>
    %494 = arith.mulf %478, %486 : vector<2x128xf32>
    %495 = arith.addf %493, %494 : vector<2x128xf32>
    %496 = math.tanh %495 : vector<2x128xf32>
    %497 = arith.mulf %492, %496 : vector<2x128xf32>
    %c1_107 = arith.constant 1 : index
    %c0_108 = arith.constant 0 : index
    %c0_109 = arith.constant 0 : index
    %498 = vector.load %arg17[%c1_107, %c0_108, %c0_109] : memref<3x2x128xf32, #tpu.memory_space<vmem>>, vector<1x2x128xf32>
    %499 = vector.shape_cast %498 : vector<1x2x128xf32> to vector<2x128xf32>
    %500 = vector.shape_cast %497 : vector<2x128xf32> to vector<1x2x128xf32>
    tpu.vector_store %arg17[%c1_107, %c0_108, %c0_109], %500 {strides = array<i32>} : memref<3x2x128xf32, #tpu.memory_space<vmem>>, vector<1x2x128xf32>,
    %c1_110 = arith.constant 1 : index
    %c0_111 = arith.constant 0 : index
    %c0_112 = arith.constant 0 : index
    %501 = vector.load %arg18[%c1_110, %c0_111, %c0_112] : memref<3x2x128xf32, #tpu.memory_space<vmem>>, vector<1x2x128xf32>
    %502 = vector.shape_cast %501 : vector<1x2x128xf32> to vector<2x128xf32>
    %503 = vector.shape_cast %495 : vector<2x128xf32> to vector<1x2x128xf32>
    tpu.vector_store %arg18[%c1_110, %c0_111, %c0_112], %503 {strides = array<i32>} : memref<3x2x128xf32, #tpu.memory_space<vmem>>, vector<1x2x128xf32>,
    %504 = tpu.concatenate %301, %329, %357, %385, %413, %441, %469, %497 in 0 : vector<2x128xf32>, vector<2x128xf32>, vector<2x128xf32>, vector<2x128xf32>, vector<2x128xf32>, vector<2x128xf32>, vector<2x128xf32>, vector<2x128xf32> -> vector<16x128xf32>
    %cst_113 = arith.constant dense<0.000000e+00> : vector<16x512xf32>
    %505 = tpu.matmul %504, %22, %cst_113 {dimension_numbers = #tpu.dot_dimension_numbers<[1], [0], [0], [1], [0, 0, 1, 1], [], []>} : vector<16x128xf32>, vector<128x512xf32>, vector<16x512xf32> -> vector<16x512xf32>
    %506 = vector.broadcast %28 : vector<1x512xf32> to vector<16x512xf32>
    %507 = arith.addf %505, %506 : vector<16x512xf32>
    %c2 = arith.constant 2 : index
    %c0_114 = arith.constant 0 : index
    %c0_115 = arith.constant 0 : index
    %508 = vector.load %arg1[%c2, %c0_114, %c0_115] : memref<3x2x128xf32, #tpu.memory_space<vmem>>, vector<1x2x128xf32>
    %509 = vector.shape_cast %508 : vector<1x2x128xf32> to vector<2x128xf32>
    %c2_116 = arith.constant 2 : index
    %c0_117 = arith.constant 0 : index
    %c0_118 = arith.constant 0 : index
    %510 = vector.load %arg2[%c2_116, %c0_117, %c0_118] : memref<3x2x128xf32, #tpu.memory_space<vmem>>, vector<1x2x128xf32>
    %511 = vector.shape_cast %510 : vector<1x2x128xf32> to vector<2x128xf32>
    %512 = vector.extract_strided_slice %507 {offsets = [0, 0], sizes = [2, 512], strides = [1, 1]} : vector<16x512xf32> to vector<2x512xf32>
    %cst_119 = arith.constant dense<0.000000e+00> : vector<2x512xf32>
    %513 = tpu.matmul %509, %25, %cst_119 {dimension_numbers = #tpu.dot_dimension_numbers<[1], [0], [0], [1], [0, 0, 1, 1], [], []>} : vector<2x128xf32>, vector<128x512xf32>, vector<2x512xf32> -> vector<2x512xf32>
    %514 = arith.addf %512, %513 : vector<2x512xf32>
    %515 = vector.extract_strided_slice %514 {offsets = [0, 0], sizes = [2, 128], strides = [1, 1]} : vector<2x512xf32> to vector<2x128xf32>
    %516 = arith.negf %515 : vector<2x128xf32>
    %517 = math.exp %516 : vector<2x128xf32>
    %cst_120 = arith.constant 1.000000e+00 : f32
    %518 = vector.broadcast %cst_120 : f32 to vector<2x128xf32>
    %519 = arith.addf %518, %517 : vector<2x128xf32>
    %520 = arith.divf %518, %519 : vector<2x128xf32>
    %521 = vector.extract_strided_slice %514 {offsets = [0, 128], sizes = [2, 128], strides = [1, 1]} : vector<2x512xf32> to vector<2x128xf32>
    %522 = arith.negf %521 : vector<2x128xf32>
    %523 = math.exp %522 : vector<2x128xf32>
    %cst_121 = arith.constant 1.000000e+00 : f32
    %524 = vector.broadcast %cst_121 : f32 to vector<2x128xf32>
    %525 = arith.addf %524, %523 : vector<2x128xf32>
    %526 = arith.divf %524, %525 : vector<2x128xf32>
    %527 = vector.extract_strided_slice %514 {offsets = [0, 256], sizes = [2, 128], strides = [1, 1]} : vector<2x512xf32> to vector<2x128xf32>
    %528 = math.tanh %527 : vector<2x128xf32>
    %529 = vector.extract_strided_slice %514 {offsets = [0, 384], sizes = [2, 128], strides = [1, 1]} : vector<2x512xf32> to vector<2x128xf32>
    %530 = arith.negf %529 : vector<2x128xf32>
    %531 = math.exp %530 : vector<2x128xf32>
    %cst_122 = arith.constant 1.000000e+00 : f32
    %532 = vector.broadcast %cst_122 : f32 to vector<2x128xf32>
    %533 = arith.addf %532, %531 : vector<2x128xf32>
    %534 = arith.divf %532, %533 : vector<2x128xf32>
    %535 = arith.mulf %526, %511 : vector<2x128xf32>
    %536 = arith.mulf %520, %528 : vector<2x128xf32>
    %537 = arith.addf %535, %536 : vector<2x128xf32>
    %538 = math.tanh %537 : vector<2x128xf32>
    %539 = arith.mulf %534, %538 : vector<2x128xf32>
    %540 = vector.extract_strided_slice %507 {offsets = [2, 0], sizes = [2, 512], strides = [1, 1]} : vector<16x512xf32> to vector<2x512xf32>
    %cst_123 = arith.constant dense<0.000000e+00> : vector<2x512xf32>
    %541 = tpu.matmul %539, %25, %cst_123 {dimension_numbers = #tpu.dot_dimension_numbers<[1], [0], [0], [1], [0, 0, 1, 1], [], []>} : vector<2x128xf32>, vector<128x512xf32>, vector<2x512xf32> -> vector<2x512xf32>
    %542 = arith.addf %540, %541 : vector<2x512xf32>
    %543 = vector.extract_strided_slice %542 {offsets = [0, 0], sizes = [2, 128], strides = [1, 1]} : vector<2x512xf32> to vector<2x128xf32>
    %544 = arith.negf %543 : vector<2x128xf32>
    %545 = math.exp %544 : vector<2x128xf32>
    %cst_124 = arith.constant 1.000000e+00 : f32
    %546 = vector.broadcast %cst_124 : f32 to vector<2x128xf32>
    %547 = arith.addf %546, %545 : vector<2x128xf32>
    %548 = arith.divf %546, %547 : vector<2x128xf32>
    %549 = vector.extract_strided_slice %542 {offsets = [0, 128], sizes = [2, 128], strides = [1, 1]} : vector<2x512xf32> to vector<2x128xf32>
    %550 = arith.negf %549 : vector<2x128xf32>
    %551 = math.exp %550 : vector<2x128xf32>
    %cst_125 = arith.constant 1.000000e+00 : f32
    %552 = vector.broadcast %cst_125 : f32 to vector<2x128xf32>
    %553 = arith.addf %552, %551 : vector<2x128xf32>
    %554 = arith.divf %552, %553 : vector<2x128xf32>
    %555 = vector.extract_strided_slice %542 {offsets = [0, 256], sizes = [2, 128], strides = [1, 1]} : vector<2x512xf32> to vector<2x128xf32>
    %556 = math.tanh %555 : vector<2x128xf32>
    %557 = vector.extract_strided_slice %542 {offsets = [0, 384], sizes = [2, 128], strides = [1, 1]} : vector<2x512xf32> to vector<2x128xf32>
    %558 = arith.negf %557 : vector<2x128xf32>
    %559 = math.exp %558 : vector<2x128xf32>
    %cst_126 = arith.constant 1.000000e+00 : f32
    %560 = vector.broadcast %cst_126 : f32 to vector<2x128xf32>
    %561 = arith.addf %560, %559 : vector<2x128xf32>
    %562 = arith.divf %560, %561 : vector<2x128xf32>
    %563 = arith.mulf %554, %537 : vector<2x128xf32>
    %564 = arith.mulf %548, %556 : vector<2x128xf32>
    %565 = arith.addf %563, %564 : vector<2x128xf32>
    %566 = math.tanh %565 : vector<2x128xf32>
    %567 = arith.mulf %562, %566 : vector<2x128xf32>
    %568 = vector.extract_strided_slice %507 {offsets = [4, 0], sizes = [2, 512], strides = [1, 1]} : vector<16x512xf32> to vector<2x512xf32>
    %cst_127 = arith.constant dense<0.000000e+00> : vector<2x512xf32>
    %569 = tpu.matmul %567, %25, %cst_127 {dimension_numbers = #tpu.dot_dimension_numbers<[1], [0], [0], [1], [0, 0, 1, 1], [], []>} : vector<2x128xf32>, vector<128x512xf32>, vector<2x512xf32> -> vector<2x512xf32>
    %570 = arith.addf %568, %569 : vector<2x512xf32>
    %571 = vector.extract_strided_slice %570 {offsets = [0, 0], sizes = [2, 128], strides = [1, 1]} : vector<2x512xf32> to vector<2x128xf32>
    %572 = arith.negf %571 : vector<2x128xf32>
    %573 = math.exp %572 : vector<2x128xf32>
    %cst_128 = arith.constant 1.000000e+00 : f32
    %574 = vector.broadcast %cst_128 : f32 to vector<2x128xf32>
    %575 = arith.addf %574, %573 : vector<2x128xf32>
    %576 = arith.divf %574, %575 : vector<2x128xf32>
    %577 = vector.extract_strided_slice %570 {offsets = [0, 128], sizes = [2, 128], strides = [1, 1]} : vector<2x512xf32> to vector<2x128xf32>
    %578 = arith.negf %577 : vector<2x128xf32>
    %579 = math.exp %578 : vector<2x128xf32>
    %cst_129 = arith.constant 1.000000e+00 : f32
    %580 = vector.broadcast %cst_129 : f32 to vector<2x128xf32>
    %581 = arith.addf %580, %579 : vector<2x128xf32>
    %582 = arith.divf %580, %581 : vector<2x128xf32>
    %583 = vector.extract_strided_slice %570 {offsets = [0, 256], sizes = [2, 128], strides = [1, 1]} : vector<2x512xf32> to vector<2x128xf32>
    %584 = math.tanh %583 : vector<2x128xf32>
    %585 = vector.extract_strided_slice %570 {offsets = [0, 384], sizes = [2, 128], strides = [1, 1]} : vector<2x512xf32> to vector<2x128xf32>
    %586 = arith.negf %585 : vector<2x128xf32>
    %587 = math.exp %586 : vector<2x128xf32>
    %cst_130 = arith.constant 1.000000e+00 : f32
    %588 = vector.broadcast %cst_130 : f32 to vector<2x128xf32>
    %589 = arith.addf %588, %587 : vector<2x128xf32>
    %590 = arith.divf %588, %589 : vector<2x128xf32>
    %591 = arith.mulf %582, %565 : vector<2x128xf32>
    %592 = arith.mulf %576, %584 : vector<2x128xf32>
    %593 = arith.addf %591, %592 : vector<2x128xf32>
    %594 = math.tanh %593 : vector<2x128xf32>
    %595 = arith.mulf %590, %594 : vector<2x128xf32>
    %596 = vector.extract_strided_slice %507 {offsets = [6, 0], sizes = [2, 512], strides = [1, 1]} : vector<16x512xf32> to vector<2x512xf32>
    %cst_131 = arith.constant dense<0.000000e+00> : vector<2x512xf32>
    %597 = tpu.matmul %595, %25, %cst_131 {dimension_numbers = #tpu.dot_dimension_numbers<[1], [0], [0], [1], [0, 0, 1, 1], [], []>} : vector<2x128xf32>, vector<128x512xf32>, vector<2x512xf32> -> vector<2x512xf32>
    %598 = arith.addf %596, %597 : vector<2x512xf32>
    %599 = vector.extract_strided_slice %598 {offsets = [0, 0], sizes = [2, 128], strides = [1, 1]} : vector<2x512xf32> to vector<2x128xf32>
    %600 = arith.negf %599 : vector<2x128xf32>
    %601 = math.exp %600 : vector<2x128xf32>
    %cst_132 = arith.constant 1.000000e+00 : f32
    %602 = vector.broadcast %cst_132 : f32 to vector<2x128xf32>
    %603 = arith.addf %602, %601 : vector<2x128xf32>
    %604 = arith.divf %602, %603 : vector<2x128xf32>
    %605 = vector.extract_strided_slice %598 {offsets = [0, 128], sizes = [2, 128], strides = [1, 1]} : vector<2x512xf32> to vector<2x128xf32>
    %606 = arith.negf %605 : vector<2x128xf32>
    %607 = math.exp %606 : vector<2x128xf32>
    %cst_133 = arith.constant 1.000000e+00 : f32
    %608 = vector.broadcast %cst_133 : f32 to vector<2x128xf32>
    %609 = arith.addf %608, %607 : vector<2x128xf32>
    %610 = arith.divf %608, %609 : vector<2x128xf32>
    %611 = vector.extract_strided_slice %598 {offsets = [0, 256], sizes = [2, 128], strides = [1, 1]} : vector<2x512xf32> to vector<2x128xf32>
    %612 = math.tanh %611 : vector<2x128xf32>
    %613 = vector.extract_strided_slice %598 {offsets = [0, 384], sizes = [2, 128], strides = [1, 1]} : vector<2x512xf32> to vector<2x128xf32>
    %614 = arith.negf %613 : vector<2x128xf32>
    %615 = math.exp %614 : vector<2x128xf32>
    %cst_134 = arith.constant 1.000000e+00 : f32
    %616 = vector.broadcast %cst_134 : f32 to vector<2x128xf32>
    %617 = arith.addf %616, %615 : vector<2x128xf32>
    %618 = arith.divf %616, %617 : vector<2x128xf32>
    %619 = arith.mulf %610, %593 : vector<2x128xf32>
    %620 = arith.mulf %604, %612 : vector<2x128xf32>
    %621 = arith.addf %619, %620 : vector<2x128xf32>
    %622 = math.tanh %621 : vector<2x128xf32>
    %623 = arith.mulf %618, %622 : vector<2x128xf32>
    %624 = vector.extract_strided_slice %507 {offsets = [8, 0], sizes = [2, 512], strides = [1, 1]} : vector<16x512xf32> to vector<2x512xf32>
    %cst_135 = arith.constant dense<0.000000e+00> : vector<2x512xf32>
    %625 = tpu.matmul %623, %25, %cst_135 {dimension_numbers = #tpu.dot_dimension_numbers<[1], [0], [0], [1], [0, 0, 1, 1], [], []>} : vector<2x128xf32>, vector<128x512xf32>, vector<2x512xf32> -> vector<2x512xf32>
    %626 = arith.addf %624, %625 : vector<2x512xf32>
    %627 = vector.extract_strided_slice %626 {offsets = [0, 0], sizes = [2, 128], strides = [1, 1]} : vector<2x512xf32> to vector<2x128xf32>
    %628 = arith.negf %627 : vector<2x128xf32>
    %629 = math.exp %628 : vector<2x128xf32>
    %cst_136 = arith.constant 1.000000e+00 : f32
    %630 = vector.broadcast %cst_136 : f32 to vector<2x128xf32>
    %631 = arith.addf %630, %629 : vector<2x128xf32>
    %632 = arith.divf %630, %631 : vector<2x128xf32>
    %633 = vector.extract_strided_slice %626 {offsets = [0, 128], sizes = [2, 128], strides = [1, 1]} : vector<2x512xf32> to vector<2x128xf32>
    %634 = arith.negf %633 : vector<2x128xf32>
    %635 = math.exp %634 : vector<2x128xf32>
    %cst_137 = arith.constant 1.000000e+00 : f32
    %636 = vector.broadcast %cst_137 : f32 to vector<2x128xf32>
    %637 = arith.addf %636, %635 : vector<2x128xf32>
    %638 = arith.divf %636, %637 : vector<2x128xf32>
    %639 = vector.extract_strided_slice %626 {offsets = [0, 256], sizes = [2, 128], strides = [1, 1]} : vector<2x512xf32> to vector<2x128xf32>
    %640 = math.tanh %639 : vector<2x128xf32>
    %641 = vector.extract_strided_slice %626 {offsets = [0, 384], sizes = [2, 128], strides = [1, 1]} : vector<2x512xf32> to vector<2x128xf32>
    %642 = arith.negf %641 : vector<2x128xf32>
    %643 = math.exp %642 : vector<2x128xf32>
    %cst_138 = arith.constant 1.000000e+00 : f32
    %644 = vector.broadcast %cst_138 : f32 to vector<2x128xf32>
    %645 = arith.addf %644, %643 : vector<2x128xf32>
    %646 = arith.divf %644, %645 : vector<2x128xf32>
    %647 = arith.mulf %638, %621 : vector<2x128xf32>
    %648 = arith.mulf %632, %640 : vector<2x128xf32>
    %649 = arith.addf %647, %648 : vector<2x128xf32>
    %650 = math.tanh %649 : vector<2x128xf32>
    %651 = arith.mulf %646, %650 : vector<2x128xf32>
    %652 = vector.extract_strided_slice %507 {offsets = [10, 0], sizes = [2, 512], strides = [1, 1]} : vector<16x512xf32> to vector<2x512xf32>
    %cst_139 = arith.constant dense<0.000000e+00> : vector<2x512xf32>
    %653 = tpu.matmul %651, %25, %cst_139 {dimension_numbers = #tpu.dot_dimension_numbers<[1], [0], [0], [1], [0, 0, 1, 1], [], []>} : vector<2x128xf32>, vector<128x512xf32>, vector<2x512xf32> -> vector<2x512xf32>
    %654 = arith.addf %652, %653 : vector<2x512xf32>
    %655 = vector.extract_strided_slice %654 {offsets = [0, 0], sizes = [2, 128], strides = [1, 1]} : vector<2x512xf32> to vector<2x128xf32>
    %656 = arith.negf %655 : vector<2x128xf32>
    %657 = math.exp %656 : vector<2x128xf32>
    %cst_140 = arith.constant 1.000000e+00 : f32
    %658 = vector.broadcast %cst_140 : f32 to vector<2x128xf32>
    %659 = arith.addf %658, %657 : vector<2x128xf32>
    %660 = arith.divf %658, %659 : vector<2x128xf32>
    %661 = vector.extract_strided_slice %654 {offsets = [0, 128], sizes = [2, 128], strides = [1, 1]} : vector<2x512xf32> to vector<2x128xf32>
    %662 = arith.negf %661 : vector<2x128xf32>
    %663 = math.exp %662 : vector<2x128xf32>
    %cst_141 = arith.constant 1.000000e+00 : f32
    %664 = vector.broadcast %cst_141 : f32 to vector<2x128xf32>
    %665 = arith.addf %664, %663 : vector<2x128xf32>
    %666 = arith.divf %664, %665 : vector<2x128xf32>
    %667 = vector.extract_strided_slice %654 {offsets = [0, 256], sizes = [2, 128], strides = [1, 1]} : vector<2x512xf32> to vector<2x128xf32>
    %668 = math.tanh %667 : vector<2x128xf32>
    %669 = vector.extract_strided_slice %654 {offsets = [0, 384], sizes = [2, 128], strides = [1, 1]} : vector<2x512xf32> to vector<2x128xf32>
    %670 = arith.negf %669 : vector<2x128xf32>
    %671 = math.exp %670 : vector<2x128xf32>
    %cst_142 = arith.constant 1.000000e+00 : f32
    %672 = vector.broadcast %cst_142 : f32 to vector<2x128xf32>
    %673 = arith.addf %672, %671 : vector<2x128xf32>
    %674 = arith.divf %672, %673 : vector<2x128xf32>
    %675 = arith.mulf %666, %649 : vector<2x128xf32>
    %676 = arith.mulf %660, %668 : vector<2x128xf32>
    %677 = arith.addf %675, %676 : vector<2x128xf32>
    %678 = math.tanh %677 : vector<2x128xf32>
    %679 = arith.mulf %674, %678 : vector<2x128xf32>
    %680 = vector.extract_strided_slice %507 {offsets = [12, 0], sizes = [2, 512], strides = [1, 1]} : vector<16x512xf32> to vector<2x512xf32>
    %cst_143 = arith.constant dense<0.000000e+00> : vector<2x512xf32>
    %681 = tpu.matmul %679, %25, %cst_143 {dimension_numbers = #tpu.dot_dimension_numbers<[1], [0], [0], [1], [0, 0, 1, 1], [], []>} : vector<2x128xf32>, vector<128x512xf32>, vector<2x512xf32> -> vector<2x512xf32>
    %682 = arith.addf %680, %681 : vector<2x512xf32>
    %683 = vector.extract_strided_slice %682 {offsets = [0, 0], sizes = [2, 128], strides = [1, 1]} : vector<2x512xf32> to vector<2x128xf32>
    %684 = arith.negf %683 : vector<2x128xf32>
    %685 = math.exp %684 : vector<2x128xf32>
    %cst_144 = arith.constant 1.000000e+00 : f32
    %686 = vector.broadcast %cst_144 : f32 to vector<2x128xf32>
    %687 = arith.addf %686, %685 : vector<2x128xf32>
    %688 = arith.divf %686, %687 : vector<2x128xf32>
    %689 = vector.extract_strided_slice %682 {offsets = [0, 128], sizes = [2, 128], strides = [1, 1]} : vector<2x512xf32> to vector<2x128xf32>
    %690 = arith.negf %689 : vector<2x128xf32>
    %691 = math.exp %690 : vector<2x128xf32>
    %cst_145 = arith.constant 1.000000e+00 : f32
    %692 = vector.broadcast %cst_145 : f32 to vector<2x128xf32>
    %693 = arith.addf %692, %691 : vector<2x128xf32>
    %694 = arith.divf %692, %693 : vector<2x128xf32>
    %695 = vector.extract_strided_slice %682 {offsets = [0, 256], sizes = [2, 128], strides = [1, 1]} : vector<2x512xf32> to vector<2x128xf32>
    %696 = math.tanh %695 : vector<2x128xf32>
    %697 = vector.extract_strided_slice %682 {offsets = [0, 384], sizes = [2, 128], strides = [1, 1]} : vector<2x512xf32> to vector<2x128xf32>
    %698 = arith.negf %697 : vector<2x128xf32>
    %699 = math.exp %698 : vector<2x128xf32>
    %cst_146 = arith.constant 1.000000e+00 : f32
    %700 = vector.broadcast %cst_146 : f32 to vector<2x128xf32>
    %701 = arith.addf %700, %699 : vector<2x128xf32>
    %702 = arith.divf %700, %701 : vector<2x128xf32>
    %703 = arith.mulf %694, %677 : vector<2x128xf32>
    %704 = arith.mulf %688, %696 : vector<2x128xf32>
    %705 = arith.addf %703, %704 : vector<2x128xf32>
    %706 = math.tanh %705 : vector<2x128xf32>
    %707 = arith.mulf %702, %706 : vector<2x128xf32>
    %708 = vector.extract_strided_slice %507 {offsets = [14, 0], sizes = [2, 512], strides = [1, 1]} : vector<16x512xf32> to vector<2x512xf32>
    %cst_147 = arith.constant dense<0.000000e+00> : vector<2x512xf32>
    %709 = tpu.matmul %707, %25, %cst_147 {dimension_numbers = #tpu.dot_dimension_numbers<[1], [0], [0], [1], [0, 0, 1, 1], [], []>} : vector<2x128xf32>, vector<128x512xf32>, vector<2x512xf32> -> vector<2x512xf32>
    %710 = arith.addf %708, %709 : vector<2x512xf32>
    %711 = vector.extract_strided_slice %710 {offsets = [0, 0], sizes = [2, 128], strides = [1, 1]} : vector<2x512xf32> to vector<2x128xf32>
    %712 = arith.negf %711 : vector<2x128xf32>
    %713 = math.exp %712 : vector<2x128xf32>
    %cst_148 = arith.constant 1.000000e+00 : f32
    %714 = vector.broadcast %cst_148 : f32 to vector<2x128xf32>
    %715 = arith.addf %714, %713 : vector<2x128xf32>
    %716 = arith.divf %714, %715 : vector<2x128xf32>
    %717 = vector.extract_strided_slice %710 {offsets = [0, 128], sizes = [2, 128], strides = [1, 1]} : vector<2x512xf32> to vector<2x128xf32>
    %718 = arith.negf %717 : vector<2x128xf32>
    %719 = math.exp %718 : vector<2x128xf32>
    %cst_149 = arith.constant 1.000000e+00 : f32
    %720 = vector.broadcast %cst_149 : f32 to vector<2x128xf32>
    %721 = arith.addf %720, %719 : vector<2x128xf32>
    %722 = arith.divf %720, %721 : vector<2x128xf32>
    %723 = vector.extract_strided_slice %710 {offsets = [0, 256], sizes = [2, 128], strides = [1, 1]} : vector<2x512xf32> to vector<2x128xf32>
    %724 = math.tanh %723 : vector<2x128xf32>
    %725 = vector.extract_strided_slice %710 {offsets = [0, 384], sizes = [2, 128], strides = [1, 1]} : vector<2x512xf32> to vector<2x128xf32>
    %726 = arith.negf %725 : vector<2x128xf32>
    %727 = math.exp %726 : vector<2x128xf32>
    %cst_150 = arith.constant 1.000000e+00 : f32
    %728 = vector.broadcast %cst_150 : f32 to vector<2x128xf32>
    %729 = arith.addf %728, %727 : vector<2x128xf32>
    %730 = arith.divf %728, %729 : vector<2x128xf32>
    %731 = arith.mulf %722, %705 : vector<2x128xf32>
    %732 = arith.mulf %716, %724 : vector<2x128xf32>
    %733 = arith.addf %731, %732 : vector<2x128xf32>
    %734 = math.tanh %733 : vector<2x128xf32>
    %735 = arith.mulf %730, %734 : vector<2x128xf32>
    %c2_151 = arith.constant 2 : index
    %c0_152 = arith.constant 0 : index
    %c0_153 = arith.constant 0 : index
    %736 = vector.load %arg17[%c2_151, %c0_152, %c0_153] : memref<3x2x128xf32, #tpu.memory_space<vmem>>, vector<1x2x128xf32>
    %737 = vector.shape_cast %736 : vector<1x2x128xf32> to vector<2x128xf32>
    %738 = vector.shape_cast %735 : vector<2x128xf32> to vector<1x2x128xf32>
    tpu.vector_store %arg17[%c2_151, %c0_152, %c0_153], %738 {strides = array<i32>} : memref<3x2x128xf32, #tpu.memory_space<vmem>>, vector<1x2x128xf32>,
    %c2_154 = arith.constant 2 : index
    %c0_155 = arith.constant 0 : index
    %c0_156 = arith.constant 0 : index
    %739 = vector.load %arg18[%c2_154, %c0_155, %c0_156] : memref<3x2x128xf32, #tpu.memory_space<vmem>>, vector<1x2x128xf32>
    %740 = vector.shape_cast %739 : vector<1x2x128xf32> to vector<2x128xf32>
    %741 = vector.shape_cast %733 : vector<2x128xf32> to vector<1x2x128xf32>
    tpu.vector_store %arg18[%c2_154, %c0_155, %c0_156], %741 {strides = array<i32>} : memref<3x2x128xf32, #tpu.memory_space<vmem>>, vector<1x2x128xf32>,
    %742 = tpu.concatenate %539, %567, %595, %623, %651, %679, %707, %735 in 0 : vector<2x128xf32>, vector<2x128xf32>, vector<2x128xf32>, vector<2x128xf32>, vector<2x128xf32>, vector<2x128xf32>, vector<2x128xf32>, vector<2x128xf32> -> vector<16x128xf32>
    %c0_157 = arith.constant 0 : index
    %c0_158 = arith.constant 0 : index
    %743 = vector.load %arg12[%c0_157, %c0_158] : memref<128x256xf32, #tpu.memory_space<vmem>>, vector<128x256xf32>
    %cst_159 = arith.constant dense<0.000000e+00> : vector<16x256xf32>
    %744 = tpu.matmul %742, %743, %cst_159 {dimension_numbers = #tpu.dot_dimension_numbers<[1], [0], [0], [1], [0, 0, 1, 1], [], []>} : vector<16x128xf32>, vector<128x256xf32>, vector<16x256xf32> -> vector<16x256xf32>
    %c0_160 = arith.constant 0 : index
    %c0_161 = arith.constant 0 : index
    %745 = vector.load %arg13[%c0_160, %c0_161] : memref<1x256xf32, #tpu.memory_space<vmem>>, vector<1x256xf32>
    %746 = vector.broadcast %745 : vector<1x256xf32> to vector<16x256xf32>
    %747 = arith.addf %744, %746 : vector<16x256xf32>
    %cst_162 = arith.constant dense<0.000000e+00> : vector<256xf32>
    %748 = vector.multi_reduction <add>, %747, %cst_162 [0] : vector<16x256xf32> to vector<256xf32>
    %749 = vector.shape_cast %748 : vector<256xf32> to vector<1x256xf32>
    %cst_163 = arith.constant 1.600000e+01 : f32
    %750 = vector.broadcast %cst_163 : f32 to vector<1x256xf32>
    %751 = arith.divf %749, %750 : vector<1x256xf32>
    %752 = vector.broadcast %751 : vector<1x256xf32> to vector<16x256xf32>
    %753 = arith.subf %747, %752 : vector<16x256xf32>
    %754 = arith.mulf %753, %753 : vector<16x256xf32>
    %cst_164 = arith.constant dense<0.000000e+00> : vector<256xf32>
    %755 = vector.multi_reduction <add>, %754, %cst_164 [0] : vector<16x256xf32> to vector<256xf32>
    %756 = vector.shape_cast %755 : vector<256xf32> to vector<1x256xf32>
    %cst_165 = arith.constant 1.600000e+01 : f32
    %757 = vector.broadcast %cst_165 : f32 to vector<1x256xf32>
    %758 = arith.divf %756, %757 : vector<1x256xf32>
    %759 = vector.broadcast %751 : vector<1x256xf32> to vector<16x256xf32>
    %760 = arith.subf %747, %759 : vector<16x256xf32>
    %cst_166 = arith.constant 9.99999974E-6 : f32
    %761 = vector.broadcast %cst_166 : f32 to vector<1x256xf32>
    %762 = arith.addf %758, %761 : vector<1x256xf32>
    %763 = math.rsqrt %762 : vector<1x256xf32>
    %764 = vector.broadcast %763 : vector<1x256xf32> to vector<16x256xf32>
    %765 = arith.mulf %760, %764 : vector<16x256xf32>
    %cst_167 = arith.constant 0.000000e+00 : f32
    %766 = vector.broadcast %cst_167 : f32 to vector<16x256xf32>
    %767 = arith.maximumf %765, %766 : vector<16x256xf32>
    %c0_168 = arith.constant 0 : index
    %c0_169 = arith.constant 0 : index
    %768 = vector.load %arg14[%c0_168, %c0_169] : memref<256x128xf32, #tpu.memory_space<vmem>>, vector<256x128xf32>
    %cst_170 = arith.constant dense<0.000000e+00> : vector<16x128xf32>
    %769 = tpu.matmul %767, %768, %cst_170 {dimension_numbers = #tpu.dot_dimension_numbers<[1], [0], [0], [1], [0, 0, 1, 1], [], []>} : vector<16x256xf32>, vector<256x128xf32>, vector<16x128xf32> -> vector<16x128xf32>
    %c0_171 = arith.constant 0 : index
    %c0_172 = arith.constant 0 : index
    %770 = vector.load %arg15[%c0_171, %c0_172] : memref<1x128xf32, #tpu.memory_space<vmem>>, vector<1x128xf32>
    %771 = vector.broadcast %770 : vector<1x128xf32> to vector<16x128xf32>
    %772 = arith.addf %769, %771 : vector<16x128xf32>
    %c0_173 = arith.constant 0 : index
    %c0_174 = arith.constant 0 : index
    %773 = vector.load %arg16[%c0_173, %c0_174] : memref<16x128xf32, #tpu.memory_space<vmem>>, vector<16x128xf32>
    tpu.vector_store %arg16[%c0_173, %c0_174], %772 {strides = array<i32>} : memref<16x128xf32, #tpu.memory_space<vmem>>, vector<16x128xf32>,
    return
  }
}

</mosaic_0001>

<llo_original>
// kernel: rl_model_forward.1
$region0: #{rl_model_forward.1}
  #allocation0 [shape = 'u32[]', space=smem, size = 0x4, offset = 0x4, fixed_abs, tag = 'smem constant byte address 0x4 - core index']
  #allocation1 [shape = 'u32[144,128]{1,0:T(1,128)}', space=vmem, size = 0x12000, scoped, tag = 'internal scratch']
  %s0 = inlined_call_operand.vmem [shape: f32[8,2,9], index: 0, kind: input, shape index: {}]
  %s1 = inlined_call_operand.vmem [shape: f32[3,2,128], index: 1, kind: input, shape index: {}]
  %s2 = inlined_call_operand.vmem [shape: f32[3,2,128], index: 2, kind: input, shape index: {}]
  %s3 = inlined_call_operand.vmem [shape: f32[9,512], index: 3, kind: input, shape index: {}]
  %s4 = inlined_call_operand.hbm [shape: f32[128,512], index: 4, kind: input, shape index: {}]
  %s5 = inlined_call_operand.vmem [shape: f32[1,512], index: 5, kind: input, shape index: {}]
  %s6 = inlined_call_operand.hbm [shape: f32[128,512], index: 6, kind: input, shape index: {}]
  %s7 = inlined_call_operand.hbm [shape: f32[128,512], index: 7, kind: input, shape index: {}]
  %s8 = inlined_call_operand.vmem [shape: f32[1,512], index: 8, kind: input, shape index: {}]
  %s9 = inlined_call_operand.hbm [shape: f32[128,512], index: 9, kind: input, shape index: {}]
  %s10 = inlined_call_operand.hbm [shape: f32[128,512], index: 10, kind: input, shape index: {}]
  %s11 = inlined_call_operand.vmem [shape: f32[1,512], index: 11, kind: input, shape index: {}]
  %s12 = inlined_call_operand.hbm [shape: f32[128,256], index: 12, kind: input, shape index: {}]
  %s13 = inlined_call_operand.vmem [shape: f32[1,256], index: 13, kind: input, shape index: {}]
  %s14 = inlined_call_operand.hbm [shape: f32[256,128], index: 14, kind: input, shape index: {}]
  %s15 = inlined_call_operand.vmem [shape: f32[1,128], index: 15, kind: input, shape index: {}]
  %s16 = inlined_call_operand.vmem [shape: f32[16,128], index: 16, kind: output, shape index: {0}]
  %s17 = inlined_call_operand.vmem [shape: f32[3,2,128], index: 17, kind: output, shape index: {1}]
  %s18 = inlined_call_operand.vmem [shape: f32[3,2,128], index: 18, kind: output, shape index: {2}]
  %19 = xla_tuple %s16, %s17, %s18
  %s20 = sld [smem:[#allocation0]]
  $region118: #{rl_model_forward.1} parent=0
    _
  %s22 = ssub.s32 1, %s20
  %s23 = scalar_select 0, %s22, %s20
  $region1: #{rl_model_forward.1} parent=0
    #allocation2 [shape = 'u8[262144]{0}', space=vmem, size = 0x40000, scoped, tag = 'input window, operand 4, single buffered']
    #allocation3 [shape = 's32[1]{0}', space=sflag, size = 0x4, scoped, tag = 'scoped memory for rl_model_forward.1']
    #allocation4 [shape = 'u8[262144]{0}', space=vmem, size = 0x40000, scoped, tag = 'input window, operand 6, single buffered']
    #allocation5 [shape = 's32[1]{0}', space=sflag, size = 0x4, scoped, tag = 'scoped memory for rl_model_forward.1']
    #allocation6 [shape = 'u8[262144]{0}', space=vmem, size = 0x40000, scoped, tag = 'input window, operand 7, single buffered']
    #allocation7 [shape = 'u8[262144]{0}', space=vmem, size = 0x40000, scoped, tag = 'input window, operand 9, single buffered']
    #allocation8 [shape = 's32[1]{0}', space=sflag, size = 0x4, scoped, tag = 'scoped memory for rl_model_forward.1']
    #allocation9 [shape = 'u8[262144]{0}', space=vmem, size = 0x40000, scoped, tag = 'input window, operand 10, single buffered']
    #allocation10 [shape = 'u8[131072]{0}', space=vmem, size = 0x20000, scoped, tag = 'input window, operand 12, single buffered']
    #allocation11 [shape = 's32[1]{0}', space=sflag, size = 0x4, scoped, tag = 'scoped memory for rl_model_forward.1']
    #allocation12 [shape = 'u8[131072]{0}', space=vmem, size = 0x20000, scoped, tag = 'input window, operand 14, single buffered']
    %24 = vsyncpa [#allocation3], 0
    %25 = vsyncpa [#allocation5], 0
    %26 = vsyncpa [#allocation8], 0
    %27 = vsyncpa [#allocation11], 0
    // Predicated region
    $region2: #{rl_model_forward.1} parent=1 // pred_check
      _
    $region3: #{rl_model_forward.1} parent=1 // pred_check_branch
      %29 = sbr.rel (0) target = $region5
    $region4: #{rl_model_forward.1} parent=1 // pred_region
      _
    $region5: #{rl_model_forward.1} parent=1 // pred_fallthru
      _
    // Predicated region
    $region6: #{rl_model_forward.1} parent=1 // pred_check
      _
    $region7: #{rl_model_forward.1} parent=1 // pred_check_branch
      %31 = sbr.rel (0) target = $region9
    $region8: #{rl_model_forward.1} parent=1 // pred_region
      _
    $region9: #{rl_model_forward.1} parent=1 // pred_fallthru
      _
    // Predicated region
    $region10: #{rl_model_forward.1} parent=1 // pred_check
      _
    $region11: #{rl_model_forward.1} parent=1 // pred_check_branch
      %33 = sbr.rel (0) target = $region13
    $region12: #{rl_model_forward.1} parent=1 // pred_region
      _
    $region13: #{rl_model_forward.1} parent=1 // pred_fallthru
      _
    // Predicated region
    $region14: #{rl_model_forward.1} parent=1 // pred_check
      _
    $region15: #{rl_model_forward.1} parent=1 // pred_check_branch
      %35 = sbr.rel (0) target = $region17
    $region16: #{rl_model_forward.1} parent=1 // pred_region
      _
    $region17: #{rl_model_forward.1} parent=1 // pred_fallthru
      _
    // Predicated region
    $region18: #{rl_model_forward.1} parent=1 // pred_check
      _
    $region19: #{rl_model_forward.1} parent=1 // pred_check_branch
      %37 = sbr.rel (0) target = $region21
    $region20: #{rl_model_forward.1} parent=1 // pred_region
      %s39 = ssub.s32 8192, 8192
      %40 = vsyncadd [#allocation3], %s39
      %s41 = sshll.u32 [#allocation2], 4
      %s42 = int_to_ptr.vmem [resolvable:$true] %s41
      %47 = dma.hbm_to_vmem [thread:$0]  %s4, 8192, %s42, [#allocation3], 512, 512, 32
    $region21: #{rl_model_forward.1} parent=1 // pred_fallthru
      _
    // Predicated region
    $region22: #{rl_model_forward.1} parent=1 // pred_check
      _
    $region23: #{rl_model_forward.1} parent=1 // pred_check_branch
      %49 = sbr.rel (0) target = $region25
    $region24: #{rl_model_forward.1} parent=1 // pred_region
      _
    $region25: #{rl_model_forward.1} parent=1 // pred_fallthru
      _
    // Predicated region
    $region26: #{rl_model_forward.1} parent=1 // pred_check
      _
    $region27: #{rl_model_forward.1} parent=1 // pred_check_branch
      %51 = sbr.rel (0) target = $region29
    $region28: #{rl_model_forward.1} parent=1 // pred_region
      %s53 = ssub.s32 8192, 8192
      %54 = vsyncadd [#allocation5], %s53
      %s55 = sshll.u32 [#allocation4], 4
      %s56 = int_to_ptr.vmem [resolvable:$true] %s55
      %61 = dma.hbm_to_vmem [thread:$0]  %s6, 8192, %s56, [#allocation5], 512, 512, 32
    $region29: #{rl_model_forward.1} parent=1 // pred_fallthru
      _
    // Predicated region
    $region30: #{rl_model_forward.1} parent=1 // pred_check
      _
    $region31: #{rl_model_forward.1} parent=1 // pred_check_branch
      %63 = sbr.rel (0) target = $region33
    $region32: #{rl_model_forward.1} parent=1 // pred_region
      %s65 = ssub.s32 8192, 8192
      %66 = vsyncadd [#allocation5], %s65
      %s67 = sshll.u32 [#allocation6], 4
      %s68 = int_to_ptr.vmem [resolvable:$true] %s67
      %73 = dma.hbm_to_vmem [thread:$0]  %s7, 8192, %s68, [#allocation5], 512, 512, 32
    $region33: #{rl_model_forward.1} parent=1 // pred_fallthru
      _
    // Predicated region
    $region34: #{rl_model_forward.1} parent=1 // pred_check
      _
    $region35: #{rl_model_forward.1} parent=1 // pred_check_branch
      %75 = sbr.rel (0) target = $region37
    $region36: #{rl_model_forward.1} parent=1 // pred_region
      _
    $region37: #{rl_model_forward.1} parent=1 // pred_fallthru
      _
    // Predicated region
    $region38: #{rl_model_forward.1} parent=1 // pred_check
      _
    $region39: #{rl_model_forward.1} parent=1 // pred_check_branch
      %77 = sbr.rel (0) target = $region41
    $region40: #{rl_model_forward.1} parent=1 // pred_region
      %s79 = ssub.s32 8192, 8192
      %80 = vsyncadd [#allocation8], %s79
      %s81 = sshll.u32 [#allocation7], 4
      %s82 = int_to_ptr.vmem [resolvable:$true] %s81
      %87 = dma.hbm_to_vmem [thread:$0]  %s9, 8192, %s82, [#allocation8], 512, 512, 32
    $region41: #{rl_model_forward.1} parent=1 // pred_fallthru
      _
    // Predicated region
    $region42: #{rl_model_forward.1} parent=1 // pred_check
      _
    $region43: #{rl_model_forward.1} parent=1 // pred_check_branch
      %89 = sbr.rel (0) target = $region45
    $region44: #{rl_model_forward.1} parent=1 // pred_region
      %s91 = ssub.s32 8192, 8192
      %92 = vsyncadd [#allocation8], %s91
      %s93 = sshll.u32 [#allocation9], 4
      %s94 = int_to_ptr.vmem [resolvable:$true] %s93
      %99 = dma.hbm_to_vmem [thread:$0]  %s10, 8192, %s94, [#allocation8], 512, 512, 32
    $region45: #{rl_model_forward.1} parent=1 // pred_fallthru
      _
    // Predicated region
    $region46: #{rl_model_forward.1} parent=1 // pred_check
      _
    $region47: #{rl_model_forward.1} parent=1 // pred_check_branch
      %101 = sbr.rel (0) target = $region49
    $region48: #{rl_model_forward.1} parent=1 // pred_region
      _
    $region49: #{rl_model_forward.1} parent=1 // pred_fallthru
      _
    // Predicated region
    $region50: #{rl_model_forward.1} parent=1 // pred_check
      _
    $region51: #{rl_model_forward.1} parent=1 // pred_check_branch
      %103 = sbr.rel (0) target = $region53
    $region52: #{rl_model_forward.1} parent=1 // pred_region
      %s105 = ssub.s32 4096, 4096
      %106 = vsyncadd [#allocation11], %s105
      %s107 = sshll.u32 [#allocation10], 4
      %s108 = int_to_ptr.vmem [resolvable:$true] %s107
      %113 = dma.hbm_to_vmem [thread:$0]  %s12, 4096, %s108, [#allocation11], 256, 256, 16
    $region53: #{rl_model_forward.1} parent=1 // pred_fallthru
      _
    // Predicated region
    $region54: #{rl_model_forward.1} parent=1 // pred_check
      _
    $region55: #{rl_model_forward.1} parent=1 // pred_check_branch
      %115 = sbr.rel (0) target = $region57
    $region56: #{rl_model_forward.1} parent=1 // pred_region
      _
    $region57: #{rl_model_forward.1} parent=1 // pred_fallthru
      _
    // Predicated region
    $region58: #{rl_model_forward.1} parent=1 // pred_check
      _
    $region59: #{rl_model_forward.1} parent=1 // pred_check_branch
      %117 = sbr.rel (0) target = $region61
    $region60: #{rl_model_forward.1} parent=1 // pred_region
      %s119 = ssub.s32 4096, 4096
      %120 = vsyncadd [#allocation11], %s119
      %s121 = sshll.u32 [#allocation12], 4
      %s122 = int_to_ptr.vmem [resolvable:$true] %s121
      %127 = dma.hbm_to_vmem [thread:$0]  %s14, 4096, %s122, [#allocation11], 128, 128, 8
    $region61: #{rl_model_forward.1} parent=1 // pred_fallthru
      _
    // Predicated region
    $region62: #{rl_model_forward.1} parent=1 // pred_check
      _
    $region63: #{rl_model_forward.1} parent=1 // pred_check_branch
      %129 = sbr.rel (0) target = $region65
    $region64: #{rl_model_forward.1} parent=1 // pred_region
      _
    $region65: #{rl_model_forward.1} parent=1 // pred_fallthru
      _
    // Predicated region
    $region66: #{rl_model_forward.1} parent=1 // pred_check
      _
    $region67: #{rl_model_forward.1} parent=1 // pred_check_branch
      %131 = sbr.rel (0) target = $region69
    $region68: #{rl_model_forward.1} parent=1 // pred_region
      %132 = dma.done [#allocation3], 8192
    $region69: #{rl_model_forward.1} parent=1 // pred_fallthru
      _
    // Predicated region
    $region70: #{rl_model_forward.1} parent=1 // pred_check
      _
    $region71: #{rl_model_forward.1} parent=1 // pred_check_branch
      %134 = sbr.rel (0) target = $region73
    $region72: #{rl_model_forward.1} parent=1 // pred_region
      %135 = dma.done [#allocation5], 8192
    $region73: #{rl_model_forward.1} parent=1 // pred_fallthru
      _
    // Predicated region
    $region74: #{rl_model_forward.1} parent=1 // pred_check
      _
    $region75: #{rl_model_forward.1} parent=1 // pred_check_branch
      %137 = sbr.rel (0) target = $region77
    $region76: #{rl_model_forward.1} parent=1 // pred_region
      %138 = dma.done [#allocation5], 8192
    $region77: #{rl_model_forward.1} parent=1 // pred_fallthru
      _
    // Predicated region
    $region78: #{rl_model_forward.1} parent=1 // pred_check
      _
    $region79: #{rl_model_forward.1} parent=1 // pred_check_branch
      %140 = sbr.rel (0) target = $region81
    $region80: #{rl_model_forward.1} parent=1 // pred_region
      %141 = dma.done [#allocation8], 8192
    $region81: #{rl_model_forward.1} parent=1 // pred_fallthru
      _
    // Predicated region
    $region82: #{rl_model_forward.1} parent=1 // pred_check
      _
    $region83: #{rl_model_forward.1} parent=1 // pred_check_branch
      %143 = sbr.rel (0) target = $region85
    $region84: #{rl_model_forward.1} parent=1 // pred_region
      %144 = dma.done [#allocation8], 8192
    $region85: #{rl_model_forward.1} parent=1 // pred_fallthru
      _
    // Predicated region
    $region86: #{rl_model_forward.1} parent=1 // pred_check
      _
    $region87: #{rl_model_forward.1} parent=1 // pred_check_branch
      %146 = sbr.rel (0) target = $region89
    $region88: #{rl_model_forward.1} parent=1 // pred_region
      %147 = dma.done [#allocation11], 4096
    $region89: #{rl_model_forward.1} parent=1 // pred_fallthru
      _
    // Predicated region
    $region90: #{rl_model_forward.1} parent=1 // pred_check
      _
    $region91: #{rl_model_forward.1} parent=1 // pred_check_branch
      %149 = sbr.rel (0) target = $region93
    $region92: #{rl_model_forward.1} parent=1 // pred_region
      %150 = dma.done [#allocation11], 4096
    $region93: #{rl_model_forward.1} parent=1 // pred_fallthru
      _
    %v151 = vld [vmem:[%s0] sm:$0x3]
    %v152 = vld [vmem:[%s0 + $0x2] sm:$0x3]
    %v153 = vld [vmem:[%s0 + $0x4] sm:$0x3]
    %v154 = vld [vmem:[%s0 + $0x6] sm:$0x3]
    %v155 = vld [vmem:[%s0 + $0x8] sm:$0x3]
    %v156 = vld [vmem:[%s0 + $0xa] sm:$0x3]
    %v157 = vld [vmem:[%s0 + $0xc] sm:$0x3]
    %v158 = vld [vmem:[%s0 + $0xe] sm:$0x3]
    %v167 = vcombine.low %v151, %v152
    %v168 = vcombine.low %v153, %v154
    %v170 = vunpack.c.l.s4 1983009808
    %v171 = vunpack.c.0.s8 %v170
    %v172 = vlaneseq
    %v173 = vshrl.u32 %v172, 7
    %v174 = vsub.s32 %v171, %v173
    %v175 = vrot.slane %v167, %v174
    %v177 = vunpack.c.l.s4 1983009808
    %v178 = vunpack.c.0.s8 %v177
    %v179 = vlaneseq
    %v180 = vshrl.u32 %v179, 7
    %v181 = vsub.s32 %v178, %v180
    %v182 = vrot.slane %v168, %v181
    %v183 = vcombine.low %v175, %v182
    %v184 = vcombine.low %v155, %v156
    %v185 = vcombine.low %v157, %v158
    %v187 = vunpack.c.l.s4 1983009808
    %v188 = vunpack.c.0.s8 %v187
    %v189 = vlaneseq
    %v190 = vshrl.u32 %v189, 7
    %v191 = vsub.s32 %v188, %v190
    %v192 = vrot.slane %v184, %v191
    %v194 = vunpack.c.l.s4 1983009808
    %v195 = vunpack.c.0.s8 %v194
    %v196 = vlaneseq
    %v197 = vshrl.u32 %v196, 7
    %v198 = vsub.s32 %v195, %v197
    %v199 = vrot.slane %v185, %v198
    %v200 = vcombine.low %v192, %v199
    %vm203 = vcmask 72704
    %v204 = vsel %vm203, %v183, 0.0
    %v205 = vsel %vm203, %v200, 0.0
    %v206 = vadd.f32 %v204, %v205
    %v207 = vrot.slane %v206, 4
    %v208 = vadd.f32 %v206, %v207
    %v209 = vrot.slane %v208, 2
    %v210 = vadd.f32 %v208, %v209
    %v211 = vrot.slane %v210, 1
    %v212 = vadd.f32 %v210, %v211
    %v213 = vrcp.pop 16.0
    %v214 = vmul.f32 %v212, %v213
    %v216 = vcombine.high %v214, %v214
    %v218 = vunpack.c.l.s4 1983009808
    %v219 = vunpack.c.0.s8 %v218
    %v220 = vlaneseq
    %v221 = vshrl.u32 %v220, 7
    %v222 = vsub.s32 %v219, %v221
    %v223 = vrot.slane %v214, %v222
    %v225 = vunpack.c.l.s4 1983009808
    %v226 = vunpack.c.0.s8 %v225
    %v227 = vlaneseq
    %v228 = vshrl.u32 %v227, 7
    %v229 = vsub.s32 %v226, %v228
    %v230 = vrot.slane %v216, %v229
    %v231 = vcombine.high %v223, %v223
    %v232 = vcombine.high %v230, %v230
    %v237 = vsub.f32 %v151, %v223
    %v238 = vsub.f32 %v152, %v231
    %v239 = vsub.f32 %v153, %v230
    %v240 = vsub.f32 %v154, %v232
    %v241 = vsub.f32 %v155, %v223
    %v242 = vsub.f32 %v156, %v231
    %v243 = vsub.f32 %v157, %v230
    %v244 = vsub.f32 %v158, %v232
    %v245 = vmul.f32 %v237, %v237
    %v246 = vmul.f32 %v238, %v238
    %v247 = vmul.f32 %v239, %v239
    %v248 = vmul.f32 %v240, %v240
    %v249 = vmul.f32 %v241, %v241
    %v250 = vmul.f32 %v242, %v242
    %v251 = vmul.f32 %v243, %v243
    %v252 = vmul.f32 %v244, %v244
    %v261 = vcombine.low %v245, %v246
    %v262 = vcombine.low %v247, %v248
    %v264 = vunpack.c.l.s4 1983009808
    %v265 = vunpack.c.0.s8 %v264
    %v266 = vlaneseq
    %v267 = vshrl.u32 %v266, 7
    %v268 = vsub.s32 %v265, %v267
    %v269 = vrot.slane %v261, %v268
    %v271 = vunpack.c.l.s4 1983009808
    %v272 = vunpack.c.0.s8 %v271
    %v273 = vlaneseq
    %v274 = vshrl.u32 %v273, 7
    %v275 = vsub.s32 %v272, %v274
    %v276 = vrot.slane %v262, %v275
    %v277 = vcombine.low %v269, %v276
    %v278 = vcombine.low %v249, %v250
    %v279 = vcombine.low %v251, %v252
    %v281 = vunpack.c.l.s4 1983009808
    %v282 = vunpack.c.0.s8 %v281
    %v283 = vlaneseq
    %v284 = vshrl.u32 %v283, 7
    %v285 = vsub.s32 %v282, %v284
    %v286 = vrot.slane %v278, %v285
    %v288 = vunpack.c.l.s4 1983009808
    %v289 = vunpack.c.0.s8 %v288
    %v290 = vlaneseq
    %v291 = vshrl.u32 %v290, 7
    %v292 = vsub.s32 %v289, %v291
    %v293 = vrot.slane %v279, %v292
    %v294 = vcombine.low %v286, %v293
    %v297 = vsel %vm203, %v277, 0.0
    %v298 = vsel %vm203, %v294, 0.0
    %v299 = vadd.f32 %v297, %v298
    %v300 = vrot.slane %v299, 4
    %v301 = vadd.f32 %v299, %v300
    %v302 = vrot.slane %v301, 2
    %v303 = vadd.f32 %v301, %v302
    %v304 = vrot.slane %v303, 1
    %v305 = vadd.f32 %v303, %v304
    %v306 = vmul.f32 %v305, %v213
    %v307 = vadd.f32 %v306, 1e-05
    %v308 = vrsqrt.pop %v307
    %v310 = vcombine.high %v308, %v308
    %v312 = vunpack.c.l.s4 1983009808
    %v313 = vunpack.c.0.s8 %v312
    %v314 = vlaneseq
    %v315 = vshrl.u32 %v314, 7
    %v316 = vsub.s32 %v313, %v315
    %v317 = vrot.slane %v308, %v316
    %v319 = vunpack.c.l.s4 1983009808
    %v320 = vunpack.c.0.s8 %v319
    %v321 = vlaneseq
    %v322 = vshrl.u32 %v321, 7
    %v323 = vsub.s32 %v320, %v322
    %v324 = vrot.slane %v310, %v323
    %v325 = vcombine.high %v317, %v317
    %v326 = vcombine.high %v324, %v324
    %v331 = vmul.f32 %v237, %v317
    %v332 = vmul.f32 %v238, %v325
    %v333 = vmul.f32 %v239, %v324
    %v334 = vmul.f32 %v240, %v326
    %v335 = vmul.f32 %v241, %v317
    %v336 = vmul.f32 %v242, %v325
    %v337 = vmul.f32 %v243, %v324
    %v338 = vmul.f32 %v244, %v326
    %v339 = vld [vmem:[%s3] sm:$0xff]
    %v340 = vld [vmem:[%s3 + $0x8] sm:$0xff]
    %v341 = vld [vmem:[%s3 + $0x10] sm:$0xff]
    %v342 = vld [vmem:[%s3 + $0x18] sm:$0xff]
    %v343 = vld [vmem:[%s3 + $0x20] sm:$0x1]
    %v344 = vld [vmem:[%s3 + $0x28] sm:$0x1]
    %v345 = vld [vmem:[%s3 + $0x30] sm:$0x1]
    %v346 = vld [vmem:[%s3 + $0x38] sm:$0x1]
    %v347 = vld [vmem:[#allocation4] sm:$0xff]
    %v348 = vld [vmem:[#allocation4 + $0x8] sm:$0xff]
    %v349 = vld [vmem:[#allocation4 + $0x10] sm:$0xff]
    %v350 = vld [vmem:[#allocation4 + $0x18] sm:$0xff]
    %v351 = vld [vmem:[#allocation4 + $0x20] sm:$0xff]
    %v352 = vld [vmem:[#allocation4 + $0x28] sm:$0xff]
    %v353 = vld [vmem:[#allocation4 + $0x30] sm:$0xff]
    %v354 = vld [vmem:[#allocation4 + $0x38] sm:$0xff]
    %v355 = vld [vmem:[#allocation4 + $0x40] sm:$0xff]
    %v356 = vld [vmem:[#allocation4 + $0x48] sm:$0xff]
    %v357 = vld [vmem:[#allocation4 + $0x50] sm:$0xff]
    %v358 = vld [vmem:[#allocation4 + $0x58] sm:$0xff]
    %v359 = vld [vmem:[#allocation4 + $0x60] sm:$0xff]
    %v360 = vld [vmem:[#allocation4 + $0x68] sm:$0xff]
    %v361 = vld [vmem:[#allocation4 + $0x70] sm:$0xff]
    %v362 = vld [vmem:[#allocation4 + $0x78] sm:$0xff]
    %v363 = vld [vmem:[#allocation4 + $0x80] sm:$0xff]
    %v364 = vld [vmem:[#allocation4 + $0x88] sm:$0xff]
    %v365 = vld [vmem:[#allocation4 + $0x90] sm:$0xff]
    %v366 = vld [vmem:[#allocation4 + $0x98] sm:$0xff]
    %v367 = vld [vmem:[#allocation4 + $0xa0] sm:$0xff]
    %v368 = vld [vmem:[#allocation4 + $0xa8] sm:$0xff]
    %v369 = vld [vmem:[#allocation4 + $0xb0] sm:$0xff]
    %v370 = vld [vmem:[#allocation4 + $0xb8] sm:$0xff]
    %v371 = vld [vmem:[#allocation4 + $0xc0] sm:$0xff]
    %v372 = vld [vmem:[#allocation4 + $0xc8] sm:$0xff]
    %v373 = vld [vmem:[#allocation4 + $0xd0] sm:$0xff]
    %v374 = vld [vmem:[#allocation4 + $0xd8] sm:$0xff]
    %v375 = vld [vmem:[#allocation4 + $0xe0] sm:$0xff]
    %v376 = vld [vmem:[#allocation4 + $0xe8] sm:$0xff]
    %v377 = vld [vmem:[#allocation4 + $0xf0] sm:$0xff]
    %v378 = vld [vmem:[#allocation4 + $0xf8] sm:$0xff]
    %v379 = vld [vmem:[#allocation4 + $0x100] sm:$0xff]
    %v380 = vld [vmem:[#allocation4 + $0x108] sm:$0xff]
    %v381 = vld [vmem:[#allocation4 + $0x110] sm:$0xff]
    %v382 = vld [vmem:[#allocation4 + $0x118] sm:$0xff]
    %v383 = vld [vmem:[#allocation4 + $0x120] sm:$0xff]
    %v384 = vld [vmem:[#allocation4 + $0x128] sm:$0xff]
    %v385 = vld [vmem:[#allocation4 + $0x130] sm:$0xff]
    %v386 = vld [vmem:[#allocation4 + $0x138] sm:$0xff]
    %v387 = vld [vmem:[#allocation4 + $0x140] sm:$0xff]
    %v388 = vld [vmem:[#allocation4 + $0x148] sm:$0xff]
    %v389 = vld [vmem:[#allocation4 + $0x150] sm:$0xff]
    %v390 = vld [vmem:[#allocation4 + $0x158] sm:$0xff]
    %v391 = vld [vmem:[#allocation4 + $0x160] sm:$0xff]
    %v392 = vld [vmem:[#allocation4 + $0x168] sm:$0xff]
    %v393 = vld [vmem:[#allocation4 + $0x170] sm:$0xff]
    %v394 = vld [vmem:[#allocation4 + $0x178] sm:$0xff]
    %v395 = vld [vmem:[#allocation4 + $0x180] sm:$0xff]
    %v396 = vld [vmem:[#allocation4 + $0x188] sm:$0xff]
    %v397 = vld [vmem:[#allocation4 + $0x190] sm:$0xff]
    %v398 = vld [vmem:[#allocation4 + $0x198] sm:$0xff]
    %v399 = vld [vmem:[#allocation4 + $0x1a0] sm:$0xff]
    %v400 = vld [vmem:[#allocation4 + $0x1a8] sm:$0xff]
    %v401 = vld [vmem:[#allocation4 + $0x1b0] sm:$0xff]
    %v402 = vld [vmem:[#allocation4 + $0x1b8] sm:$0xff]
    %v403 = vld [vmem:[#allocation4 + $0x1c0] sm:$0xff]
    %v404 = vld [vmem:[#allocation4 + $0x1c8] sm:$0xff]
    %v405 = vld [vmem:[#allocation4 + $0x1d0] sm:$0xff]
    %v406 = vld [vmem:[#allocation4 + $0x1d8] sm:$0xff]
    %v407 = vld [vmem:[#allocation4 + $0x1e0] sm:$0xff]
    %v408 = vld [vmem:[#allocation4 + $0x1e8] sm:$0xff]
    %v409 = vld [vmem:[#allocation4 + $0x1f0] sm:$0xff]
    %v410 = vld [vmem:[#allocation4 + $0x1f8] sm:$0xff]
    %v411 = vld [vmem:[#allocation7] sm:$0xff]
    %v412 = vld [vmem:[#allocation7 + $0x8] sm:$0xff]
    %v413 = vld [vmem:[#allocation7 + $0x10] sm:$0xff]
    %v414 = vld [vmem:[#allocation7 + $0x18] sm:$0xff]
    %v415 = vld [vmem:[#allocation7 + $0x20] sm:$0xff]
    %v416 = vld [vmem:[#allocation7 + $0x28] sm:$0xff]
    %v417 = vld [vmem:[#allocation7 + $0x30] sm:$0xff]
    %v418 = vld [vmem:[#allocation7 + $0x38] sm:$0xff]
    %v419 = vld [vmem:[#allocation7 + $0x40] sm:$0xff]
    %v420 = vld [vmem:[#allocation7 + $0x48] sm:$0xff]
    %v421 = vld [vmem:[#allocation7 + $0x50] sm:$0xff]
    %v422 = vld [vmem:[#allocation7 + $0x58] sm:$0xff]
    %v423 = vld [vmem:[#allocation7 + $0x60] sm:$0xff]
    %v424 = vld [vmem:[#allocation7 + $0x68] sm:$0xff]
    %v425 = vld [vmem:[#allocation7 + $0x70] sm:$0xff]
    %v426 = vld [vmem:[#allocation7 + $0x78] sm:$0xff]
    %v427 = vld [vmem:[#allocation7 + $0x80] sm:$0xff]
    %v428 = vld [vmem:[#allocation7 + $0x88] sm:$0xff]
    %v429 = vld [vmem:[#allocation7 + $0x90] sm:$0xff]
    %v430 = vld [vmem:[#allocation7 + $0x98] sm:$0xff]
    %v431 = vld [vmem:[#allocation7 + $0xa0] sm:$0xff]
    %v432 = vld [vmem:[#allocation7 + $0xa8] sm:$0xff]
    %v433 = vld [vmem:[#allocation7 + $0xb0] sm:$0xff]
    %v434 = vld [vmem:[#allocation7 + $0xb8] sm:$0xff]
    %v435 = vld [vmem:[#allocation7 + $0xc0] sm:$0xff]
    %v436 = vld [vmem:[#allocation7 + $0xc8] sm:$0xff]
    %v437 = vld [vmem:[#allocation7 + $0xd0] sm:$0xff]
    %v438 = vld [vmem:[#allocation7 + $0xd8] sm:$0xff]
    %v439 = vld [vmem:[#allocation7 + $0xe0] sm:$0xff]
    %v440 = vld [vmem:[#allocation7 + $0xe8] sm:$0xff]
    %v441 = vld [vmem:[#allocation7 + $0xf0] sm:$0xff]
    %v442 = vld [vmem:[#allocation7 + $0xf8] sm:$0xff]
    %v443 = vld [vmem:[#allocation7 + $0x100] sm:$0xff]
    %v444 = vld [vmem:[#allocation7 + $0x108] sm:$0xff]
    %v445 = vld [vmem:[#allocation7 + $0x110] sm:$0xff]
    %v446 = vld [vmem:[#allocation7 + $0x118] sm:$0xff]
    %v447 = vld [vmem:[#allocation7 + $0x120] sm:$0xff]
    %v448 = vld [vmem:[#allocation7 + $0x128] sm:$0xff]
    %v449 = vld [vmem:[#allocation7 + $0x130] sm:$0xff]
    %v450 = vld [vmem:[#allocation7 + $0x138] sm:$0xff]
    %v451 = vld [vmem:[#allocation7 + $0x140] sm:$0xff]
    %v452 = vld [vmem:[#allocation7 + $0x148] sm:$0xff]
    %v453 = vld [vmem:[#allocation7 + $0x150] sm:$0xff]
    %v454 = vld [vmem:[#allocation7 + $0x158] sm:$0xff]
    %v455 = vld [vmem:[#allocation7 + $0x160] sm:$0xff]
    %v456 = vld [vmem:[#allocation7 + $0x168] sm:$0xff]
    %v457 = vld [vmem:[#allocation7 + $0x170] sm:$0xff]
    %v458 = vld [vmem:[#allocation7 + $0x178] sm:$0xff]
    %v459 = vld [vmem:[#allocation7 + $0x180] sm:$0xff]
    %v460 = vld [vmem:[#allocation7 + $0x188] sm:$0xff]
    %v461 = vld [vmem:[#allocation7 + $0x190] sm:$0xff]
    %v462 = vld [vmem:[#allocation7 + $0x198] sm:$0xff]
    %v463 = vld [vmem:[#allocation7 + $0x1a0] sm:$0xff]
    %v464 = vld [vmem:[#allocation7 + $0x1a8] sm:$0xff]
    %v465 = vld [vmem:[#allocation7 + $0x1b0] sm:$0xff]
    %v466 = vld [vmem:[#allocation7 + $0x1b8] sm:$0xff]
    %v467 = vld [vmem:[#allocation7 + $0x1c0] sm:$0xff]
    %v468 = vld [vmem:[#allocation7 + $0x1c8] sm:$0xff]
    %v469 = vld [vmem:[#allocation7 + $0x1d0] sm:$0xff]
    %v470 = vld [vmem:[#allocation7 + $0x1d8] sm:$0xff]
    %v471 = vld [vmem:[#allocation7 + $0x1e0] sm:$0xff]
    %v472 = vld [vmem:[#allocation7 + $0x1e8] sm:$0xff]
    %v473 = vld [vmem:[#allocation7 + $0x1f0] sm:$0xff]
    %v474 = vld [vmem:[#allocation7 + $0x1f8] sm:$0xff]
    %v475 = vld [vmem:[#allocation2] sm:$0xff]
    %v476 = vld [vmem:[#allocation2 + $0x8] sm:$0xff]
    %v477 = vld [vmem:[#allocation2 + $0x10] sm:$0xff]
    %v478 = vld [vmem:[#allocation2 + $0x18] sm:$0xff]
    %v479 = vld [vmem:[#allocation2 + $0x20] sm:$0xff]
    %v480 = vld [vmem:[#allocation2 + $0x28] sm:$0xff]
    %v481 = vld [vmem:[#allocation2 + $0x30] sm:$0xff]
    %v482 = vld [vmem:[#allocation2 + $0x38] sm:$0xff]
    %v483 = vld [vmem:[#allocation2 + $0x40] sm:$0xff]
    %v484 = vld [vmem:[#allocation2 + $0x48] sm:$0xff]
    %v485 = vld [vmem:[#allocation2 + $0x50] sm:$0xff]
    %v486 = vld [vmem:[#allocation2 + $0x58] sm:$0xff]
    %v487 = vld [vmem:[#allocation2 + $0x60] sm:$0xff]
    %v488 = vld [vmem:[#allocation2 + $0x68] sm:$0xff]
    %v489 = vld [vmem:[#allocation2 + $0x70] sm:$0xff]
    %v490 = vld [vmem:[#allocation2 + $0x78] sm:$0xff]
    %v491 = vld [vmem:[#allocation2 + $0x80] sm:$0xff]
    %v492 = vld [vmem:[#allocation2 + $0x88] sm:$0xff]
    %v493 = vld [vmem:[#allocation2 + $0x90] sm:$0xff]
    %v494 = vld [vmem:[#allocation2 + $0x98] sm:$0xff]
    %v495 = vld [vmem:[#allocation2 + $0xa0] sm:$0xff]
    %v496 = vld [vmem:[#allocation2 + $0xa8] sm:$0xff]
    %v497 = vld [vmem:[#allocation2 + $0xb0] sm:$0xff]
    %v498 = vld [vmem:[#allocation2 + $0xb8] sm:$0xff]
    %v499 = vld [vmem:[#allocation2 + $0xc0] sm:$0xff]
    %v500 = vld [vmem:[#allocation2 + $0xc8] sm:$0xff]
    %v501 = vld [vmem:[#allocation2 + $0xd0] sm:$0xff]
    %v502 = vld [vmem:[#allocation2 + $0xd8] sm:$0xff]
    %v503 = vld [vmem:[#allocation2 + $0xe0] sm:$0xff]
    %v504 = vld [vmem:[#allocation2 + $0xe8] sm:$0xff]
    %v505 = vld [vmem:[#allocation2 + $0xf0] sm:$0xff]
    %v506 = vld [vmem:[#allocation2 + $0xf8] sm:$0xff]
    %v507 = vld [vmem:[#allocation2 + $0x100] sm:$0xff]
    %v508 = vld [vmem:[#allocation2 + $0x108] sm:$0xff]
    %v509 = vld [vmem:[#allocation2 + $0x110] sm:$0xff]
    %v510 = vld [vmem:[#allocation2 + $0x118] sm:$0xff]
    %v511 = vld [vmem:[#allocation2 + $0x120] sm:$0xff]
    %v512 = vld [vmem:[#allocation2 + $0x128] sm:$0xff]
    %v513 = vld [vmem:[#allocation2 + $0x130] sm:$0xff]
    %v514 = vld [vmem:[#allocation2 + $0x138] sm:$0xff]
    %v515 = vld [vmem:[#allocation2 + $0x140] sm:$0xff]
    %v516 = vld [vmem:[#allocation2 + $0x148] sm:$0xff]
    %v517 = vld [vmem:[#allocation2 + $0x150] sm:$0xff]
    %v518 = vld [vmem:[#allocation2 + $0x158] sm:$0xff]
    %v519 = vld [vmem:[#allocation2 + $0x160] sm:$0xff]
    %v520 = vld [vmem:[#allocation2 + $0x168] sm:$0xff]
    %v521 = vld [vmem:[#allocation2 + $0x170] sm:$0xff]
    %v522 = vld [vmem:[#allocation2 + $0x178] sm:$0xff]
    %v523 = vld [vmem:[#allocation2 + $0x180] sm:$0xff]
    %v524 = vld [vmem:[#allocation2 + $0x188] sm:$0xff]
    %v525 = vld [vmem:[#allocation2 + $0x190] sm:$0xff]
    %v526 = vld [vmem:[#allocation2 + $0x198] sm:$0xff]
    %v527 = vld [vmem:[#allocation2 + $0x1a0] sm:$0xff]
    %v528 = vld [vmem:[#allocation2 + $0x1a8] sm:$0xff]
    %v529 = vld [vmem:[#allocation2 + $0x1b0] sm:$0xff]
    %v530 = vld [vmem:[#allocation2 + $0x1b8] sm:$0xff]
    %v531 = vld [vmem:[#allocation2 + $0x1c0] sm:$0xff]
    %v532 = vld [vmem:[#allocation2 + $0x1c8] sm:$0xff]
    %v533 = vld [vmem:[#allocation2 + $0x1d0] sm:$0xff]
    %v534 = vld [vmem:[#allocation2 + $0x1d8] sm:$0xff]
    %v535 = vld [vmem:[#allocation2 + $0x1e0] sm:$0xff]
    %v536 = vld [vmem:[#allocation2 + $0x1e8] sm:$0xff]
    %v537 = vld [vmem:[#allocation2 + $0x1f0] sm:$0xff]
    %v538 = vld [vmem:[#allocation2 + $0x1f8] sm:$0xff]
    %v539 = vld [vmem:[#allocation6] sm:$0xff]
    %v540 = vld [vmem:[#allocation6 + $0x8] sm:$0xff]
    %v541 = vld [vmem:[#allocation6 + $0x10] sm:$0xff]
    %v542 = vld [vmem:[#allocation6 + $0x18] sm:$0xff]
    %v543 = vld [vmem:[#allocation6 + $0x20] sm:$0xff]
    %v544 = vld [vmem:[#allocation6 + $0x28] sm:$0xff]
    %v545 = vld [vmem:[#allocation6 + $0x30] sm:$0xff]
    %v546 = vld [vmem:[#allocation6 + $0x38] sm:$0xff]
    %v547 = vld [vmem:[#allocation6 + $0x40] sm:$0xff]
    %v548 = vld [vmem:[#allocation6 + $0x48] sm:$0xff]
    %v549 = vld [vmem:[#allocation6 + $0x50] sm:$0xff]
    %v550 = vld [vmem:[#allocation6 + $0x58] sm:$0xff]
    %v551 = vld [vmem:[#allocation6 + $0x60] sm:$0xff]
    %v552 = vld [vmem:[#allocation6 + $0x68] sm:$0xff]
    %v553 = vld [vmem:[#allocation6 + $0x70] sm:$0xff]
    %v554 = vld [vmem:[#allocation6 + $0x78] sm:$0xff]
    %v555 = vld [vmem:[#allocation6 + $0x80] sm:$0xff]
    %v556 = vld [vmem:[#allocation6 + $0x88] sm:$0xff]
    %v557 = vld [vmem:[#allocation6 + $0x90] sm:$0xff]
    %v558 = vld [vmem:[#allocation6 + $0x98] sm:$0xff]
    %v559 = vld [vmem:[#allocation6 + $0xa0] sm:$0xff]
    %v560 = vld [vmem:[#allocation6 + $0xa8] sm:$0xff]
    %v561 = vld [vmem:[#allocation6 + $0xb0] sm:$0xff]
    %v562 = vld [vmem:[#allocation6 + $0xb8] sm:$0xff]
    %v563 = vld [vmem:[#allocation6 + $0xc0] sm:$0xff]
    %v564 = vld [vmem:[#allocation6 + $0xc8] sm:$0xff]
    %v565 = vld [vmem:[#allocation6 + $0xd0] sm:$0xff]
    %v566 = vld [vmem:[#allocation6 + $0xd8] sm:$0xff]
    %v567 = vld [vmem:[#allocation6 + $0xe0] sm:$0xff]
    %v568 = vld [vmem:[#allocation6 + $0xe8] sm:$0xff]
    %v569 = vld [vmem:[#allocation6 + $0xf0] sm:$0xff]
    %v570 = vld [vmem:[#allocation6 + $0xf8] sm:$0xff]
    %v571 = vld [vmem:[#allocation6 + $0x100] sm:$0xff]
    %v572 = vld [vmem:[#allocation6 + $0x108] sm:$0xff]
    %v573 = vld [vmem:[#allocation6 + $0x110] sm:$0xff]
    %v574 = vld [vmem:[#allocation6 + $0x118] sm:$0xff]
    %v575 = vld [vmem:[#allocation6 + $0x120] sm:$0xff]
    %v576 = vld [vmem:[#allocation6 + $0x128] sm:$0xff]
    %v577 = vld [vmem:[#allocation6 + $0x130] sm:$0xff]
    %v578 = vld [vmem:[#allocation6 + $0x138] sm:$0xff]
    %v579 = vld [vmem:[#allocation6 + $0x140] sm:$0xff]
    %v580 = vld [vmem:[#allocation6 + $0x148] sm:$0xff]
    %v581 = vld [vmem:[#allocation6 + $0x150] sm:$0xff]
    %v582 = vld [vmem:[#allocation6 + $0x158] sm:$0xff]
    %v583 = vld [vmem:[#allocation6 + $0x160] sm:$0xff]
    %v584 = vld [vmem:[#allocation6 + $0x168] sm:$0xff]
    %v585 = vld [vmem:[#allocation6 + $0x170] sm:$0xff]
    %v586 = vld [vmem:[#allocation6 + $0x178] sm:$0xff]
    %v587 = vld [vmem:[#allocation6 + $0x180] sm:$0xff]
    %v588 = vld [vmem:[#allocation6 + $0x188] sm:$0xff]
    %v589 = vld [vmem:[#allocation6 + $0x190] sm:$0xff]
    %v590 = vld [vmem:[#allocation6 + $0x198] sm:$0xff]
    %v591 = vld [vmem:[#allocation6 + $0x1a0] sm:$0xff]
    %v592 = vld [vmem:[#allocation6 + $0x1a8] sm:$0xff]
    %v593 = vld [vmem:[#allocation6 + $0x1b0] sm:$0xff]
    %v594 = vld [vmem:[#allocation6 + $0x1b8] sm:$0xff]
    %v595 = vld [vmem:[#allocation6 + $0x1c0] sm:$0xff]
    %v596 = vld [vmem:[#allocation6 + $0x1c8] sm:$0xff]
    %v597 = vld [vmem:[#allocation6 + $0x1d0] sm:$0xff]
    %v598 = vld [vmem:[#allocation6 + $0x1d8] sm:$0xff]
    %v599 = vld [vmem:[#allocation6 + $0x1e0] sm:$0xff]
    %v600 = vld [vmem:[#allocation6 + $0x1e8] sm:$0xff]
    %v601 = vld [vmem:[#allocation6 + $0x1f0] sm:$0xff]
    %v602 = vld [vmem:[#allocation6 + $0x1f8] sm:$0xff]
    %v603 = vld [vmem:[#allocation9] sm:$0xff]
    %v604 = vld [vmem:[#allocation9 + $0x8] sm:$0xff]
    %v605 = vld [vmem:[#allocation9 + $0x10] sm:$0xff]
    %v606 = vld [vmem:[#allocation9 + $0x18] sm:$0xff]
    %v607 = vld [vmem:[#allocation9 + $0x20] sm:$0xff]
    %v608 = vld [vmem:[#allocation9 + $0x28] sm:$0xff]
    %v609 = vld [vmem:[#allocation9 + $0x30] sm:$0xff]
    %v610 = vld [vmem:[#allocation9 + $0x38] sm:$0xff]
    %v611 = vld [vmem:[#allocation9 + $0x40] sm:$0xff]
    %v612 = vld [vmem:[#allocation9 + $0x48] sm:$0xff]
    %v613 = vld [vmem:[#allocation9 + $0x50] sm:$0xff]
    %v614 = vld [vmem:[#allocation9 + $0x58] sm:$0xff]
    %v615 = vld [vmem:[#allocation9 + $0x60] sm:$0xff]
    %v616 = vld [vmem:[#allocation9 + $0x68] sm:$0xff]
    %v617 = vld [vmem:[#allocation9 + $0x70] sm:$0xff]
    %v618 = vld [vmem:[#allocation9 + $0x78] sm:$0xff]
    %v619 = vld [vmem:[#allocation9 + $0x80] sm:$0xff]
    %v620 = vld [vmem:[#allocation9 + $0x88] sm:$0xff]
    %v621 = vld [vmem:[#allocation9 + $0x90] sm:$0xff]
    %v622 = vld [vmem:[#allocation9 + $0x98] sm:$0xff]
    %v623 = vld [vmem:[#allocation9 + $0xa0] sm:$0xff]
    %v624 = vld [vmem:[#allocation9 + $0xa8] sm:$0xff]
    %v625 = vld [vmem:[#allocation9 + $0xb0] sm:$0xff]
    %v626 = vld [vmem:[#allocation9 + $0xb8] sm:$0xff]
    %v627 = vld [vmem:[#allocation9 + $0xc0] sm:$0xff]
    %v628 = vld [vmem:[#allocation9 + $0xc8] sm:$0xff]
    %v629 = vld [vmem:[#allocation9 + $0xd0] sm:$0xff]
    %v630 = vld [vmem:[#allocation9 + $0xd8] sm:$0xff]
    %v631 = vld [vmem:[#allocation9 + $0xe0] sm:$0xff]
    %v632 = vld [vmem:[#allocation9 + $0xe8] sm:$0xff]
    %v633 = vld [vmem:[#allocation9 + $0xf0] sm:$0xff]
    %v634 = vld [vmem:[#allocation9 + $0xf8] sm:$0xff]
    %v635 = vld [vmem:[#allocation9 + $0x100] sm:$0xff]
    %v636 = vld [vmem:[#allocation9 + $0x108] sm:$0xff]
    %v637 = vld [vmem:[#allocation9 + $0x110] sm:$0xff]
    %v638 = vld [vmem:[#allocation9 + $0x118] sm:$0xff]
    %v639 = vld [vmem:[#allocation9 + $0x120] sm:$0xff]
    %v640 = vld [vmem:[#allocation9 + $0x128] sm:$0xff]
    %v641 = vld [vmem:[#allocation9 + $0x130] sm:$0xff]
    %v642 = vld [vmem:[#allocation9 + $0x138] sm:$0xff]
    %v643 = vld [vmem:[#allocation9 + $0x140] sm:$0xff]
    %v644 = vld [vmem:[#allocation9 + $0x148] sm:$0xff]
    %v645 = vld [vmem:[#allocation9 + $0x150] sm:$0xff]
    %v646 = vld [vmem:[#allocation9 + $0x158] sm:$0xff]
    %v647 = vld [vmem:[#allocation9 + $0x160] sm:$0xff]
    %v648 = vld [vmem:[#allocation9 + $0x168] sm:$0xff]
    %v649 = vld [vmem:[#allocation9 + $0x170] sm:$0xff]
    %v650 = vld [vmem:[#allocation9 + $0x178] sm:$0xff]
    %v651 = vld [vmem:[#allocation9 + $0x180] sm:$0xff]
    %v652 = vld [vmem:[#allocation9 + $0x188] sm:$0xff]
    %v653 = vld [vmem:[#allocation9 + $0x190] sm:$0xff]
    %v654 = vld [vmem:[#allocation9 + $0x198] sm:$0xff]
    %v655 = vld [vmem:[#allocation9 + $0x1a0] sm:$0xff]
    %v656 = vld [vmem:[#allocation9 + $0x1a8] sm:$0xff]
    %v657 = vld [vmem:[#allocation9 + $0x1b0] sm:$0xff]
    %v658 = vld [vmem:[#allocation9 + $0x1b8] sm:$0xff]
    %v659 = vld [vmem:[#allocation9 + $0x1c0] sm:$0xff]
    %v660 = vld [vmem:[#allocation9 + $0x1c8] sm:$0xff]
    %v661 = vld [vmem:[#allocation9 + $0x1d0] sm:$0xff]
    %v662 = vld [vmem:[#allocation9 + $0x1d8] sm:$0xff]
    %v663 = vld [vmem:[#allocation9 + $0x1e0] sm:$0xff]
    %v664 = vld [vmem:[#allocation9 + $0x1e8] sm:$0xff]
    %v665 = vld [vmem:[#allocation9 + $0x1f0] sm:$0xff]
    %v666 = vld [vmem:[#allocation9 + $0x1f8] sm:$0xff]
    %v667 = vld [vmem:[%s5] sm:$0xf]
    %v668 = vld [vmem:[%s8] sm:$0xf]
    %v669 = vld [vmem:[%s11] sm:$0xf]
    %v671 = vlaneseq
    %v672 = vshrl.u32 %v671, 7
    %v673 = vsub.s32 0, %v672
    %v674 = vrot.slane %v667, %v673
    %v675 = vlaneseq
    %v676 = vshrl.u32 %v675, 7
    %v677 = vsub.s32 1, %v676
    %v678 = vrot.slane %v667, %v677
    %v679 = vlaneseq
    %v680 = vshrl.u32 %v679, 7
    %v681 = vsub.s32 2, %v680
    %v682 = vrot.slane %v667, %v681
    %v683 = vlaneseq
    %v684 = vshrl.u32 %v683, 7
    %v685 = vsub.s32 3, %v684
    %v686 = vrot.slane %v667, %v685
    %v699 = vcombine.low %v331, %v332
    %v700 = vcombine.low %v333, %v334
    %v702 = vunpack.c.l.s4 1983009808
    %v703 = vunpack.c.0.s8 %v702
    %v704 = vlaneseq
    %v705 = vshrl.u32 %v704, 7
    %v706 = vsub.s32 %v703, %v705
    %v707 = vrot.slane %v699, %v706
    %v709 = vunpack.c.l.s4 1983009808
    %v710 = vunpack.c.0.s8 %v709
    %v711 = vlaneseq
    %v712 = vshrl.u32 %v711, 7
    %v713 = vsub.s32 %v710, %v712
    %v714 = vrot.slane %v700, %v713
    %v715 = vcombine.low %v707, %v714
    %v716 = vcombine.low %v335, %v336
    %v717 = vcombine.low %v337, %v338
    %v719 = vunpack.c.l.s4 1983009808
    %v720 = vunpack.c.0.s8 %v719
    %v721 = vlaneseq
    %v722 = vshrl.u32 %v721, 7
    %v723 = vsub.s32 %v720, %v722
    %v724 = vrot.slane %v716, %v723
    %v726 = vunpack.c.l.s4 1983009808
    %v727 = vunpack.c.0.s8 %v726
    %v728 = vlaneseq
    %v729 = vshrl.u32 %v728, 7
    %v730 = vsub.s32 %v727, %v729
    %v731 = vrot.slane %v717, %v730
    %v732 = vcombine.low %v724, %v731
    %v733 = vsel %vm203, %v715, 0
    %v735 = vsel %vm203, %v732, 0
    %vm737 = vcmask 1040384
    %v739 = vsel %vm737, %v343, 0
    %v742 = vsel %vm737, %v344, 0
    %v745 = vsel %vm737, %v345, 0
    %v748 = vsel %vm737, %v346, 0
    %750 = vmatprep.subr.mxu0 %v340
    %751 = vmatpush1.msra.mxu0 %v339
    %752 = vmatprep.subr.mxu0 %v742
    %753 = vmatpush1.msra.mxu0 %v739
    %754 = vmatprep.subr.mxu0 0.0
    %755 = vmatpush1.msra.mxu0 0.0
    %756 = vmatprep.subr.mxu0 0.0
    %757 = vmatpush1.msra.mxu0 0.0
    %758 = vmatprep.subr.mxu0 0.0
    %759 = vmatpush1.msra.mxu0 0.0
    %760 = vmatprep.subr.mxu0 0.0
    %761 = vmatpush1.msra.mxu0 0.0
    %762 = vmatprep.subr.mxu0 0.0
    %763 = vmatpush1.msra.mxu0 0.0
    %764 = vmatprep.subr.mxu0 0.0
    %765 = vmatpush1.msra.mxu0 0.0
    %766 = vmatprep.subr.mxu0 0.0
    %767 = vmatpush1.msra.mxu0 0.0
    %768 = vmatprep.subr.mxu0 0.0
    %769 = vmatpush1.msra.mxu0 0.0
    %770 = vmatprep.subr.mxu0 0.0
    %771 = vmatpush1.msra.mxu0 0.0
    %772 = vmatprep.subr.mxu0 0.0
    %773 = vmatpush1.msra.mxu0 0.0
    %774 = vmatprep.subr.mxu0 0.0
    %775 = vmatpush1.msra.mxu0 0.0
    %776 = vmatprep.subr.mxu0 0.0
    %777 = vmatpush1.msra.mxu0 0.0
    %778 = vmatprep.subr.mxu0 0.0
    %779 = vmatpush1.msra.mxu0 0.0
    %780 = vmatprep.subr.mxu0 0.0
    %781 = vmatpush1.msra.mxu0 0.0
    %782 = vmatprep.subr.mxu0 0.0
    %783 = vmatpush1.msra.mxu0 0.0
    %784 = vmatprep.subr.mxu0 0.0
    %785 = vmatpush1.msra.mxu0 0.0
    %786 = vmatprep.subr.mxu0 0.0
    %787 = vmatpush1.msra.mxu0 0.0
    %788 = vmatprep.subr.mxu0 0.0
    %789 = vmatpush1.msra.mxu0 0.0
    %790 = vmatprep.subr.mxu0 0.0
    %791 = vmatpush1.msra.mxu0 0.0
    %792 = vmatprep.subr.mxu0 0.0
    %793 = vmatpush1.msra.mxu0 0.0
    %794 = vmatprep.subr.mxu0 0.0
    %795 = vmatpush1.msra.mxu0 0.0
    %796 = vmatprep.subr.mxu0 0.0
    %797 = vmatpush1.msra.mxu0 0.0
    %798 = vmatprep.subr.mxu0 0.0
    %799 = vmatpush1.msra.mxu0 0.0
    %800 = vmatprep.subr.mxu0 0.0
    %801 = vmatpush1.msra.mxu0 0.0
    %802 = vmatprep.subr.mxu0 0.0
    %803 = vmatpush1.msra.mxu0 0.0
    %804 = vmatprep.subr.mxu0 0.0
    %805 = vmatpush1.msra.mxu0 0.0
    %806 = vmatprep.subr.mxu0 0.0
    %807 = vmatpush1.msra.mxu0 0.0
    %808 = vmatprep.subr.mxu0 0.0
    %809 = vmatpush1.msra.mxu0 0.0
    %810 = vmatprep.subr.mxu0 0.0
    %811 = vmatpush1.msra.mxu0 0.0
    %812 = vmatprep.subr.mxu0 0.0
    %813 = vmatpush1.msra.mxu0 0.0
    %814 = vmatprep.mubr.f32.mxu0 0.0
    %815 = vmatmul.mubr.f32.gmra.mrb[0].mxu0 %v733
    %v816 = vpop.f32.mrb[0].mxu0
    %v817 = vadd.f32 %v674, %v816
    %v818 = vpop.f32.mrb[0].mxu0
    %v819 = vadd.f32 %v678, %v818
    %820 = vmatprep.mubr.f32.mxu0 0.0
    %821 = vmatmul.mubr.f32.gmra.mrb[0].mxu0 %v735
    %v822 = vpop.f32.mrb[0].mxu0
    %v823 = vadd.f32 %v674, %v822
    %v824 = vpop.f32.mrb[0].mxu0
    %v825 = vadd.f32 %v678, %v824
    %826 = vdwg.mxu0
    %827 = vmatprep.subr.mxu0 %v342
    %828 = vmatpush1.msra.mxu0 %v341
    %829 = vmatprep.subr.mxu0 %v748
    %830 = vmatpush1.msra.mxu0 %v745
    %831 = vmatprep.subr.mxu0 0.0
    %832 = vmatpush1.msra.mxu0 0.0
    %833 = vmatprep.subr.mxu0 0.0
    %834 = vmatpush1.msra.mxu0 0.0
    %835 = vmatprep.subr.mxu0 0.0
    %836 = vmatpush1.msra.mxu0 0.0
    %837 = vmatprep.subr.mxu0 0.0
    %838 = vmatpush1.msra.mxu0 0.0
    %839 = vmatprep.subr.mxu0 0.0
    %840 = vmatpush1.msra.mxu0 0.0
    %841 = vmatprep.subr.mxu0 0.0
    %842 = vmatpush1.msra.mxu0 0.0
    %843 = vmatprep.subr.mxu0 0.0
    %844 = vmatpush1.msra.mxu0 0.0
    %845 = vmatprep.subr.mxu0 0.0
    %846 = vmatpush1.msra.mxu0 0.0
    %847 = vmatprep.subr.mxu0 0.0
    %848 = vmatpush1.msra.mxu0 0.0
    %849 = vmatprep.subr.mxu0 0.0
    %850 = vmatpush1.msra.mxu0 0.0
    %851 = vmatprep.subr.mxu0 0.0
    %852 = vmatpush1.msra.mxu0 0.0
    %853 = vmatprep.subr.mxu0 0.0
    %854 = vmatpush1.msra.mxu0 0.0
    %855 = vmatprep.subr.mxu0 0.0
    %856 = vmatpush1.msra.mxu0 0.0
    %857 = vmatprep.subr.mxu0 0.0
    %858 = vmatpush1.msra.mxu0 0.0
    %859 = vmatprep.subr.mxu0 0.0
    %860 = vmatpush1.msra.mxu0 0.0
    %861 = vmatprep.subr.mxu0 0.0
    %862 = vmatpush1.msra.mxu0 0.0
    %863 = vmatprep.subr.mxu0 0.0
    %864 = vmatpush1.msra.mxu0 0.0
    %865 = vmatprep.subr.mxu0 0.0
    %866 = vmatpush1.msra.mxu0 0.0
    %867 = vmatprep.subr.mxu0 0.0
    %868 = vmatpush1.msra.mxu0 0.0
    %869 = vmatprep.subr.mxu0 0.0
    %870 = vmatpush1.msra.mxu0 0.0
    %871 = vmatprep.subr.mxu0 0.0
    %872 = vmatpush1.msra.mxu0 0.0
    %873 = vmatprep.subr.mxu0 0.0
    %874 = vmatpush1.msra.mxu0 0.0
    %875 = vmatprep.subr.mxu0 0.0
    %876 = vmatpush1.msra.mxu0 0.0
    %877 = vmatprep.subr.mxu0 0.0
    %878 = vmatpush1.msra.mxu0 0.0
    %879 = vmatprep.subr.mxu0 0.0
    %880 = vmatpush1.msra.mxu0 0.0
    %881 = vmatprep.subr.mxu0 0.0
    %882 = vmatpush1.msra.mxu0 0.0
    %883 = vmatprep.subr.mxu0 0.0
    %884 = vmatpush1.msra.mxu0 0.0
    %885 = vmatprep.subr.mxu0 0.0
    %886 = vmatpush1.msra.mxu0 0.0
    %887 = vmatprep.subr.mxu0 0.0
    %888 = vmatpush1.msra.mxu0 0.0
    %889 = vmatprep.subr.mxu0 0.0
    %890 = vmatpush1.msra.mxu0 0.0
    %891 = vmatprep.mubr.f32.mxu0 0.0
    %892 = vmatmul.mubr.f32.gmra.mrb[0].mxu0 %v733
    %v893 = vpop.f32.mrb[0].mxu0
    %v894 = vadd.f32 %v682, %v893
    %v895 = vpop.f32.mrb[0].mxu0
    %v896 = vadd.f32 %v686, %v895
    %897 = vmatprep.mubr.f32.mxu0 0.0
    %898 = vmatmul.mubr.f32.gmra.mrb[0].mxu0 %v735
    %v899 = vpop.f32.mrb[0].mxu0
    %v900 = vadd.f32 %v682, %v899
    %v901 = vpop.f32.mrb[0].mxu0
    %v902 = vadd.f32 %v686, %v901
    %903 = vdwg.mxu0
    %v904 = vld [vmem:[%s1] sm:$0x3]
    %v905 = vld [vmem:[%s2] sm:$0x3]
    %906 = vmatprep.subr.mxu0 %v476
    %907 = vmatpush1.msra.mxu0 %v475
    %908 = vmatprep.subr.mxu0 %v480
    %909 = vmatpush1.msra.mxu0 %v479
    %910 = vmatprep.subr.mxu0 %v484
    %911 = vmatpush1.msra.mxu0 %v483
    %912 = vmatprep.subr.mxu0 %v488
    %913 = vmatpush1.msra.mxu0 %v487
    %914 = vmatprep.subr.mxu0 %v492
    %915 = vmatpush1.msra.mxu0 %v491
    %916 = vmatprep.subr.mxu0 %v496
    %917 = vmatpush1.msra.mxu0 %v495
    %918 = vmatprep.subr.mxu0 %v500
    %919 = vmatpush1.msra.mxu0 %v499
    %920 = vmatprep.subr.mxu0 %v504
    %921 = vmatpush1.msra.mxu0 %v503
    %922 = vmatprep.subr.mxu0 %v508
    %923 = vmatpush1.msra.mxu0 %v507
    %924 = vmatprep.subr.mxu0 %v512
    %925 = vmatpush1.msra.mxu0 %v511
    %926 = vmatprep.subr.mxu0 %v516
    %927 = vmatpush1.msra.mxu0 %v515
    %928 = vmatprep.subr.mxu0 %v520
    %929 = vmatpush1.msra.mxu0 %v519
    %930 = vmatprep.subr.mxu0 %v524
    %931 = vmatpush1.msra.mxu0 %v523
    %932 = vmatprep.subr.mxu0 %v528
    %933 = vmatpush1.msra.mxu0 %v527
    %934 = vmatprep.subr.mxu0 %v532
    %935 = vmatpush1.msra.mxu0 %v531
    %936 = vmatprep.subr.mxu0 %v536
    %937 = vmatpush1.msra.mxu0 %v535
    %938 = vmatprep.subr.mxu0 0.0
    %939 = vmatpush1.msra.mxu0 0.0
    %940 = vmatprep.subr.mxu0 0.0
    %941 = vmatpush1.msra.mxu0 0.0
    %942 = vmatprep.subr.mxu0 0.0
    %943 = vmatpush1.msra.mxu0 0.0
    %944 = vmatprep.subr.mxu0 0.0
    %945 = vmatpush1.msra.mxu0 0.0
    %946 = vmatprep.subr.mxu0 0.0
    %947 = vmatpush1.msra.mxu0 0.0
    %948 = vmatprep.subr.mxu0 0.0
    %949 = vmatpush1.msra.mxu0 0.0
    %950 = vmatprep.subr.mxu0 0.0
    %951 = vmatpush1.msra.mxu0 0.0
    %952 = vmatprep.subr.mxu0 0.0
    %953 = vmatpush1.msra.mxu0 0.0
    %954 = vmatprep.subr.mxu0 0.0
    %955 = vmatpush1.msra.mxu0 0.0
    %956 = vmatprep.subr.mxu0 0.0
    %957 = vmatpush1.msra.mxu0 0.0
    %958 = vmatprep.subr.mxu0 0.0
    %959 = vmatpush1.msra.mxu0 0.0
    %960 = vmatprep.subr.mxu0 0.0
    %961 = vmatpush1.msra.mxu0 0.0
    %962 = vmatprep.subr.mxu0 0.0
    %963 = vmatpush1.msra.mxu0 0.0
    %964 = vmatprep.subr.mxu0 0.0
    %965 = vmatpush1.msra.mxu0 0.0
    %966 = vmatprep.subr.mxu0 0.0
    %967 = vmatpush1.msra.mxu0 0.0
    %968 = vmatprep.subr.mxu0 0.0
    %969 = vmatpush1.msra.mxu0 0.0
    %970 = vmatprep.mubr.f32.mxu0 0.0
    %971 = vmatmul.mubr.f32.gmra.mrb[0].mxu0 %v904
    %v972 = vpop.f32.mrb[0].mxu0
    %v973 = vadd.f32 0.0, %v972
    %v974 = vpop.f32.mrb[0].mxu0
    %v975 = vadd.f32 0.0, %v974
    %976 = vdwg.mxu0
    %977 = vmatprep.subr.mxu0 %v478
    %978 = vmatpush1.msra.mxu0 %v477
    %979 = vmatprep.subr.mxu0 %v482
    %980 = vmatpush1.msra.mxu0 %v481
    %981 = vmatprep.subr.mxu0 %v486
    %982 = vmatpush1.msra.mxu0 %v485
    %983 = vmatprep.subr.mxu0 %v490
    %984 = vmatpush1.msra.mxu0 %v489
    %985 = vmatprep.subr.mxu0 %v494
    %986 = vmatpush1.msra.mxu0 %v493
    %987 = vmatprep.subr.mxu0 %v498
    %988 = vmatpush1.msra.mxu0 %v497
    %989 = vmatprep.subr.mxu0 %v502
    %990 = vmatpush1.msra.mxu0 %v501
    %991 = vmatprep.subr.mxu0 %v506
    %992 = vmatpush1.msra.mxu0 %v505
    %993 = vmatprep.subr.mxu0 %v510
    %994 = vmatpush1.msra.mxu0 %v509
    %995 = vmatprep.subr.mxu0 %v514
    %996 = vmatpush1.msra.mxu0 %v513
    %997 = vmatprep.subr.mxu0 %v518
    %998 = vmatpush1.msra.mxu0 %v517
    %999 = vmatprep.subr.mxu0 %v522
    %1000 = vmatpush1.msra.mxu0 %v521
    %1001 = vmatprep.subr.mxu0 %v526
    %1002 = vmatpush1.msra.mxu0 %v525
    %1003 = vmatprep.subr.mxu0 %v530
    %1004 = vmatpush1.msra.mxu0 %v529
    %1005 = vmatprep.subr.mxu0 %v534
    %1006 = vmatpush1.msra.mxu0 %v533
    %1007 = vmatprep.subr.mxu0 %v538
    %1008 = vmatpush1.msra.mxu0 %v537
    %1009 = vmatprep.subr.mxu0 0.0
    %1010 = vmatpush1.msra.mxu0 0.0
    %1011 = vmatprep.subr.mxu0 0.0
    %1012 = vmatpush1.msra.mxu0 0.0
    %1013 = vmatprep.subr.mxu0 0.0
    %1014 = vmatpush1.msra.mxu0 0.0
    %1015 = vmatprep.subr.mxu0 0.0
    %1016 = vmatpush1.msra.mxu0 0.0
    %1017 = vmatprep.subr.mxu0 0.0
    %1018 = vmatpush1.msra.mxu0 0.0
    %1019 = vmatprep.subr.mxu0 0.0
    %1020 = vmatpush1.msra.mxu0 0.0
    %1021 = vmatprep.subr.mxu0 0.0
    %1022 = vmatpush1.msra.mxu0 0.0
    %1023 = vmatprep.subr.mxu0 0.0
    %1024 = vmatpush1.msra.mxu0 0.0
    %1025 = vmatprep.subr.mxu0 0.0
    %1026 = vmatpush1.msra.mxu0 0.0
    %1027 = vmatprep.subr.mxu0 0.0
    %1028 = vmatpush1.msra.mxu0 0.0
    %1029 = vmatprep.subr.mxu0 0.0
    %1030 = vmatpush1.msra.mxu0 0.0
    %1031 = vmatprep.subr.mxu0 0.0
    %1032 = vmatpush1.msra.mxu0 0.0
    %1033 = vmatprep.subr.mxu0 0.0
    %1034 = vmatpush1.msra.mxu0 0.0
    %1035 = vmatprep.subr.mxu0 0.0
    %1036 = vmatpush1.msra.mxu0 0.0
    %1037 = vmatprep.subr.mxu0 0.0
    %1038 = vmatpush1.msra.mxu0 0.0
    %1039 = vmatprep.subr.mxu0 0.0
    %1040 = vmatpush1.msra.mxu0 0.0
    %1041 = vmatprep.mubr.f32.mxu0 0.0
    %1042 = vmatmul.mubr.f32.gmra.mrb[0].mxu0 %v904
    %v1043 = vpop.f32.mrb[0].mxu0
    %v1044 = vadd.f32 0.0, %v1043
    %v1045 = vpop.f32.mrb[0].mxu0
    %v1046 = vadd.f32 0.0, %v1045
    %1047 = vdwg.mxu0
    %v1048 = vadd.f32 %v817, %v973
    %v1049 = vadd.f32 %v819, %v975
    %v1050 = vadd.f32 %v894, %v1044
    %v1051 = vadd.f32 %v896, %v1046
    %v1052 = vxor.u32 %v1048, 2147483648
    %v1053 = vmul.f32 %v1052, 1.442695
    %v1054 = vpow.pop %v1053
    %v1055 = vadd.f32 %v1054, 1.0
    %v1056 = vrcp.pop %v1055
    %v1057 = vmul.f32 1.0, %v1056
    %v1058 = vxor.u32 %v1049, 2147483648
    %v1059 = vmul.f32 %v1058, 1.442695
    %v1060 = vpow.pop %v1059
    %v1061 = vadd.f32 %v1060, 1.0
    %v1062 = vrcp.pop %v1061
    %v1063 = vmul.f32 1.0, %v1062
    %v1064 = vtanh.pop %v1050
    %v1065 = vxor.u32 %v1051, 2147483648
    %v1066 = vmul.f32 %v1065, 1.442695
    %v1067 = vpow.pop %v1066
    %v1068 = vadd.f32 %v1067, 1.0
    %v1069 = vrcp.pop %v1068
    %v1070 = vmul.f32 1.0, %v1069
    %v1071 = vmul.f32 %v1063, %v905
    %v1072 = vmul.f32 %v1057, %v1064
    %v1073 = vadd.f32 %v1071, %v1072
    %v1074 = vtanh.pop %v1073
    %v1075 = vmul.f32 %v1070, %v1074
    %1076 = vmatprep.subr.mxu0 %v476
    %1077 = vmatpush1.msra.mxu0 %v475
    %1078 = vmatprep.subr.mxu0 %v480
    %1079 = vmatpush1.msra.mxu0 %v479
    %1080 = vmatprep.subr.mxu0 %v484
    %1081 = vmatpush1.msra.mxu0 %v483
    %1082 = vmatprep.subr.mxu0 %v488
    %1083 = vmatpush1.msra.mxu0 %v487
    %1084 = vmatprep.subr.mxu0 %v492
    %1085 = vmatpush1.msra.mxu0 %v491
    %1086 = vmatprep.subr.mxu0 %v496
    %1087 = vmatpush1.msra.mxu0 %v495
    %1088 = vmatprep.subr.mxu0 %v500
    %1089 = vmatpush1.msra.mxu0 %v499
    %1090 = vmatprep.subr.mxu0 %v504
    %1091 = vmatpush1.msra.mxu0 %v503
    %1092 = vmatprep.subr.mxu0 %v508
    %1093 = vmatpush1.msra.mxu0 %v507
    %1094 = vmatprep.subr.mxu0 %v512
    %1095 = vmatpush1.msra.mxu0 %v511
    %1096 = vmatprep.subr.mxu0 %v516
    %1097 = vmatpush1.msra.mxu0 %v515
    %1098 = vmatprep.subr.mxu0 %v520
    %1099 = vmatpush1.msra.mxu0 %v519
    %1100 = vmatprep.subr.mxu0 %v524
    %1101 = vmatpush1.msra.mxu0 %v523
    %1102 = vmatprep.subr.mxu0 %v528
    %1103 = vmatpush1.msra.mxu0 %v527
    %1104 = vmatprep.subr.mxu0 %v532
    %1105 = vmatpush1.msra.mxu0 %v531
    %1106 = vmatprep.subr.mxu0 %v536
    %1107 = vmatpush1.msra.mxu0 %v535
    %1108 = vmatprep.subr.mxu0 0.0
    %1109 = vmatpush1.msra.mxu0 0.0
    %1110 = vmatprep.subr.mxu0 0.0
    %1111 = vmatpush1.msra.mxu0 0.0
    %1112 = vmatprep.subr.mxu0 0.0
    %1113 = vmatpush1.msra.mxu0 0.0
    %1114 = vmatprep.subr.mxu0 0.0
    %1115 = vmatpush1.msra.mxu0 0.0
    %1116 = vmatprep.subr.mxu0 0.0
    %1117 = vmatpush1.msra.mxu0 0.0
    %1118 = vmatprep.subr.mxu0 0.0
    %1119 = vmatpush1.msra.mxu0 0.0
    %1120 = vmatprep.subr.mxu0 0.0
    %1121 = vmatpush1.msra.mxu0 0.0
    %1122 = vmatprep.subr.mxu0 0.0
    %1123 = vmatpush1.msra.mxu0 0.0
    %1124 = vmatprep.subr.mxu0 0.0
    %1125 = vmatpush1.msra.mxu0 0.0
    %1126 = vmatprep.subr.mxu0 0.0
    %1127 = vmatpush1.msra.mxu0 0.0
    %1128 = vmatprep.subr.mxu0 0.0
    %1129 = vmatpush1.msra.mxu0 0.0
    %1130 = vmatprep.subr.mxu0 0.0
    %1131 = vmatpush1.msra.mxu0 0.0
    %1132 = vmatprep.subr.mxu0 0.0
    %1133 = vmatpush1.msra.mxu0 0.0
    %1134 = vmatprep.subr.mxu0 0.0
    %1135 = vmatpush1.msra.mxu0 0.0
    %1136 = vmatprep.subr.mxu0 0.0
    %1137 = vmatpush1.msra.mxu0 0.0
    %1138 = vmatprep.subr.mxu0 0.0
    %1139 = vmatpush1.msra.mxu0 0.0
    %1140 = vmatprep.mubr.f32.mxu0 0.0
    %1141 = vmatmul.mubr.f32.gmra.mrb[0].mxu0 %v1075
    %v1142 = vpop.f32.mrb[0].mxu0
    %v1143 = vadd.f32 0.0, %v1142
    %v1144 = vpop.f32.mrb[0].mxu0
    %v1145 = vadd.f32 0.0, %v1144
    %1146 = vdwg.mxu0
    %1147 = vmatprep.subr.mxu0 %v478
    %1148 = vmatpush1.msra.mxu0 %v477
    %1149 = vmatprep.subr.mxu0 %v482
    %1150 = vmatpush1.msra.mxu0 %v481
    %1151 = vmatprep.subr.mxu0 %v486
    %1152 = vmatpush1.msra.mxu0 %v485
    %1153 = vmatprep.subr.mxu0 %v490
    %1154 = vmatpush1.msra.mxu0 %v489
    %1155 = vmatprep.subr.mxu0 %v494
    %1156 = vmatpush1.msra.mxu0 %v493
    %1157 = vmatprep.subr.mxu0 %v498
    %1158 = vmatpush1.msra.mxu0 %v497
    %1159 = vmatprep.subr.mxu0 %v502
    %1160 = vmatpush1.msra.mxu0 %v501
    %1161 = vmatprep.subr.mxu0 %v506
    %1162 = vmatpush1.msra.mxu0 %v505
    %1163 = vmatprep.subr.mxu0 %v510
    %1164 = vmatpush1.msra.mxu0 %v509
    %1165 = vmatprep.subr.mxu0 %v514
    %1166 = vmatpush1.msra.mxu0 %v513
    %1167 = vmatprep.subr.mxu0 %v518
    %1168 = vmatpush1.msra.mxu0 %v517
    %1169 = vmatprep.subr.mxu0 %v522
    %1170 = vmatpush1.msra.mxu0 %v521
    %1171 = vmatprep.subr.mxu0 %v526
    %1172 = vmatpush1.msra.mxu0 %v525
    %1173 = vmatprep.subr.mxu0 %v530
    %1174 = vmatpush1.msra.mxu0 %v529
    %1175 = vmatprep.subr.mxu0 %v534
    %1176 = vmatpush1.msra.mxu0 %v533
    %1177 = vmatprep.subr.mxu0 %v538
    %1178 = vmatpush1.msra.mxu0 %v537
    %1179 = vmatprep.subr.mxu0 0.0
    %1180 = vmatpush1.msra.mxu0 0.0
    %1181 = vmatprep.subr.mxu0 0.0
    %1182 = vmatpush1.msra.mxu0 0.0
    %1183 = vmatprep.subr.mxu0 0.0
    %1184 = vmatpush1.msra.mxu0 0.0
    %1185 = vmatprep.subr.mxu0 0.0
    %1186 = vmatpush1.msra.mxu0 0.0
    %1187 = vmatprep.subr.mxu0 0.0
    %1188 = vmatpush1.msra.mxu0 0.0
    %1189 = vmatprep.subr.mxu0 0.0
    %1190 = vmatpush1.msra.mxu0 0.0
    %1191 = vmatprep.subr.mxu0 0.0
    %1192 = vmatpush1.msra.mxu0 0.0
    %1193 = vmatprep.subr.mxu0 0.0
    %1194 = vmatpush1.msra.mxu0 0.0
    %1195 = vmatprep.subr.mxu0 0.0
    %1196 = vmatpush1.msra.mxu0 0.0
    %1197 = vmatprep.subr.mxu0 0.0
    %1198 = vmatpush1.msra.mxu0 0.0
    %1199 = vmatprep.subr.mxu0 0.0
    %1200 = vmatpush1.msra.mxu0 0.0
    %1201 = vmatprep.subr.mxu0 0.0
    %1202 = vmatpush1.msra.mxu0 0.0
    %1203 = vmatprep.subr.mxu0 0.0
    %1204 = vmatpush1.msra.mxu0 0.0
    %1205 = vmatprep.subr.mxu0 0.0
    %1206 = vmatpush1.msra.mxu0 0.0
    %1207 = vmatprep.subr.mxu0 0.0
    %1208 = vmatpush1.msra.mxu0 0.0
    %1209 = vmatprep.subr.mxu0 0.0
    %1210 = vmatpush1.msra.mxu0 0.0
    %1211 = vmatprep.mubr.f32.mxu0 0.0
    %1212 = vmatmul.mubr.f32.gmra.mrb[0].mxu0 %v1075
    %v1213 = vpop.f32.mrb[0].mxu0
    %v1214 = vadd.f32 0.0, %v1213
    %v1215 = vpop.f32.mrb[0].mxu0
    %v1216 = vadd.f32 0.0, %v1215
    %1217 = vdwg.mxu0
    %v1222 = vrot.slane %v1143, 6
    %v1223 = vrot.slane %v1145, 6
    %v1224 = vrot.slane %v1214, 6
    %v1225 = vrot.slane %v1216, 6
    %v1230 = vadd.f32 %v817, %v1222
    %v1231 = vadd.f32 %v819, %v1223
    %v1232 = vadd.f32 %v894, %v1224
    %v1233 = vadd.f32 %v896, %v1225
    %v1234 = vxor.u32 %v1230, 2147483648
    %v1235 = vmul.f32 %v1234, 1.442695
    %v1236 = vpow.pop %v1235
    %v1237 = vadd.f32 %v1236, 1.0
    %v1238 = vrcp.pop %v1237
    %v1239 = vmul.f32 1.0, %v1238
    %v1240 = vxor.u32 %v1231, 2147483648
    %v1241 = vmul.f32 %v1240, 1.442695
    %v1242 = vpow.pop %v1241
    %v1243 = vadd.f32 %v1242, 1.0
    %v1244 = vrcp.pop %v1243
    %v1245 = vmul.f32 1.0, %v1244
    %v1246 = vtanh.pop %v1232
    %v1247 = vxor.u32 %v1233, 2147483648
    %v1248 = vmul.f32 %v1247, 1.442695
    %v1249 = vpow.pop %v1248
    %v1250 = vadd.f32 %v1249, 1.0
    %v1251 = vrcp.pop %v1250
    %v1252 = vmul.f32 1.0, %v1251
    %v1254 = vrot.slane %v1073, 6
    %v1256 = vmul.f32 %v1245, %v1254
    %v1257 = vmul.f32 %v1239, %v1246
    %v1258 = vadd.f32 %v1256, %v1257
    %v1259 = vtanh.pop %v1258
    %v1260 = vmul.f32 %v1252, %v1259
    %v1262 = vrot.slane %v1260, 2
    %1264 = vmatprep.subr.mxu0 %v476
    %1265 = vmatpush1.msra.mxu0 %v475
    %1266 = vmatprep.subr.mxu0 %v480
    %1267 = vmatpush1.msra.mxu0 %v479
    %1268 = vmatprep.subr.mxu0 %v484
    %1269 = vmatpush1.msra.mxu0 %v483
    %1270 = vmatprep.subr.mxu0 %v488
    %1271 = vmatpush1.msra.mxu0 %v487
    %1272 = vmatprep.subr.mxu0 %v492
    %1273 = vmatpush1.msra.mxu0 %v491
    %1274 = vmatprep.subr.mxu0 %v496
    %1275 = vmatpush1.msra.mxu0 %v495
    %1276 = vmatprep.subr.mxu0 %v500
    %1277 = vmatpush1.msra.mxu0 %v499
    %1278 = vmatprep.subr.mxu0 %v504
    %1279 = vmatpush1.msra.mxu0 %v503
    %1280 = vmatprep.subr.mxu0 %v508
    %1281 = vmatpush1.msra.mxu0 %v507
    %1282 = vmatprep.subr.mxu0 %v512
    %1283 = vmatpush1.msra.mxu0 %v511
    %1284 = vmatprep.subr.mxu0 %v516
    %1285 = vmatpush1.msra.mxu0 %v515
    %1286 = vmatprep.subr.mxu0 %v520
    %1287 = vmatpush1.msra.mxu0 %v519
    %1288 = vmatprep.subr.mxu0 %v524
    %1289 = vmatpush1.msra.mxu0 %v523
    %1290 = vmatprep.subr.mxu0 %v528
    %1291 = vmatpush1.msra.mxu0 %v527
    %1292 = vmatprep.subr.mxu0 %v532
    %1293 = vmatpush1.msra.mxu0 %v531
    %1294 = vmatprep.subr.mxu0 %v536
    %1295 = vmatpush1.msra.mxu0 %v535
    %1296 = vmatprep.subr.mxu0 0.0
    %1297 = vmatpush1.msra.mxu0 0.0
    %1298 = vmatprep.subr.mxu0 0.0
    %1299 = vmatpush1.msra.mxu0 0.0
    %1300 = vmatprep.subr.mxu0 0.0
    %1301 = vmatpush1.msra.mxu0 0.0
    %1302 = vmatprep.subr.mxu0 0.0
    %1303 = vmatpush1.msra.mxu0 0.0
    %1304 = vmatprep.subr.mxu0 0.0
    %1305 = vmatpush1.msra.mxu0 0.0
    %1306 = vmatprep.subr.mxu0 0.0
    %1307 = vmatpush1.msra.mxu0 0.0
    %1308 = vmatprep.subr.mxu0 0.0
    %1309 = vmatpush1.msra.mxu0 0.0
    %1310 = vmatprep.subr.mxu0 0.0
    %1311 = vmatpush1.msra.mxu0 0.0
    %1312 = vmatprep.subr.mxu0 0.0
    %1313 = vmatpush1.msra.mxu0 0.0
    %1314 = vmatprep.subr.mxu0 0.0
    %1315 = vmatpush1.msra.mxu0 0.0
    %1316 = vmatprep.subr.mxu0 0.0
    %1317 = vmatpush1.msra.mxu0 0.0
    %1318 = vmatprep.subr.mxu0 0.0
    %1319 = vmatpush1.msra.mxu0 0.0
    %1320 = vmatprep.subr.mxu0 0.0
    %1321 = vmatpush1.msra.mxu0 0.0
    %1322 = vmatprep.subr.mxu0 0.0
    %1323 = vmatpush1.msra.mxu0 0.0
    %1324 = vmatprep.subr.mxu0 0.0
    %1325 = vmatpush1.msra.mxu0 0.0
    %1326 = vmatprep.subr.mxu0 0.0
    %1327 = vmatpush1.msra.mxu0 0.0
    %1328 = vmatprep.mubr.f32.mxu0 0.0
    %1329 = vmatmul.mubr.f32.gmra.mrb[0].mxu0 %v1262
    %v1330 = vpop.f32.mrb[0].mxu0
    %v1331 = vadd.f32 0.0, %v1330
    %v1332 = vpop.f32.mrb[0].mxu0
    %v1333 = vadd.f32 0.0, %v1332
    %1334 = vdwg.mxu0
    %1335 = vmatprep.subr.mxu0 %v478
    %1336 = vmatpush1.msra.mxu0 %v477
    %1337 = vmatprep.subr.mxu0 %v482
    %1338 = vmatpush1.msra.mxu0 %v481
    %1339 = vmatprep.subr.mxu0 %v486
    %1340 = vmatpush1.msra.mxu0 %v485
    %1341 = vmatprep.subr.mxu0 %v490
    %1342 = vmatpush1.msra.mxu0 %v489
    %1343 = vmatprep.subr.mxu0 %v494
    %1344 = vmatpush1.msra.mxu0 %v493
    %1345 = vmatprep.subr.mxu0 %v498
    %1346 = vmatpush1.msra.mxu0 %v497
    %1347 = vmatprep.subr.mxu0 %v502
    %1348 = vmatpush1.msra.mxu0 %v501
    %1349 = vmatprep.subr.mxu0 %v506
    %1350 = vmatpush1.msra.mxu0 %v505
    %1351 = vmatprep.subr.mxu0 %v510
    %1352 = vmatpush1.msra.mxu0 %v509
    %1353 = vmatprep.subr.mxu0 %v514
    %1354 = vmatpush1.msra.mxu0 %v513
    %1355 = vmatprep.subr.mxu0 %v518
    %1356 = vmatpush1.msra.mxu0 %v517
    %1357 = vmatprep.subr.mxu0 %v522
    %1358 = vmatpush1.msra.mxu0 %v521
    %1359 = vmatprep.subr.mxu0 %v526
    %1360 = vmatpush1.msra.mxu0 %v525
    %1361 = vmatprep.subr.mxu0 %v530
    %1362 = vmatpush1.msra.mxu0 %v529
    %1363 = vmatprep.subr.mxu0 %v534
    %1364 = vmatpush1.msra.mxu0 %v533
    %1365 = vmatprep.subr.mxu0 %v538
    %1366 = vmatpush1.msra.mxu0 %v537
    %1367 = vmatprep.subr.mxu0 0.0
    %1368 = vmatpush1.msra.mxu0 0.0
    %1369 = vmatprep.subr.mxu0 0.0
    %1370 = vmatpush1.msra.mxu0 0.0
    %1371 = vmatprep.subr.mxu0 0.0
    %1372 = vmatpush1.msra.mxu0 0.0
    %1373 = vmatprep.subr.mxu0 0.0
    %1374 = vmatpush1.msra.mxu0 0.0
    %1375 = vmatprep.subr.mxu0 0.0
    %1376 = vmatpush1.msra.mxu0 0.0
    %1377 = vmatprep.subr.mxu0 0.0
    %1378 = vmatpush1.msra.mxu0 0.0
    %1379 = vmatprep.subr.mxu0 0.0
    %1380 = vmatpush1.msra.mxu0 0.0
    %1381 = vmatprep.subr.mxu0 0.0
    %1382 = vmatpush1.msra.mxu0 0.0
    %1383 = vmatprep.subr.mxu0 0.0
    %1384 = vmatpush1.msra.mxu0 0.0
    %1385 = vmatprep.subr.mxu0 0.0
    %1386 = vmatpush1.msra.mxu0 0.0
    %1387 = vmatprep.subr.mxu0 0.0
    %1388 = vmatpush1.msra.mxu0 0.0
    %1389 = vmatprep.subr.mxu0 0.0
    %1390 = vmatpush1.msra.mxu0 0.0
    %1391 = vmatprep.subr.mxu0 0.0
    %1392 = vmatpush1.msra.mxu0 0.0
    %1393 = vmatprep.subr.mxu0 0.0
    %1394 = vmatpush1.msra.mxu0 0.0
    %1395 = vmatprep.subr.mxu0 0.0
    %1396 = vmatpush1.msra.mxu0 0.0
    %1397 = vmatprep.subr.mxu0 0.0
    %1398 = vmatpush1.msra.mxu0 0.0
    %1399 = vmatprep.mubr.f32.mxu0 0.0
    %1400 = vmatmul.mubr.f32.gmra.mrb[0].mxu0 %v1262
    %v1401 = vpop.f32.mrb[0].mxu0
    %v1402 = vadd.f32 0.0, %v1401
    %v1403 = vpop.f32.mrb[0].mxu0
    %v1404 = vadd.f32 0.0, %v1403
    %1405 = vdwg.mxu0
    %v1410 = vrot.slane %v1331, 4
    %v1411 = vrot.slane %v1333, 4
    %v1412 = vrot.slane %v1402, 4
    %v1413 = vrot.slane %v1404, 4
    %v1418 = vadd.f32 %v817, %v1410
    %v1419 = vadd.f32 %v819, %v1411
    %v1420 = vadd.f32 %v894, %v1412
    %v1421 = vadd.f32 %v896, %v1413
    %v1422 = vxor.u32 %v1418, 2147483648
    %v1423 = vmul.f32 %v1422, 1.442695
    %v1424 = vpow.pop %v1423
    %v1425 = vadd.f32 %v1424, 1.0
    %v1426 = vrcp.pop %v1425
    %v1427 = vmul.f32 1.0, %v1426
    %v1428 = vxor.u32 %v1419, 2147483648
    %v1429 = vmul.f32 %v1428, 1.442695
    %v1430 = vpow.pop %v1429
    %v1431 = vadd.f32 %v1430, 1.0
    %v1432 = vrcp.pop %v1431
    %v1433 = vmul.f32 1.0, %v1432
    %v1434 = vtanh.pop %v1420
    %v1435 = vxor.u32 %v1421, 2147483648
    %v1436 = vmul.f32 %v1435, 1.442695
    %v1437 = vpow.pop %v1436
    %v1438 = vadd.f32 %v1437, 1.0
    %v1439 = vrcp.pop %v1438
    %v1440 = vmul.f32 1.0, %v1439
    %v1442 = vrot.slane %v1258, 6
    %v1444 = vmul.f32 %v1433, %v1442
    %v1445 = vmul.f32 %v1427, %v1434
    %v1446 = vadd.f32 %v1444, %v1445
    %v1447 = vtanh.pop %v1446
    %v1448 = vmul.f32 %v1440, %v1447
    %v1450 = vrot.slane %v1448, 4
    %1452 = vmatprep.subr.mxu0 %v476
    %1453 = vmatpush1.msra.mxu0 %v475
    %1454 = vmatprep.subr.mxu0 %v480
    %1455 = vmatpush1.msra.mxu0 %v479
    %1456 = vmatprep.subr.mxu0 %v484
    %1457 = vmatpush1.msra.mxu0 %v483
    %1458 = vmatprep.subr.mxu0 %v488
    %1459 = vmatpush1.msra.mxu0 %v487
    %1460 = vmatprep.subr.mxu0 %v492
    %1461 = vmatpush1.msra.mxu0 %v491
    %1462 = vmatprep.subr.mxu0 %v496
    %1463 = vmatpush1.msra.mxu0 %v495
    %1464 = vmatprep.subr.mxu0 %v500
    %1465 = vmatpush1.msra.mxu0 %v499
    %1466 = vmatprep.subr.mxu0 %v504
    %1467 = vmatpush1.msra.mxu0 %v503
    %1468 = vmatprep.subr.mxu0 %v508
    %1469 = vmatpush1.msra.mxu0 %v507
    %1470 = vmatprep.subr.mxu0 %v512
    %1471 = vmatpush1.msra.mxu0 %v511
    %1472 = vmatprep.subr.mxu0 %v516
    %1473 = vmatpush1.msra.mxu0 %v515
    %1474 = vmatprep.subr.mxu0 %v520
    %1475 = vmatpush1.msra.mxu0 %v519
    %1476 = vmatprep.subr.mxu0 %v524
    %1477 = vmatpush1.msra.mxu0 %v523
    %1478 = vmatprep.subr.mxu0 %v528
    %1479 = vmatpush1.msra.mxu0 %v527
    %1480 = vmatprep.subr.mxu0 %v532
    %1481 = vmatpush1.msra.mxu0 %v531
    %1482 = vmatprep.subr.mxu0 %v536
    %1483 = vmatpush1.msra.mxu0 %v535
    %1484 = vmatprep.subr.mxu0 0.0
    %1485 = vmatpush1.msra.mxu0 0.0
    %1486 = vmatprep.subr.mxu0 0.0
    %1487 = vmatpush1.msra.mxu0 0.0
    %1488 = vmatprep.subr.mxu0 0.0
    %1489 = vmatpush1.msra.mxu0 0.0
    %1490 = vmatprep.subr.mxu0 0.0
    %1491 = vmatpush1.msra.mxu0 0.0
    %1492 = vmatprep.subr.mxu0 0.0
    %1493 = vmatpush1.msra.mxu0 0.0
    %1494 = vmatprep.subr.mxu0 0.0
    %1495 = vmatpush1.msra.mxu0 0.0
    %1496 = vmatprep.subr.mxu0 0.0
    %1497 = vmatpush1.msra.mxu0 0.0
    %1498 = vmatprep.subr.mxu0 0.0
    %1499 = vmatpush1.msra.mxu0 0.0
    %1500 = vmatprep.subr.mxu0 0.0
    %1501 = vmatpush1.msra.mxu0 0.0
    %1502 = vmatprep.subr.mxu0 0.0
    %1503 = vmatpush1.msra.mxu0 0.0
    %1504 = vmatprep.subr.mxu0 0.0
    %1505 = vmatpush1.msra.mxu0 0.0
    %1506 = vmatprep.subr.mxu0 0.0
    %1507 = vmatpush1.msra.mxu0 0.0
    %1508 = vmatprep.subr.mxu0 0.0
    %1509 = vmatpush1.msra.mxu0 0.0
    %1510 = vmatprep.subr.mxu0 0.0
    %1511 = vmatpush1.msra.mxu0 0.0
    %1512 = vmatprep.subr.mxu0 0.0
    %1513 = vmatpush1.msra.mxu0 0.0
    %1514 = vmatprep.subr.mxu0 0.0
    %1515 = vmatpush1.msra.mxu0 0.0
    %1516 = vmatprep.mubr.f32.mxu0 0.0
    %1517 = vmatmul.mubr.f32.gmra.mrb[0].mxu0 %v1450
    %v1518 = vpop.f32.mrb[0].mxu0
    %v1519 = vadd.f32 0.0, %v1518
    %v1520 = vpop.f32.mrb[0].mxu0
    %v1521 = vadd.f32 0.0, %v1520
    %1522 = vdwg.mxu0
    %1523 = vmatprep.subr.mxu0 %v478
    %1524 = vmatpush1.msra.mxu0 %v477
    %1525 = vmatprep.subr.mxu0 %v482
    %1526 = vmatpush1.msra.mxu0 %v481
    %1527 = vmatprep.subr.mxu0 %v486
    %1528 = vmatpush1.msra.mxu0 %v485
    %1529 = vmatprep.subr.mxu0 %v490
    %1530 = vmatpush1.msra.mxu0 %v489
    %1531 = vmatprep.subr.mxu0 %v494
    %1532 = vmatpush1.msra.mxu0 %v493
    %1533 = vmatprep.subr.mxu0 %v498
    %1534 = vmatpush1.msra.mxu0 %v497
    %1535 = vmatprep.subr.mxu0 %v502
    %1536 = vmatpush1.msra.mxu0 %v501
    %1537 = vmatprep.subr.mxu0 %v506
    %1538 = vmatpush1.msra.mxu0 %v505
    %1539 = vmatprep.subr.mxu0 %v510
    %1540 = vmatpush1.msra.mxu0 %v509
    %1541 = vmatprep.subr.mxu0 %v514
    %1542 = vmatpush1.msra.mxu0 %v513
    %1543 = vmatprep.subr.mxu0 %v518
    %1544 = vmatpush1.msra.mxu0 %v517
    %1545 = vmatprep.subr.mxu0 %v522
    %1546 = vmatpush1.msra.mxu0 %v521
    %1547 = vmatprep.subr.mxu0 %v526
    %1548 = vmatpush1.msra.mxu0 %v525
    %1549 = vmatprep.subr.mxu0 %v530
    %1550 = vmatpush1.msra.mxu0 %v529
    %1551 = vmatprep.subr.mxu0 %v534
    %1552 = vmatpush1.msra.mxu0 %v533
    %1553 = vmatprep.subr.mxu0 %v538
    %1554 = vmatpush1.msra.mxu0 %v537
    %1555 = vmatprep.subr.mxu0 0.0
    %1556 = vmatpush1.msra.mxu0 0.0
    %1557 = vmatprep.subr.mxu0 0.0
    %1558 = vmatpush1.msra.mxu0 0.0
    %1559 = vmatprep.subr.mxu0 0.0
    %1560 = vmatpush1.msra.mxu0 0.0
    %1561 = vmatprep.subr.mxu0 0.0
    %1562 = vmatpush1.msra.mxu0 0.0
    %1563 = vmatprep.subr.mxu0 0.0
    %1564 = vmatpush1.msra.mxu0 0.0
    %1565 = vmatprep.subr.mxu0 0.0
    %1566 = vmatpush1.msra.mxu0 0.0
    %1567 = vmatprep.subr.mxu0 0.0
    %1568 = vmatpush1.msra.mxu0 0.0
    %1569 = vmatprep.subr.mxu0 0.0
    %1570 = vmatpush1.msra.mxu0 0.0
    %1571 = vmatprep.subr.mxu0 0.0
    %1572 = vmatpush1.msra.mxu0 0.0
    %1573 = vmatprep.subr.mxu0 0.0
    %1574 = vmatpush1.msra.mxu0 0.0
    %1575 = vmatprep.subr.mxu0 0.0
    %1576 = vmatpush1.msra.mxu0 0.0
    %1577 = vmatprep.subr.mxu0 0.0
    %1578 = vmatpush1.msra.mxu0 0.0
    %1579 = vmatprep.subr.mxu0 0.0
    %1580 = vmatpush1.msra.mxu0 0.0
    %1581 = vmatprep.subr.mxu0 0.0
    %1582 = vmatpush1.msra.mxu0 0.0
    %1583 = vmatprep.subr.mxu0 0.0
    %1584 = vmatpush1.msra.mxu0 0.0
    %1585 = vmatprep.subr.mxu0 0.0
    %1586 = vmatpush1.msra.mxu0 0.0
    %1587 = vmatprep.mubr.f32.mxu0 0.0
    %1588 = vmatmul.mubr.f32.gmra.mrb[0].mxu0 %v1450
    %v1589 = vpop.f32.mrb[0].mxu0
    %v1590 = vadd.f32 0.0, %v1589
    %v1591 = vpop.f32.mrb[0].mxu0
    %v1592 = vadd.f32 0.0, %v1591
    %1593 = vdwg.mxu0
    %v1598 = vrot.slane %v1519, 2
    %v1599 = vrot.slane %v1521, 2
    %v1600 = vrot.slane %v1590, 2
    %v1601 = vrot.slane %v1592, 2
    %v1606 = vadd.f32 %v817, %v1598
    %v1607 = vadd.f32 %v819, %v1599
    %v1608 = vadd.f32 %v894, %v1600
    %v1609 = vadd.f32 %v896, %v1601
    %v1610 = vxor.u32 %v1606, 2147483648
    %v1611 = vmul.f32 %v1610, 1.442695
    %v1612 = vpow.pop %v1611
    %v1613 = vadd.f32 %v1612, 1.0
    %v1614 = vrcp.pop %v1613
    %v1615 = vmul.f32 1.0, %v1614
    %v1616 = vxor.u32 %v1607, 2147483648
    %v1617 = vmul.f32 %v1616, 1.442695
    %v1618 = vpow.pop %v1617
    %v1619 = vadd.f32 %v1618, 1.0
    %v1620 = vrcp.pop %v1619
    %v1621 = vmul.f32 1.0, %v1620
    %v1622 = vtanh.pop %v1608
    %v1623 = vxor.u32 %v1609, 2147483648
    %v1624 = vmul.f32 %v1623, 1.442695
    %v1625 = vpow.pop %v1624
    %v1626 = vadd.f32 %v1625, 1.0
    %v1627 = vrcp.pop %v1626
    %v1628 = vmul.f32 1.0, %v1627
    %v1630 = vrot.slane %v1446, 6
    %v1632 = vmul.f32 %v1621, %v1630
    %v1633 = vmul.f32 %v1615, %v1622
    %v1634 = vadd.f32 %v1632, %v1633
    %v1635 = vtanh.pop %v1634
    %v1636 = vmul.f32 %v1628, %v1635
    %v1638 = vrot.slane %v1636, 6
    %1640 = vmatprep.subr.mxu0 %v476
    %1641 = vmatpush1.msra.mxu0 %v475
    %1642 = vmatprep.subr.mxu0 %v480
    %1643 = vmatpush1.msra.mxu0 %v479
    %1644 = vmatprep.subr.mxu0 %v484
    %1645 = vmatpush1.msra.mxu0 %v483
    %1646 = vmatprep.subr.mxu0 %v488
    %1647 = vmatpush1.msra.mxu0 %v487
    %1648 = vmatprep.subr.mxu0 %v492
    %1649 = vmatpush1.msra.mxu0 %v491
    %1650 = vmatprep.subr.mxu0 %v496
    %1651 = vmatpush1.msra.mxu0 %v495
    %1652 = vmatprep.subr.mxu0 %v500
    %1653 = vmatpush1.msra.mxu0 %v499
    %1654 = vmatprep.subr.mxu0 %v504
    %1655 = vmatpush1.msra.mxu0 %v503
    %1656 = vmatprep.subr.mxu0 %v508
    %1657 = vmatpush1.msra.mxu0 %v507
    %1658 = vmatprep.subr.mxu0 %v512
    %1659 = vmatpush1.msra.mxu0 %v511
    %1660 = vmatprep.subr.mxu0 %v516
    %1661 = vmatpush1.msra.mxu0 %v515
    %1662 = vmatprep.subr.mxu0 %v520
    %1663 = vmatpush1.msra.mxu0 %v519
    %1664 = vmatprep.subr.mxu0 %v524
    %1665 = vmatpush1.msra.mxu0 %v523
    %1666 = vmatprep.subr.mxu0 %v528
    %1667 = vmatpush1.msra.mxu0 %v527
    %1668 = vmatprep.subr.mxu0 %v532
    %1669 = vmatpush1.msra.mxu0 %v531
    %1670 = vmatprep.subr.mxu0 %v536
    %1671 = vmatpush1.msra.mxu0 %v535
    %1672 = vmatprep.subr.mxu0 0.0
    %1673 = vmatpush1.msra.mxu0 0.0
    %1674 = vmatprep.subr.mxu0 0.0
    %1675 = vmatpush1.msra.mxu0 0.0
    %1676 = vmatprep.subr.mxu0 0.0
    %1677 = vmatpush1.msra.mxu0 0.0
    %1678 = vmatprep.subr.mxu0 0.0
    %1679 = vmatpush1.msra.mxu0 0.0
    %1680 = vmatprep.subr.mxu0 0.0
    %1681 = vmatpush1.msra.mxu0 0.0
    %1682 = vmatprep.subr.mxu0 0.0
    %1683 = vmatpush1.msra.mxu0 0.0
    %1684 = vmatprep.subr.mxu0 0.0
    %1685 = vmatpush1.msra.mxu0 0.0
    %1686 = vmatprep.subr.mxu0 0.0
    %1687 = vmatpush1.msra.mxu0 0.0
    %1688 = vmatprep.subr.mxu0 0.0
    %1689 = vmatpush1.msra.mxu0 0.0
    %1690 = vmatprep.subr.mxu0 0.0
    %1691 = vmatpush1.msra.mxu0 0.0
    %1692 = vmatprep.subr.mxu0 0.0
    %1693 = vmatpush1.msra.mxu0 0.0
    %1694 = vmatprep.subr.mxu0 0.0
    %1695 = vmatpush1.msra.mxu0 0.0
    %1696 = vmatprep.subr.mxu0 0.0
    %1697 = vmatpush1.msra.mxu0 0.0
    %1698 = vmatprep.subr.mxu0 0.0
    %1699 = vmatpush1.msra.mxu0 0.0
    %1700 = vmatprep.subr.mxu0 0.0
    %1701 = vmatpush1.msra.mxu0 0.0
    %1702 = vmatprep.subr.mxu0 0.0
    %1703 = vmatpush1.msra.mxu0 0.0
    %1704 = vmatprep.mubr.f32.mxu0 0.0
    %1705 = vmatmul.mubr.f32.gmra.mrb[0].mxu0 %v1638
    %v1706 = vpop.f32.mrb[0].mxu0
    %v1707 = vadd.f32 0.0, %v1706
    %v1708 = vpop.f32.mrb[0].mxu0
    %v1709 = vadd.f32 0.0, %v1708
    %1710 = vdwg.mxu0
    %1711 = vmatprep.subr.mxu0 %v478
    %1712 = vmatpush1.msra.mxu0 %v477
    %1713 = vmatprep.subr.mxu0 %v482
    %1714 = vmatpush1.msra.mxu0 %v481
    %1715 = vmatprep.subr.mxu0 %v486
    %1716 = vmatpush1.msra.mxu0 %v485
    %1717 = vmatprep.subr.mxu0 %v490
    %1718 = vmatpush1.msra.mxu0 %v489
    %1719 = vmatprep.subr.mxu0 %v494
    %1720 = vmatpush1.msra.mxu0 %v493
    %1721 = vmatprep.subr.mxu0 %v498
    %1722 = vmatpush1.msra.mxu0 %v497
    %1723 = vmatprep.subr.mxu0 %v502
    %1724 = vmatpush1.msra.mxu0 %v501
    %1725 = vmatprep.subr.mxu0 %v506
    %1726 = vmatpush1.msra.mxu0 %v505
    %1727 = vmatprep.subr.mxu0 %v510
    %1728 = vmatpush1.msra.mxu0 %v509
    %1729 = vmatprep.subr.mxu0 %v514
    %1730 = vmatpush1.msra.mxu0 %v513
    %1731 = vmatprep.subr.mxu0 %v518
    %1732 = vmatpush1.msra.mxu0 %v517
    %1733 = vmatprep.subr.mxu0 %v522
    %1734 = vmatpush1.msra.mxu0 %v521
    %1735 = vmatprep.subr.mxu0 %v526
    %1736 = vmatpush1.msra.mxu0 %v525
    %1737 = vmatprep.subr.mxu0 %v530
    %1738 = vmatpush1.msra.mxu0 %v529
    %1739 = vmatprep.subr.mxu0 %v534
    %1740 = vmatpush1.msra.mxu0 %v533
    %1741 = vmatprep.subr.mxu0 %v538
    %1742 = vmatpush1.msra.mxu0 %v537
    %1743 = vmatprep.subr.mxu0 0.0
    %1744 = vmatpush1.msra.mxu0 0.0
    %1745 = vmatprep.subr.mxu0 0.0
    %1746 = vmatpush1.msra.mxu0 0.0
    %1747 = vmatprep.subr.mxu0 0.0
    %1748 = vmatpush1.msra.mxu0 0.0
    %1749 = vmatprep.subr.mxu0 0.0
    %1750 = vmatpush1.msra.mxu0 0.0
    %1751 = vmatprep.subr.mxu0 0.0
    %1752 = vmatpush1.msra.mxu0 0.0
    %1753 = vmatprep.subr.mxu0 0.0
    %1754 = vmatpush1.msra.mxu0 0.0
    %1755 = vmatprep.subr.mxu0 0.0
    %1756 = vmatpush1.msra.mxu0 0.0
    %1757 = vmatprep.subr.mxu0 0.0
    %1758 = vmatpush1.msra.mxu0 0.0
    %1759 = vmatprep.subr.mxu0 0.0
    %1760 = vmatpush1.msra.mxu0 0.0
    %1761 = vmatprep.subr.mxu0 0.0
    %1762 = vmatpush1.msra.mxu0 0.0
    %1763 = vmatprep.subr.mxu0 0.0
    %1764 = vmatpush1.msra.mxu0 0.0
    %1765 = vmatprep.subr.mxu0 0.0
    %1766 = vmatpush1.msra.mxu0 0.0
    %1767 = vmatprep.subr.mxu0 0.0
    %1768 = vmatpush1.msra.mxu0 0.0
    %1769 = vmatprep.subr.mxu0 0.0
    %1770 = vmatpush1.msra.mxu0 0.0
    %1771 = vmatprep.subr.mxu0 0.0
    %1772 = vmatpush1.msra.mxu0 0.0
    %1773 = vmatprep.subr.mxu0 0.0
    %1774 = vmatpush1.msra.mxu0 0.0
    %1775 = vmatprep.mubr.f32.mxu0 0.0
    %1776 = vmatmul.mubr.f32.gmra.mrb[0].mxu0 %v1638
    %v1777 = vpop.f32.mrb[0].mxu0
    %v1778 = vadd.f32 0.0, %v1777
    %v1779 = vpop.f32.mrb[0].mxu0
    %v1780 = vadd.f32 0.0, %v1779
    %1781 = vdwg.mxu0
    %v1782 = vadd.f32 %v823, %v1707
    %v1783 = vadd.f32 %v825, %v1709
    %v1784 = vadd.f32 %v900, %v1778
    %v1785 = vadd.f32 %v902, %v1780
    %v1786 = vxor.u32 %v1782, 2147483648
    %v1787 = vmul.f32 %v1786, 1.442695
    %v1788 = vpow.pop %v1787
    %v1789 = vadd.f32 %v1788, 1.0
    %v1790 = vrcp.pop %v1789
    %v1791 = vmul.f32 1.0, %v1790
    %v1792 = vxor.u32 %v1783, 2147483648
    %v1793 = vmul.f32 %v1792, 1.442695
    %v1794 = vpow.pop %v1793
    %v1795 = vadd.f32 %v1794, 1.0
    %v1796 = vrcp.pop %v1795
    %v1797 = vmul.f32 1.0, %v1796
    %v1798 = vtanh.pop %v1784
    %v1799 = vxor.u32 %v1785, 2147483648
    %v1800 = vmul.f32 %v1799, 1.442695
    %v1801 = vpow.pop %v1800
    %v1802 = vadd.f32 %v1801, 1.0
    %v1803 = vrcp.pop %v1802
    %v1804 = vmul.f32 1.0, %v1803
    %v1806 = vrot.slane %v1634, 6
    %v1808 = vmul.f32 %v1797, %v1806
    %v1809 = vmul.f32 %v1791, %v1798
    %v1810 = vadd.f32 %v1808, %v1809
    %v1811 = vtanh.pop %v1810
    %v1812 = vmul.f32 %v1804, %v1811
    %1813 = vmatprep.subr.mxu0 %v476
    %1814 = vmatpush1.msra.mxu0 %v475
    %1815 = vmatprep.subr.mxu0 %v480
    %1816 = vmatpush1.msra.mxu0 %v479
    %1817 = vmatprep.subr.mxu0 %v484
    %1818 = vmatpush1.msra.mxu0 %v483
    %1819 = vmatprep.subr.mxu0 %v488
    %1820 = vmatpush1.msra.mxu0 %v487
    %1821 = vmatprep.subr.mxu0 %v492
    %1822 = vmatpush1.msra.mxu0 %v491
    %1823 = vmatprep.subr.mxu0 %v496
    %1824 = vmatpush1.msra.mxu0 %v495
    %1825 = vmatprep.subr.mxu0 %v500
    %1826 = vmatpush1.msra.mxu0 %v499
    %1827 = vmatprep.subr.mxu0 %v504
    %1828 = vmatpush1.msra.mxu0 %v503
    %1829 = vmatprep.subr.mxu0 %v508
    %1830 = vmatpush1.msra.mxu0 %v507
    %1831 = vmatprep.subr.mxu0 %v512
    %1832 = vmatpush1.msra.mxu0 %v511
    %1833 = vmatprep.subr.mxu0 %v516
    %1834 = vmatpush1.msra.mxu0 %v515
    %1835 = vmatprep.subr.mxu0 %v520
    %1836 = vmatpush1.msra.mxu0 %v519
    %1837 = vmatprep.subr.mxu0 %v524
    %1838 = vmatpush1.msra.mxu0 %v523
    %1839 = vmatprep.subr.mxu0 %v528
    %1840 = vmatpush1.msra.mxu0 %v527
    %1841 = vmatprep.subr.mxu0 %v532
    %1842 = vmatpush1.msra.mxu0 %v531
    %1843 = vmatprep.subr.mxu0 %v536
    %1844 = vmatpush1.msra.mxu0 %v535
    %1845 = vmatprep.subr.mxu0 0.0
    %1846 = vmatpush1.msra.mxu0 0.0
    %1847 = vmatprep.subr.mxu0 0.0
    %1848 = vmatpush1.msra.mxu0 0.0
    %1849 = vmatprep.subr.mxu0 0.0
    %1850 = vmatpush1.msra.mxu0 0.0
    %1851 = vmatprep.subr.mxu0 0.0
    %1852 = vmatpush1.msra.mxu0 0.0
    %1853 = vmatprep.subr.mxu0 0.0
    %1854 = vmatpush1.msra.mxu0 0.0
    %1855 = vmatprep.subr.mxu0 0.0
    %1856 = vmatpush1.msra.mxu0 0.0
    %1857 = vmatprep.subr.mxu0 0.0
    %1858 = vmatpush1.msra.mxu0 0.0
    %1859 = vmatprep.subr.mxu0 0.0
    %1860 = vmatpush1.msra.mxu0 0.0
    %1861 = vmatprep.subr.mxu0 0.0
    %1862 = vmatpush1.msra.mxu0 0.0
    %1863 = vmatprep.subr.mxu0 0.0
    %1864 = vmatpush1.msra.mxu0 0.0
    %1865 = vmatprep.subr.mxu0 0.0
    %1866 = vmatpush1.msra.mxu0 0.0
    %1867 = vmatprep.subr.mxu0 0.0
    %1868 = vmatpush1.msra.mxu0 0.0
    %1869 = vmatprep.subr.mxu0 0.0
    %1870 = vmatpush1.msra.mxu0 0.0
    %1871 = vmatprep.subr.mxu0 0.0
    %1872 = vmatpush1.msra.mxu0 0.0
    %1873 = vmatprep.subr.mxu0 0.0
    %1874 = vmatpush1.msra.mxu0 0.0
    %1875 = vmatprep.subr.mxu0 0.0
    %1876 = vmatpush1.msra.mxu0 0.0
    %1877 = vmatprep.mubr.f32.mxu0 0.0
    %1878 = vmatmul.mubr.f32.gmra.mrb[0].mxu0 %v1812
    %v1879 = vpop.f32.mrb[0].mxu0
    %v1880 = vadd.f32 0.0, %v1879
    %v1881 = vpop.f32.mrb[0].mxu0
    %v1882 = vadd.f32 0.0, %v1881
    %1883 = vdwg.mxu0
    %1884 = vmatprep.subr.mxu0 %v478
    %1885 = vmatpush1.msra.mxu0 %v477
    %1886 = vmatprep.subr.mxu0 %v482
    %1887 = vmatpush1.msra.mxu0 %v481
    %1888 = vmatprep.subr.mxu0 %v486
    %1889 = vmatpush1.msra.mxu0 %v485
    %1890 = vmatprep.subr.mxu0 %v490
    %1891 = vmatpush1.msra.mxu0 %v489
    %1892 = vmatprep.subr.mxu0 %v494
    %1893 = vmatpush1.msra.mxu0 %v493
    %1894 = vmatprep.subr.mxu0 %v498
    %1895 = vmatpush1.msra.mxu0 %v497
    %1896 = vmatprep.subr.mxu0 %v502
    %1897 = vmatpush1.msra.mxu0 %v501
    %1898 = vmatprep.subr.mxu0 %v506
    %1899 = vmatpush1.msra.mxu0 %v505
    %1900 = vmatprep.subr.mxu0 %v510
    %1901 = vmatpush1.msra.mxu0 %v509
    %1902 = vmatprep.subr.mxu0 %v514
    %1903 = vmatpush1.msra.mxu0 %v513
    %1904 = vmatprep.subr.mxu0 %v518
    %1905 = vmatpush1.msra.mxu0 %v517
    %1906 = vmatprep.subr.mxu0 %v522
    %1907 = vmatpush1.msra.mxu0 %v521
    %1908 = vmatprep.subr.mxu0 %v526
    %1909 = vmatpush1.msra.mxu0 %v525
    %1910 = vmatprep.subr.mxu0 %v530
    %1911 = vmatpush1.msra.mxu0 %v529
    %1912 = vmatprep.subr.mxu0 %v534
    %1913 = vmatpush1.msra.mxu0 %v533
    %1914 = vmatprep.subr.mxu0 %v538
    %1915 = vmatpush1.msra.mxu0 %v537
    %1916 = vmatprep.subr.mxu0 0.0
    %1917 = vmatpush1.msra.mxu0 0.0
    %1918 = vmatprep.subr.mxu0 0.0
    %1919 = vmatpush1.msra.mxu0 0.0
    %1920 = vmatprep.subr.mxu0 0.0
    %1921 = vmatpush1.msra.mxu0 0.0
    %1922 = vmatprep.subr.mxu0 0.0
    %1923 = vmatpush1.msra.mxu0 0.0
    %1924 = vmatprep.subr.mxu0 0.0
    %1925 = vmatpush1.msra.mxu0 0.0
    %1926 = vmatprep.subr.mxu0 0.0
    %1927 = vmatpush1.msra.mxu0 0.0
    %1928 = vmatprep.subr.mxu0 0.0
    %1929 = vmatpush1.msra.mxu0 0.0
    %1930 = vmatprep.subr.mxu0 0.0
    %1931 = vmatpush1.msra.mxu0 0.0
    %1932 = vmatprep.subr.mxu0 0.0
    %1933 = vmatpush1.msra.mxu0 0.0
    %1934 = vmatprep.subr.mxu0 0.0
    %1935 = vmatpush1.msra.mxu0 0.0
    %1936 = vmatprep.subr.mxu0 0.0
    %1937 = vmatpush1.msra.mxu0 0.0
    %1938 = vmatprep.subr.mxu0 0.0
    %1939 = vmatpush1.msra.mxu0 0.0
    %1940 = vmatprep.subr.mxu0 0.0
    %1941 = vmatpush1.msra.mxu0 0.0
    %1942 = vmatprep.subr.mxu0 0.0
    %1943 = vmatpush1.msra.mxu0 0.0
    %1944 = vmatprep.subr.mxu0 0.0
    %1945 = vmatpush1.msra.mxu0 0.0
    %1946 = vmatprep.subr.mxu0 0.0
    %1947 = vmatpush1.msra.mxu0 0.0
    %1948 = vmatprep.mubr.f32.mxu0 0.0
    %1949 = vmatmul.mubr.f32.gmra.mrb[0].mxu0 %v1812
    %v1950 = vpop.f32.mrb[0].mxu0
    %v1951 = vadd.f32 0.0, %v1950
    %v1952 = vpop.f32.mrb[0].mxu0
    %v1953 = vadd.f32 0.0, %v1952
    %1954 = vdwg.mxu0
    %v1959 = vrot.slane %v1880, 6
    %v1960 = vrot.slane %v1882, 6
    %v1961 = vrot.slane %v1951, 6
    %v1962 = vrot.slane %v1953, 6
    %v1967 = vadd.f32 %v823, %v1959
    %v1968 = vadd.f32 %v825, %v1960
    %v1969 = vadd.f32 %v900, %v1961
    %v1970 = vadd.f32 %v902, %v1962
    %v1971 = vxor.u32 %v1967, 2147483648
    %v1972 = vmul.f32 %v1971, 1.442695
    %v1973 = vpow.pop %v1972
    %v1974 = vadd.f32 %v1973, 1.0
    %v1975 = vrcp.pop %v1974
    %v1976 = vmul.f32 1.0, %v1975
    %v1977 = vxor.u32 %v1968, 2147483648
    %v1978 = vmul.f32 %v1977, 1.442695
    %v1979 = vpow.pop %v1978
    %v1980 = vadd.f32 %v1979, 1.0
    %v1981 = vrcp.pop %v1980
    %v1982 = vmul.f32 1.0, %v1981
    %v1983 = vtanh.pop %v1969
    %v1984 = vxor.u32 %v1970, 2147483648
    %v1985 = vmul.f32 %v1984, 1.442695
    %v1986 = vpow.pop %v1985
    %v1987 = vadd.f32 %v1986, 1.0
    %v1988 = vrcp.pop %v1987
    %v1989 = vmul.f32 1.0, %v1988
    %v1991 = vrot.slane %v1810, 6
    %v1993 = vmul.f32 %v1982, %v1991
    %v1994 = vmul.f32 %v1976, %v1983
    %v1995 = vadd.f32 %v1993, %v1994
    %v1996 = vtanh.pop %v1995
    %v1997 = vmul.f32 %v1989, %v1996
    %v1999 = vrot.slane %v1997, 2
    %2001 = vmatprep.subr.mxu0 %v476
    %2002 = vmatpush1.msra.mxu0 %v475
    %2003 = vmatprep.subr.mxu0 %v480
    %2004 = vmatpush1.msra.mxu0 %v479
    %2005 = vmatprep.subr.mxu0 %v484
    %2006 = vmatpush1.msra.mxu0 %v483
    %2007 = vmatprep.subr.mxu0 %v488
    %2008 = vmatpush1.msra.mxu0 %v487
    %2009 = vmatprep.subr.mxu0 %v492
    %2010 = vmatpush1.msra.mxu0 %v491
    %2011 = vmatprep.subr.mxu0 %v496
    %2012 = vmatpush1.msra.mxu0 %v495
    %2013 = vmatprep.subr.mxu0 %v500
    %2014 = vmatpush1.msra.mxu0 %v499
    %2015 = vmatprep.subr.mxu0 %v504
    %2016 = vmatpush1.msra.mxu0 %v503
    %2017 = vmatprep.subr.mxu0 %v508
    %2018 = vmatpush1.msra.mxu0 %v507
    %2019 = vmatprep.subr.mxu0 %v512
    %2020 = vmatpush1.msra.mxu0 %v511
    %2021 = vmatprep.subr.mxu0 %v516
    %2022 = vmatpush1.msra.mxu0 %v515
    %2023 = vmatprep.subr.mxu0 %v520
    %2024 = vmatpush1.msra.mxu0 %v519
    %2025 = vmatprep.subr.mxu0 %v524
    %2026 = vmatpush1.msra.mxu0 %v523
    %2027 = vmatprep.subr.mxu0 %v528
    %2028 = vmatpush1.msra.mxu0 %v527
    %2029 = vmatprep.subr.mxu0 %v532
    %2030 = vmatpush1.msra.mxu0 %v531
    %2031 = vmatprep.subr.mxu0 %v536
    %2032 = vmatpush1.msra.mxu0 %v535
    %2033 = vmatprep.subr.mxu0 0.0
    %2034 = vmatpush1.msra.mxu0 0.0
    %2035 = vmatprep.subr.mxu0 0.0
    %2036 = vmatpush1.msra.mxu0 0.0
    %2037 = vmatprep.subr.mxu0 0.0
    %2038 = vmatpush1.msra.mxu0 0.0
    %2039 = vmatprep.subr.mxu0 0.0
    %2040 = vmatpush1.msra.mxu0 0.0
    %2041 = vmatprep.subr.mxu0 0.0
    %2042 = vmatpush1.msra.mxu0 0.0
    %2043 = vmatprep.subr.mxu0 0.0
    %2044 = vmatpush1.msra.mxu0 0.0
    %2045 = vmatprep.subr.mxu0 0.0
    %2046 = vmatpush1.msra.mxu0 0.0
    %2047 = vmatprep.subr.mxu0 0.0
    %2048 = vmatpush1.msra.mxu0 0.0
    %2049 = vmatprep.subr.mxu0 0.0
    %2050 = vmatpush1.msra.mxu0 0.0
    %2051 = vmatprep.subr.mxu0 0.0
    %2052 = vmatpush1.msra.mxu0 0.0
    %2053 = vmatprep.subr.mxu0 0.0
    %2054 = vmatpush1.msra.mxu0 0.0
    %2055 = vmatprep.subr.mxu0 0.0
    %2056 = vmatpush1.msra.mxu0 0.0
    %2057 = vmatprep.subr.mxu0 0.0
    %2058 = vmatpush1.msra.mxu0 0.0
    %2059 = vmatprep.subr.mxu0 0.0
    %2060 = vmatpush1.msra.mxu0 0.0
    %2061 = vmatprep.subr.mxu0 0.0
    %2062 = vmatpush1.msra.mxu0 0.0
    %2063 = vmatprep.subr.mxu0 0.0
    %2064 = vmatpush1.msra.mxu0 0.0
    %2065 = vmatprep.mubr.f32.mxu0 0.0
    %2066 = vmatmul.mubr.f32.gmra.mrb[0].mxu0 %v1999
    %v2067 = vpop.f32.mrb[0].mxu0
    %v2068 = vadd.f32 0.0, %v2067
    %v2069 = vpop.f32.mrb[0].mxu0
    %v2070 = vadd.f32 0.0, %v2069
    %2071 = vdwg.mxu0
    %2072 = vmatprep.subr.mxu0 %v478
    %2073 = vmatpush1.msra.mxu0 %v477
    %2074 = vmatprep.subr.mxu0 %v482
    %2075 = vmatpush1.msra.mxu0 %v481
    %2076 = vmatprep.subr.mxu0 %v486
    %2077 = vmatpush1.msra.mxu0 %v485
    %2078 = vmatprep.subr.mxu0 %v490
    %2079 = vmatpush1.msra.mxu0 %v489
    %2080 = vmatprep.subr.mxu0 %v494
    %2081 = vmatpush1.msra.mxu0 %v493
    %2082 = vmatprep.subr.mxu0 %v498
    %2083 = vmatpush1.msra.mxu0 %v497
    %2084 = vmatprep.subr.mxu0 %v502
    %2085 = vmatpush1.msra.mxu0 %v501
    %2086 = vmatprep.subr.mxu0 %v506
    %2087 = vmatpush1.msra.mxu0 %v505
    %2088 = vmatprep.subr.mxu0 %v510
    %2089 = vmatpush1.msra.mxu0 %v509
    %2090 = vmatprep.subr.mxu0 %v514
    %2091 = vmatpush1.msra.mxu0 %v513
    %2092 = vmatprep.subr.mxu0 %v518
    %2093 = vmatpush1.msra.mxu0 %v517
    %2094 = vmatprep.subr.mxu0 %v522
    %2095 = vmatpush1.msra.mxu0 %v521
    %2096 = vmatprep.subr.mxu0 %v526
    %2097 = vmatpush1.msra.mxu0 %v525
    %2098 = vmatprep.subr.mxu0 %v530
    %2099 = vmatpush1.msra.mxu0 %v529
    %2100 = vmatprep.subr.mxu0 %v534
    %2101 = vmatpush1.msra.mxu0 %v533
    %2102 = vmatprep.subr.mxu0 %v538
    %2103 = vmatpush1.msra.mxu0 %v537
    %2104 = vmatprep.subr.mxu0 0.0
    %2105 = vmatpush1.msra.mxu0 0.0
    %2106 = vmatprep.subr.mxu0 0.0
    %2107 = vmatpush1.msra.mxu0 0.0
    %2108 = vmatprep.subr.mxu0 0.0
    %2109 = vmatpush1.msra.mxu0 0.0
    %2110 = vmatprep.subr.mxu0 0.0
    %2111 = vmatpush1.msra.mxu0 0.0
    %2112 = vmatprep.subr.mxu0 0.0
    %2113 = vmatpush1.msra.mxu0 0.0
    %2114 = vmatprep.subr.mxu0 0.0
    %2115 = vmatpush1.msra.mxu0 0.0
    %2116 = vmatprep.subr.mxu0 0.0
    %2117 = vmatpush1.msra.mxu0 0.0
    %2118 = vmatprep.subr.mxu0 0.0
    %2119 = vmatpush1.msra.mxu0 0.0
    %2120 = vmatprep.subr.mxu0 0.0
    %2121 = vmatpush1.msra.mxu0 0.0
    %2122 = vmatprep.subr.mxu0 0.0
    %2123 = vmatpush1.msra.mxu0 0.0
    %2124 = vmatprep.subr.mxu0 0.0
    %2125 = vmatpush1.msra.mxu0 0.0
    %2126 = vmatprep.subr.mxu0 0.0
    %2127 = vmatpush1.msra.mxu0 0.0
    %2128 = vmatprep.subr.mxu0 0.0
    %2129 = vmatpush1.msra.mxu0 0.0
    %2130 = vmatprep.subr.mxu0 0.0
    %2131 = vmatpush1.msra.mxu0 0.0
    %2132 = vmatprep.subr.mxu0 0.0
    %2133 = vmatpush1.msra.mxu0 0.0
    %2134 = vmatprep.subr.mxu0 0.0
    %2135 = vmatpush1.msra.mxu0 0.0
    %2136 = vmatprep.mubr.f32.mxu0 0.0
    %2137 = vmatmul.mubr.f32.gmra.mrb[0].mxu0 %v1999
    %v2138 = vpop.f32.mrb[0].mxu0
    %v2139 = vadd.f32 0.0, %v2138
    %v2140 = vpop.f32.mrb[0].mxu0
    %v2141 = vadd.f32 0.0, %v2140
    %2142 = vdwg.mxu0
    %v2147 = vrot.slane %v2068, 4
    %v2148 = vrot.slane %v2070, 4
    %v2149 = vrot.slane %v2139, 4
    %v2150 = vrot.slane %v2141, 4
    %v2155 = vadd.f32 %v823, %v2147
    %v2156 = vadd.f32 %v825, %v2148
    %v2157 = vadd.f32 %v900, %v2149
    %v2158 = vadd.f32 %v902, %v2150
    %v2159 = vxor.u32 %v2155, 2147483648
    %v2160 = vmul.f32 %v2159, 1.442695
    %v2161 = vpow.pop %v2160
    %v2162 = vadd.f32 %v2161, 1.0
    %v2163 = vrcp.pop %v2162
    %v2164 = vmul.f32 1.0, %v2163
    %v2165 = vxor.u32 %v2156, 2147483648
    %v2166 = vmul.f32 %v2165, 1.442695
    %v2167 = vpow.pop %v2166
    %v2168 = vadd.f32 %v2167, 1.0
    %v2169 = vrcp.pop %v2168
    %v2170 = vmul.f32 1.0, %v2169
    %v2171 = vtanh.pop %v2157
    %v2172 = vxor.u32 %v2158, 2147483648
    %v2173 = vmul.f32 %v2172, 1.442695
    %v2174 = vpow.pop %v2173
    %v2175 = vadd.f32 %v2174, 1.0
    %v2176 = vrcp.pop %v2175
    %v2177 = vmul.f32 1.0, %v2176
    %v2179 = vrot.slane %v1995, 6
    %v2181 = vmul.f32 %v2170, %v2179
    %v2182 = vmul.f32 %v2164, %v2171
    %v2183 = vadd.f32 %v2181, %v2182
    %v2184 = vtanh.pop %v2183
    %v2185 = vmul.f32 %v2177, %v2184
    %v2187 = vrot.slane %v2185, 4
    %2189 = vmatprep.subr.mxu0 %v476
    %2190 = vmatpush1.msra.mxu0 %v475
    %2191 = vmatprep.subr.mxu0 %v480
    %2192 = vmatpush1.msra.mxu0 %v479
    %2193 = vmatprep.subr.mxu0 %v484
    %2194 = vmatpush1.msra.mxu0 %v483
    %2195 = vmatprep.subr.mxu0 %v488
    %2196 = vmatpush1.msra.mxu0 %v487
    %2197 = vmatprep.subr.mxu0 %v492
    %2198 = vmatpush1.msra.mxu0 %v491
    %2199 = vmatprep.subr.mxu0 %v496
    %2200 = vmatpush1.msra.mxu0 %v495
    %2201 = vmatprep.subr.mxu0 %v500
    %2202 = vmatpush1.msra.mxu0 %v499
    %2203 = vmatprep.subr.mxu0 %v504
    %2204 = vmatpush1.msra.mxu0 %v503
    %2205 = vmatprep.subr.mxu0 %v508
    %2206 = vmatpush1.msra.mxu0 %v507
    %2207 = vmatprep.subr.mxu0 %v512
    %2208 = vmatpush1.msra.mxu0 %v511
    %2209 = vmatprep.subr.mxu0 %v516
    %2210 = vmatpush1.msra.mxu0 %v515
    %2211 = vmatprep.subr.mxu0 %v520
    %2212 = vmatpush1.msra.mxu0 %v519
    %2213 = vmatprep.subr.mxu0 %v524
    %2214 = vmatpush1.msra.mxu0 %v523
    %2215 = vmatprep.subr.mxu0 %v528
    %2216 = vmatpush1.msra.mxu0 %v527
    %2217 = vmatprep.subr.mxu0 %v532
    %2218 = vmatpush1.msra.mxu0 %v531
    %2219 = vmatprep.subr.mxu0 %v536
    %2220 = vmatpush1.msra.mxu0 %v535
    %2221 = vmatprep.subr.mxu0 0.0
    %2222 = vmatpush1.msra.mxu0 0.0
    %2223 = vmatprep.subr.mxu0 0.0
    %2224 = vmatpush1.msra.mxu0 0.0
    %2225 = vmatprep.subr.mxu0 0.0
    %2226 = vmatpush1.msra.mxu0 0.0
    %2227 = vmatprep.subr.mxu0 0.0
    %2228 = vmatpush1.msra.mxu0 0.0
    %2229 = vmatprep.subr.mxu0 0.0
    %2230 = vmatpush1.msra.mxu0 0.0
    %2231 = vmatprep.subr.mxu0 0.0
    %2232 = vmatpush1.msra.mxu0 0.0
    %2233 = vmatprep.subr.mxu0 0.0
    %2234 = vmatpush1.msra.mxu0 0.0
    %2235 = vmatprep.subr.mxu0 0.0
    %2236 = vmatpush1.msra.mxu0 0.0
    %2237 = vmatprep.subr.mxu0 0.0
    %2238 = vmatpush1.msra.mxu0 0.0
    %2239 = vmatprep.subr.mxu0 0.0
    %2240 = vmatpush1.msra.mxu0 0.0
    %2241 = vmatprep.subr.mxu0 0.0
    %2242 = vmatpush1.msra.mxu0 0.0
    %2243 = vmatprep.subr.mxu0 0.0
    %2244 = vmatpush1.msra.mxu0 0.0
    %2245 = vmatprep.subr.mxu0 0.0
    %2246 = vmatpush1.msra.mxu0 0.0
    %2247 = vmatprep.subr.mxu0 0.0
    %2248 = vmatpush1.msra.mxu0 0.0
    %2249 = vmatprep.subr.mxu0 0.0
    %2250 = vmatpush1.msra.mxu0 0.0
    %2251 = vmatprep.subr.mxu0 0.0
    %2252 = vmatpush1.msra.mxu0 0.0
    %2253 = vmatprep.mubr.f32.mxu0 0.0
    %2254 = vmatmul.mubr.f32.gmra.mrb[0].mxu0 %v2187
    %v2255 = vpop.f32.mrb[0].mxu0
    %v2256 = vadd.f32 0.0, %v2255
    %v2257 = vpop.f32.mrb[0].mxu0
    %v2258 = vadd.f32 0.0, %v2257
    %2259 = vdwg.mxu0
    %2260 = vmatprep.subr.mxu0 %v478
    %2261 = vmatpush1.msra.mxu0 %v477
    %2262 = vmatprep.subr.mxu0 %v482
    %2263 = vmatpush1.msra.mxu0 %v481
    %2264 = vmatprep.subr.mxu0 %v486
    %2265 = vmatpush1.msra.mxu0 %v485
    %2266 = vmatprep.subr.mxu0 %v490
    %2267 = vmatpush1.msra.mxu0 %v489
    %2268 = vmatprep.subr.mxu0 %v494
    %2269 = vmatpush1.msra.mxu0 %v493
    %2270 = vmatprep.subr.mxu0 %v498
    %2271 = vmatpush1.msra.mxu0 %v497
    %2272 = vmatprep.subr.mxu0 %v502
    %2273 = vmatpush1.msra.mxu0 %v501
    %2274 = vmatprep.subr.mxu0 %v506
    %2275 = vmatpush1.msra.mxu0 %v505
    %2276 = vmatprep.subr.mxu0 %v510
    %2277 = vmatpush1.msra.mxu0 %v509
    %2278 = vmatprep.subr.mxu0 %v514
    %2279 = vmatpush1.msra.mxu0 %v513
    %2280 = vmatprep.subr.mxu0 %v518
    %2281 = vmatpush1.msra.mxu0 %v517
    %2282 = vmatprep.subr.mxu0 %v522
    %2283 = vmatpush1.msra.mxu0 %v521
    %2284 = vmatprep.subr.mxu0 %v526
    %2285 = vmatpush1.msra.mxu0 %v525
    %2286 = vmatprep.subr.mxu0 %v530
    %2287 = vmatpush1.msra.mxu0 %v529
    %2288 = vmatprep.subr.mxu0 %v534
    %2289 = vmatpush1.msra.mxu0 %v533
    %2290 = vmatprep.subr.mxu0 %v538
    %2291 = vmatpush1.msra.mxu0 %v537
    %2292 = vmatprep.subr.mxu0 0.0
    %2293 = vmatpush1.msra.mxu0 0.0
    %2294 = vmatprep.subr.mxu0 0.0
    %2295 = vmatpush1.msra.mxu0 0.0
    %2296 = vmatprep.subr.mxu0 0.0
    %2297 = vmatpush1.msra.mxu0 0.0
    %2298 = vmatprep.subr.mxu0 0.0
    %2299 = vmatpush1.msra.mxu0 0.0
    %2300 = vmatprep.subr.mxu0 0.0
    %2301 = vmatpush1.msra.mxu0 0.0
    %2302 = vmatprep.subr.mxu0 0.0
    %2303 = vmatpush1.msra.mxu0 0.0
    %2304 = vmatprep.subr.mxu0 0.0
    %2305 = vmatpush1.msra.mxu0 0.0
    %2306 = vmatprep.subr.mxu0 0.0
    %2307 = vmatpush1.msra.mxu0 0.0
    %2308 = vmatprep.subr.mxu0 0.0
    %2309 = vmatpush1.msra.mxu0 0.0
    %2310 = vmatprep.subr.mxu0 0.0
    %2311 = vmatpush1.msra.mxu0 0.0
    %2312 = vmatprep.subr.mxu0 0.0
    %2313 = vmatpush1.msra.mxu0 0.0
    %2314 = vmatprep.subr.mxu0 0.0
    %2315 = vmatpush1.msra.mxu0 0.0
    %2316 = vmatprep.subr.mxu0 0.0
    %2317 = vmatpush1.msra.mxu0 0.0
    %2318 = vmatprep.subr.mxu0 0.0
    %2319 = vmatpush1.msra.mxu0 0.0
    %2320 = vmatprep.subr.mxu0 0.0
    %2321 = vmatpush1.msra.mxu0 0.0
    %2322 = vmatprep.subr.mxu0 0.0
    %2323 = vmatpush1.msra.mxu0 0.0
    %2324 = vmatprep.mubr.f32.mxu0 0.0
    %2325 = vmatmul.mubr.f32.gmra.mrb[0].mxu0 %v2187
    %v2326 = vpop.f32.mrb[0].mxu0
    %v2327 = vadd.f32 0.0, %v2326
    %v2328 = vpop.f32.mrb[0].mxu0
    %v2329 = vadd.f32 0.0, %v2328
    %2330 = vdwg.mxu0
    %v2335 = vrot.slane %v2256, 2
    %v2336 = vrot.slane %v2258, 2
    %v2337 = vrot.slane %v2327, 2
    %v2338 = vrot.slane %v2329, 2
    %v2343 = vadd.f32 %v823, %v2335
    %v2344 = vadd.f32 %v825, %v2336
    %v2345 = vadd.f32 %v900, %v2337
    %v2346 = vadd.f32 %v902, %v2338
    %v2347 = vxor.u32 %v2343, 2147483648
    %v2348 = vmul.f32 %v2347, 1.442695
    %v2349 = vpow.pop %v2348
    %v2350 = vadd.f32 %v2349, 1.0
    %v2351 = vrcp.pop %v2350
    %v2352 = vmul.f32 1.0, %v2351
    %v2353 = vxor.u32 %v2344, 2147483648
    %v2354 = vmul.f32 %v2353, 1.442695
    %v2355 = vpow.pop %v2354
    %v2356 = vadd.f32 %v2355, 1.0
    %v2357 = vrcp.pop %v2356
    %v2358 = vmul.f32 1.0, %v2357
    %v2359 = vtanh.pop %v2345
    %v2360 = vxor.u32 %v2346, 2147483648
    %v2361 = vmul.f32 %v2360, 1.442695
    %v2362 = vpow.pop %v2361
    %v2363 = vadd.f32 %v2362, 1.0
    %v2364 = vrcp.pop %v2363
    %v2365 = vmul.f32 1.0, %v2364
    %v2367 = vrot.slane %v2183, 6
    %v2369 = vmul.f32 %v2358, %v2367
    %v2370 = vmul.f32 %v2352, %v2359
    %v2371 = vadd.f32 %v2369, %v2370
    %v2372 = vtanh.pop %v2371
    %v2373 = vmul.f32 %v2365, %v2372
    %2374 = vst [vmem:[%s17 - $0x6] sm:$0xc0] %v2373
    %2375 = vst [vmem:[%s18 - $0x6] sm:$0xc0] %v2371
    %vm2376 = vcmask 1041408
    %v2377 = vsel %vm2376, %v1075, %v1260
    %vm2378 = vcmask 1043456
    %v2379 = vsel %vm2378, %v2377, %v1448
    %vm2380 = vcmask 1045504
    %v2381 = vsel %vm2380, %v2379, %v1636
    %v2382 = vsel %vm2376, %v1812, %v1997
    %v2383 = vsel %vm2378, %v2382, %v2185
    %v2384 = vsel %vm2380, %v2383, %v2373
    %v2386 = vlaneseq
    %v2387 = vshrl.u32 %v2386, 7
    %v2388 = vsub.s32 0, %v2387
    %v2389 = vrot.slane %v668, %v2388
    %v2390 = vlaneseq
    %v2391 = vshrl.u32 %v2390, 7
    %v2392 = vsub.s32 1, %v2391
    %v2393 = vrot.slane %v668, %v2392
    %v2394 = vlaneseq
    %v2395 = vshrl.u32 %v2394, 7
    %v2396 = vsub.s32 2, %v2395
    %v2397 = vrot.slane %v668, %v2396
    %v2398 = vlaneseq
    %v2399 = vshrl.u32 %v2398, 7
    %v2400 = vsub.s32 3, %v2399
    %v2401 = vrot.slane %v668, %v2400
    %2406 = vmatprep.subr.mxu0 %v348
    %2407 = vmatpush1.msra.mxu0 %v347
    %2408 = vmatprep.subr.mxu0 %v352
    %2409 = vmatpush1.msra.mxu0 %v351
    %2410 = vmatprep.subr.mxu0 %v356
    %2411 = vmatpush1.msra.mxu0 %v355
    %2412 = vmatprep.subr.mxu0 %v360
    %2413 = vmatpush1.msra.mxu0 %v359
    %2414 = vmatprep.subr.mxu0 %v364
    %2415 = vmatpush1.msra.mxu0 %v363
    %2416 = vmatprep.subr.mxu0 %v368
    %2417 = vmatpush1.msra.mxu0 %v367
    %2418 = vmatprep.subr.mxu0 %v372
    %2419 = vmatpush1.msra.mxu0 %v371
    %2420 = vmatprep.subr.mxu0 %v376
    %2421 = vmatpush1.msra.mxu0 %v375
    %2422 = vmatprep.subr.mxu0 %v380
    %2423 = vmatpush1.msra.mxu0 %v379
    %2424 = vmatprep.subr.mxu0 %v384
    %2425 = vmatpush1.msra.mxu0 %v383
    %2426 = vmatprep.subr.mxu0 %v388
    %2427 = vmatpush1.msra.mxu0 %v387
    %2428 = vmatprep.subr.mxu0 %v392
    %2429 = vmatpush1.msra.mxu0 %v391
    %2430 = vmatprep.subr.mxu0 %v396
    %2431 = vmatpush1.msra.mxu0 %v395
    %2432 = vmatprep.subr.mxu0 %v400
    %2433 = vmatpush1.msra.mxu0 %v399
    %2434 = vmatprep.subr.mxu0 %v404
    %2435 = vmatpush1.msra.mxu0 %v403
    %2436 = vmatprep.subr.mxu0 %v408
    %2437 = vmatpush1.msra.mxu0 %v407
    %2438 = vmatprep.subr.mxu0 0.0
    %2439 = vmatpush1.msra.mxu0 0.0
    %2440 = vmatprep.subr.mxu0 0.0
    %2441 = vmatpush1.msra.mxu0 0.0
    %2442 = vmatprep.subr.mxu0 0.0
    %2443 = vmatpush1.msra.mxu0 0.0
    %2444 = vmatprep.subr.mxu0 0.0
    %2445 = vmatpush1.msra.mxu0 0.0
    %2446 = vmatprep.subr.mxu0 0.0
    %2447 = vmatpush1.msra.mxu0 0.0
    %2448 = vmatprep.subr.mxu0 0.0
    %2449 = vmatpush1.msra.mxu0 0.0
    %2450 = vmatprep.subr.mxu0 0.0
    %2451 = vmatpush1.msra.mxu0 0.0
    %2452 = vmatprep.subr.mxu0 0.0
    %2453 = vmatpush1.msra.mxu0 0.0
    %2454 = vmatprep.subr.mxu0 0.0
    %2455 = vmatpush1.msra.mxu0 0.0
    %2456 = vmatprep.subr.mxu0 0.0
    %2457 = vmatpush1.msra.mxu0 0.0
    %2458 = vmatprep.subr.mxu0 0.0
    %2459 = vmatpush1.msra.mxu0 0.0
    %2460 = vmatprep.subr.mxu0 0.0
    %2461 = vmatpush1.msra.mxu0 0.0
    %2462 = vmatprep.subr.mxu0 0.0
    %2463 = vmatpush1.msra.mxu0 0.0
    %2464 = vmatprep.subr.mxu0 0.0
    %2465 = vmatpush1.msra.mxu0 0.0
    %2466 = vmatprep.subr.mxu0 0.0
    %2467 = vmatpush1.msra.mxu0 0.0
    %2468 = vmatprep.subr.mxu0 0.0
    %2469 = vmatpush1.msra.mxu0 0.0
    %2470 = vmatprep.mubr.f32.mxu0 0.0
    %2471 = vmatmul.mubr.f32.gmra.mrb[0].mxu0 %v2381
    %v2472 = vpop.f32.mrb[0].mxu0
    %v2473 = vadd.f32 %v2389, %v2472
    %v2474 = vpop.f32.mrb[0].mxu0
    %v2475 = vadd.f32 %v2393, %v2474
    %2476 = vmatprep.mubr.f32.mxu0 0.0
    %2477 = vmatmul.mubr.f32.gmra.mrb[0].mxu0 %v2384
    %v2478 = vpop.f32.mrb[0].mxu0
    %v2479 = vadd.f32 %v2389, %v2478
    %v2480 = vpop.f32.mrb[0].mxu0
    %v2481 = vadd.f32 %v2393, %v2480
    %2482 = vdwg.mxu0
    %2483 = vmatprep.subr.mxu0 %v350
    %2484 = vmatpush1.msra.mxu0 %v349
    %2485 = vmatprep.subr.mxu0 %v354
    %2486 = vmatpush1.msra.mxu0 %v353
    %2487 = vmatprep.subr.mxu0 %v358
    %2488 = vmatpush1.msra.mxu0 %v357
    %2489 = vmatprep.subr.mxu0 %v362
    %2490 = vmatpush1.msra.mxu0 %v361
    %2491 = vmatprep.subr.mxu0 %v366
    %2492 = vmatpush1.msra.mxu0 %v365
    %2493 = vmatprep.subr.mxu0 %v370
    %2494 = vmatpush1.msra.mxu0 %v369
    %2495 = vmatprep.subr.mxu0 %v374
    %2496 = vmatpush1.msra.mxu0 %v373
    %2497 = vmatprep.subr.mxu0 %v378
    %2498 = vmatpush1.msra.mxu0 %v377
    %2499 = vmatprep.subr.mxu0 %v382
    %2500 = vmatpush1.msra.mxu0 %v381
    %2501 = vmatprep.subr.mxu0 %v386
    %2502 = vmatpush1.msra.mxu0 %v385
    %2503 = vmatprep.subr.mxu0 %v390
    %2504 = vmatpush1.msra.mxu0 %v389
    %2505 = vmatprep.subr.mxu0 %v394
    %2506 = vmatpush1.msra.mxu0 %v393
    %2507 = vmatprep.subr.mxu0 %v398
    %2508 = vmatpush1.msra.mxu0 %v397
    %2509 = vmatprep.subr.mxu0 %v402
    %2510 = vmatpush1.msra.mxu0 %v401
    %2511 = vmatprep.subr.mxu0 %v406
    %2512 = vmatpush1.msra.mxu0 %v405
    %2513 = vmatprep.subr.mxu0 %v410
    %2514 = vmatpush1.msra.mxu0 %v409
    %2515 = vmatprep.subr.mxu0 0.0
    %2516 = vmatpush1.msra.mxu0 0.0
    %2517 = vmatprep.subr.mxu0 0.0
    %2518 = vmatpush1.msra.mxu0 0.0
    %2519 = vmatprep.subr.mxu0 0.0
    %2520 = vmatpush1.msra.mxu0 0.0
    %2521 = vmatprep.subr.mxu0 0.0
    %2522 = vmatpush1.msra.mxu0 0.0
    %2523 = vmatprep.subr.mxu0 0.0
    %2524 = vmatpush1.msra.mxu0 0.0
    %2525 = vmatprep.subr.mxu0 0.0
    %2526 = vmatpush1.msra.mxu0 0.0
    %2527 = vmatprep.subr.mxu0 0.0
    %2528 = vmatpush1.msra.mxu0 0.0
    %2529 = vmatprep.subr.mxu0 0.0
    %2530 = vmatpush1.msra.mxu0 0.0
    %2531 = vmatprep.subr.mxu0 0.0
    %2532 = vmatpush1.msra.mxu0 0.0
    %2533 = vmatprep.subr.mxu0 0.0
    %2534 = vmatpush1.msra.mxu0 0.0
    %2535 = vmatprep.subr.mxu0 0.0
    %2536 = vmatpush1.msra.mxu0 0.0
    %2537 = vmatprep.subr.mxu0 0.0
    %2538 = vmatpush1.msra.mxu0 0.0
    %2539 = vmatprep.subr.mxu0 0.0
    %2540 = vmatpush1.msra.mxu0 0.0
    %2541 = vmatprep.subr.mxu0 0.0
    %2542 = vmatpush1.msra.mxu0 0.0
    %2543 = vmatprep.subr.mxu0 0.0
    %2544 = vmatpush1.msra.mxu0 0.0
    %2545 = vmatprep.subr.mxu0 0.0
    %2546 = vmatpush1.msra.mxu0 0.0
    %2547 = vmatprep.mubr.f32.mxu0 0.0
    %2548 = vmatmul.mubr.f32.gmra.mrb[0].mxu0 %v2381
    %v2549 = vpop.f32.mrb[0].mxu0
    %v2550 = vadd.f32 %v2397, %v2549
    %v2551 = vpop.f32.mrb[0].mxu0
    %v2552 = vadd.f32 %v2401, %v2551
    %2553 = vmatprep.mubr.f32.mxu0 0.0
    %2554 = vmatmul.mubr.f32.gmra.mrb[0].mxu0 %v2384
    %v2555 = vpop.f32.mrb[0].mxu0
    %v2556 = vadd.f32 %v2397, %v2555
    %v2557 = vpop.f32.mrb[0].mxu0
    %v2558 = vadd.f32 %v2401, %v2557
    %2559 = vdwg.mxu0
    %s2560 = scalar_lea.vmem %s1, 2
    %v2561 = vld [vmem:[%s2560] sm:$0x3]
    %s2562 = scalar_lea.vmem %s2, 2
    %v2563 = vld [vmem:[%s2562] sm:$0x3]
    %2564 = vmatprep.subr.mxu0 %v540
    %2565 = vmatpush1.msra.mxu0 %v539
    %2566 = vmatprep.subr.mxu0 %v544
    %2567 = vmatpush1.msra.mxu0 %v543
    %2568 = vmatprep.subr.mxu0 %v548
    %2569 = vmatpush1.msra.mxu0 %v547
    %2570 = vmatprep.subr.mxu0 %v552
    %2571 = vmatpush1.msra.mxu0 %v551
    %2572 = vmatprep.subr.mxu0 %v556
    %2573 = vmatpush1.msra.mxu0 %v555
    %2574 = vmatprep.subr.mxu0 %v560
    %2575 = vmatpush1.msra.mxu0 %v559
    %2576 = vmatprep.subr.mxu0 %v564
    %2577 = vmatpush1.msra.mxu0 %v563
    %2578 = vmatprep.subr.mxu0 %v568
    %2579 = vmatpush1.msra.mxu0 %v567
    %2580 = vmatprep.subr.mxu0 %v572
    %2581 = vmatpush1.msra.mxu0 %v571
    %2582 = vmatprep.subr.mxu0 %v576
    %2583 = vmatpush1.msra.mxu0 %v575
    %2584 = vmatprep.subr.mxu0 %v580
    %2585 = vmatpush1.msra.mxu0 %v579
    %2586 = vmatprep.subr.mxu0 %v584
    %2587 = vmatpush1.msra.mxu0 %v583
    %2588 = vmatprep.subr.mxu0 %v588
    %2589 = vmatpush1.msra.mxu0 %v587
    %2590 = vmatprep.subr.mxu0 %v592
    %2591 = vmatpush1.msra.mxu0 %v591
    %2592 = vmatprep.subr.mxu0 %v596
    %2593 = vmatpush1.msra.mxu0 %v595
    %2594 = vmatprep.subr.mxu0 %v600
    %2595 = vmatpush1.msra.mxu0 %v599
    %2596 = vmatprep.subr.mxu0 0.0
    %2597 = vmatpush1.msra.mxu0 0.0
    %2598 = vmatprep.subr.mxu0 0.0
    %2599 = vmatpush1.msra.mxu0 0.0
    %2600 = vmatprep.subr.mxu0 0.0
    %2601 = vmatpush1.msra.mxu0 0.0
    %2602 = vmatprep.subr.mxu0 0.0
    %2603 = vmatpush1.msra.mxu0 0.0
    %2604 = vmatprep.subr.mxu0 0.0
    %2605 = vmatpush1.msra.mxu0 0.0
    %2606 = vmatprep.subr.mxu0 0.0
    %2607 = vmatpush1.msra.mxu0 0.0
    %2608 = vmatprep.subr.mxu0 0.0
    %2609 = vmatpush1.msra.mxu0 0.0
    %2610 = vmatprep.subr.mxu0 0.0
    %2611 = vmatpush1.msra.mxu0 0.0
    %2612 = vmatprep.subr.mxu0 0.0
    %2613 = vmatpush1.msra.mxu0 0.0
    %2614 = vmatprep.subr.mxu0 0.0
    %2615 = vmatpush1.msra.mxu0 0.0
    %2616 = vmatprep.subr.mxu0 0.0
    %2617 = vmatpush1.msra.mxu0 0.0
    %2618 = vmatprep.subr.mxu0 0.0
    %2619 = vmatpush1.msra.mxu0 0.0
    %2620 = vmatprep.subr.mxu0 0.0
    %2621 = vmatpush1.msra.mxu0 0.0
    %2622 = vmatprep.subr.mxu0 0.0
    %2623 = vmatpush1.msra.mxu0 0.0
    %2624 = vmatprep.subr.mxu0 0.0
    %2625 = vmatpush1.msra.mxu0 0.0
    %2626 = vmatprep.subr.mxu0 0.0
    %2627 = vmatpush1.msra.mxu0 0.0
    %2628 = vmatprep.mubr.f32.mxu0 0.0
    %2629 = vmatmul.mubr.f32.gmra.mrb[0].mxu0 %v2561
    %v2630 = vpop.f32.mrb[0].mxu0
    %v2631 = vadd.f32 0.0, %v2630
    %v2632 = vpop.f32.mrb[0].mxu0
    %v2633 = vadd.f32 0.0, %v2632
    %2634 = vdwg.mxu0
    %2635 = vmatprep.subr.mxu0 %v542
    %2636 = vmatpush1.msra.mxu0 %v541
    %2637 = vmatprep.subr.mxu0 %v546
    %2638 = vmatpush1.msra.mxu0 %v545
    %2639 = vmatprep.subr.mxu0 %v550
    %2640 = vmatpush1.msra.mxu0 %v549
    %2641 = vmatprep.subr.mxu0 %v554
    %2642 = vmatpush1.msra.mxu0 %v553
    %2643 = vmatprep.subr.mxu0 %v558
    %2644 = vmatpush1.msra.mxu0 %v557
    %2645 = vmatprep.subr.mxu0 %v562
    %2646 = vmatpush1.msra.mxu0 %v561
    %2647 = vmatprep.subr.mxu0 %v566
    %2648 = vmatpush1.msra.mxu0 %v565
    %2649 = vmatprep.subr.mxu0 %v570
    %2650 = vmatpush1.msra.mxu0 %v569
    %2651 = vmatprep.subr.mxu0 %v574
    %2652 = vmatpush1.msra.mxu0 %v573
    %2653 = vmatprep.subr.mxu0 %v578
    %2654 = vmatpush1.msra.mxu0 %v577
    %2655 = vmatprep.subr.mxu0 %v582
    %2656 = vmatpush1.msra.mxu0 %v581
    %2657 = vmatprep.subr.mxu0 %v586
    %2658 = vmatpush1.msra.mxu0 %v585
    %2659 = vmatprep.subr.mxu0 %v590
    %2660 = vmatpush1.msra.mxu0 %v589
    %2661 = vmatprep.subr.mxu0 %v594
    %2662 = vmatpush1.msra.mxu0 %v593
    %2663 = vmatprep.subr.mxu0 %v598
    %2664 = vmatpush1.msra.mxu0 %v597
    %2665 = vmatprep.subr.mxu0 %v602
    %2666 = vmatpush1.msra.mxu0 %v601
    %2667 = vmatprep.subr.mxu0 0.0
    %2668 = vmatpush1.msra.mxu0 0.0
    %2669 = vmatprep.subr.mxu0 0.0
    %2670 = vmatpush1.msra.mxu0 0.0
    %2671 = vmatprep.subr.mxu0 0.0
    %2672 = vmatpush1.msra.mxu0 0.0
    %2673 = vmatprep.subr.mxu0 0.0
    %2674 = vmatpush1.msra.mxu0 0.0
    %2675 = vmatprep.subr.mxu0 0.0
    %2676 = vmatpush1.msra.mxu0 0.0
    %2677 = vmatprep.subr.mxu0 0.0
    %2678 = vmatpush1.msra.mxu0 0.0
    %2679 = vmatprep.subr.mxu0 0.0
    %2680 = vmatpush1.msra.mxu0 0.0
    %2681 = vmatprep.subr.mxu0 0.0
    %2682 = vmatpush1.msra.mxu0 0.0
    %2683 = vmatprep.subr.mxu0 0.0
    %2684 = vmatpush1.msra.mxu0 0.0
    %2685 = vmatprep.subr.mxu0 0.0
    %2686 = vmatpush1.msra.mxu0 0.0
    %2687 = vmatprep.subr.mxu0 0.0
    %2688 = vmatpush1.msra.mxu0 0.0
    %2689 = vmatprep.subr.mxu0 0.0
    %2690 = vmatpush1.msra.mxu0 0.0
    %2691 = vmatprep.subr.mxu0 0.0
    %2692 = vmatpush1.msra.mxu0 0.0
    %2693 = vmatprep.subr.mxu0 0.0
    %2694 = vmatpush1.msra.mxu0 0.0
    %2695 = vmatprep.subr.mxu0 0.0
    %2696 = vmatpush1.msra.mxu0 0.0
    %2697 = vmatprep.subr.mxu0 0.0
    %2698 = vmatpush1.msra.mxu0 0.0
    %2699 = vmatprep.mubr.f32.mxu0 0.0
    %2700 = vmatmul.mubr.f32.gmra.mrb[0].mxu0 %v2561
    %v2701 = vpop.f32.mrb[0].mxu0
    %v2702 = vadd.f32 0.0, %v2701
    %v2703 = vpop.f32.mrb[0].mxu0
    %v2704 = vadd.f32 0.0, %v2703
    %2705 = vdwg.mxu0
    %v2706 = vadd.f32 %v2473, %v2631
    %v2707 = vadd.f32 %v2475, %v2633
    %v2708 = vadd.f32 %v2550, %v2702
    %v2709 = vadd.f32 %v2552, %v2704
    %v2710 = vxor.u32 %v2706, 2147483648
    %v2711 = vmul.f32 %v2710, 1.442695
    %v2712 = vpow.pop %v2711
    %v2713 = vadd.f32 %v2712, 1.0
    %v2714 = vrcp.pop %v2713
    %v2715 = vmul.f32 1.0, %v2714
    %v2716 = vxor.u32 %v2707, 2147483648
    %v2717 = vmul.f32 %v2716, 1.442695
    %v2718 = vpow.pop %v2717
    %v2719 = vadd.f32 %v2718, 1.0
    %v2720 = vrcp.pop %v2719
    %v2721 = vmul.f32 1.0, %v2720
    %v2722 = vtanh.pop %v2708
    %v2723 = vxor.u32 %v2709, 2147483648
    %v2724 = vmul.f32 %v2723, 1.442695
    %v2725 = vpow.pop %v2724
    %v2726 = vadd.f32 %v2725, 1.0
    %v2727 = vrcp.pop %v2726
    %v2728 = vmul.f32 1.0, %v2727
    %v2729 = vmul.f32 %v2721, %v2563
    %v2730 = vmul.f32 %v2715, %v2722
    %v2731 = vadd.f32 %v2729, %v2730
    %v2732 = vtanh.pop %v2731
    %v2733 = vmul.f32 %v2728, %v2732
    %2734 = vmatprep.subr.mxu0 %v540
    %2735 = vmatpush1.msra.mxu0 %v539
    %2736 = vmatprep.subr.mxu0 %v544
    %2737 = vmatpush1.msra.mxu0 %v543
    %2738 = vmatprep.subr.mxu0 %v548
    %2739 = vmatpush1.msra.mxu0 %v547
    %2740 = vmatprep.subr.mxu0 %v552
    %2741 = vmatpush1.msra.mxu0 %v551
    %2742 = vmatprep.subr.mxu0 %v556
    %2743 = vmatpush1.msra.mxu0 %v555
    %2744 = vmatprep.subr.mxu0 %v560
    %2745 = vmatpush1.msra.mxu0 %v559
    %2746 = vmatprep.subr.mxu0 %v564
    %2747 = vmatpush1.msra.mxu0 %v563
    %2748 = vmatprep.subr.mxu0 %v568
    %2749 = vmatpush1.msra.mxu0 %v567
    %2750 = vmatprep.subr.mxu0 %v572
    %2751 = vmatpush1.msra.mxu0 %v571
    %2752 = vmatprep.subr.mxu0 %v576
    %2753 = vmatpush1.msra.mxu0 %v575
    %2754 = vmatprep.subr.mxu0 %v580
    %2755 = vmatpush1.msra.mxu0 %v579
    %2756 = vmatprep.subr.mxu0 %v584
    %2757 = vmatpush1.msra.mxu0 %v583
    %2758 = vmatprep.subr.mxu0 %v588
    %2759 = vmatpush1.msra.mxu0 %v587
    %2760 = vmatprep.subr.mxu0 %v592
    %2761 = vmatpush1.msra.mxu0 %v591
    %2762 = vmatprep.subr.mxu0 %v596
    %2763 = vmatpush1.msra.mxu0 %v595
    %2764 = vmatprep.subr.mxu0 %v600
    %2765 = vmatpush1.msra.mxu0 %v599
    %2766 = vmatprep.subr.mxu0 0.0
    %2767 = vmatpush1.msra.mxu0 0.0
    %2768 = vmatprep.subr.mxu0 0.0
    %2769 = vmatpush1.msra.mxu0 0.0
    %2770 = vmatprep.subr.mxu0 0.0
    %2771 = vmatpush1.msra.mxu0 0.0
    %2772 = vmatprep.subr.mxu0 0.0
    %2773 = vmatpush1.msra.mxu0 0.0
    %2774 = vmatprep.subr.mxu0 0.0
    %2775 = vmatpush1.msra.mxu0 0.0
    %2776 = vmatprep.subr.mxu0 0.0
    %2777 = vmatpush1.msra.mxu0 0.0
    %2778 = vmatprep.subr.mxu0 0.0
    %2779 = vmatpush1.msra.mxu0 0.0
    %2780 = vmatprep.subr.mxu0 0.0
    %2781 = vmatpush1.msra.mxu0 0.0
    %2782 = vmatprep.subr.mxu0 0.0
    %2783 = vmatpush1.msra.mxu0 0.0
    %2784 = vmatprep.subr.mxu0 0.0
    %2785 = vmatpush1.msra.mxu0 0.0
    %2786 = vmatprep.subr.mxu0 0.0
    %2787 = vmatpush1.msra.mxu0 0.0
    %2788 = vmatprep.subr.mxu0 0.0
    %2789 = vmatpush1.msra.mxu0 0.0
    %2790 = vmatprep.subr.mxu0 0.0
    %2791 = vmatpush1.msra.mxu0 0.0
    %2792 = vmatprep.subr.mxu0 0.0
    %2793 = vmatpush1.msra.mxu0 0.0
    %2794 = vmatprep.subr.mxu0 0.0
    %2795 = vmatpush1.msra.mxu0 0.0
    %2796 = vmatprep.subr.mxu0 0.0
    %2797 = vmatpush1.msra.mxu0 0.0
    %2798 = vmatprep.mubr.f32.mxu0 0.0
    %2799 = vmatmul.mubr.f32.gmra.mrb[0].mxu0 %v2733
    %v2800 = vpop.f32.mrb[0].mxu0
    %v2801 = vadd.f32 0.0, %v2800
    %v2802 = vpop.f32.mrb[0].mxu0
    %v2803 = vadd.f32 0.0, %v2802
    %2804 = vdwg.mxu0
    %2805 = vmatprep.subr.mxu0 %v542
    %2806 = vmatpush1.msra.mxu0 %v541
    %2807 = vmatprep.subr.mxu0 %v546
    %2808 = vmatpush1.msra.mxu0 %v545
    %2809 = vmatprep.subr.mxu0 %v550
    %2810 = vmatpush1.msra.mxu0 %v549
    %2811 = vmatprep.subr.mxu0 %v554
    %2812 = vmatpush1.msra.mxu0 %v553
    %2813 = vmatprep.subr.mxu0 %v558
    %2814 = vmatpush1.msra.mxu0 %v557
    %2815 = vmatprep.subr.mxu0 %v562
    %2816 = vmatpush1.msra.mxu0 %v561
    %2817 = vmatprep.subr.mxu0 %v566
    %2818 = vmatpush1.msra.mxu0 %v565
    %2819 = vmatprep.subr.mxu0 %v570
    %2820 = vmatpush1.msra.mxu0 %v569
    %2821 = vmatprep.subr.mxu0 %v574
    %2822 = vmatpush1.msra.mxu0 %v573
    %2823 = vmatprep.subr.mxu0 %v578
    %2824 = vmatpush1.msra.mxu0 %v577
    %2825 = vmatprep.subr.mxu0 %v582
    %2826 = vmatpush1.msra.mxu0 %v581
    %2827 = vmatprep.subr.mxu0 %v586
    %2828 = vmatpush1.msra.mxu0 %v585
    %2829 = vmatprep.subr.mxu0 %v590
    %2830 = vmatpush1.msra.mxu0 %v589
    %2831 = vmatprep.subr.mxu0 %v594
    %2832 = vmatpush1.msra.mxu0 %v593
    %2833 = vmatprep.subr.mxu0 %v598
    %2834 = vmatpush1.msra.mxu0 %v597
    %2835 = vmatprep.subr.mxu0 %v602
    %2836 = vmatpush1.msra.mxu0 %v601
    %2837 = vmatprep.subr.mxu0 0.0
    %2838 = vmatpush1.msra.mxu0 0.0
    %2839 = vmatprep.subr.mxu0 0.0
    %2840 = vmatpush1.msra.mxu0 0.0
    %2841 = vmatprep.subr.mxu0 0.0
    %2842 = vmatpush1.msra.mxu0 0.0
    %2843 = vmatprep.subr.mxu0 0.0
    %2844 = vmatpush1.msra.mxu0 0.0
    %2845 = vmatprep.subr.mxu0 0.0
    %2846 = vmatpush1.msra.mxu0 0.0
    %2847 = vmatprep.subr.mxu0 0.0
    %2848 = vmatpush1.msra.mxu0 0.0
    %2849 = vmatprep.subr.mxu0 0.0
    %2850 = vmatpush1.msra.mxu0 0.0
    %2851 = vmatprep.subr.mxu0 0.0
    %2852 = vmatpush1.msra.mxu0 0.0
    %2853 = vmatprep.subr.mxu0 0.0
    %2854 = vmatpush1.msra.mxu0 0.0
    %2855 = vmatprep.subr.mxu0 0.0
    %2856 = vmatpush1.msra.mxu0 0.0
    %2857 = vmatprep.subr.mxu0 0.0
    %2858 = vmatpush1.msra.mxu0 0.0
    %2859 = vmatprep.subr.mxu0 0.0
    %2860 = vmatpush1.msra.mxu0 0.0
    %2861 = vmatprep.subr.mxu0 0.0
    %2862 = vmatpush1.msra.mxu0 0.0
    %2863 = vmatprep.subr.mxu0 0.0
    %2864 = vmatpush1.msra.mxu0 0.0
    %2865 = vmatprep.subr.mxu0 0.0
    %2866 = vmatpush1.msra.mxu0 0.0
    %2867 = vmatprep.subr.mxu0 0.0
    %2868 = vmatpush1.msra.mxu0 0.0
    %2869 = vmatprep.mubr.f32.mxu0 0.0
    %2870 = vmatmul.mubr.f32.gmra.mrb[0].mxu0 %v2733
    %v2871 = vpop.f32.mrb[0].mxu0
    %v2872 = vadd.f32 0.0, %v2871
    %v2873 = vpop.f32.mrb[0].mxu0
    %v2874 = vadd.f32 0.0, %v2873
    %2875 = vdwg.mxu0
    %v2880 = vrot.slane %v2801, 6
    %v2881 = vrot.slane %v2803, 6
    %v2882 = vrot.slane %v2872, 6
    %v2883 = vrot.slane %v2874, 6
    %v2888 = vadd.f32 %v2473, %v2880
    %v2889 = vadd.f32 %v2475, %v2881
    %v2890 = vadd.f32 %v2550, %v2882
    %v2891 = vadd.f32 %v2552, %v2883
    %v2892 = vxor.u32 %v2888, 2147483648
    %v2893 = vmul.f32 %v2892, 1.442695
    %v2894 = vpow.pop %v2893
    %v2895 = vadd.f32 %v2894, 1.0
    %v2896 = vrcp.pop %v2895
    %v2897 = vmul.f32 1.0, %v2896
    %v2898 = vxor.u32 %v2889, 2147483648
    %v2899 = vmul.f32 %v2898, 1.442695
    %v2900 = vpow.pop %v2899
    %v2901 = vadd.f32 %v2900, 1.0
    %v2902 = vrcp.pop %v2901
    %v2903 = vmul.f32 1.0, %v2902
    %v2904 = vtanh.pop %v2890
    %v2905 = vxor.u32 %v2891, 2147483648
    %v2906 = vmul.f32 %v2905, 1.442695
    %v2907 = vpow.pop %v2906
    %v2908 = vadd.f32 %v2907, 1.0
    %v2909 = vrcp.pop %v2908
    %v2910 = vmul.f32 1.0, %v2909
    %v2912 = vrot.slane %v2731, 6
    %v2914 = vmul.f32 %v2903, %v2912
    %v2915 = vmul.f32 %v2897, %v2904
    %v2916 = vadd.f32 %v2914, %v2915
    %v2917 = vtanh.pop %v2916
    %v2918 = vmul.f32 %v2910, %v2917
    %v2920 = vrot.slane %v2918, 2
    %2922 = vmatprep.subr.mxu0 %v540
    %2923 = vmatpush1.msra.mxu0 %v539
    %2924 = vmatprep.subr.mxu0 %v544
    %2925 = vmatpush1.msra.mxu0 %v543
    %2926 = vmatprep.subr.mxu0 %v548
    %2927 = vmatpush1.msra.mxu0 %v547
    %2928 = vmatprep.subr.mxu0 %v552
    %2929 = vmatpush1.msra.mxu0 %v551
    %2930 = vmatprep.subr.mxu0 %v556
    %2931 = vmatpush1.msra.mxu0 %v555
    %2932 = vmatprep.subr.mxu0 %v560
    %2933 = vmatpush1.msra.mxu0 %v559
    %2934 = vmatprep.subr.mxu0 %v564
    %2935 = vmatpush1.msra.mxu0 %v563
    %2936 = vmatprep.subr.mxu0 %v568
    %2937 = vmatpush1.msra.mxu0 %v567
    %2938 = vmatprep.subr.mxu0 %v572
    %2939 = vmatpush1.msra.mxu0 %v571
    %2940 = vmatprep.subr.mxu0 %v576
    %2941 = vmatpush1.msra.mxu0 %v575
    %2942 = vmatprep.subr.mxu0 %v580
    %2943 = vmatpush1.msra.mxu0 %v579
    %2944 = vmatprep.subr.mxu0 %v584
    %2945 = vmatpush1.msra.mxu0 %v583
    %2946 = vmatprep.subr.mxu0 %v588
    %2947 = vmatpush1.msra.mxu0 %v587
    %2948 = vmatprep.subr.mxu0 %v592
    %2949 = vmatpush1.msra.mxu0 %v591
    %2950 = vmatprep.subr.mxu0 %v596
    %2951 = vmatpush1.msra.mxu0 %v595
    %2952 = vmatprep.subr.mxu0 %v600
    %2953 = vmatpush1.msra.mxu0 %v599
    %2954 = vmatprep.subr.mxu0 0.0
    %2955 = vmatpush1.msra.mxu0 0.0
    %2956 = vmatprep.subr.mxu0 0.0
    %2957 = vmatpush1.msra.mxu0 0.0
    %2958 = vmatprep.subr.mxu0 0.0
    %2959 = vmatpush1.msra.mxu0 0.0
    %2960 = vmatprep.subr.mxu0 0.0
    %2961 = vmatpush1.msra.mxu0 0.0
    %2962 = vmatprep.subr.mxu0 0.0
    %2963 = vmatpush1.msra.mxu0 0.0
    %2964 = vmatprep.subr.mxu0 0.0
    %2965 = vmatpush1.msra.mxu0 0.0
    %2966 = vmatprep.subr.mxu0 0.0
    %2967 = vmatpush1.msra.mxu0 0.0
    %2968 = vmatprep.subr.mxu0 0.0
    %2969 = vmatpush1.msra.mxu0 0.0
    %2970 = vmatprep.subr.mxu0 0.0
    %2971 = vmatpush1.msra.mxu0 0.0
    %2972 = vmatprep.subr.mxu0 0.0
    %2973 = vmatpush1.msra.mxu0 0.0
    %2974 = vmatprep.subr.mxu0 0.0
    %2975 = vmatpush1.msra.mxu0 0.0
    %2976 = vmatprep.subr.mxu0 0.0
    %2977 = vmatpush1.msra.mxu0 0.0
    %2978 = vmatprep.subr.mxu0 0.0
    %2979 = vmatpush1.msra.mxu0 0.0
    %2980 = vmatprep.subr.mxu0 0.0
    %2981 = vmatpush1.msra.mxu0 0.0
    %2982 = vmatprep.subr.mxu0 0.0
    %2983 = vmatpush1.msra.mxu0 0.0
    %2984 = vmatprep.subr.mxu0 0.0
    %2985 = vmatpush1.msra.mxu0 0.0
    %2986 = vmatprep.mubr.f32.mxu0 0.0
    %2987 = vmatmul.mubr.f32.gmra.mrb[0].mxu0 %v2920
    %v2988 = vpop.f32.mrb[0].mxu0
    %v2989 = vadd.f32 0.0, %v2988
    %v2990 = vpop.f32.mrb[0].mxu0
    %v2991 = vadd.f32 0.0, %v2990
    %2992 = vdwg.mxu0
    %2993 = vmatprep.subr.mxu0 %v542
    %2994 = vmatpush1.msra.mxu0 %v541
    %2995 = vmatprep.subr.mxu0 %v546
    %2996 = vmatpush1.msra.mxu0 %v545
    %2997 = vmatprep.subr.mxu0 %v550
    %2998 = vmatpush1.msra.mxu0 %v549
    %2999 = vmatprep.subr.mxu0 %v554
    %3000 = vmatpush1.msra.mxu0 %v553
    %3001 = vmatprep.subr.mxu0 %v558
    %3002 = vmatpush1.msra.mxu0 %v557
    %3003 = vmatprep.subr.mxu0 %v562
    %3004 = vmatpush1.msra.mxu0 %v561
    %3005 = vmatprep.subr.mxu0 %v566
    %3006 = vmatpush1.msra.mxu0 %v565
    %3007 = vmatprep.subr.mxu0 %v570
    %3008 = vmatpush1.msra.mxu0 %v569
    %3009 = vmatprep.subr.mxu0 %v574
    %3010 = vmatpush1.msra.mxu0 %v573
    %3011 = vmatprep.subr.mxu0 %v578
    %3012 = vmatpush1.msra.mxu0 %v577
    %3013 = vmatprep.subr.mxu0 %v582
    %3014 = vmatpush1.msra.mxu0 %v581
    %3015 = vmatprep.subr.mxu0 %v586
    %3016 = vmatpush1.msra.mxu0 %v585
    %3017 = vmatprep.subr.mxu0 %v590
    %3018 = vmatpush1.msra.mxu0 %v589
    %3019 = vmatprep.subr.mxu0 %v594
    %3020 = vmatpush1.msra.mxu0 %v593
    %3021 = vmatprep.subr.mxu0 %v598
    %3022 = vmatpush1.msra.mxu0 %v597
    %3023 = vmatprep.subr.mxu0 %v602
    %3024 = vmatpush1.msra.mxu0 %v601
    %3025 = vmatprep.subr.mxu0 0.0
    %3026 = vmatpush1.msra.mxu0 0.0
    %3027 = vmatprep.subr.mxu0 0.0
    %3028 = vmatpush1.msra.mxu0 0.0
    %3029 = vmatprep.subr.mxu0 0.0
    %3030 = vmatpush1.msra.mxu0 0.0
    %3031 = vmatprep.subr.mxu0 0.0
    %3032 = vmatpush1.msra.mxu0 0.0
    %3033 = vmatprep.subr.mxu0 0.0
    %3034 = vmatpush1.msra.mxu0 0.0
    %3035 = vmatprep.subr.mxu0 0.0
    %3036 = vmatpush1.msra.mxu0 0.0
    %3037 = vmatprep.subr.mxu0 0.0
    %3038 = vmatpush1.msra.mxu0 0.0
    %3039 = vmatprep.subr.mxu0 0.0
    %3040 = vmatpush1.msra.mxu0 0.0
    %3041 = vmatprep.subr.mxu0 0.0
    %3042 = vmatpush1.msra.mxu0 0.0
    %3043 = vmatprep.subr.mxu0 0.0
    %3044 = vmatpush1.msra.mxu0 0.0
    %3045 = vmatprep.subr.mxu0 0.0
    %3046 = vmatpush1.msra.mxu0 0.0
    %3047 = vmatprep.subr.mxu0 0.0
    %3048 = vmatpush1.msra.mxu0 0.0
    %3049 = vmatprep.subr.mxu0 0.0
    %3050 = vmatpush1.msra.mxu0 0.0
    %3051 = vmatprep.subr.mxu0 0.0
    %3052 = vmatpush1.msra.mxu0 0.0
    %3053 = vmatprep.subr.mxu0 0.0
    %3054 = vmatpush1.msra.mxu0 0.0
    %3055 = vmatprep.subr.mxu0 0.0
    %3056 = vmatpush1.msra.mxu0 0.0
    %3057 = vmatprep.mubr.f32.mxu0 0.0
    %3058 = vmatmul.mubr.f32.gmra.mrb[0].mxu0 %v2920
    %v3059 = vpop.f32.mrb[0].mxu0
    %v3060 = vadd.f32 0.0, %v3059
    %v3061 = vpop.f32.mrb[0].mxu0
    %v3062 = vadd.f32 0.0, %v3061
    %3063 = vdwg.mxu0
    %v3068 = vrot.slane %v2989, 4
    %v3069 = vrot.slane %v2991, 4
    %v3070 = vrot.slane %v3060, 4
    %v3071 = vrot.slane %v3062, 4
    %v3076 = vadd.f32 %v2473, %v3068
    %v3077 = vadd.f32 %v2475, %v3069
    %v3078 = vadd.f32 %v2550, %v3070
    %v3079 = vadd.f32 %v2552, %v3071
    %v3080 = vxor.u32 %v3076, 2147483648
    %v3081 = vmul.f32 %v3080, 1.442695
    %v3082 = vpow.pop %v3081
    %v3083 = vadd.f32 %v3082, 1.0
    %v3084 = vrcp.pop %v3083
    %v3085 = vmul.f32 1.0, %v3084
    %v3086 = vxor.u32 %v3077, 2147483648
    %v3087 = vmul.f32 %v3086, 1.442695
    %v3088 = vpow.pop %v3087
    %v3089 = vadd.f32 %v3088, 1.0
    %v3090 = vrcp.pop %v3089
    %v3091 = vmul.f32 1.0, %v3090
    %v3092 = vtanh.pop %v3078
    %v3093 = vxor.u32 %v3079, 2147483648
    %v3094 = vmul.f32 %v3093, 1.442695
    %v3095 = vpow.pop %v3094
    %v3096 = vadd.f32 %v3095, 1.0
    %v3097 = vrcp.pop %v3096
    %v3098 = vmul.f32 1.0, %v3097
    %v3100 = vrot.slane %v2916, 6
    %v3102 = vmul.f32 %v3091, %v3100
    %v3103 = vmul.f32 %v3085, %v3092
    %v3104 = vadd.f32 %v3102, %v3103
    %v3105 = vtanh.pop %v3104
    %v3106 = vmul.f32 %v3098, %v3105
    %v3108 = vrot.slane %v3106, 4
    %3110 = vmatprep.subr.mxu0 %v540
    %3111 = vmatpush1.msra.mxu0 %v539
    %3112 = vmatprep.subr.mxu0 %v544
    %3113 = vmatpush1.msra.mxu0 %v543
    %3114 = vmatprep.subr.mxu0 %v548
    %3115 = vmatpush1.msra.mxu0 %v547
    %3116 = vmatprep.subr.mxu0 %v552
    %3117 = vmatpush1.msra.mxu0 %v551
    %3118 = vmatprep.subr.mxu0 %v556
    %3119 = vmatpush1.msra.mxu0 %v555
    %3120 = vmatprep.subr.mxu0 %v560
    %3121 = vmatpush1.msra.mxu0 %v559
    %3122 = vmatprep.subr.mxu0 %v564
    %3123 = vmatpush1.msra.mxu0 %v563
    %3124 = vmatprep.subr.mxu0 %v568
    %3125 = vmatpush1.msra.mxu0 %v567
    %3126 = vmatprep.subr.mxu0 %v572
    %3127 = vmatpush1.msra.mxu0 %v571
    %3128 = vmatprep.subr.mxu0 %v576
    %3129 = vmatpush1.msra.mxu0 %v575
    %3130 = vmatprep.subr.mxu0 %v580
    %3131 = vmatpush1.msra.mxu0 %v579
    %3132 = vmatprep.subr.mxu0 %v584
    %3133 = vmatpush1.msra.mxu0 %v583
    %3134 = vmatprep.subr.mxu0 %v588
    %3135 = vmatpush1.msra.mxu0 %v587
    %3136 = vmatprep.subr.mxu0 %v592
    %3137 = vmatpush1.msra.mxu0 %v591
    %3138 = vmatprep.subr.mxu0 %v596
    %3139 = vmatpush1.msra.mxu0 %v595
    %3140 = vmatprep.subr.mxu0 %v600
    %3141 = vmatpush1.msra.mxu0 %v599
    %3142 = vmatprep.subr.mxu0 0.0
    %3143 = vmatpush1.msra.mxu0 0.0
    %3144 = vmatprep.subr.mxu0 0.0
    %3145 = vmatpush1.msra.mxu0 0.0
    %3146 = vmatprep.subr.mxu0 0.0
    %3147 = vmatpush1.msra.mxu0 0.0
    %3148 = vmatprep.subr.mxu0 0.0
    %3149 = vmatpush1.msra.mxu0 0.0
    %3150 = vmatprep.subr.mxu0 0.0
    %3151 = vmatpush1.msra.mxu0 0.0
    %3152 = vmatprep.subr.mxu0 0.0
    %3153 = vmatpush1.msra.mxu0 0.0
    %3154 = vmatprep.subr.mxu0 0.0
    %3155 = vmatpush1.msra.mxu0 0.0
    %3156 = vmatprep.subr.mxu0 0.0
    %3157 = vmatpush1.msra.mxu0 0.0
    %3158 = vmatprep.subr.mxu0 0.0
    %3159 = vmatpush1.msra.mxu0 0.0
    %3160 = vmatprep.subr.mxu0 0.0
    %3161 = vmatpush1.msra.mxu0 0.0
    %3162 = vmatprep.subr.mxu0 0.0
    %3163 = vmatpush1.msra.mxu0 0.0
    %3164 = vmatprep.subr.mxu0 0.0
    %3165 = vmatpush1.msra.mxu0 0.0
    %3166 = vmatprep.subr.mxu0 0.0
    %3167 = vmatpush1.msra.mxu0 0.0
    %3168 = vmatprep.subr.mxu0 0.0
    %3169 = vmatpush1.msra.mxu0 0.0
    %3170 = vmatprep.subr.mxu0 0.0
    %3171 = vmatpush1.msra.mxu0 0.0
    %3172 = vmatprep.subr.mxu0 0.0
    %3173 = vmatpush1.msra.mxu0 0.0
    %3174 = vmatprep.mubr.f32.mxu0 0.0
    %3175 = vmatmul.mubr.f32.gmra.mrb[0].mxu0 %v3108
    %v3176 = vpop.f32.mrb[0].mxu0
    %v3177 = vadd.f32 0.0, %v3176
    %v3178 = vpop.f32.mrb[0].mxu0
    %v3179 = vadd.f32 0.0, %v3178
    %3180 = vdwg.mxu0
    %3181 = vmatprep.subr.mxu0 %v542
    %3182 = vmatpush1.msra.mxu0 %v541
    %3183 = vmatprep.subr.mxu0 %v546
    %3184 = vmatpush1.msra.mxu0 %v545
    %3185 = vmatprep.subr.mxu0 %v550
    %3186 = vmatpush1.msra.mxu0 %v549
    %3187 = vmatprep.subr.mxu0 %v554
    %3188 = vmatpush1.msra.mxu0 %v553
    %3189 = vmatprep.subr.mxu0 %v558
    %3190 = vmatpush1.msra.mxu0 %v557
    %3191 = vmatprep.subr.mxu0 %v562
    %3192 = vmatpush1.msra.mxu0 %v561
    %3193 = vmatprep.subr.mxu0 %v566
    %3194 = vmatpush1.msra.mxu0 %v565
    %3195 = vmatprep.subr.mxu0 %v570
    %3196 = vmatpush1.msra.mxu0 %v569
    %3197 = vmatprep.subr.mxu0 %v574
    %3198 = vmatpush1.msra.mxu0 %v573
    %3199 = vmatprep.subr.mxu0 %v578
    %3200 = vmatpush1.msra.mxu0 %v577
    %3201 = vmatprep.subr.mxu0 %v582
    %3202 = vmatpush1.msra.mxu0 %v581
    %3203 = vmatprep.subr.mxu0 %v586
    %3204 = vmatpush1.msra.mxu0 %v585
    %3205 = vmatprep.subr.mxu0 %v590
    %3206 = vmatpush1.msra.mxu0 %v589
    %3207 = vmatprep.subr.mxu0 %v594
    %3208 = vmatpush1.msra.mxu0 %v593
    %3209 = vmatprep.subr.mxu0 %v598
    %3210 = vmatpush1.msra.mxu0 %v597
    %3211 = vmatprep.subr.mxu0 %v602
    %3212 = vmatpush1.msra.mxu0 %v601
    %3213 = vmatprep.subr.mxu0 0.0
    %3214 = vmatpush1.msra.mxu0 0.0
    %3215 = vmatprep.subr.mxu0 0.0
    %3216 = vmatpush1.msra.mxu0 0.0
    %3217 = vmatprep.subr.mxu0 0.0
    %3218 = vmatpush1.msra.mxu0 0.0
    %3219 = vmatprep.subr.mxu0 0.0
    %3220 = vmatpush1.msra.mxu0 0.0
    %3221 = vmatprep.subr.mxu0 0.0
    %3222 = vmatpush1.msra.mxu0 0.0
    %3223 = vmatprep.subr.mxu0 0.0
    %3224 = vmatpush1.msra.mxu0 0.0
    %3225 = vmatprep.subr.mxu0 0.0
    %3226 = vmatpush1.msra.mxu0 0.0
    %3227 = vmatprep.subr.mxu0 0.0
    %3228 = vmatpush1.msra.mxu0 0.0
    %3229 = vmatprep.subr.mxu0 0.0
    %3230 = vmatpush1.msra.mxu0 0.0
    %3231 = vmatprep.subr.mxu0 0.0
    %3232 = vmatpush1.msra.mxu0 0.0
    %3233 = vmatprep.subr.mxu0 0.0
    %3234 = vmatpush1.msra.mxu0 0.0
    %3235 = vmatprep.subr.mxu0 0.0
    %3236 = vmatpush1.msra.mxu0 0.0
    %3237 = vmatprep.subr.mxu0 0.0
    %3238 = vmatpush1.msra.mxu0 0.0
    %3239 = vmatprep.subr.mxu0 0.0
    %3240 = vmatpush1.msra.mxu0 0.0
    %3241 = vmatprep.subr.mxu0 0.0
    %3242 = vmatpush1.msra.mxu0 0.0
    %3243 = vmatprep.subr.mxu0 0.0
    %3244 = vmatpush1.msra.mxu0 0.0
    %3245 = vmatprep.mubr.f32.mxu0 0.0
    %3246 = vmatmul.mubr.f32.gmra.mrb[0].mxu0 %v3108
    %v3247 = vpop.f32.mrb[0].mxu0
    %v3248 = vadd.f32 0.0, %v3247
    %v3249 = vpop.f32.mrb[0].mxu0
    %v3250 = vadd.f32 0.0, %v3249
    %3251 = vdwg.mxu0
    %v3256 = vrot.slane %v3177, 2
    %v3257 = vrot.slane %v3179, 2
    %v3258 = vrot.slane %v3248, 2
    %v3259 = vrot.slane %v3250, 2
    %v3264 = vadd.f32 %v2473, %v3256
    %v3265 = vadd.f32 %v2475, %v3257
    %v3266 = vadd.f32 %v2550, %v3258
    %v3267 = vadd.f32 %v2552, %v3259
    %v3268 = vxor.u32 %v3264, 2147483648
    %v3269 = vmul.f32 %v3268, 1.442695
    %v3270 = vpow.pop %v3269
    %v3271 = vadd.f32 %v3270, 1.0
    %v3272 = vrcp.pop %v3271
    %v3273 = vmul.f32 1.0, %v3272
    %v3274 = vxor.u32 %v3265, 2147483648
    %v3275 = vmul.f32 %v3274, 1.442695
    %v3276 = vpow.pop %v3275
    %v3277 = vadd.f32 %v3276, 1.0
    %v3278 = vrcp.pop %v3277
    %v3279 = vmul.f32 1.0, %v3278
    %v3280 = vtanh.pop %v3266
    %v3281 = vxor.u32 %v3267, 2147483648
    %v3282 = vmul.f32 %v3281, 1.442695
    %v3283 = vpow.pop %v3282
    %v3284 = vadd.f32 %v3283, 1.0
    %v3285 = vrcp.pop %v3284
    %v3286 = vmul.f32 1.0, %v3285
    %v3288 = vrot.slane %v3104, 6
    %v3290 = vmul.f32 %v3279, %v3288
    %v3291 = vmul.f32 %v3273, %v3280
    %v3292 = vadd.f32 %v3290, %v3291
    %v3293 = vtanh.pop %v3292
    %v3294 = vmul.f32 %v3286, %v3293
    %v3296 = vrot.slane %v3294, 6
    %3298 = vmatprep.subr.mxu0 %v540
    %3299 = vmatpush1.msra.mxu0 %v539
    %3300 = vmatprep.subr.mxu0 %v544
    %3301 = vmatpush1.msra.mxu0 %v543
    %3302 = vmatprep.subr.mxu0 %v548
    %3303 = vmatpush1.msra.mxu0 %v547
    %3304 = vmatprep.subr.mxu0 %v552
    %3305 = vmatpush1.msra.mxu0 %v551
    %3306 = vmatprep.subr.mxu0 %v556
    %3307 = vmatpush1.msra.mxu0 %v555
    %3308 = vmatprep.subr.mxu0 %v560
    %3309 = vmatpush1.msra.mxu0 %v559
    %3310 = vmatprep.subr.mxu0 %v564
    %3311 = vmatpush1.msra.mxu0 %v563
    %3312 = vmatprep.subr.mxu0 %v568
    %3313 = vmatpush1.msra.mxu0 %v567
    %3314 = vmatprep.subr.mxu0 %v572
    %3315 = vmatpush1.msra.mxu0 %v571
    %3316 = vmatprep.subr.mxu0 %v576
    %3317 = vmatpush1.msra.mxu0 %v575
    %3318 = vmatprep.subr.mxu0 %v580
    %3319 = vmatpush1.msra.mxu0 %v579
    %3320 = vmatprep.subr.mxu0 %v584
    %3321 = vmatpush1.msra.mxu0 %v583
    %3322 = vmatprep.subr.mxu0 %v588
    %3323 = vmatpush1.msra.mxu0 %v587
    %3324 = vmatprep.subr.mxu0 %v592
    %3325 = vmatpush1.msra.mxu0 %v591
    %3326 = vmatprep.subr.mxu0 %v596
    %3327 = vmatpush1.msra.mxu0 %v595
    %3328 = vmatprep.subr.mxu0 %v600
    %3329 = vmatpush1.msra.mxu0 %v599
    %3330 = vmatprep.subr.mxu0 0.0
    %3331 = vmatpush1.msra.mxu0 0.0
    %3332 = vmatprep.subr.mxu0 0.0
    %3333 = vmatpush1.msra.mxu0 0.0
    %3334 = vmatprep.subr.mxu0 0.0
    %3335 = vmatpush1.msra.mxu0 0.0
    %3336 = vmatprep.subr.mxu0 0.0
    %3337 = vmatpush1.msra.mxu0 0.0
    %3338 = vmatprep.subr.mxu0 0.0
    %3339 = vmatpush1.msra.mxu0 0.0
    %3340 = vmatprep.subr.mxu0 0.0
    %3341 = vmatpush1.msra.mxu0 0.0
    %3342 = vmatprep.subr.mxu0 0.0
    %3343 = vmatpush1.msra.mxu0 0.0
    %3344 = vmatprep.subr.mxu0 0.0
    %3345 = vmatpush1.msra.mxu0 0.0
    %3346 = vmatprep.subr.mxu0 0.0
    %3347 = vmatpush1.msra.mxu0 0.0
    %3348 = vmatprep.subr.mxu0 0.0
    %3349 = vmatpush1.msra.mxu0 0.0
    %3350 = vmatprep.subr.mxu0 0.0
    %3351 = vmatpush1.msra.mxu0 0.0
    %3352 = vmatprep.subr.mxu0 0.0
    %3353 = vmatpush1.msra.mxu0 0.0
    %3354 = vmatprep.subr.mxu0 0.0
    %3355 = vmatpush1.msra.mxu0 0.0
    %3356 = vmatprep.subr.mxu0 0.0
    %3357 = vmatpush1.msra.mxu0 0.0
    %3358 = vmatprep.subr.mxu0 0.0
    %3359 = vmatpush1.msra.mxu0 0.0
    %3360 = vmatprep.subr.mxu0 0.0
    %3361 = vmatpush1.msra.mxu0 0.0
    %3362 = vmatprep.mubr.f32.mxu0 0.0
    %3363 = vmatmul.mubr.f32.gmra.mrb[0].mxu0 %v3296
    %v3364 = vpop.f32.mrb[0].mxu0
    %v3365 = vadd.f32 0.0, %v3364
    %v3366 = vpop.f32.mrb[0].mxu0
    %v3367 = vadd.f32 0.0, %v3366
    %3368 = vdwg.mxu0
    %3369 = vmatprep.subr.mxu0 %v542
    %3370 = vmatpush1.msra.mxu0 %v541
    %3371 = vmatprep.subr.mxu0 %v546
    %3372 = vmatpush1.msra.mxu0 %v545
    %3373 = vmatprep.subr.mxu0 %v550
    %3374 = vmatpush1.msra.mxu0 %v549
    %3375 = vmatprep.subr.mxu0 %v554
    %3376 = vmatpush1.msra.mxu0 %v553
    %3377 = vmatprep.subr.mxu0 %v558
    %3378 = vmatpush1.msra.mxu0 %v557
    %3379 = vmatprep.subr.mxu0 %v562
    %3380 = vmatpush1.msra.mxu0 %v561
    %3381 = vmatprep.subr.mxu0 %v566
    %3382 = vmatpush1.msra.mxu0 %v565
    %3383 = vmatprep.subr.mxu0 %v570
    %3384 = vmatpush1.msra.mxu0 %v569
    %3385 = vmatprep.subr.mxu0 %v574
    %3386 = vmatpush1.msra.mxu0 %v573
    %3387 = vmatprep.subr.mxu0 %v578
    %3388 = vmatpush1.msra.mxu0 %v577
    %3389 = vmatprep.subr.mxu0 %v582
    %3390 = vmatpush1.msra.mxu0 %v581
    %3391 = vmatprep.subr.mxu0 %v586
    %3392 = vmatpush1.msra.mxu0 %v585
    %3393 = vmatprep.subr.mxu0 %v590
    %3394 = vmatpush1.msra.mxu0 %v589
    %3395 = vmatprep.subr.mxu0 %v594
    %3396 = vmatpush1.msra.mxu0 %v593
    %3397 = vmatprep.subr.mxu0 %v598
    %3398 = vmatpush1.msra.mxu0 %v597
    %3399 = vmatprep.subr.mxu0 %v602
    %3400 = vmatpush1.msra.mxu0 %v601
    %3401 = vmatprep.subr.mxu0 0.0
    %3402 = vmatpush1.msra.mxu0 0.0
    %3403 = vmatprep.subr.mxu0 0.0
    %3404 = vmatpush1.msra.mxu0 0.0
    %3405 = vmatprep.subr.mxu0 0.0
    %3406 = vmatpush1.msra.mxu0 0.0
    %3407 = vmatprep.subr.mxu0 0.0
    %3408 = vmatpush1.msra.mxu0 0.0
    %3409 = vmatprep.subr.mxu0 0.0
    %3410 = vmatpush1.msra.mxu0 0.0
    %3411 = vmatprep.subr.mxu0 0.0
    %3412 = vmatpush1.msra.mxu0 0.0
    %3413 = vmatprep.subr.mxu0 0.0
    %3414 = vmatpush1.msra.mxu0 0.0
    %3415 = vmatprep.subr.mxu0 0.0
    %3416 = vmatpush1.msra.mxu0 0.0
    %3417 = vmatprep.subr.mxu0 0.0
    %3418 = vmatpush1.msra.mxu0 0.0
    %3419 = vmatprep.subr.mxu0 0.0
    %3420 = vmatpush1.msra.mxu0 0.0
    %3421 = vmatprep.subr.mxu0 0.0
    %3422 = vmatpush1.msra.mxu0 0.0
    %3423 = vmatprep.subr.mxu0 0.0
    %3424 = vmatpush1.msra.mxu0 0.0
    %3425 = vmatprep.subr.mxu0 0.0
    %3426 = vmatpush1.msra.mxu0 0.0
    %3427 = vmatprep.subr.mxu0 0.0
    %3428 = vmatpush1.msra.mxu0 0.0
    %3429 = vmatprep.subr.mxu0 0.0
    %3430 = vmatpush1.msra.mxu0 0.0
    %3431 = vmatprep.subr.mxu0 0.0
    %3432 = vmatpush1.msra.mxu0 0.0
    %3433 = vmatprep.mubr.f32.mxu0 0.0
    %3434 = vmatmul.mubr.f32.gmra.mrb[0].mxu0 %v3296
    %v3435 = vpop.f32.mrb[0].mxu0
    %v3436 = vadd.f32 0.0, %v3435
    %v3437 = vpop.f32.mrb[0].mxu0
    %v3438 = vadd.f32 0.0, %v3437
    %3439 = vdwg.mxu0
    %v3440 = vadd.f32 %v2479, %v3365
    %v3441 = vadd.f32 %v2481, %v3367
    %v3442 = vadd.f32 %v2556, %v3436
    %v3443 = vadd.f32 %v2558, %v3438
    %v3444 = vxor.u32 %v3440, 2147483648
    %v3445 = vmul.f32 %v3444, 1.442695
    %v3446 = vpow.pop %v3445
    %v3447 = vadd.f32 %v3446, 1.0
    %v3448 = vrcp.pop %v3447
    %v3449 = vmul.f32 1.0, %v3448
    %v3450 = vxor.u32 %v3441, 2147483648
    %v3451 = vmul.f32 %v3450, 1.442695
    %v3452 = vpow.pop %v3451
    %v3453 = vadd.f32 %v3452, 1.0
    %v3454 = vrcp.pop %v3453
    %v3455 = vmul.f32 1.0, %v3454
    %v3456 = vtanh.pop %v3442
    %v3457 = vxor.u32 %v3443, 2147483648
    %v3458 = vmul.f32 %v3457, 1.442695
    %v3459 = vpow.pop %v3458
    %v3460 = vadd.f32 %v3459, 1.0
    %v3461 = vrcp.pop %v3460
    %v3462 = vmul.f32 1.0, %v3461
    %v3464 = vrot.slane %v3292, 6
    %v3466 = vmul.f32 %v3455, %v3464
    %v3467 = vmul.f32 %v3449, %v3456
    %v3468 = vadd.f32 %v3466, %v3467
    %v3469 = vtanh.pop %v3468
    %v3470 = vmul.f32 %v3462, %v3469
    %3471 = vmatprep.subr.mxu0 %v540
    %3472 = vmatpush1.msra.mxu0 %v539
    %3473 = vmatprep.subr.mxu0 %v544
    %3474 = vmatpush1.msra.mxu0 %v543
    %3475 = vmatprep.subr.mxu0 %v548
    %3476 = vmatpush1.msra.mxu0 %v547
    %3477 = vmatprep.subr.mxu0 %v552
    %3478 = vmatpush1.msra.mxu0 %v551
    %3479 = vmatprep.subr.mxu0 %v556
    %3480 = vmatpush1.msra.mxu0 %v555
    %3481 = vmatprep.subr.mxu0 %v560
    %3482 = vmatpush1.msra.mxu0 %v559
    %3483 = vmatprep.subr.mxu0 %v564
    %3484 = vmatpush1.msra.mxu0 %v563
    %3485 = vmatprep.subr.mxu0 %v568
    %3486 = vmatpush1.msra.mxu0 %v567
    %3487 = vmatprep.subr.mxu0 %v572
    %3488 = vmatpush1.msra.mxu0 %v571
    %3489 = vmatprep.subr.mxu0 %v576
    %3490 = vmatpush1.msra.mxu0 %v575
    %3491 = vmatprep.subr.mxu0 %v580
    %3492 = vmatpush1.msra.mxu0 %v579
    %3493 = vmatprep.subr.mxu0 %v584
    %3494 = vmatpush1.msra.mxu0 %v583
    %3495 = vmatprep.subr.mxu0 %v588
    %3496 = vmatpush1.msra.mxu0 %v587
    %3497 = vmatprep.subr.mxu0 %v592
    %3498 = vmatpush1.msra.mxu0 %v591
    %3499 = vmatprep.subr.mxu0 %v596
    %3500 = vmatpush1.msra.mxu0 %v595
    %3501 = vmatprep.subr.mxu0 %v600
    %3502 = vmatpush1.msra.mxu0 %v599
    %3503 = vmatprep.subr.mxu0 0.0
    %3504 = vmatpush1.msra.mxu0 0.0
    %3505 = vmatprep.subr.mxu0 0.0
    %3506 = vmatpush1.msra.mxu0 0.0
    %3507 = vmatprep.subr.mxu0 0.0
    %3508 = vmatpush1.msra.mxu0 0.0
    %3509 = vmatprep.subr.mxu0 0.0
    %3510 = vmatpush1.msra.mxu0 0.0
    %3511 = vmatprep.subr.mxu0 0.0
    %3512 = vmatpush1.msra.mxu0 0.0
    %3513 = vmatprep.subr.mxu0 0.0
    %3514 = vmatpush1.msra.mxu0 0.0
    %3515 = vmatprep.subr.mxu0 0.0
    %3516 = vmatpush1.msra.mxu0 0.0
    %3517 = vmatprep.subr.mxu0 0.0
    %3518 = vmatpush1.msra.mxu0 0.0
    %3519 = vmatprep.subr.mxu0 0.0
    %3520 = vmatpush1.msra.mxu0 0.0
    %3521 = vmatprep.subr.mxu0 0.0
    %3522 = vmatpush1.msra.mxu0 0.0
    %3523 = vmatprep.subr.mxu0 0.0
    %3524 = vmatpush1.msra.mxu0 0.0
    %3525 = vmatprep.subr.mxu0 0.0
    %3526 = vmatpush1.msra.mxu0 0.0
    %3527 = vmatprep.subr.mxu0 0.0
    %3528 = vmatpush1.msra.mxu0 0.0
    %3529 = vmatprep.subr.mxu0 0.0
    %3530 = vmatpush1.msra.mxu0 0.0
    %3531 = vmatprep.subr.mxu0 0.0
    %3532 = vmatpush1.msra.mxu0 0.0
    %3533 = vmatprep.subr.mxu0 0.0
    %3534 = vmatpush1.msra.mxu0 0.0
    %3535 = vmatprep.mubr.f32.mxu0 0.0
    %3536 = vmatmul.mubr.f32.gmra.mrb[0].mxu0 %v3470
    %v3537 = vpop.f32.mrb[0].mxu0
    %v3538 = vadd.f32 0.0, %v3537
    %v3539 = vpop.f32.mrb[0].mxu0
    %v3540 = vadd.f32 0.0, %v3539
    %3541 = vdwg.mxu0
    %3542 = vmatprep.subr.mxu0 %v542
    %3543 = vmatpush1.msra.mxu0 %v541
    %3544 = vmatprep.subr.mxu0 %v546
    %3545 = vmatpush1.msra.mxu0 %v545
    %3546 = vmatprep.subr.mxu0 %v550
    %3547 = vmatpush1.msra.mxu0 %v549
    %3548 = vmatprep.subr.mxu0 %v554
    %3549 = vmatpush1.msra.mxu0 %v553
    %3550 = vmatprep.subr.mxu0 %v558
    %3551 = vmatpush1.msra.mxu0 %v557
    %3552 = vmatprep.subr.mxu0 %v562
    %3553 = vmatpush1.msra.mxu0 %v561
    %3554 = vmatprep.subr.mxu0 %v566
    %3555 = vmatpush1.msra.mxu0 %v565
    %3556 = vmatprep.subr.mxu0 %v570
    %3557 = vmatpush1.msra.mxu0 %v569
    %3558 = vmatprep.subr.mxu0 %v574
    %3559 = vmatpush1.msra.mxu0 %v573
    %3560 = vmatprep.subr.mxu0 %v578
    %3561 = vmatpush1.msra.mxu0 %v577
    %3562 = vmatprep.subr.mxu0 %v582
    %3563 = vmatpush1.msra.mxu0 %v581
    %3564 = vmatprep.subr.mxu0 %v586
    %3565 = vmatpush1.msra.mxu0 %v585
    %3566 = vmatprep.subr.mxu0 %v590
    %3567 = vmatpush1.msra.mxu0 %v589
    %3568 = vmatprep.subr.mxu0 %v594
    %3569 = vmatpush1.msra.mxu0 %v593
    %3570 = vmatprep.subr.mxu0 %v598
    %3571 = vmatpush1.msra.mxu0 %v597
    %3572 = vmatprep.subr.mxu0 %v602
    %3573 = vmatpush1.msra.mxu0 %v601
    %3574 = vmatprep.subr.mxu0 0.0
    %3575 = vmatpush1.msra.mxu0 0.0
    %3576 = vmatprep.subr.mxu0 0.0
    %3577 = vmatpush1.msra.mxu0 0.0
    %3578 = vmatprep.subr.mxu0 0.0
    %3579 = vmatpush1.msra.mxu0 0.0
    %3580 = vmatprep.subr.mxu0 0.0
    %3581 = vmatpush1.msra.mxu0 0.0
    %3582 = vmatprep.subr.mxu0 0.0
    %3583 = vmatpush1.msra.mxu0 0.0
    %3584 = vmatprep.subr.mxu0 0.0
    %3585 = vmatpush1.msra.mxu0 0.0
    %3586 = vmatprep.subr.mxu0 0.0
    %3587 = vmatpush1.msra.mxu0 0.0
    %3588 = vmatprep.subr.mxu0 0.0
    %3589 = vmatpush1.msra.mxu0 0.0
    %3590 = vmatprep.subr.mxu0 0.0
    %3591 = vmatpush1.msra.mxu0 0.0
    %3592 = vmatprep.subr.mxu0 0.0
    %3593 = vmatpush1.msra.mxu0 0.0
    %3594 = vmatprep.subr.mxu0 0.0
    %3595 = vmatpush1.msra.mxu0 0.0
    %3596 = vmatprep.subr.mxu0 0.0
    %3597 = vmatpush1.msra.mxu0 0.0
    %3598 = vmatprep.subr.mxu0 0.0
    %3599 = vmatpush1.msra.mxu0 0.0
    %3600 = vmatprep.subr.mxu0 0.0
    %3601 = vmatpush1.msra.mxu0 0.0
    %3602 = vmatprep.subr.mxu0 0.0
    %3603 = vmatpush1.msra.mxu0 0.0
    %3604 = vmatprep.subr.mxu0 0.0
    %3605 = vmatpush1.msra.mxu0 0.0
    %3606 = vmatprep.mubr.f32.mxu0 0.0
    %3607 = vmatmul.mubr.f32.gmra.mrb[0].mxu0 %v3470
    %v3608 = vpop.f32.mrb[0].mxu0
    %v3609 = vadd.f32 0.0, %v3608
    %v3610 = vpop.f32.mrb[0].mxu0
    %v3611 = vadd.f32 0.0, %v3610
    %3612 = vdwg.mxu0
    %v3617 = vrot.slane %v3538, 6
    %v3618 = vrot.slane %v3540, 6
    %v3619 = vrot.slane %v3609, 6
    %v3620 = vrot.slane %v3611, 6
    %v3625 = vadd.f32 %v2479, %v3617
    %v3626 = vadd.f32 %v2481, %v3618
    %v3627 = vadd.f32 %v2556, %v3619
    %v3628 = vadd.f32 %v2558, %v3620
    %v3629 = vxor.u32 %v3625, 2147483648
    %v3630 = vmul.f32 %v3629, 1.442695
    %v3631 = vpow.pop %v3630
    %v3632 = vadd.f32 %v3631, 1.0
    %v3633 = vrcp.pop %v3632
    %v3634 = vmul.f32 1.0, %v3633
    %v3635 = vxor.u32 %v3626, 2147483648
    %v3636 = vmul.f32 %v3635, 1.442695
    %v3637 = vpow.pop %v3636
    %v3638 = vadd.f32 %v3637, 1.0
    %v3639 = vrcp.pop %v3638
    %v3640 = vmul.f32 1.0, %v3639
    %v3641 = vtanh.pop %v3627
    %v3642 = vxor.u32 %v3628, 2147483648
    %v3643 = vmul.f32 %v3642, 1.442695
    %v3644 = vpow.pop %v3643
    %v3645 = vadd.f32 %v3644, 1.0
    %v3646 = vrcp.pop %v3645
    %v3647 = vmul.f32 1.0, %v3646
    %v3649 = vrot.slane %v3468, 6
    %v3651 = vmul.f32 %v3640, %v3649
    %v3652 = vmul.f32 %v3634, %v3641
    %v3653 = vadd.f32 %v3651, %v3652
    %v3654 = vtanh.pop %v3653
    %v3655 = vmul.f32 %v3647, %v3654
    %v3657 = vrot.slane %v3655, 2
    %3659 = vmatprep.subr.mxu0 %v540
    %3660 = vmatpush1.msra.mxu0 %v539
    %3661 = vmatprep.subr.mxu0 %v544
    %3662 = vmatpush1.msra.mxu0 %v543
    %3663 = vmatprep.subr.mxu0 %v548
    %3664 = vmatpush1.msra.mxu0 %v547
    %3665 = vmatprep.subr.mxu0 %v552
    %3666 = vmatpush1.msra.mxu0 %v551
    %3667 = vmatprep.subr.mxu0 %v556
    %3668 = vmatpush1.msra.mxu0 %v555
    %3669 = vmatprep.subr.mxu0 %v560
    %3670 = vmatpush1.msra.mxu0 %v559
    %3671 = vmatprep.subr.mxu0 %v564
    %3672 = vmatpush1.msra.mxu0 %v563
    %3673 = vmatprep.subr.mxu0 %v568
    %3674 = vmatpush1.msra.mxu0 %v567
    %3675 = vmatprep.subr.mxu0 %v572
    %3676 = vmatpush1.msra.mxu0 %v571
    %3677 = vmatprep.subr.mxu0 %v576
    %3678 = vmatpush1.msra.mxu0 %v575
    %3679 = vmatprep.subr.mxu0 %v580
    %3680 = vmatpush1.msra.mxu0 %v579
    %3681 = vmatprep.subr.mxu0 %v584
    %3682 = vmatpush1.msra.mxu0 %v583
    %3683 = vmatprep.subr.mxu0 %v588
    %3684 = vmatpush1.msra.mxu0 %v587
    %3685 = vmatprep.subr.mxu0 %v592
    %3686 = vmatpush1.msra.mxu0 %v591
    %3687 = vmatprep.subr.mxu0 %v596
    %3688 = vmatpush1.msra.mxu0 %v595
    %3689 = vmatprep.subr.mxu0 %v600
    %3690 = vmatpush1.msra.mxu0 %v599
    %3691 = vmatprep.subr.mxu0 0.0
    %3692 = vmatpush1.msra.mxu0 0.0
    %3693 = vmatprep.subr.mxu0 0.0
    %3694 = vmatpush1.msra.mxu0 0.0
    %3695 = vmatprep.subr.mxu0 0.0
    %3696 = vmatpush1.msra.mxu0 0.0
    %3697 = vmatprep.subr.mxu0 0.0
    %3698 = vmatpush1.msra.mxu0 0.0
    %3699 = vmatprep.subr.mxu0 0.0
    %3700 = vmatpush1.msra.mxu0 0.0
    %3701 = vmatprep.subr.mxu0 0.0
    %3702 = vmatpush1.msra.mxu0 0.0
    %3703 = vmatprep.subr.mxu0 0.0
    %3704 = vmatpush1.msra.mxu0 0.0
    %3705 = vmatprep.subr.mxu0 0.0
    %3706 = vmatpush1.msra.mxu0 0.0
    %3707 = vmatprep.subr.mxu0 0.0
    %3708 = vmatpush1.msra.mxu0 0.0
    %3709 = vmatprep.subr.mxu0 0.0
    %3710 = vmatpush1.msra.mxu0 0.0
    %3711 = vmatprep.subr.mxu0 0.0
    %3712 = vmatpush1.msra.mxu0 0.0
    %3713 = vmatprep.subr.mxu0 0.0
    %3714 = vmatpush1.msra.mxu0 0.0
    %3715 = vmatprep.subr.mxu0 0.0
    %3716 = vmatpush1.msra.mxu0 0.0
    %3717 = vmatprep.subr.mxu0 0.0
    %3718 = vmatpush1.msra.mxu0 0.0
    %3719 = vmatprep.subr.mxu0 0.0
    %3720 = vmatpush1.msra.mxu0 0.0
    %3721 = vmatprep.subr.mxu0 0.0
    %3722 = vmatpush1.msra.mxu0 0.0
    %3723 = vmatprep.mubr.f32.mxu0 0.0
    %3724 = vmatmul.mubr.f32.gmra.mrb[0].mxu0 %v3657
    %v3725 = vpop.f32.mrb[0].mxu0
    %v3726 = vadd.f32 0.0, %v3725
    %v3727 = vpop.f32.mrb[0].mxu0
    %v3728 = vadd.f32 0.0, %v3727
    %3729 = vdwg.mxu0
    %3730 = vmatprep.subr.mxu0 %v542
    %3731 = vmatpush1.msra.mxu0 %v541
    %3732 = vmatprep.subr.mxu0 %v546
    %3733 = vmatpush1.msra.mxu0 %v545
    %3734 = vmatprep.subr.mxu0 %v550
    %3735 = vmatpush1.msra.mxu0 %v549
    %3736 = vmatprep.subr.mxu0 %v554
    %3737 = vmatpush1.msra.mxu0 %v553
    %3738 = vmatprep.subr.mxu0 %v558
    %3739 = vmatpush1.msra.mxu0 %v557
    %3740 = vmatprep.subr.mxu0 %v562
    %3741 = vmatpush1.msra.mxu0 %v561
    %3742 = vmatprep.subr.mxu0 %v566
    %3743 = vmatpush1.msra.mxu0 %v565
    %3744 = vmatprep.subr.mxu0 %v570
    %3745 = vmatpush1.msra.mxu0 %v569
    %3746 = vmatprep.subr.mxu0 %v574
    %3747 = vmatpush1.msra.mxu0 %v573
    %3748 = vmatprep.subr.mxu0 %v578
    %3749 = vmatpush1.msra.mxu0 %v577
    %3750 = vmatprep.subr.mxu0 %v582
    %3751 = vmatpush1.msra.mxu0 %v581
    %3752 = vmatprep.subr.mxu0 %v586
    %3753 = vmatpush1.msra.mxu0 %v585
    %3754 = vmatprep.subr.mxu0 %v590
    %3755 = vmatpush1.msra.mxu0 %v589
    %3756 = vmatprep.subr.mxu0 %v594
    %3757 = vmatpush1.msra.mxu0 %v593
    %3758 = vmatprep.subr.mxu0 %v598
    %3759 = vmatpush1.msra.mxu0 %v597
    %3760 = vmatprep.subr.mxu0 %v602
    %3761 = vmatpush1.msra.mxu0 %v601
    %3762 = vmatprep.subr.mxu0 0.0
    %3763 = vmatpush1.msra.mxu0 0.0
    %3764 = vmatprep.subr.mxu0 0.0
    %3765 = vmatpush1.msra.mxu0 0.0
    %3766 = vmatprep.subr.mxu0 0.0
    %3767 = vmatpush1.msra.mxu0 0.0
    %3768 = vmatprep.subr.mxu0 0.0
    %3769 = vmatpush1.msra.mxu0 0.0
    %3770 = vmatprep.subr.mxu0 0.0
    %3771 = vmatpush1.msra.mxu0 0.0
    %3772 = vmatprep.subr.mxu0 0.0
    %3773 = vmatpush1.msra.mxu0 0.0
    %3774 = vmatprep.subr.mxu0 0.0
    %3775 = vmatpush1.msra.mxu0 0.0
    %3776 = vmatprep.subr.mxu0 0.0
    %3777 = vmatpush1.msra.mxu0 0.0
    %3778 = vmatprep.subr.mxu0 0.0
    %3779 = vmatpush1.msra.mxu0 0.0
    %3780 = vmatprep.subr.mxu0 0.0
    %3781 = vmatpush1.msra.mxu0 0.0
    %3782 = vmatprep.subr.mxu0 0.0
    %3783 = vmatpush1.msra.mxu0 0.0
    %3784 = vmatprep.subr.mxu0 0.0
    %3785 = vmatpush1.msra.mxu0 0.0
    %3786 = vmatprep.subr.mxu0 0.0
    %3787 = vmatpush1.msra.mxu0 0.0
    %3788 = vmatprep.subr.mxu0 0.0
    %3789 = vmatpush1.msra.mxu0 0.0
    %3790 = vmatprep.subr.mxu0 0.0
    %3791 = vmatpush1.msra.mxu0 0.0
    %3792 = vmatprep.subr.mxu0 0.0
    %3793 = vmatpush1.msra.mxu0 0.0
    %3794 = vmatprep.mubr.f32.mxu0 0.0
    %3795 = vmatmul.mubr.f32.gmra.mrb[0].mxu0 %v3657
    %v3796 = vpop.f32.mrb[0].mxu0
    %v3797 = vadd.f32 0.0, %v3796
    %v3798 = vpop.f32.mrb[0].mxu0
    %v3799 = vadd.f32 0.0, %v3798
    %3800 = vdwg.mxu0
    %v3805 = vrot.slane %v3726, 4
    %v3806 = vrot.slane %v3728, 4
    %v3807 = vrot.slane %v3797, 4
    %v3808 = vrot.slane %v3799, 4
    %v3813 = vadd.f32 %v2479, %v3805
    %v3814 = vadd.f32 %v2481, %v3806
    %v3815 = vadd.f32 %v2556, %v3807
    %v3816 = vadd.f32 %v2558, %v3808
    %v3817 = vxor.u32 %v3813, 2147483648
    %v3818 = vmul.f32 %v3817, 1.442695
    %v3819 = vpow.pop %v3818
    %v3820 = vadd.f32 %v3819, 1.0
    %v3821 = vrcp.pop %v3820
    %v3822 = vmul.f32 1.0, %v3821
    %v3823 = vxor.u32 %v3814, 2147483648
    %v3824 = vmul.f32 %v3823, 1.442695
    %v3825 = vpow.pop %v3824
    %v3826 = vadd.f32 %v3825, 1.0
    %v3827 = vrcp.pop %v3826
    %v3828 = vmul.f32 1.0, %v3827
    %v3829 = vtanh.pop %v3815
    %v3830 = vxor.u32 %v3816, 2147483648
    %v3831 = vmul.f32 %v3830, 1.442695
    %v3832 = vpow.pop %v3831
    %v3833 = vadd.f32 %v3832, 1.0
    %v3834 = vrcp.pop %v3833
    %v3835 = vmul.f32 1.0, %v3834
    %v3837 = vrot.slane %v3653, 6
    %v3839 = vmul.f32 %v3828, %v3837
    %v3840 = vmul.f32 %v3822, %v3829
    %v3841 = vadd.f32 %v3839, %v3840
    %v3842 = vtanh.pop %v3841
    %v3843 = vmul.f32 %v3835, %v3842
    %v3845 = vrot.slane %v3843, 4
    %3847 = vmatprep.subr.mxu0 %v540
    %3848 = vmatpush1.msra.mxu0 %v539
    %3849 = vmatprep.subr.mxu0 %v544
    %3850 = vmatpush1.msra.mxu0 %v543
    %3851 = vmatprep.subr.mxu0 %v548
    %3852 = vmatpush1.msra.mxu0 %v547
    %3853 = vmatprep.subr.mxu0 %v552
    %3854 = vmatpush1.msra.mxu0 %v551
    %3855 = vmatprep.subr.mxu0 %v556
    %3856 = vmatpush1.msra.mxu0 %v555
    %3857 = vmatprep.subr.mxu0 %v560
    %3858 = vmatpush1.msra.mxu0 %v559
    %3859 = vmatprep.subr.mxu0 %v564
    %3860 = vmatpush1.msra.mxu0 %v563
    %3861 = vmatprep.subr.mxu0 %v568
    %3862 = vmatpush1.msra.mxu0 %v567
    %3863 = vmatprep.subr.mxu0 %v572
    %3864 = vmatpush1.msra.mxu0 %v571
    %3865 = vmatprep.subr.mxu0 %v576
    %3866 = vmatpush1.msra.mxu0 %v575
    %3867 = vmatprep.subr.mxu0 %v580
    %3868 = vmatpush1.msra.mxu0 %v579
    %3869 = vmatprep.subr.mxu0 %v584
    %3870 = vmatpush1.msra.mxu0 %v583
    %3871 = vmatprep.subr.mxu0 %v588
    %3872 = vmatpush1.msra.mxu0 %v587
    %3873 = vmatprep.subr.mxu0 %v592
    %3874 = vmatpush1.msra.mxu0 %v591
    %3875 = vmatprep.subr.mxu0 %v596
    %3876 = vmatpush1.msra.mxu0 %v595
    %3877 = vmatprep.subr.mxu0 %v600
    %3878 = vmatpush1.msra.mxu0 %v599
    %3879 = vmatprep.subr.mxu0 0.0
    %3880 = vmatpush1.msra.mxu0 0.0
    %3881 = vmatprep.subr.mxu0 0.0
    %3882 = vmatpush1.msra.mxu0 0.0
    %3883 = vmatprep.subr.mxu0 0.0
    %3884 = vmatpush1.msra.mxu0 0.0
    %3885 = vmatprep.subr.mxu0 0.0
    %3886 = vmatpush1.msra.mxu0 0.0
    %3887 = vmatprep.subr.mxu0 0.0
    %3888 = vmatpush1.msra.mxu0 0.0
    %3889 = vmatprep.subr.mxu0 0.0
    %3890 = vmatpush1.msra.mxu0 0.0
    %3891 = vmatprep.subr.mxu0 0.0
    %3892 = vmatpush1.msra.mxu0 0.0
    %3893 = vmatprep.subr.mxu0 0.0
    %3894 = vmatpush1.msra.mxu0 0.0
    %3895 = vmatprep.subr.mxu0 0.0
    %3896 = vmatpush1.msra.mxu0 0.0
    %3897 = vmatprep.subr.mxu0 0.0
    %3898 = vmatpush1.msra.mxu0 0.0
    %3899 = vmatprep.subr.mxu0 0.0
    %3900 = vmatpush1.msra.mxu0 0.0
    %3901 = vmatprep.subr.mxu0 0.0
    %3902 = vmatpush1.msra.mxu0 0.0
    %3903 = vmatprep.subr.mxu0 0.0
    %3904 = vmatpush1.msra.mxu0 0.0
    %3905 = vmatprep.subr.mxu0 0.0
    %3906 = vmatpush1.msra.mxu0 0.0
    %3907 = vmatprep.subr.mxu0 0.0
    %3908 = vmatpush1.msra.mxu0 0.0
    %3909 = vmatprep.subr.mxu0 0.0
    %3910 = vmatpush1.msra.mxu0 0.0
    %3911 = vmatprep.mubr.f32.mxu0 0.0
    %3912 = vmatmul.mubr.f32.gmra.mrb[0].mxu0 %v3845
    %v3913 = vpop.f32.mrb[0].mxu0
    %v3914 = vadd.f32 0.0, %v3913
    %v3915 = vpop.f32.mrb[0].mxu0
    %v3916 = vadd.f32 0.0, %v3915
    %3917 = vdwg.mxu0
    %3918 = vmatprep.subr.mxu0 %v542
    %3919 = vmatpush1.msra.mxu0 %v541
    %3920 = vmatprep.subr.mxu0 %v546
    %3921 = vmatpush1.msra.mxu0 %v545
    %3922 = vmatprep.subr.mxu0 %v550
    %3923 = vmatpush1.msra.mxu0 %v549
    %3924 = vmatprep.subr.mxu0 %v554
    %3925 = vmatpush1.msra.mxu0 %v553
    %3926 = vmatprep.subr.mxu0 %v558
    %3927 = vmatpush1.msra.mxu0 %v557
    %3928 = vmatprep.subr.mxu0 %v562
    %3929 = vmatpush1.msra.mxu0 %v561
    %3930 = vmatprep.subr.mxu0 %v566
    %3931 = vmatpush1.msra.mxu0 %v565
    %3932 = vmatprep.subr.mxu0 %v570
    %3933 = vmatpush1.msra.mxu0 %v569
    %3934 = vmatprep.subr.mxu0 %v574
    %3935 = vmatpush1.msra.mxu0 %v573
    %3936 = vmatprep.subr.mxu0 %v578
    %3937 = vmatpush1.msra.mxu0 %v577
    %3938 = vmatprep.subr.mxu0 %v582
    %3939 = vmatpush1.msra.mxu0 %v581
    %3940 = vmatprep.subr.mxu0 %v586
    %3941 = vmatpush1.msra.mxu0 %v585
    %3942 = vmatprep.subr.mxu0 %v590
    %3943 = vmatpush1.msra.mxu0 %v589
    %3944 = vmatprep.subr.mxu0 %v594
    %3945 = vmatpush1.msra.mxu0 %v593
    %3946 = vmatprep.subr.mxu0 %v598
    %3947 = vmatpush1.msra.mxu0 %v597
    %3948 = vmatprep.subr.mxu0 %v602
    %3949 = vmatpush1.msra.mxu0 %v601
    %3950 = vmatprep.subr.mxu0 0.0
    %3951 = vmatpush1.msra.mxu0 0.0
    %3952 = vmatprep.subr.mxu0 0.0
    %3953 = vmatpush1.msra.mxu0 0.0
    %3954 = vmatprep.subr.mxu0 0.0
    %3955 = vmatpush1.msra.mxu0 0.0
    %3956 = vmatprep.subr.mxu0 0.0
    %3957 = vmatpush1.msra.mxu0 0.0
    %3958 = vmatprep.subr.mxu0 0.0
    %3959 = vmatpush1.msra.mxu0 0.0
    %3960 = vmatprep.subr.mxu0 0.0
    %3961 = vmatpush1.msra.mxu0 0.0
    %3962 = vmatprep.subr.mxu0 0.0
    %3963 = vmatpush1.msra.mxu0 0.0
    %3964 = vmatprep.subr.mxu0 0.0
    %3965 = vmatpush1.msra.mxu0 0.0
    %3966 = vmatprep.subr.mxu0 0.0
    %3967 = vmatpush1.msra.mxu0 0.0
    %3968 = vmatprep.subr.mxu0 0.0
    %3969 = vmatpush1.msra.mxu0 0.0
    %3970 = vmatprep.subr.mxu0 0.0
    %3971 = vmatpush1.msra.mxu0 0.0
    %3972 = vmatprep.subr.mxu0 0.0
    %3973 = vmatpush1.msra.mxu0 0.0
    %3974 = vmatprep.subr.mxu0 0.0
    %3975 = vmatpush1.msra.mxu0 0.0
    %3976 = vmatprep.subr.mxu0 0.0
    %3977 = vmatpush1.msra.mxu0 0.0
    %3978 = vmatprep.subr.mxu0 0.0
    %3979 = vmatpush1.msra.mxu0 0.0
    %3980 = vmatprep.subr.mxu0 0.0
    %3981 = vmatpush1.msra.mxu0 0.0
    %3982 = vmatprep.mubr.f32.mxu0 0.0
    %3983 = vmatmul.mubr.f32.gmra.mrb[0].mxu0 %v3845
    %v3984 = vpop.f32.mrb[0].mxu0
    %v3985 = vadd.f32 0.0, %v3984
    %v3986 = vpop.f32.mrb[0].mxu0
    %v3987 = vadd.f32 0.0, %v3986
    %3988 = vdwg.mxu0
    %v3993 = vrot.slane %v3914, 2
    %v3994 = vrot.slane %v3916, 2
    %v3995 = vrot.slane %v3985, 2
    %v3996 = vrot.slane %v3987, 2
    %v4001 = vadd.f32 %v2479, %v3993
    %v4002 = vadd.f32 %v2481, %v3994
    %v4003 = vadd.f32 %v2556, %v3995
    %v4004 = vadd.f32 %v2558, %v3996
    %v4005 = vxor.u32 %v4001, 2147483648
    %v4006 = vmul.f32 %v4005, 1.442695
    %v4007 = vpow.pop %v4006
    %v4008 = vadd.f32 %v4007, 1.0
    %v4009 = vrcp.pop %v4008
    %v4010 = vmul.f32 1.0, %v4009
    %v4011 = vxor.u32 %v4002, 2147483648
    %v4012 = vmul.f32 %v4011, 1.442695
    %v4013 = vpow.pop %v4012
    %v4014 = vadd.f32 %v4013, 1.0
    %v4015 = vrcp.pop %v4014
    %v4016 = vmul.f32 1.0, %v4015
    %v4017 = vtanh.pop %v4003
    %v4018 = vxor.u32 %v4004, 2147483648
    %v4019 = vmul.f32 %v4018, 1.442695
    %v4020 = vpow.pop %v4019
    %v4021 = vadd.f32 %v4020, 1.0
    %v4022 = vrcp.pop %v4021
    %v4023 = vmul.f32 1.0, %v4022
    %v4025 = vrot.slane %v3841, 6
    %v4027 = vmul.f32 %v4016, %v4025
    %v4028 = vmul.f32 %v4010, %v4017
    %v4029 = vadd.f32 %v4027, %v4028
    %v4030 = vtanh.pop %v4029
    %v4031 = vmul.f32 %v4023, %v4030
    %s4032 = scalar_lea.vmem %s17, 2
    %4033 = vst [vmem:[%s4032 - $0x6] sm:$0xc0] %v4031
    %s4034 = scalar_lea.vmem %s18, 2
    %4035 = vst [vmem:[%s4034 - $0x6] sm:$0xc0] %v4029
    %v4036 = vsel %vm2376, %v2733, %v2918
    %v4037 = vsel %vm2378, %v4036, %v3106
    %v4038 = vsel %vm2380, %v4037, %v3294
    %v4039 = vsel %vm2376, %v3470, %v3655
    %v4040 = vsel %vm2378, %v4039, %v3843
    %v4041 = vsel %vm2380, %v4040, %v4031
    %v4043 = vlaneseq
    %v4044 = vshrl.u32 %v4043, 7
    %v4045 = vsub.s32 0, %v4044
    %v4046 = vrot.slane %v669, %v4045
    %v4047 = vlaneseq
    %v4048 = vshrl.u32 %v4047, 7
    %v4049 = vsub.s32 1, %v4048
    %v4050 = vrot.slane %v669, %v4049
    %v4051 = vlaneseq
    %v4052 = vshrl.u32 %v4051, 7
    %v4053 = vsub.s32 2, %v4052
    %v4054 = vrot.slane %v669, %v4053
    %v4055 = vlaneseq
    %v4056 = vshrl.u32 %v4055, 7
    %v4057 = vsub.s32 3, %v4056
    %v4058 = vrot.slane %v669, %v4057
    %4063 = vmatprep.subr.mxu0 %v412
    %4064 = vmatpush1.msra.mxu0 %v411
    %4065 = vmatprep.subr.mxu0 %v416
    %4066 = vmatpush1.msra.mxu0 %v415
    %4067 = vmatprep.subr.mxu0 %v420
    %4068 = vmatpush1.msra.mxu0 %v419
    %4069 = vmatprep.subr.mxu0 %v424
    %4070 = vmatpush1.msra.mxu0 %v423
    %4071 = vmatprep.subr.mxu0 %v428
    %4072 = vmatpush1.msra.mxu0 %v427
    %4073 = vmatprep.subr.mxu0 %v432
    %4074 = vmatpush1.msra.mxu0 %v431
    %4075 = vmatprep.subr.mxu0 %v436
    %4076 = vmatpush1.msra.mxu0 %v435
    %4077 = vmatprep.subr.mxu0 %v440
    %4078 = vmatpush1.msra.mxu0 %v439
    %4079 = vmatprep.subr.mxu0 %v444
    %4080 = vmatpush1.msra.mxu0 %v443
    %4081 = vmatprep.subr.mxu0 %v448
    %4082 = vmatpush1.msra.mxu0 %v447
    %4083 = vmatprep.subr.mxu0 %v452
    %4084 = vmatpush1.msra.mxu0 %v451
    %4085 = vmatprep.subr.mxu0 %v456
    %4086 = vmatpush1.msra.mxu0 %v455
    %4087 = vmatprep.subr.mxu0 %v460
    %4088 = vmatpush1.msra.mxu0 %v459
    %4089 = vmatprep.subr.mxu0 %v464
    %4090 = vmatpush1.msra.mxu0 %v463
    %4091 = vmatprep.subr.mxu0 %v468
    %4092 = vmatpush1.msra.mxu0 %v467
    %4093 = vmatprep.subr.mxu0 %v472
    %4094 = vmatpush1.msra.mxu0 %v471
    %4095 = vmatprep.subr.mxu0 0.0
    %4096 = vmatpush1.msra.mxu0 0.0
    %4097 = vmatprep.subr.mxu0 0.0
    %4098 = vmatpush1.msra.mxu0 0.0
    %4099 = vmatprep.subr.mxu0 0.0
    %4100 = vmatpush1.msra.mxu0 0.0
    %4101 = vmatprep.subr.mxu0 0.0
    %4102 = vmatpush1.msra.mxu0 0.0
    %4103 = vmatprep.subr.mxu0 0.0
    %4104 = vmatpush1.msra.mxu0 0.0
    %4105 = vmatprep.subr.mxu0 0.0
    %4106 = vmatpush1.msra.mxu0 0.0
    %4107 = vmatprep.subr.mxu0 0.0
    %4108 = vmatpush1.msra.mxu0 0.0
    %4109 = vmatprep.subr.mxu0 0.0
    %4110 = vmatpush1.msra.mxu0 0.0
    %4111 = vmatprep.subr.mxu0 0.0
    %4112 = vmatpush1.msra.mxu0 0.0
    %4113 = vmatprep.subr.mxu0 0.0
    %4114 = vmatpush1.msra.mxu0 0.0
    %4115 = vmatprep.subr.mxu0 0.0
    %4116 = vmatpush1.msra.mxu0 0.0
    %4117 = vmatprep.subr.mxu0 0.0
    %4118 = vmatpush1.msra.mxu0 0.0
    %4119 = vmatprep.subr.mxu0 0.0
    %4120 = vmatpush1.msra.mxu0 0.0
    %4121 = vmatprep.subr.mxu0 0.0
    %4122 = vmatpush1.msra.mxu0 0.0
    %4123 = vmatprep.subr.mxu0 0.0
    %4124 = vmatpush1.msra.mxu0 0.0
    %4125 = vmatprep.subr.mxu0 0.0
    %4126 = vmatpush1.msra.mxu0 0.0
    %4127 = vmatprep.mubr.f32.mxu0 0.0
    %4128 = vmatmul.mubr.f32.gmra.mrb[0].mxu0 %v4038
    %v4129 = vpop.f32.mrb[0].mxu0
    %v4130 = vadd.f32 %v4046, %v4129
    %v4131 = vpop.f32.mrb[0].mxu0
    %v4132 = vadd.f32 %v4050, %v4131
    %4133 = vmatprep.mubr.f32.mxu0 0.0
    %4134 = vmatmul.mubr.f32.gmra.mrb[0].mxu0 %v4041
    %v4135 = vpop.f32.mrb[0].mxu0
    %v4136 = vadd.f32 %v4046, %v4135
    %v4137 = vpop.f32.mrb[0].mxu0
    %v4138 = vadd.f32 %v4050, %v4137
    %4139 = vdwg.mxu0
    %4140 = vmatprep.subr.mxu0 %v414
    %4141 = vmatpush1.msra.mxu0 %v413
    %4142 = vmatprep.subr.mxu0 %v418
    %4143 = vmatpush1.msra.mxu0 %v417
    %4144 = vmatprep.subr.mxu0 %v422
    %4145 = vmatpush1.msra.mxu0 %v421
    %4146 = vmatprep.subr.mxu0 %v426
    %4147 = vmatpush1.msra.mxu0 %v425
    %4148 = vmatprep.subr.mxu0 %v430
    %4149 = vmatpush1.msra.mxu0 %v429
    %4150 = vmatprep.subr.mxu0 %v434
    %4151 = vmatpush1.msra.mxu0 %v433
    %4152 = vmatprep.subr.mxu0 %v438
    %4153 = vmatpush1.msra.mxu0 %v437
    %4154 = vmatprep.subr.mxu0 %v442
    %4155 = vmatpush1.msra.mxu0 %v441
    %4156 = vmatprep.subr.mxu0 %v446
    %4157 = vmatpush1.msra.mxu0 %v445
    %4158 = vmatprep.subr.mxu0 %v450
    %4159 = vmatpush1.msra.mxu0 %v449
    %4160 = vmatprep.subr.mxu0 %v454
    %4161 = vmatpush1.msra.mxu0 %v453
    %4162 = vmatprep.subr.mxu0 %v458
    %4163 = vmatpush1.msra.mxu0 %v457
    %4164 = vmatprep.subr.mxu0 %v462
    %4165 = vmatpush1.msra.mxu0 %v461
    %4166 = vmatprep.subr.mxu0 %v466
    %4167 = vmatpush1.msra.mxu0 %v465
    %4168 = vmatprep.subr.mxu0 %v470
    %4169 = vmatpush1.msra.mxu0 %v469
    %4170 = vmatprep.subr.mxu0 %v474
    %4171 = vmatpush1.msra.mxu0 %v473
    %4172 = vmatprep.subr.mxu0 0.0
    %4173 = vmatpush1.msra.mxu0 0.0
    %4174 = vmatprep.subr.mxu0 0.0
    %4175 = vmatpush1.msra.mxu0 0.0
    %4176 = vmatprep.subr.mxu0 0.0
    %4177 = vmatpush1.msra.mxu0 0.0
    %4178 = vmatprep.subr.mxu0 0.0
    %4179 = vmatpush1.msra.mxu0 0.0
    %4180 = vmatprep.subr.mxu0 0.0
    %4181 = vmatpush1.msra.mxu0 0.0
    %4182 = vmatprep.subr.mxu0 0.0
    %4183 = vmatpush1.msra.mxu0 0.0
    %4184 = vmatprep.subr.mxu0 0.0
    %4185 = vmatpush1.msra.mxu0 0.0
    %4186 = vmatprep.subr.mxu0 0.0
    %4187 = vmatpush1.msra.mxu0 0.0
    %4188 = vmatprep.subr.mxu0 0.0
    %4189 = vmatpush1.msra.mxu0 0.0
    %4190 = vmatprep.subr.mxu0 0.0
    %4191 = vmatpush1.msra.mxu0 0.0
    %4192 = vmatprep.subr.mxu0 0.0
    %4193 = vmatpush1.msra.mxu0 0.0
    %4194 = vmatprep.subr.mxu0 0.0
    %4195 = vmatpush1.msra.mxu0 0.0
    %4196 = vmatprep.subr.mxu0 0.0
    %4197 = vmatpush1.msra.mxu0 0.0
    %4198 = vmatprep.subr.mxu0 0.0
    %4199 = vmatpush1.msra.mxu0 0.0
    %4200 = vmatprep.subr.mxu0 0.0
    %4201 = vmatpush1.msra.mxu0 0.0
    %4202 = vmatprep.subr.mxu0 0.0
    %4203 = vmatpush1.msra.mxu0 0.0
    %4204 = vmatprep.mubr.f32.mxu0 0.0
    %4205 = vmatmul.mubr.f32.gmra.mrb[0].mxu0 %v4038
    %v4206 = vpop.f32.mrb[0].mxu0
    %v4207 = vadd.f32 %v4054, %v4206
    %v4208 = vpop.f32.mrb[0].mxu0
    %v4209 = vadd.f32 %v4058, %v4208
    %4210 = vmatprep.mubr.f32.mxu0 0.0
    %4211 = vmatmul.mubr.f32.gmra.mrb[0].mxu0 %v4041
    %v4212 = vpop.f32.mrb[0].mxu0
    %v4213 = vadd.f32 %v4054, %v4212
    %v4214 = vpop.f32.mrb[0].mxu0
    %v4215 = vadd.f32 %v4058, %v4214
    %4216 = vdwg.mxu0
    %s4217 = scalar_lea.vmem %s1, 4
    %v4218 = vld [vmem:[%s4217] sm:$0x3]
    %s4219 = scalar_lea.vmem %s2, 4
    %v4220 = vld [vmem:[%s4219] sm:$0x3]
    %4221 = vmatprep.subr.mxu0 %v604
    %4222 = vmatpush1.msra.mxu0 %v603
    %4223 = vmatprep.subr.mxu0 %v608
    %4224 = vmatpush1.msra.mxu0 %v607
    %4225 = vmatprep.subr.mxu0 %v612
    %4226 = vmatpush1.msra.mxu0 %v611
    %4227 = vmatprep.subr.mxu0 %v616
    %4228 = vmatpush1.msra.mxu0 %v615
    %4229 = vmatprep.subr.mxu0 %v620
    %4230 = vmatpush1.msra.mxu0 %v619
    %4231 = vmatprep.subr.mxu0 %v624
    %4232 = vmatpush1.msra.mxu0 %v623
    %4233 = vmatprep.subr.mxu0 %v628
    %4234 = vmatpush1.msra.mxu0 %v627
    %4235 = vmatprep.subr.mxu0 %v632
    %4236 = vmatpush1.msra.mxu0 %v631
    %4237 = vmatprep.subr.mxu0 %v636
    %4238 = vmatpush1.msra.mxu0 %v635
    %4239 = vmatprep.subr.mxu0 %v640
    %4240 = vmatpush1.msra.mxu0 %v639
    %4241 = vmatprep.subr.mxu0 %v644
    %4242 = vmatpush1.msra.mxu0 %v643
    %4243 = vmatprep.subr.mxu0 %v648
    %4244 = vmatpush1.msra.mxu0 %v647
    %4245 = vmatprep.subr.mxu0 %v652
    %4246 = vmatpush1.msra.mxu0 %v651
    %4247 = vmatprep.subr.mxu0 %v656
    %4248 = vmatpush1.msra.mxu0 %v655
    %4249 = vmatprep.subr.mxu0 %v660
    %4250 = vmatpush1.msra.mxu0 %v659
    %4251 = vmatprep.subr.mxu0 %v664
    %4252 = vmatpush1.msra.mxu0 %v663
    %4253 = vmatprep.subr.mxu0 0.0
    %4254 = vmatpush1.msra.mxu0 0.0
    %4255 = vmatprep.subr.mxu0 0.0
    %4256 = vmatpush1.msra.mxu0 0.0
    %4257 = vmatprep.subr.mxu0 0.0
    %4258 = vmatpush1.msra.mxu0 0.0
    %4259 = vmatprep.subr.mxu0 0.0
    %4260 = vmatpush1.msra.mxu0 0.0
    %4261 = vmatprep.subr.mxu0 0.0
    %4262 = vmatpush1.msra.mxu0 0.0
    %4263 = vmatprep.subr.mxu0 0.0
    %4264 = vmatpush1.msra.mxu0 0.0
    %4265 = vmatprep.subr.mxu0 0.0
    %4266 = vmatpush1.msra.mxu0 0.0
    %4267 = vmatprep.subr.mxu0 0.0
    %4268 = vmatpush1.msra.mxu0 0.0
    %4269 = vmatprep.subr.mxu0 0.0
    %4270 = vmatpush1.msra.mxu0 0.0
    %4271 = vmatprep.subr.mxu0 0.0
    %4272 = vmatpush1.msra.mxu0 0.0
    %4273 = vmatprep.subr.mxu0 0.0
    %4274 = vmatpush1.msra.mxu0 0.0
    %4275 = vmatprep.subr.mxu0 0.0
    %4276 = vmatpush1.msra.mxu0 0.0
    %4277 = vmatprep.subr.mxu0 0.0
    %4278 = vmatpush1.msra.mxu0 0.0
    %4279 = vmatprep.subr.mxu0 0.0
    %4280 = vmatpush1.msra.mxu0 0.0
    %4281 = vmatprep.subr.mxu0 0.0
    %4282 = vmatpush1.msra.mxu0 0.0
    %4283 = vmatprep.subr.mxu0 0.0
    %4284 = vmatpush1.msra.mxu0 0.0
    %4285 = vmatprep.mubr.f32.mxu0 0.0
    %4286 = vmatmul.mubr.f32.gmra.mrb[0].mxu0 %v4218
    %v4287 = vpop.f32.mrb[0].mxu0
    %v4288 = vadd.f32 0.0, %v4287
    %v4289 = vpop.f32.mrb[0].mxu0
    %v4290 = vadd.f32 0.0, %v4289
    %4291 = vdwg.mxu0
    %4292 = vmatprep.subr.mxu0 %v606
    %4293 = vmatpush1.msra.mxu0 %v605
    %4294 = vmatprep.subr.mxu0 %v610
    %4295 = vmatpush1.msra.mxu0 %v609
    %4296 = vmatprep.subr.mxu0 %v614
    %4297 = vmatpush1.msra.mxu0 %v613
    %4298 = vmatprep.subr.mxu0 %v618
    %4299 = vmatpush1.msra.mxu0 %v617
    %4300 = vmatprep.subr.mxu0 %v622
    %4301 = vmatpush1.msra.mxu0 %v621
    %4302 = vmatprep.subr.mxu0 %v626
    %4303 = vmatpush1.msra.mxu0 %v625
    %4304 = vmatprep.subr.mxu0 %v630
    %4305 = vmatpush1.msra.mxu0 %v629
    %4306 = vmatprep.subr.mxu0 %v634
    %4307 = vmatpush1.msra.mxu0 %v633
    %4308 = vmatprep.subr.mxu0 %v638
    %4309 = vmatpush1.msra.mxu0 %v637
    %4310 = vmatprep.subr.mxu0 %v642
    %4311 = vmatpush1.msra.mxu0 %v641
    %4312 = vmatprep.subr.mxu0 %v646
    %4313 = vmatpush1.msra.mxu0 %v645
    %4314 = vmatprep.subr.mxu0 %v650
    %4315 = vmatpush1.msra.mxu0 %v649
    %4316 = vmatprep.subr.mxu0 %v654
    %4317 = vmatpush1.msra.mxu0 %v653
    %4318 = vmatprep.subr.mxu0 %v658
    %4319 = vmatpush1.msra.mxu0 %v657
    %4320 = vmatprep.subr.mxu0 %v662
    %4321 = vmatpush1.msra.mxu0 %v661
    %4322 = vmatprep.subr.mxu0 %v666
    %4323 = vmatpush1.msra.mxu0 %v665
    %4324 = vmatprep.subr.mxu0 0.0
    %4325 = vmatpush1.msra.mxu0 0.0
    %4326 = vmatprep.subr.mxu0 0.0
    %4327 = vmatpush1.msra.mxu0 0.0
    %4328 = vmatprep.subr.mxu0 0.0
    %4329 = vmatpush1.msra.mxu0 0.0
    %4330 = vmatprep.subr.mxu0 0.0
    %4331 = vmatpush1.msra.mxu0 0.0
    %4332 = vmatprep.subr.mxu0 0.0
    %4333 = vmatpush1.msra.mxu0 0.0
    %4334 = vmatprep.subr.mxu0 0.0
    %4335 = vmatpush1.msra.mxu0 0.0
    %4336 = vmatprep.subr.mxu0 0.0
    %4337 = vmatpush1.msra.mxu0 0.0
    %4338 = vmatprep.subr.mxu0 0.0
    %4339 = vmatpush1.msra.mxu0 0.0
    %4340 = vmatprep.subr.mxu0 0.0
    %4341 = vmatpush1.msra.mxu0 0.0
    %4342 = vmatprep.subr.mxu0 0.0
    %4343 = vmatpush1.msra.mxu0 0.0
    %4344 = vmatprep.subr.mxu0 0.0
    %4345 = vmatpush1.msra.mxu0 0.0
    %4346 = vmatprep.subr.mxu0 0.0
    %4347 = vmatpush1.msra.mxu0 0.0
    %4348 = vmatprep.subr.mxu0 0.0
    %4349 = vmatpush1.msra.mxu0 0.0
    %4350 = vmatprep.subr.mxu0 0.0
    %4351 = vmatpush1.msra.mxu0 0.0
    %4352 = vmatprep.subr.mxu0 0.0
    %4353 = vmatpush1.msra.mxu0 0.0
    %4354 = vmatprep.subr.mxu0 0.0
    %4355 = vmatpush1.msra.mxu0 0.0
    %4356 = vmatprep.mubr.f32.mxu0 0.0
    %4357 = vmatmul.mubr.f32.gmra.mrb[0].mxu0 %v4218
    %v4358 = vpop.f32.mrb[0].mxu0
    %v4359 = vadd.f32 0.0, %v4358
    %v4360 = vpop.f32.mrb[0].mxu0
    %v4361 = vadd.f32 0.0, %v4360
    %4362 = vdwg.mxu0
    %v4363 = vadd.f32 %v4130, %v4288
    %v4364 = vadd.f32 %v4132, %v4290
    %v4365 = vadd.f32 %v4207, %v4359
    %v4366 = vadd.f32 %v4209, %v4361
    %v4367 = vxor.u32 %v4363, 2147483648
    %v4368 = vmul.f32 %v4367, 1.442695
    %v4369 = vpow.pop %v4368
    %v4370 = vadd.f32 %v4369, 1.0
    %v4371 = vrcp.pop %v4370
    %v4372 = vmul.f32 1.0, %v4371
    %v4373 = vxor.u32 %v4364, 2147483648
    %v4374 = vmul.f32 %v4373, 1.442695
    %v4375 = vpow.pop %v4374
    %v4376 = vadd.f32 %v4375, 1.0
    %v4377 = vrcp.pop %v4376
    %v4378 = vmul.f32 1.0, %v4377
    %v4379 = vtanh.pop %v4365
    %v4380 = vxor.u32 %v4366, 2147483648
    %v4381 = vmul.f32 %v4380, 1.442695
    %v4382 = vpow.pop %v4381
    %v4383 = vadd.f32 %v4382, 1.0
    %v4384 = vrcp.pop %v4383
    %v4385 = vmul.f32 1.0, %v4384
    %v4386 = vmul.f32 %v4378, %v4220
    %v4387 = vmul.f32 %v4372, %v4379
    %v4388 = vadd.f32 %v4386, %v4387
    %v4389 = vtanh.pop %v4388
    %v4390 = vmul.f32 %v4385, %v4389
    %4391 = vmatprep.subr.mxu0 %v604
    %4392 = vmatpush1.msra.mxu0 %v603
    %4393 = vmatprep.subr.mxu0 %v608
    %4394 = vmatpush1.msra.mxu0 %v607
    %4395 = vmatprep.subr.mxu0 %v612
    %4396 = vmatpush1.msra.mxu0 %v611
    %4397 = vmatprep.subr.mxu0 %v616
    %4398 = vmatpush1.msra.mxu0 %v615
    %4399 = vmatprep.subr.mxu0 %v620
    %4400 = vmatpush1.msra.mxu0 %v619
    %4401 = vmatprep.subr.mxu0 %v624
    %4402 = vmatpush1.msra.mxu0 %v623
    %4403 = vmatprep.subr.mxu0 %v628
    %4404 = vmatpush1.msra.mxu0 %v627
    %4405 = vmatprep.subr.mxu0 %v632
    %4406 = vmatpush1.msra.mxu0 %v631
    %4407 = vmatprep.subr.mxu0 %v636
    %4408 = vmatpush1.msra.mxu0 %v635
    %4409 = vmatprep.subr.mxu0 %v640
    %4410 = vmatpush1.msra.mxu0 %v639
    %4411 = vmatprep.subr.mxu0 %v644
    %4412 = vmatpush1.msra.mxu0 %v643
    %4413 = vmatprep.subr.mxu0 %v648
    %4414 = vmatpush1.msra.mxu0 %v647
    %4415 = vmatprep.subr.mxu0 %v652
    %4416 = vmatpush1.msra.mxu0 %v651
    %4417 = vmatprep.subr.mxu0 %v656
    %4418 = vmatpush1.msra.mxu0 %v655
    %4419 = vmatprep.subr.mxu0 %v660
    %4420 = vmatpush1.msra.mxu0 %v659
    %4421 = vmatprep.subr.mxu0 %v664
    %4422 = vmatpush1.msra.mxu0 %v663
    %4423 = vmatprep.subr.mxu0 0.0
    %4424 = vmatpush1.msra.mxu0 0.0
    %4425 = vmatprep.subr.mxu0 0.0
    %4426 = vmatpush1.msra.mxu0 0.0
    %4427 = vmatprep.subr.mxu0 0.0
    %4428 = vmatpush1.msra.mxu0 0.0
    %4429 = vmatprep.subr.mxu0 0.0
    %4430 = vmatpush1.msra.mxu0 0.0
    %4431 = vmatprep.subr.mxu0 0.0
    %4432 = vmatpush1.msra.mxu0 0.0
    %4433 = vmatprep.subr.mxu0 0.0
    %4434 = vmatpush1.msra.mxu0 0.0
    %4435 = vmatprep.subr.mxu0 0.0
    %4436 = vmatpush1.msra.mxu0 0.0
    %4437 = vmatprep.subr.mxu0 0.0
    %4438 = vmatpush1.msra.mxu0 0.0
    %4439 = vmatprep.subr.mxu0 0.0
    %4440 = vmatpush1.msra.mxu0 0.0
    %4441 = vmatprep.subr.mxu0 0.0
    %4442 = vmatpush1.msra.mxu0 0.0
    %4443 = vmatprep.subr.mxu0 0.0
    %4444 = vmatpush1.msra.mxu0 0.0
    %4445 = vmatprep.subr.mxu0 0.0
    %4446 = vmatpush1.msra.mxu0 0.0
    %4447 = vmatprep.subr.mxu0 0.0
    %4448 = vmatpush1.msra.mxu0 0.0
    %4449 = vmatprep.subr.mxu0 0.0
    %4450 = vmatpush1.msra.mxu0 0.0
    %4451 = vmatprep.subr.mxu0 0.0
    %4452 = vmatpush1.msra.mxu0 0.0
    %4453 = vmatprep.subr.mxu0 0.0
    %4454 = vmatpush1.msra.mxu0 0.0
    %4455 = vmatprep.mubr.f32.mxu0 0.0
    %4456 = vmatmul.mubr.f32.gmra.mrb[0].mxu0 %v4390
    %v4457 = vpop.f32.mrb[0].mxu0
    %v4458 = vadd.f32 0.0, %v4457
    %v4459 = vpop.f32.mrb[0].mxu0
    %v4460 = vadd.f32 0.0, %v4459
    %4461 = vdwg.mxu0
    %4462 = vmatprep.subr.mxu0 %v606
    %4463 = vmatpush1.msra.mxu0 %v605
    %4464 = vmatprep.subr.mxu0 %v610
    %4465 = vmatpush1.msra.mxu0 %v609
    %4466 = vmatprep.subr.mxu0 %v614
    %4467 = vmatpush1.msra.mxu0 %v613
    %4468 = vmatprep.subr.mxu0 %v618
    %4469 = vmatpush1.msra.mxu0 %v617
    %4470 = vmatprep.subr.mxu0 %v622
    %4471 = vmatpush1.msra.mxu0 %v621
    %4472 = vmatprep.subr.mxu0 %v626
    %4473 = vmatpush1.msra.mxu0 %v625
    %4474 = vmatprep.subr.mxu0 %v630
    %4475 = vmatpush1.msra.mxu0 %v629
    %4476 = vmatprep.subr.mxu0 %v634
    %4477 = vmatpush1.msra.mxu0 %v633
    %4478 = vmatprep.subr.mxu0 %v638
    %4479 = vmatpush1.msra.mxu0 %v637
    %4480 = vmatprep.subr.mxu0 %v642
    %4481 = vmatpush1.msra.mxu0 %v641
    %4482 = vmatprep.subr.mxu0 %v646
    %4483 = vmatpush1.msra.mxu0 %v645
    %4484 = vmatprep.subr.mxu0 %v650
    %4485 = vmatpush1.msra.mxu0 %v649
    %4486 = vmatprep.subr.mxu0 %v654
    %4487 = vmatpush1.msra.mxu0 %v653
    %4488 = vmatprep.subr.mxu0 %v658
    %4489 = vmatpush1.msra.mxu0 %v657
    %4490 = vmatprep.subr.mxu0 %v662
    %4491 = vmatpush1.msra.mxu0 %v661
    %4492 = vmatprep.subr.mxu0 %v666
    %4493 = vmatpush1.msra.mxu0 %v665
    %4494 = vmatprep.subr.mxu0 0.0
    %4495 = vmatpush1.msra.mxu0 0.0
    %4496 = vmatprep.subr.mxu0 0.0
    %4497 = vmatpush1.msra.mxu0 0.0
    %4498 = vmatprep.subr.mxu0 0.0
    %4499 = vmatpush1.msra.mxu0 0.0
    %4500 = vmatprep.subr.mxu0 0.0
    %4501 = vmatpush1.msra.mxu0 0.0
    %4502 = vmatprep.subr.mxu0 0.0
    %4503 = vmatpush1.msra.mxu0 0.0
    %4504 = vmatprep.subr.mxu0 0.0
    %4505 = vmatpush1.msra.mxu0 0.0
    %4506 = vmatprep.subr.mxu0 0.0
    %4507 = vmatpush1.msra.mxu0 0.0
    %4508 = vmatprep.subr.mxu0 0.0
    %4509 = vmatpush1.msra.mxu0 0.0
    %4510 = vmatprep.subr.mxu0 0.0
    %4511 = vmatpush1.msra.mxu0 0.0
    %4512 = vmatprep.subr.mxu0 0.0
    %4513 = vmatpush1.msra.mxu0 0.0
    %4514 = vmatprep.subr.mxu0 0.0
    %4515 = vmatpush1.msra.mxu0 0.0
    %4516 = vmatprep.subr.mxu0 0.0
    %4517 = vmatpush1.msra.mxu0 0.0
    %4518 = vmatprep.subr.mxu0 0.0
    %4519 = vmatpush1.msra.mxu0 0.0
    %4520 = vmatprep.subr.mxu0 0.0
    %4521 = vmatpush1.msra.mxu0 0.0
    %4522 = vmatprep.subr.mxu0 0.0
    %4523 = vmatpush1.msra.mxu0 0.0
    %4524 = vmatprep.subr.mxu0 0.0
    %4525 = vmatpush1.msra.mxu0 0.0
    %4526 = vmatprep.mubr.f32.mxu0 0.0
    %4527 = vmatmul.mubr.f32.gmra.mrb[0].mxu0 %v4390
    %v4528 = vpop.f32.mrb[0].mxu0
    %v4529 = vadd.f32 0.0, %v4528
    %v4530 = vpop.f32.mrb[0].mxu0
    %v4531 = vadd.f32 0.0, %v4530
    %4532 = vdwg.mxu0
    %v4537 = vrot.slane %v4458, 6
    %v4538 = vrot.slane %v4460, 6
    %v4539 = vrot.slane %v4529, 6
    %v4540 = vrot.slane %v4531, 6
    %v4545 = vadd.f32 %v4130, %v4537
    %v4546 = vadd.f32 %v4132, %v4538
    %v4547 = vadd.f32 %v4207, %v4539
    %v4548 = vadd.f32 %v4209, %v4540
    %v4549 = vxor.u32 %v4545, 2147483648
    %v4550 = vmul.f32 %v4549, 1.442695
    %v4551 = vpow.pop %v4550
    %v4552 = vadd.f32 %v4551, 1.0
    %v4553 = vrcp.pop %v4552
    %v4554 = vmul.f32 1.0, %v4553
    %v4555 = vxor.u32 %v4546, 2147483648
    %v4556 = vmul.f32 %v4555, 1.442695
    %v4557 = vpow.pop %v4556
    %v4558 = vadd.f32 %v4557, 1.0
    %v4559 = vrcp.pop %v4558
    %v4560 = vmul.f32 1.0, %v4559
    %v4561 = vtanh.pop %v4547
    %v4562 = vxor.u32 %v4548, 2147483648
    %v4563 = vmul.f32 %v4562, 1.442695
    %v4564 = vpow.pop %v4563
    %v4565 = vadd.f32 %v4564, 1.0
    %v4566 = vrcp.pop %v4565
    %v4567 = vmul.f32 1.0, %v4566
    %v4569 = vrot.slane %v4388, 6
    %v4571 = vmul.f32 %v4560, %v4569
    %v4572 = vmul.f32 %v4554, %v4561
    %v4573 = vadd.f32 %v4571, %v4572
    %v4574 = vtanh.pop %v4573
    %v4575 = vmul.f32 %v4567, %v4574
    %v4577 = vrot.slane %v4575, 2
    %4579 = vmatprep.subr.mxu0 %v604
    %4580 = vmatpush1.msra.mxu0 %v603
    %4581 = vmatprep.subr.mxu0 %v608
    %4582 = vmatpush1.msra.mxu0 %v607
    %4583 = vmatprep.subr.mxu0 %v612
    %4584 = vmatpush1.msra.mxu0 %v611
    %4585 = vmatprep.subr.mxu0 %v616
    %4586 = vmatpush1.msra.mxu0 %v615
    %4587 = vmatprep.subr.mxu0 %v620
    %4588 = vmatpush1.msra.mxu0 %v619
    %4589 = vmatprep.subr.mxu0 %v624
    %4590 = vmatpush1.msra.mxu0 %v623
    %4591 = vmatprep.subr.mxu0 %v628
    %4592 = vmatpush1.msra.mxu0 %v627
    %4593 = vmatprep.subr.mxu0 %v632
    %4594 = vmatpush1.msra.mxu0 %v631
    %4595 = vmatprep.subr.mxu0 %v636
    %4596 = vmatpush1.msra.mxu0 %v635
    %4597 = vmatprep.subr.mxu0 %v640
    %4598 = vmatpush1.msra.mxu0 %v639
    %4599 = vmatprep.subr.mxu0 %v644
    %4600 = vmatpush1.msra.mxu0 %v643
    %4601 = vmatprep.subr.mxu0 %v648
    %4602 = vmatpush1.msra.mxu0 %v647
    %4603 = vmatprep.subr.mxu0 %v652
    %4604 = vmatpush1.msra.mxu0 %v651
    %4605 = vmatprep.subr.mxu0 %v656
    %4606 = vmatpush1.msra.mxu0 %v655
    %4607 = vmatprep.subr.mxu0 %v660
    %4608 = vmatpush1.msra.mxu0 %v659
    %4609 = vmatprep.subr.mxu0 %v664
    %4610 = vmatpush1.msra.mxu0 %v663
    %4611 = vmatprep.subr.mxu0 0.0
    %4612 = vmatpush1.msra.mxu0 0.0
    %4613 = vmatprep.subr.mxu0 0.0
    %4614 = vmatpush1.msra.mxu0 0.0
    %4615 = vmatprep.subr.mxu0 0.0
    %4616 = vmatpush1.msra.mxu0 0.0
    %4617 = vmatprep.subr.mxu0 0.0
    %4618 = vmatpush1.msra.mxu0 0.0
    %4619 = vmatprep.subr.mxu0 0.0
    %4620 = vmatpush1.msra.mxu0 0.0
    %4621 = vmatprep.subr.mxu0 0.0
    %4622 = vmatpush1.msra.mxu0 0.0
    %4623 = vmatprep.subr.mxu0 0.0
    %4624 = vmatpush1.msra.mxu0 0.0
    %4625 = vmatprep.subr.mxu0 0.0
    %4626 = vmatpush1.msra.mxu0 0.0
    %4627 = vmatprep.subr.mxu0 0.0
    %4628 = vmatpush1.msra.mxu0 0.0
    %4629 = vmatprep.subr.mxu0 0.0
    %4630 = vmatpush1.msra.mxu0 0.0
    %4631 = vmatprep.subr.mxu0 0.0
    %4632 = vmatpush1.msra.mxu0 0.0
    %4633 = vmatprep.subr.mxu0 0.0
    %4634 = vmatpush1.msra.mxu0 0.0
    %4635 = vmatprep.subr.mxu0 0.0
    %4636 = vmatpush1.msra.mxu0 0.0
    %4637 = vmatprep.subr.mxu0 0.0
    %4638 = vmatpush1.msra.mxu0 0.0
    %4639 = vmatprep.subr.mxu0 0.0
    %4640 = vmatpush1.msra.mxu0 0.0
    %4641 = vmatprep.subr.mxu0 0.0
    %4642 = vmatpush1.msra.mxu0 0.0
    %4643 = vmatprep.mubr.f32.mxu0 0.0
    %4644 = vmatmul.mubr.f32.gmra.mrb[0].mxu0 %v4577
    %v4645 = vpop.f32.mrb[0].mxu0
    %v4646 = vadd.f32 0.0, %v4645
    %v4647 = vpop.f32.mrb[0].mxu0
    %v4648 = vadd.f32 0.0, %v4647
    %4649 = vdwg.mxu0
    %4650 = vmatprep.subr.mxu0 %v606
    %4651 = vmatpush1.msra.mxu0 %v605
    %4652 = vmatprep.subr.mxu0 %v610
    %4653 = vmatpush1.msra.mxu0 %v609
    %4654 = vmatprep.subr.mxu0 %v614
    %4655 = vmatpush1.msra.mxu0 %v613
    %4656 = vmatprep.subr.mxu0 %v618
    %4657 = vmatpush1.msra.mxu0 %v617
    %4658 = vmatprep.subr.mxu0 %v622
    %4659 = vmatpush1.msra.mxu0 %v621
    %4660 = vmatprep.subr.mxu0 %v626
    %4661 = vmatpush1.msra.mxu0 %v625
    %4662 = vmatprep.subr.mxu0 %v630
    %4663 = vmatpush1.msra.mxu0 %v629
    %4664 = vmatprep.subr.mxu0 %v634
    %4665 = vmatpush1.msra.mxu0 %v633
    %4666 = vmatprep.subr.mxu0 %v638
    %4667 = vmatpush1.msra.mxu0 %v637
    %4668 = vmatprep.subr.mxu0 %v642
    %4669 = vmatpush1.msra.mxu0 %v641
    %4670 = vmatprep.subr.mxu0 %v646
    %4671 = vmatpush1.msra.mxu0 %v645
    %4672 = vmatprep.subr.mxu0 %v650
    %4673 = vmatpush1.msra.mxu0 %v649
    %4674 = vmatprep.subr.mxu0 %v654
    %4675 = vmatpush1.msra.mxu0 %v653
    %4676 = vmatprep.subr.mxu0 %v658
    %4677 = vmatpush1.msra.mxu0 %v657
    %4678 = vmatprep.subr.mxu0 %v662
    %4679 = vmatpush1.msra.mxu0 %v661
    %4680 = vmatprep.subr.mxu0 %v666
    %4681 = vmatpush1.msra.mxu0 %v665
    %4682 = vmatprep.subr.mxu0 0.0
    %4683 = vmatpush1.msra.mxu0 0.0
    %4684 = vmatprep.subr.mxu0 0.0
    %4685 = vmatpush1.msra.mxu0 0.0
    %4686 = vmatprep.subr.mxu0 0.0
    %4687 = vmatpush1.msra.mxu0 0.0
    %4688 = vmatprep.subr.mxu0 0.0
    %4689 = vmatpush1.msra.mxu0 0.0
    %4690 = vmatprep.subr.mxu0 0.0
    %4691 = vmatpush1.msra.mxu0 0.0
    %4692 = vmatprep.subr.mxu0 0.0
    %4693 = vmatpush1.msra.mxu0 0.0
    %4694 = vmatprep.subr.mxu0 0.0
    %4695 = vmatpush1.msra.mxu0 0.0
    %4696 = vmatprep.subr.mxu0 0.0
    %4697 = vmatpush1.msra.mxu0 0.0
    %4698 = vmatprep.subr.mxu0 0.0
    %4699 = vmatpush1.msra.mxu0 0.0
    %4700 = vmatprep.subr.mxu0 0.0
    %4701 = vmatpush1.msra.mxu0 0.0
    %4702 = vmatprep.subr.mxu0 0.0
    %4703 = vmatpush1.msra.mxu0 0.0
    %4704 = vmatprep.subr.mxu0 0.0
    %4705 = vmatpush1.msra.mxu0 0.0
    %4706 = vmatprep.subr.mxu0 0.0
    %4707 = vmatpush1.msra.mxu0 0.0
    %4708 = vmatprep.subr.mxu0 0.0
    %4709 = vmatpush1.msra.mxu0 0.0
    %4710 = vmatprep.subr.mxu0 0.0
    %4711 = vmatpush1.msra.mxu0 0.0
    %4712 = vmatprep.subr.mxu0 0.0
    %4713 = vmatpush1.msra.mxu0 0.0
    %4714 = vmatprep.mubr.f32.mxu0 0.0
    %4715 = vmatmul.mubr.f32.gmra.mrb[0].mxu0 %v4577
    %v4716 = vpop.f32.mrb[0].mxu0
    %v4717 = vadd.f32 0.0, %v4716
    %v4718 = vpop.f32.mrb[0].mxu0
    %v4719 = vadd.f32 0.0, %v4718
    %4720 = vdwg.mxu0
    %v4725 = vrot.slane %v4646, 4
    %v4726 = vrot.slane %v4648, 4
    %v4727 = vrot.slane %v4717, 4
    %v4728 = vrot.slane %v4719, 4
    %v4733 = vadd.f32 %v4130, %v4725
    %v4734 = vadd.f32 %v4132, %v4726
    %v4735 = vadd.f32 %v4207, %v4727
    %v4736 = vadd.f32 %v4209, %v4728
    %v4737 = vxor.u32 %v4733, 2147483648
    %v4738 = vmul.f32 %v4737, 1.442695
    %v4739 = vpow.pop %v4738
    %v4740 = vadd.f32 %v4739, 1.0
    %v4741 = vrcp.pop %v4740
    %v4742 = vmul.f32 1.0, %v4741
    %v4743 = vxor.u32 %v4734, 2147483648
    %v4744 = vmul.f32 %v4743, 1.442695
    %v4745 = vpow.pop %v4744
    %v4746 = vadd.f32 %v4745, 1.0
    %v4747 = vrcp.pop %v4746
    %v4748 = vmul.f32 1.0, %v4747
    %v4749 = vtanh.pop %v4735
    %v4750 = vxor.u32 %v4736, 2147483648
    %v4751 = vmul.f32 %v4750, 1.442695
    %v4752 = vpow.pop %v4751
    %v4753 = vadd.f32 %v4752, 1.0
    %v4754 = vrcp.pop %v4753
    %v4755 = vmul.f32 1.0, %v4754
    %v4757 = vrot.slane %v4573, 6
    %v4759 = vmul.f32 %v4748, %v4757
    %v4760 = vmul.f32 %v4742, %v4749
    %v4761 = vadd.f32 %v4759, %v4760
    %v4762 = vtanh.pop %v4761
    %v4763 = vmul.f32 %v4755, %v4762
    %v4765 = vrot.slane %v4763, 4
    %4767 = vmatprep.subr.mxu0 %v604
    %4768 = vmatpush1.msra.mxu0 %v603
    %4769 = vmatprep.subr.mxu0 %v608
    %4770 = vmatpush1.msra.mxu0 %v607
    %4771 = vmatprep.subr.mxu0 %v612
    %4772 = vmatpush1.msra.mxu0 %v611
    %4773 = vmatprep.subr.mxu0 %v616
    %4774 = vmatpush1.msra.mxu0 %v615
    %4775 = vmatprep.subr.mxu0 %v620
    %4776 = vmatpush1.msra.mxu0 %v619
    %4777 = vmatprep.subr.mxu0 %v624
    %4778 = vmatpush1.msra.mxu0 %v623
    %4779 = vmatprep.subr.mxu0 %v628
    %4780 = vmatpush1.msra.mxu0 %v627
    %4781 = vmatprep.subr.mxu0 %v632
    %4782 = vmatpush1.msra.mxu0 %v631
    %4783 = vmatprep.subr.mxu0 %v636
    %4784 = vmatpush1.msra.mxu0 %v635
    %4785 = vmatprep.subr.mxu0 %v640
    %4786 = vmatpush1.msra.mxu0 %v639
    %4787 = vmatprep.subr.mxu0 %v644
    %4788 = vmatpush1.msra.mxu0 %v643
    %4789 = vmatprep.subr.mxu0 %v648
    %4790 = vmatpush1.msra.mxu0 %v647
    %4791 = vmatprep.subr.mxu0 %v652
    %4792 = vmatpush1.msra.mxu0 %v651
    %4793 = vmatprep.subr.mxu0 %v656
    %4794 = vmatpush1.msra.mxu0 %v655
    %4795 = vmatprep.subr.mxu0 %v660
    %4796 = vmatpush1.msra.mxu0 %v659
    %4797 = vmatprep.subr.mxu0 %v664
    %4798 = vmatpush1.msra.mxu0 %v663
    %4799 = vmatprep.subr.mxu0 0.0
    %4800 = vmatpush1.msra.mxu0 0.0
    %4801 = vmatprep.subr.mxu0 0.0
    %4802 = vmatpush1.msra.mxu0 0.0
    %4803 = vmatprep.subr.mxu0 0.0
    %4804 = vmatpush1.msra.mxu0 0.0
    %4805 = vmatprep.subr.mxu0 0.0
    %4806 = vmatpush1.msra.mxu0 0.0
    %4807 = vmatprep.subr.mxu0 0.0
    %4808 = vmatpush1.msra.mxu0 0.0
    %4809 = vmatprep.subr.mxu0 0.0
    %4810 = vmatpush1.msra.mxu0 0.0
    %4811 = vmatprep.subr.mxu0 0.0
    %4812 = vmatpush1.msra.mxu0 0.0
    %4813 = vmatprep.subr.mxu0 0.0
    %4814 = vmatpush1.msra.mxu0 0.0
    %4815 = vmatprep.subr.mxu0 0.0
    %4816 = vmatpush1.msra.mxu0 0.0
    %4817 = vmatprep.subr.mxu0 0.0
    %4818 = vmatpush1.msra.mxu0 0.0
    %4819 = vmatprep.subr.mxu0 0.0
    %4820 = vmatpush1.msra.mxu0 0.0
    %4821 = vmatprep.subr.mxu0 0.0
    %4822 = vmatpush1.msra.mxu0 0.0
    %4823 = vmatprep.subr.mxu0 0.0
    %4824 = vmatpush1.msra.mxu0 0.0
    %4825 = vmatprep.subr.mxu0 0.0
    %4826 = vmatpush1.msra.mxu0 0.0
    %4827 = vmatprep.subr.mxu0 0.0
    %4828 = vmatpush1.msra.mxu0 0.0
    %4829 = vmatprep.subr.mxu0 0.0
    %4830 = vmatpush1.msra.mxu0 0.0
    %4831 = vmatprep.mubr.f32.mxu0 0.0
    %4832 = vmatmul.mubr.f32.gmra.mrb[0].mxu0 %v4765
    %v4833 = vpop.f32.mrb[0].mxu0
    %v4834 = vadd.f32 0.0, %v4833
    %v4835 = vpop.f32.mrb[0].mxu0
    %v4836 = vadd.f32 0.0, %v4835
    %4837 = vdwg.mxu0
    %4838 = vmatprep.subr.mxu0 %v606
    %4839 = vmatpush1.msra.mxu0 %v605
    %4840 = vmatprep.subr.mxu0 %v610
    %4841 = vmatpush1.msra.mxu0 %v609
    %4842 = vmatprep.subr.mxu0 %v614
    %4843 = vmatpush1.msra.mxu0 %v613
    %4844 = vmatprep.subr.mxu0 %v618
    %4845 = vmatpush1.msra.mxu0 %v617
    %4846 = vmatprep.subr.mxu0 %v622
    %4847 = vmatpush1.msra.mxu0 %v621
    %4848 = vmatprep.subr.mxu0 %v626
    %4849 = vmatpush1.msra.mxu0 %v625
    %4850 = vmatprep.subr.mxu0 %v630
    %4851 = vmatpush1.msra.mxu0 %v629
    %4852 = vmatprep.subr.mxu0 %v634
    %4853 = vmatpush1.msra.mxu0 %v633
    %4854 = vmatprep.subr.mxu0 %v638
    %4855 = vmatpush1.msra.mxu0 %v637
    %4856 = vmatprep.subr.mxu0 %v642
    %4857 = vmatpush1.msra.mxu0 %v641
    %4858 = vmatprep.subr.mxu0 %v646
    %4859 = vmatpush1.msra.mxu0 %v645
    %4860 = vmatprep.subr.mxu0 %v650
    %4861 = vmatpush1.msra.mxu0 %v649
    %4862 = vmatprep.subr.mxu0 %v654
    %4863 = vmatpush1.msra.mxu0 %v653
    %4864 = vmatprep.subr.mxu0 %v658
    %4865 = vmatpush1.msra.mxu0 %v657
    %4866 = vmatprep.subr.mxu0 %v662
    %4867 = vmatpush1.msra.mxu0 %v661
    %4868 = vmatprep.subr.mxu0 %v666
    %4869 = vmatpush1.msra.mxu0 %v665
    %4870 = vmatprep.subr.mxu0 0.0
    %4871 = vmatpush1.msra.mxu0 0.0
    %4872 = vmatprep.subr.mxu0 0.0
    %4873 = vmatpush1.msra.mxu0 0.0
    %4874 = vmatprep.subr.mxu0 0.0
    %4875 = vmatpush1.msra.mxu0 0.0
    %4876 = vmatprep.subr.mxu0 0.0
    %4877 = vmatpush1.msra.mxu0 0.0
    %4878 = vmatprep.subr.mxu0 0.0
    %4879 = vmatpush1.msra.mxu0 0.0
    %4880 = vmatprep.subr.mxu0 0.0
    %4881 = vmatpush1.msra.mxu0 0.0
    %4882 = vmatprep.subr.mxu0 0.0
    %4883 = vmatpush1.msra.mxu0 0.0
    %4884 = vmatprep.subr.mxu0 0.0
    %4885 = vmatpush1.msra.mxu0 0.0
    %4886 = vmatprep.subr.mxu0 0.0
    %4887 = vmatpush1.msra.mxu0 0.0
    %4888 = vmatprep.subr.mxu0 0.0
    %4889 = vmatpush1.msra.mxu0 0.0
    %4890 = vmatprep.subr.mxu0 0.0
    %4891 = vmatpush1.msra.mxu0 0.0
    %4892 = vmatprep.subr.mxu0 0.0
    %4893 = vmatpush1.msra.mxu0 0.0
    %4894 = vmatprep.subr.mxu0 0.0
    %4895 = vmatpush1.msra.mxu0 0.0
    %4896 = vmatprep.subr.mxu0 0.0
    %4897 = vmatpush1.msra.mxu0 0.0
    %4898 = vmatprep.subr.mxu0 0.0
    %4899 = vmatpush1.msra.mxu0 0.0
    %4900 = vmatprep.subr.mxu0 0.0
    %4901 = vmatpush1.msra.mxu0 0.0
    %4902 = vmatprep.mubr.f32.mxu0 0.0
    %4903 = vmatmul.mubr.f32.gmra.mrb[0].mxu0 %v4765
    %v4904 = vpop.f32.mrb[0].mxu0
    %v4905 = vadd.f32 0.0, %v4904
    %v4906 = vpop.f32.mrb[0].mxu0
    %v4907 = vadd.f32 0.0, %v4906
    %4908 = vdwg.mxu0
    %v4913 = vrot.slane %v4834, 2
    %v4914 = vrot.slane %v4836, 2
    %v4915 = vrot.slane %v4905, 2
    %v4916 = vrot.slane %v4907, 2
    %v4921 = vadd.f32 %v4130, %v4913
    %v4922 = vadd.f32 %v4132, %v4914
    %v4923 = vadd.f32 %v4207, %v4915
    %v4924 = vadd.f32 %v4209, %v4916
    %v4925 = vxor.u32 %v4921, 2147483648
    %v4926 = vmul.f32 %v4925, 1.442695
    %v4927 = vpow.pop %v4926
    %v4928 = vadd.f32 %v4927, 1.0
    %v4929 = vrcp.pop %v4928
    %v4930 = vmul.f32 1.0, %v4929
    %v4931 = vxor.u32 %v4922, 2147483648
    %v4932 = vmul.f32 %v4931, 1.442695
    %v4933 = vpow.pop %v4932
    %v4934 = vadd.f32 %v4933, 1.0
    %v4935 = vrcp.pop %v4934
    %v4936 = vmul.f32 1.0, %v4935
    %v4937 = vtanh.pop %v4923
    %v4938 = vxor.u32 %v4924, 2147483648
    %v4939 = vmul.f32 %v4938, 1.442695
    %v4940 = vpow.pop %v4939
    %v4941 = vadd.f32 %v4940, 1.0
    %v4942 = vrcp.pop %v4941
    %v4943 = vmul.f32 1.0, %v4942
    %v4945 = vrot.slane %v4761, 6
    %v4947 = vmul.f32 %v4936, %v4945
    %v4948 = vmul.f32 %v4930, %v4937
    %v4949 = vadd.f32 %v4947, %v4948
    %v4950 = vtanh.pop %v4949
    %v4951 = vmul.f32 %v4943, %v4950
    %v4953 = vrot.slane %v4951, 6
    %4955 = vmatprep.subr.mxu0 %v604
    %4956 = vmatpush1.msra.mxu0 %v603
    %4957 = vmatprep.subr.mxu0 %v608
    %4958 = vmatpush1.msra.mxu0 %v607
    %4959 = vmatprep.subr.mxu0 %v612
    %4960 = vmatpush1.msra.mxu0 %v611
    %4961 = vmatprep.subr.mxu0 %v616
    %4962 = vmatpush1.msra.mxu0 %v615
    %4963 = vmatprep.subr.mxu0 %v620
    %4964 = vmatpush1.msra.mxu0 %v619
    %4965 = vmatprep.subr.mxu0 %v624
    %4966 = vmatpush1.msra.mxu0 %v623
    %4967 = vmatprep.subr.mxu0 %v628
    %4968 = vmatpush1.msra.mxu0 %v627
    %4969 = vmatprep.subr.mxu0 %v632
    %4970 = vmatpush1.msra.mxu0 %v631
    %4971 = vmatprep.subr.mxu0 %v636
    %4972 = vmatpush1.msra.mxu0 %v635
    %4973 = vmatprep.subr.mxu0 %v640
    %4974 = vmatpush1.msra.mxu0 %v639
    %4975 = vmatprep.subr.mxu0 %v644
    %4976 = vmatpush1.msra.mxu0 %v643
    %4977 = vmatprep.subr.mxu0 %v648
    %4978 = vmatpush1.msra.mxu0 %v647
    %4979 = vmatprep.subr.mxu0 %v652
    %4980 = vmatpush1.msra.mxu0 %v651
    %4981 = vmatprep.subr.mxu0 %v656
    %4982 = vmatpush1.msra.mxu0 %v655
    %4983 = vmatprep.subr.mxu0 %v660
    %4984 = vmatpush1.msra.mxu0 %v659
    %4985 = vmatprep.subr.mxu0 %v664
    %4986 = vmatpush1.msra.mxu0 %v663
    %4987 = vmatprep.subr.mxu0 0.0
    %4988 = vmatpush1.msra.mxu0 0.0
    %4989 = vmatprep.subr.mxu0 0.0
    %4990 = vmatpush1.msra.mxu0 0.0
    %4991 = vmatprep.subr.mxu0 0.0
    %4992 = vmatpush1.msra.mxu0 0.0
    %4993 = vmatprep.subr.mxu0 0.0
    %4994 = vmatpush1.msra.mxu0 0.0
    %4995 = vmatprep.subr.mxu0 0.0
    %4996 = vmatpush1.msra.mxu0 0.0
    %4997 = vmatprep.subr.mxu0 0.0
    %4998 = vmatpush1.msra.mxu0 0.0
    %4999 = vmatprep.subr.mxu0 0.0
    %5000 = vmatpush1.msra.mxu0 0.0
    %5001 = vmatprep.subr.mxu0 0.0
    %5002 = vmatpush1.msra.mxu0 0.0
    %5003 = vmatprep.subr.mxu0 0.0
    %5004 = vmatpush1.msra.mxu0 0.0
    %5005 = vmatprep.subr.mxu0 0.0
    %5006 = vmatpush1.msra.mxu0 0.0
    %5007 = vmatprep.subr.mxu0 0.0
    %5008 = vmatpush1.msra.mxu0 0.0
    %5009 = vmatprep.subr.mxu0 0.0
    %5010 = vmatpush1.msra.mxu0 0.0
    %5011 = vmatprep.subr.mxu0 0.0
    %5012 = vmatpush1.msra.mxu0 0.0
    %5013 = vmatprep.subr.mxu0 0.0
    %5014 = vmatpush1.msra.mxu0 0.0
    %5015 = vmatprep.subr.mxu0 0.0
    %5016 = vmatpush1.msra.mxu0 0.0
    %5017 = vmatprep.subr.mxu0 0.0
    %5018 = vmatpush1.msra.mxu0 0.0
    %5019 = vmatprep.mubr.f32.mxu0 0.0
    %5020 = vmatmul.mubr.f32.gmra.mrb[0].mxu0 %v4953
    %v5021 = vpop.f32.mrb[0].mxu0
    %v5022 = vadd.f32 0.0, %v5021
    %v5023 = vpop.f32.mrb[0].mxu0
    %v5024 = vadd.f32 0.0, %v5023
    %5025 = vdwg.mxu0
    %5026 = vmatprep.subr.mxu0 %v606
    %5027 = vmatpush1.msra.mxu0 %v605
    %5028 = vmatprep.subr.mxu0 %v610
    %5029 = vmatpush1.msra.mxu0 %v609
    %5030 = vmatprep.subr.mxu0 %v614
    %5031 = vmatpush1.msra.mxu0 %v613
    %5032 = vmatprep.subr.mxu0 %v618
    %5033 = vmatpush1.msra.mxu0 %v617
    %5034 = vmatprep.subr.mxu0 %v622
    %5035 = vmatpush1.msra.mxu0 %v621
    %5036 = vmatprep.subr.mxu0 %v626
    %5037 = vmatpush1.msra.mxu0 %v625
    %5038 = vmatprep.subr.mxu0 %v630
    %5039 = vmatpush1.msra.mxu0 %v629
    %5040 = vmatprep.subr.mxu0 %v634
    %5041 = vmatpush1.msra.mxu0 %v633
    %5042 = vmatprep.subr.mxu0 %v638
    %5043 = vmatpush1.msra.mxu0 %v637
    %5044 = vmatprep.subr.mxu0 %v642
    %5045 = vmatpush1.msra.mxu0 %v641
    %5046 = vmatprep.subr.mxu0 %v646
    %5047 = vmatpush1.msra.mxu0 %v645
    %5048 = vmatprep.subr.mxu0 %v650
    %5049 = vmatpush1.msra.mxu0 %v649
    %5050 = vmatprep.subr.mxu0 %v654
    %5051 = vmatpush1.msra.mxu0 %v653
    %5052 = vmatprep.subr.mxu0 %v658
    %5053 = vmatpush1.msra.mxu0 %v657
    %5054 = vmatprep.subr.mxu0 %v662
    %5055 = vmatpush1.msra.mxu0 %v661
    %5056 = vmatprep.subr.mxu0 %v666
    %5057 = vmatpush1.msra.mxu0 %v665
    %5058 = vmatprep.subr.mxu0 0.0
    %5059 = vmatpush1.msra.mxu0 0.0
    %5060 = vmatprep.subr.mxu0 0.0
    %5061 = vmatpush1.msra.mxu0 0.0
    %5062 = vmatprep.subr.mxu0 0.0
    %5063 = vmatpush1.msra.mxu0 0.0
    %5064 = vmatprep.subr.mxu0 0.0
    %5065 = vmatpush1.msra.mxu0 0.0
    %5066 = vmatprep.subr.mxu0 0.0
    %5067 = vmatpush1.msra.mxu0 0.0
    %5068 = vmatprep.subr.mxu0 0.0
    %5069 = vmatpush1.msra.mxu0 0.0
    %5070 = vmatprep.subr.mxu0 0.0
    %5071 = vmatpush1.msra.mxu0 0.0
    %5072 = vmatprep.subr.mxu0 0.0
    %5073 = vmatpush1.msra.mxu0 0.0
    %5074 = vmatprep.subr.mxu0 0.0
    %5075 = vmatpush1.msra.mxu0 0.0
    %5076 = vmatprep.subr.mxu0 0.0
    %5077 = vmatpush1.msra.mxu0 0.0
    %5078 = vmatprep.subr.mxu0 0.0
    %5079 = vmatpush1.msra.mxu0 0.0
    %5080 = vmatprep.subr.mxu0 0.0
    %5081 = vmatpush1.msra.mxu0 0.0
    %5082 = vmatprep.subr.mxu0 0.0
    %5083 = vmatpush1.msra.mxu0 0.0
    %5084 = vmatprep.subr.mxu0 0.0
    %5085 = vmatpush1.msra.mxu0 0.0
    %5086 = vmatprep.subr.mxu0 0.0
    %5087 = vmatpush1.msra.mxu0 0.0
    %5088 = vmatprep.subr.mxu0 0.0
    %5089 = vmatpush1.msra.mxu0 0.0
    %5090 = vmatprep.mubr.f32.mxu0 0.0
    %5091 = vmatmul.mubr.f32.gmra.mrb[0].mxu0 %v4953
    %v5092 = vpop.f32.mrb[0].mxu0
    %v5093 = vadd.f32 0.0, %v5092
    %v5094 = vpop.f32.mrb[0].mxu0
    %v5095 = vadd.f32 0.0, %v5094
    %5096 = vdwg.mxu0
    %v5097 = vadd.f32 %v4136, %v5022
    %v5098 = vadd.f32 %v4138, %v5024
    %v5099 = vadd.f32 %v4213, %v5093
    %v5100 = vadd.f32 %v4215, %v5095
    %v5101 = vxor.u32 %v5097, 2147483648
    %v5102 = vmul.f32 %v5101, 1.442695
    %v5103 = vpow.pop %v5102
    %v5104 = vadd.f32 %v5103, 1.0
    %v5105 = vrcp.pop %v5104
    %v5106 = vmul.f32 1.0, %v5105
    %v5107 = vxor.u32 %v5098, 2147483648
    %v5108 = vmul.f32 %v5107, 1.442695
    %v5109 = vpow.pop %v5108
    %v5110 = vadd.f32 %v5109, 1.0
    %v5111 = vrcp.pop %v5110
    %v5112 = vmul.f32 1.0, %v5111
    %v5113 = vtanh.pop %v5099
    %v5114 = vxor.u32 %v5100, 2147483648
    %v5115 = vmul.f32 %v5114, 1.442695
    %v5116 = vpow.pop %v5115
    %v5117 = vadd.f32 %v5116, 1.0
    %v5118 = vrcp.pop %v5117
    %v5119 = vmul.f32 1.0, %v5118
    %v5121 = vrot.slane %v4949, 6
    %v5123 = vmul.f32 %v5112, %v5121
    %v5124 = vmul.f32 %v5106, %v5113
    %v5125 = vadd.f32 %v5123, %v5124
    %v5126 = vtanh.pop %v5125
    %v5127 = vmul.f32 %v5119, %v5126
    %5128 = vmatprep.subr.mxu0 %v604
    %5129 = vmatpush1.msra.mxu0 %v603
    %5130 = vmatprep.subr.mxu0 %v608
    %5131 = vmatpush1.msra.mxu0 %v607
    %5132 = vmatprep.subr.mxu0 %v612
    %5133 = vmatpush1.msra.mxu0 %v611
    %5134 = vmatprep.subr.mxu0 %v616
    %5135 = vmatpush1.msra.mxu0 %v615
    %5136 = vmatprep.subr.mxu0 %v620
    %5137 = vmatpush1.msra.mxu0 %v619
    %5138 = vmatprep.subr.mxu0 %v624
    %5139 = vmatpush1.msra.mxu0 %v623
    %5140 = vmatprep.subr.mxu0 %v628
    %5141 = vmatpush1.msra.mxu0 %v627
    %5142 = vmatprep.subr.mxu0 %v632
    %5143 = vmatpush1.msra.mxu0 %v631
    %5144 = vmatprep.subr.mxu0 %v636
    %5145 = vmatpush1.msra.mxu0 %v635
    %5146 = vmatprep.subr.mxu0 %v640
    %5147 = vmatpush1.msra.mxu0 %v639
    %5148 = vmatprep.subr.mxu0 %v644
    %5149 = vmatpush1.msra.mxu0 %v643
    %5150 = vmatprep.subr.mxu0 %v648
    %5151 = vmatpush1.msra.mxu0 %v647
    %5152 = vmatprep.subr.mxu0 %v652
    %5153 = vmatpush1.msra.mxu0 %v651
    %5154 = vmatprep.subr.mxu0 %v656
    %5155 = vmatpush1.msra.mxu0 %v655
    %5156 = vmatprep.subr.mxu0 %v660
    %5157 = vmatpush1.msra.mxu0 %v659
    %5158 = vmatprep.subr.mxu0 %v664
    %5159 = vmatpush1.msra.mxu0 %v663
    %5160 = vmatprep.subr.mxu0 0.0
    %5161 = vmatpush1.msra.mxu0 0.0
    %5162 = vmatprep.subr.mxu0 0.0
    %5163 = vmatpush1.msra.mxu0 0.0
    %5164 = vmatprep.subr.mxu0 0.0
    %5165 = vmatpush1.msra.mxu0 0.0
    %5166 = vmatprep.subr.mxu0 0.0
    %5167 = vmatpush1.msra.mxu0 0.0
    %5168 = vmatprep.subr.mxu0 0.0
    %5169 = vmatpush1.msra.mxu0 0.0
    %5170 = vmatprep.subr.mxu0 0.0
    %5171 = vmatpush1.msra.mxu0 0.0
    %5172 = vmatprep.subr.mxu0 0.0
    %5173 = vmatpush1.msra.mxu0 0.0
    %5174 = vmatprep.subr.mxu0 0.0
    %5175 = vmatpush1.msra.mxu0 0.0
    %5176 = vmatprep.subr.mxu0 0.0
    %5177 = vmatpush1.msra.mxu0 0.0
    %5178 = vmatprep.subr.mxu0 0.0
    %5179 = vmatpush1.msra.mxu0 0.0
    %5180 = vmatprep.subr.mxu0 0.0
    %5181 = vmatpush1.msra.mxu0 0.0
    %5182 = vmatprep.subr.mxu0 0.0
    %5183 = vmatpush1.msra.mxu0 0.0
    %5184 = vmatprep.subr.mxu0 0.0
    %5185 = vmatpush1.msra.mxu0 0.0
    %5186 = vmatprep.subr.mxu0 0.0
    %5187 = vmatpush1.msra.mxu0 0.0
    %5188 = vmatprep.subr.mxu0 0.0
    %5189 = vmatpush1.msra.mxu0 0.0
    %5190 = vmatprep.subr.mxu0 0.0
    %5191 = vmatpush1.msra.mxu0 0.0
    %5192 = vmatprep.mubr.f32.mxu0 0.0
    %5193 = vmatmul.mubr.f32.gmra.mrb[0].mxu0 %v5127
    %v5194 = vpop.f32.mrb[0].mxu0
    %v5195 = vadd.f32 0.0, %v5194
    %v5196 = vpop.f32.mrb[0].mxu0
    %v5197 = vadd.f32 0.0, %v5196
    %5198 = vdwg.mxu0
    %5199 = vmatprep.subr.mxu0 %v606
    %5200 = vmatpush1.msra.mxu0 %v605
    %5201 = vmatprep.subr.mxu0 %v610
    %5202 = vmatpush1.msra.mxu0 %v609
    %5203 = vmatprep.subr.mxu0 %v614
    %5204 = vmatpush1.msra.mxu0 %v613
    %5205 = vmatprep.subr.mxu0 %v618
    %5206 = vmatpush1.msra.mxu0 %v617
    %5207 = vmatprep.subr.mxu0 %v622
    %5208 = vmatpush1.msra.mxu0 %v621
    %5209 = vmatprep.subr.mxu0 %v626
    %5210 = vmatpush1.msra.mxu0 %v625
    %5211 = vmatprep.subr.mxu0 %v630
    %5212 = vmatpush1.msra.mxu0 %v629
    %5213 = vmatprep.subr.mxu0 %v634
    %5214 = vmatpush1.msra.mxu0 %v633
    %5215 = vmatprep.subr.mxu0 %v638
    %5216 = vmatpush1.msra.mxu0 %v637
    %5217 = vmatprep.subr.mxu0 %v642
    %5218 = vmatpush1.msra.mxu0 %v641
    %5219 = vmatprep.subr.mxu0 %v646
    %5220 = vmatpush1.msra.mxu0 %v645
    %5221 = vmatprep.subr.mxu0 %v650
    %5222 = vmatpush1.msra.mxu0 %v649
    %5223 = vmatprep.subr.mxu0 %v654
    %5224 = vmatpush1.msra.mxu0 %v653
    %5225 = vmatprep.subr.mxu0 %v658
    %5226 = vmatpush1.msra.mxu0 %v657
    %5227 = vmatprep.subr.mxu0 %v662
    %5228 = vmatpush1.msra.mxu0 %v661
    %5229 = vmatprep.subr.mxu0 %v666
    %5230 = vmatpush1.msra.mxu0 %v665
    %5231 = vmatprep.subr.mxu0 0.0
    %5232 = vmatpush1.msra.mxu0 0.0
    %5233 = vmatprep.subr.mxu0 0.0
    %5234 = vmatpush1.msra.mxu0 0.0
    %5235 = vmatprep.subr.mxu0 0.0
    %5236 = vmatpush1.msra.mxu0 0.0
    %5237 = vmatprep.subr.mxu0 0.0
    %5238 = vmatpush1.msra.mxu0 0.0
    %5239 = vmatprep.subr.mxu0 0.0
    %5240 = vmatpush1.msra.mxu0 0.0
    %5241 = vmatprep.subr.mxu0 0.0
    %5242 = vmatpush1.msra.mxu0 0.0
    %5243 = vmatprep.subr.mxu0 0.0
    %5244 = vmatpush1.msra.mxu0 0.0
    %5245 = vmatprep.subr.mxu0 0.0
    %5246 = vmatpush1.msra.mxu0 0.0
    %5247 = vmatprep.subr.mxu0 0.0
    %5248 = vmatpush1.msra.mxu0 0.0
    %5249 = vmatprep.subr.mxu0 0.0
    %5250 = vmatpush1.msra.mxu0 0.0
    %5251 = vmatprep.subr.mxu0 0.0
    %5252 = vmatpush1.msra.mxu0 0.0
    %5253 = vmatprep.subr.mxu0 0.0
    %5254 = vmatpush1.msra.mxu0 0.0
    %5255 = vmatprep.subr.mxu0 0.0
    %5256 = vmatpush1.msra.mxu0 0.0
    %5257 = vmatprep.subr.mxu0 0.0
    %5258 = vmatpush1.msra.mxu0 0.0
    %5259 = vmatprep.subr.mxu0 0.0
    %5260 = vmatpush1.msra.mxu0 0.0
    %5261 = vmatprep.subr.mxu0 0.0
    %5262 = vmatpush1.msra.mxu0 0.0
    %5263 = vmatprep.mubr.f32.mxu0 0.0
    %5264 = vmatmul.mubr.f32.gmra.mrb[0].mxu0 %v5127
    %v5265 = vpop.f32.mrb[0].mxu0
    %v5266 = vadd.f32 0.0, %v5265
    %v5267 = vpop.f32.mrb[0].mxu0
    %v5268 = vadd.f32 0.0, %v5267
    %5269 = vdwg.mxu0
    %v5274 = vrot.slane %v5195, 6
    %v5275 = vrot.slane %v5197, 6
    %v5276 = vrot.slane %v5266, 6
    %v5277 = vrot.slane %v5268, 6
    %v5282 = vadd.f32 %v4136, %v5274
    %v5283 = vadd.f32 %v4138, %v5275
    %v5284 = vadd.f32 %v4213, %v5276
    %v5285 = vadd.f32 %v4215, %v5277
    %v5286 = vxor.u32 %v5282, 2147483648
    %v5287 = vmul.f32 %v5286, 1.442695
    %v5288 = vpow.pop %v5287
    %v5289 = vadd.f32 %v5288, 1.0
    %v5290 = vrcp.pop %v5289
    %v5291 = vmul.f32 1.0, %v5290
    %v5292 = vxor.u32 %v5283, 2147483648
    %v5293 = vmul.f32 %v5292, 1.442695
    %v5294 = vpow.pop %v5293
    %v5295 = vadd.f32 %v5294, 1.0
    %v5296 = vrcp.pop %v5295
    %v5297 = vmul.f32 1.0, %v5296
    %v5298 = vtanh.pop %v5284
    %v5299 = vxor.u32 %v5285, 2147483648
    %v5300 = vmul.f32 %v5299, 1.442695
    %v5301 = vpow.pop %v5300
    %v5302 = vadd.f32 %v5301, 1.0
    %v5303 = vrcp.pop %v5302
    %v5304 = vmul.f32 1.0, %v5303
    %v5306 = vrot.slane %v5125, 6
    %v5308 = vmul.f32 %v5297, %v5306
    %v5309 = vmul.f32 %v5291, %v5298
    %v5310 = vadd.f32 %v5308, %v5309
    %v5311 = vtanh.pop %v5310
    %v5312 = vmul.f32 %v5304, %v5311
    %v5314 = vrot.slane %v5312, 2
    %5316 = vmatprep.subr.mxu0 %v604
    %5317 = vmatpush1.msra.mxu0 %v603
    %5318 = vmatprep.subr.mxu0 %v608
    %5319 = vmatpush1.msra.mxu0 %v607
    %5320 = vmatprep.subr.mxu0 %v612
    %5321 = vmatpush1.msra.mxu0 %v611
    %5322 = vmatprep.subr.mxu0 %v616
    %5323 = vmatpush1.msra.mxu0 %v615
    %5324 = vmatprep.subr.mxu0 %v620
    %5325 = vmatpush1.msra.mxu0 %v619
    %5326 = vmatprep.subr.mxu0 %v624
    %5327 = vmatpush1.msra.mxu0 %v623
    %5328 = vmatprep.subr.mxu0 %v628
    %5329 = vmatpush1.msra.mxu0 %v627
    %5330 = vmatprep.subr.mxu0 %v632
    %5331 = vmatpush1.msra.mxu0 %v631
    %5332 = vmatprep.subr.mxu0 %v636
    %5333 = vmatpush1.msra.mxu0 %v635
    %5334 = vmatprep.subr.mxu0 %v640
    %5335 = vmatpush1.msra.mxu0 %v639
    %5336 = vmatprep.subr.mxu0 %v644
    %5337 = vmatpush1.msra.mxu0 %v643
    %5338 = vmatprep.subr.mxu0 %v648
    %5339 = vmatpush1.msra.mxu0 %v647
    %5340 = vmatprep.subr.mxu0 %v652
    %5341 = vmatpush1.msra.mxu0 %v651
    %5342 = vmatprep.subr.mxu0 %v656
    %5343 = vmatpush1.msra.mxu0 %v655
    %5344 = vmatprep.subr.mxu0 %v660
    %5345 = vmatpush1.msra.mxu0 %v659
    %5346 = vmatprep.subr.mxu0 %v664
    %5347 = vmatpush1.msra.mxu0 %v663
    %5348 = vmatprep.subr.mxu0 0.0
    %5349 = vmatpush1.msra.mxu0 0.0
    %5350 = vmatprep.subr.mxu0 0.0
    %5351 = vmatpush1.msra.mxu0 0.0
    %5352 = vmatprep.subr.mxu0 0.0
    %5353 = vmatpush1.msra.mxu0 0.0
    %5354 = vmatprep.subr.mxu0 0.0
    %5355 = vmatpush1.msra.mxu0 0.0
    %5356 = vmatprep.subr.mxu0 0.0
    %5357 = vmatpush1.msra.mxu0 0.0
    %5358 = vmatprep.subr.mxu0 0.0
    %5359 = vmatpush1.msra.mxu0 0.0
    %5360 = vmatprep.subr.mxu0 0.0
    %5361 = vmatpush1.msra.mxu0 0.0
    %5362 = vmatprep.subr.mxu0 0.0
    %5363 = vmatpush1.msra.mxu0 0.0
    %5364 = vmatprep.subr.mxu0 0.0
    %5365 = vmatpush1.msra.mxu0 0.0
    %5366 = vmatprep.subr.mxu0 0.0
    %5367 = vmatpush1.msra.mxu0 0.0
    %5368 = vmatprep.subr.mxu0 0.0
    %5369 = vmatpush1.msra.mxu0 0.0
    %5370 = vmatprep.subr.mxu0 0.0
    %5371 = vmatpush1.msra.mxu0 0.0
    %5372 = vmatprep.subr.mxu0 0.0
    %5373 = vmatpush1.msra.mxu0 0.0
    %5374 = vmatprep.subr.mxu0 0.0
    %5375 = vmatpush1.msra.mxu0 0.0
    %5376 = vmatprep.subr.mxu0 0.0
    %5377 = vmatpush1.msra.mxu0 0.0
    %5378 = vmatprep.subr.mxu0 0.0
    %5379 = vmatpush1.msra.mxu0 0.0
    %5380 = vmatprep.mubr.f32.mxu0 0.0
    %5381 = vmatmul.mubr.f32.gmra.mrb[0].mxu0 %v5314
    %v5382 = vpop.f32.mrb[0].mxu0
    %v5383 = vadd.f32 0.0, %v5382
    %v5384 = vpop.f32.mrb[0].mxu0
    %v5385 = vadd.f32 0.0, %v5384
    %5386 = vdwg.mxu0
    %5387 = vmatprep.subr.mxu0 %v606
    %5388 = vmatpush1.msra.mxu0 %v605
    %5389 = vmatprep.subr.mxu0 %v610
    %5390 = vmatpush1.msra.mxu0 %v609
    %5391 = vmatprep.subr.mxu0 %v614
    %5392 = vmatpush1.msra.mxu0 %v613
    %5393 = vmatprep.subr.mxu0 %v618
    %5394 = vmatpush1.msra.mxu0 %v617
    %5395 = vmatprep.subr.mxu0 %v622
    %5396 = vmatpush1.msra.mxu0 %v621
    %5397 = vmatprep.subr.mxu0 %v626
    %5398 = vmatpush1.msra.mxu0 %v625
    %5399 = vmatprep.subr.mxu0 %v630
    %5400 = vmatpush1.msra.mxu0 %v629
    %5401 = vmatprep.subr.mxu0 %v634
    %5402 = vmatpush1.msra.mxu0 %v633
    %5403 = vmatprep.subr.mxu0 %v638
    %5404 = vmatpush1.msra.mxu0 %v637
    %5405 = vmatprep.subr.mxu0 %v642
    %5406 = vmatpush1.msra.mxu0 %v641
    %5407 = vmatprep.subr.mxu0 %v646
    %5408 = vmatpush1.msra.mxu0 %v645
    %5409 = vmatprep.subr.mxu0 %v650
    %5410 = vmatpush1.msra.mxu0 %v649
    %5411 = vmatprep.subr.mxu0 %v654
    %5412 = vmatpush1.msra.mxu0 %v653
    %5413 = vmatprep.subr.mxu0 %v658
    %5414 = vmatpush1.msra.mxu0 %v657
    %5415 = vmatprep.subr.mxu0 %v662
    %5416 = vmatpush1.msra.mxu0 %v661
    %5417 = vmatprep.subr.mxu0 %v666
    %5418 = vmatpush1.msra.mxu0 %v665
    %5419 = vmatprep.subr.mxu0 0.0
    %5420 = vmatpush1.msra.mxu0 0.0
    %5421 = vmatprep.subr.mxu0 0.0
    %5422 = vmatpush1.msra.mxu0 0.0
    %5423 = vmatprep.subr.mxu0 0.0
    %5424 = vmatpush1.msra.mxu0 0.0
    %5425 = vmatprep.subr.mxu0 0.0
    %5426 = vmatpush1.msra.mxu0 0.0
    %5427 = vmatprep.subr.mxu0 0.0
    %5428 = vmatpush1.msra.mxu0 0.0
    %5429 = vmatprep.subr.mxu0 0.0
    %5430 = vmatpush1.msra.mxu0 0.0
    %5431 = vmatprep.subr.mxu0 0.0
    %5432 = vmatpush1.msra.mxu0 0.0
    %5433 = vmatprep.subr.mxu0 0.0
    %5434 = vmatpush1.msra.mxu0 0.0
    %5435 = vmatprep.subr.mxu0 0.0
    %5436 = vmatpush1.msra.mxu0 0.0
    %5437 = vmatprep.subr.mxu0 0.0
    %5438 = vmatpush1.msra.mxu0 0.0
    %5439 = vmatprep.subr.mxu0 0.0
    %5440 = vmatpush1.msra.mxu0 0.0
    %5441 = vmatprep.subr.mxu0 0.0
    %5442 = vmatpush1.msra.mxu0 0.0
    %5443 = vmatprep.subr.mxu0 0.0
    %5444 = vmatpush1.msra.mxu0 0.0
    %5445 = vmatprep.subr.mxu0 0.0
    %5446 = vmatpush1.msra.mxu0 0.0
    %5447 = vmatprep.subr.mxu0 0.0
    %5448 = vmatpush1.msra.mxu0 0.0
    %5449 = vmatprep.subr.mxu0 0.0
    %5450 = vmatpush1.msra.mxu0 0.0
    %5451 = vmatprep.mubr.f32.mxu0 0.0
    %5452 = vmatmul.mubr.f32.gmra.mrb[0].mxu0 %v5314
    %v5453 = vpop.f32.mrb[0].mxu0
    %v5454 = vadd.f32 0.0, %v5453
    %v5455 = vpop.f32.mrb[0].mxu0
    %v5456 = vadd.f32 0.0, %v5455
    %5457 = vdwg.mxu0
    %v5462 = vrot.slane %v5383, 4
    %v5463 = vrot.slane %v5385, 4
    %v5464 = vrot.slane %v5454, 4
    %v5465 = vrot.slane %v5456, 4
    %v5470 = vadd.f32 %v4136, %v5462
    %v5471 = vadd.f32 %v4138, %v5463
    %v5472 = vadd.f32 %v4213, %v5464
    %v5473 = vadd.f32 %v4215, %v5465
    %v5474 = vxor.u32 %v5470, 2147483648
    %v5475 = vmul.f32 %v5474, 1.442695
    %v5476 = vpow.pop %v5475
    %v5477 = vadd.f32 %v5476, 1.0
    %v5478 = vrcp.pop %v5477
    %v5479 = vmul.f32 1.0, %v5478
    %v5480 = vxor.u32 %v5471, 2147483648
    %v5481 = vmul.f32 %v5480, 1.442695
    %v5482 = vpow.pop %v5481
    %v5483 = vadd.f32 %v5482, 1.0
    %v5484 = vrcp.pop %v5483
    %v5485 = vmul.f32 1.0, %v5484
    %v5486 = vtanh.pop %v5472
    %v5487 = vxor.u32 %v5473, 2147483648
    %v5488 = vmul.f32 %v5487, 1.442695
    %v5489 = vpow.pop %v5488
    %v5490 = vadd.f32 %v5489, 1.0
    %v5491 = vrcp.pop %v5490
    %v5492 = vmul.f32 1.0, %v5491
    %v5494 = vrot.slane %v5310, 6
    %v5496 = vmul.f32 %v5485, %v5494
    %v5497 = vmul.f32 %v5479, %v5486
    %v5498 = vadd.f32 %v5496, %v5497
    %v5499 = vtanh.pop %v5498
    %v5500 = vmul.f32 %v5492, %v5499
    %v5502 = vrot.slane %v5500, 4
    %5504 = vmatprep.subr.mxu0 %v604
    %5505 = vmatpush1.msra.mxu0 %v603
    %5506 = vmatprep.subr.mxu0 %v608
    %5507 = vmatpush1.msra.mxu0 %v607
    %5508 = vmatprep.subr.mxu0 %v612
    %5509 = vmatpush1.msra.mxu0 %v611
    %5510 = vmatprep.subr.mxu0 %v616
    %5511 = vmatpush1.msra.mxu0 %v615
    %5512 = vmatprep.subr.mxu0 %v620
    %5513 = vmatpush1.msra.mxu0 %v619
    %5514 = vmatprep.subr.mxu0 %v624
    %5515 = vmatpush1.msra.mxu0 %v623
    %5516 = vmatprep.subr.mxu0 %v628
    %5517 = vmatpush1.msra.mxu0 %v627
    %5518 = vmatprep.subr.mxu0 %v632
    %5519 = vmatpush1.msra.mxu0 %v631
    %5520 = vmatprep.subr.mxu0 %v636
    %5521 = vmatpush1.msra.mxu0 %v635
    %5522 = vmatprep.subr.mxu0 %v640
    %5523 = vmatpush1.msra.mxu0 %v639
    %5524 = vmatprep.subr.mxu0 %v644
    %5525 = vmatpush1.msra.mxu0 %v643
    %5526 = vmatprep.subr.mxu0 %v648
    %5527 = vmatpush1.msra.mxu0 %v647
    %5528 = vmatprep.subr.mxu0 %v652
    %5529 = vmatpush1.msra.mxu0 %v651
    %5530 = vmatprep.subr.mxu0 %v656
    %5531 = vmatpush1.msra.mxu0 %v655
    %5532 = vmatprep.subr.mxu0 %v660
    %5533 = vmatpush1.msra.mxu0 %v659
    %5534 = vmatprep.subr.mxu0 %v664
    %5535 = vmatpush1.msra.mxu0 %v663
    %5536 = vmatprep.subr.mxu0 0.0
    %5537 = vmatpush1.msra.mxu0 0.0
    %5538 = vmatprep.subr.mxu0 0.0
    %5539 = vmatpush1.msra.mxu0 0.0
    %5540 = vmatprep.subr.mxu0 0.0
    %5541 = vmatpush1.msra.mxu0 0.0
    %5542 = vmatprep.subr.mxu0 0.0
    %5543 = vmatpush1.msra.mxu0 0.0
    %5544 = vmatprep.subr.mxu0 0.0
    %5545 = vmatpush1.msra.mxu0 0.0
    %5546 = vmatprep.subr.mxu0 0.0
    %5547 = vmatpush1.msra.mxu0 0.0
    %5548 = vmatprep.subr.mxu0 0.0
    %5549 = vmatpush1.msra.mxu0 0.0
    %5550 = vmatprep.subr.mxu0 0.0
    %5551 = vmatpush1.msra.mxu0 0.0
    %5552 = vmatprep.subr.mxu0 0.0
    %5553 = vmatpush1.msra.mxu0 0.0
    %5554 = vmatprep.subr.mxu0 0.0
    %5555 = vmatpush1.msra.mxu0 0.0
    %5556 = vmatprep.subr.mxu0 0.0
    %5557 = vmatpush1.msra.mxu0 0.0
    %5558 = vmatprep.subr.mxu0 0.0
    %5559 = vmatpush1.msra.mxu0 0.0
    %5560 = vmatprep.subr.mxu0 0.0
    %5561 = vmatpush1.msra.mxu0 0.0
    %5562 = vmatprep.subr.mxu0 0.0
    %5563 = vmatpush1.msra.mxu0 0.0
    %5564 = vmatprep.subr.mxu0 0.0
    %5565 = vmatpush1.msra.mxu0 0.0
    %5566 = vmatprep.subr.mxu0 0.0
    %5567 = vmatpush1.msra.mxu0 0.0
    %5568 = vmatprep.mubr.f32.mxu0 0.0
    %5569 = vmatmul.mubr.f32.gmra.mrb[0].mxu0 %v5502
    %v5570 = vpop.f32.mrb[0].mxu0
    %v5571 = vadd.f32 0.0, %v5570
    %v5572 = vpop.f32.mrb[0].mxu0
    %v5573 = vadd.f32 0.0, %v5572
    %5574 = vdwg.mxu0
    %5575 = vmatprep.subr.mxu0 %v606
    %5576 = vmatpush1.msra.mxu0 %v605
    %5577 = vmatprep.subr.mxu0 %v610
    %5578 = vmatpush1.msra.mxu0 %v609
    %5579 = vmatprep.subr.mxu0 %v614
    %5580 = vmatpush1.msra.mxu0 %v613
    %5581 = vmatprep.subr.mxu0 %v618
    %5582 = vmatpush1.msra.mxu0 %v617
    %5583 = vmatprep.subr.mxu0 %v622
    %5584 = vmatpush1.msra.mxu0 %v621
    %5585 = vmatprep.subr.mxu0 %v626
    %5586 = vmatpush1.msra.mxu0 %v625
    %5587 = vmatprep.subr.mxu0 %v630
    %5588 = vmatpush1.msra.mxu0 %v629
    %5589 = vmatprep.subr.mxu0 %v634
    %5590 = vmatpush1.msra.mxu0 %v633
    %5591 = vmatprep.subr.mxu0 %v638
    %5592 = vmatpush1.msra.mxu0 %v637
    %5593 = vmatprep.subr.mxu0 %v642
    %5594 = vmatpush1.msra.mxu0 %v641
    %5595 = vmatprep.subr.mxu0 %v646
    %5596 = vmatpush1.msra.mxu0 %v645
    %5597 = vmatprep.subr.mxu0 %v650
    %5598 = vmatpush1.msra.mxu0 %v649
    %5599 = vmatprep.subr.mxu0 %v654
    %5600 = vmatpush1.msra.mxu0 %v653
    %5601 = vmatprep.subr.mxu0 %v658
    %5602 = vmatpush1.msra.mxu0 %v657
    %5603 = vmatprep.subr.mxu0 %v662
    %5604 = vmatpush1.msra.mxu0 %v661
    %5605 = vmatprep.subr.mxu0 %v666
    %5606 = vmatpush1.msra.mxu0 %v665
    %5607 = vmatprep.subr.mxu0 0.0
    %5608 = vmatpush1.msra.mxu0 0.0
    %5609 = vmatprep.subr.mxu0 0.0
    %5610 = vmatpush1.msra.mxu0 0.0
    %5611 = vmatprep.subr.mxu0 0.0
    %5612 = vmatpush1.msra.mxu0 0.0
    %5613 = vmatprep.subr.mxu0 0.0
    %5614 = vmatpush1.msra.mxu0 0.0
    %5615 = vmatprep.subr.mxu0 0.0
    %5616 = vmatpush1.msra.mxu0 0.0
    %5617 = vmatprep.subr.mxu0 0.0
    %5618 = vmatpush1.msra.mxu0 0.0
    %5619 = vmatprep.subr.mxu0 0.0
    %5620 = vmatpush1.msra.mxu0 0.0
    %5621 = vmatprep.subr.mxu0 0.0
    %5622 = vmatpush1.msra.mxu0 0.0
    %5623 = vmatprep.subr.mxu0 0.0
    %5624 = vmatpush1.msra.mxu0 0.0
    %5625 = vmatprep.subr.mxu0 0.0
    %5626 = vmatpush1.msra.mxu0 0.0
    %5627 = vmatprep.subr.mxu0 0.0
    %5628 = vmatpush1.msra.mxu0 0.0
    %5629 = vmatprep.subr.mxu0 0.0
    %5630 = vmatpush1.msra.mxu0 0.0
    %5631 = vmatprep.subr.mxu0 0.0
    %5632 = vmatpush1.msra.mxu0 0.0
    %5633 = vmatprep.subr.mxu0 0.0
    %5634 = vmatpush1.msra.mxu0 0.0
    %5635 = vmatprep.subr.mxu0 0.0
    %5636 = vmatpush1.msra.mxu0 0.0
    %5637 = vmatprep.subr.mxu0 0.0
    %5638 = vmatpush1.msra.mxu0 0.0
    %5639 = vmatprep.mubr.f32.mxu0 0.0
    %5640 = vmatmul.mubr.f32.gmra.mrb[0].mxu0 %v5502
    %v5641 = vpop.f32.mrb[0].mxu0
    %v5642 = vadd.f32 0.0, %v5641
    %v5643 = vpop.f32.mrb[0].mxu0
    %v5644 = vadd.f32 0.0, %v5643
    %5645 = vdwg.mxu0
    %v5650 = vrot.slane %v5571, 2
    %v5651 = vrot.slane %v5573, 2
    %v5652 = vrot.slane %v5642, 2
    %v5653 = vrot.slane %v5644, 2
    %v5658 = vadd.f32 %v4136, %v5650
    %v5659 = vadd.f32 %v4138, %v5651
    %v5660 = vadd.f32 %v4213, %v5652
    %v5661 = vadd.f32 %v4215, %v5653
    %v5662 = vxor.u32 %v5658, 2147483648
    %v5663 = vmul.f32 %v5662, 1.442695
    %v5664 = vpow.pop %v5663
    %v5665 = vadd.f32 %v5664, 1.0
    %v5666 = vrcp.pop %v5665
    %v5667 = vmul.f32 1.0, %v5666
    %v5668 = vxor.u32 %v5659, 2147483648
    %v5669 = vmul.f32 %v5668, 1.442695
    %v5670 = vpow.pop %v5669
    %v5671 = vadd.f32 %v5670, 1.0
    %v5672 = vrcp.pop %v5671
    %v5673 = vmul.f32 1.0, %v5672
    %v5674 = vtanh.pop %v5660
    %v5675 = vxor.u32 %v5661, 2147483648
    %v5676 = vmul.f32 %v5675, 1.442695
    %v5677 = vpow.pop %v5676
    %v5678 = vadd.f32 %v5677, 1.0
    %v5679 = vrcp.pop %v5678
    %v5680 = vmul.f32 1.0, %v5679
    %v5682 = vrot.slane %v5498, 6
    %v5684 = vmul.f32 %v5673, %v5682
    %v5685 = vmul.f32 %v5667, %v5674
    %v5686 = vadd.f32 %v5684, %v5685
    %v5687 = vtanh.pop %v5686
    %v5688 = vmul.f32 %v5680, %v5687
    %s5689 = scalar_lea.vmem %s17, 4
    %5690 = vst [vmem:[%s5689 - $0x6] sm:$0xc0] %v5688
    %s5691 = scalar_lea.vmem %s18, 4
    %5692 = vst [vmem:[%s5691 - $0x6] sm:$0xc0] %v5686
    %v5693 = vsel %vm2376, %v4390, %v4575
    %v5694 = vsel %vm2378, %v5693, %v4763
    %v5695 = vsel %vm2380, %v5694, %v4951
    %v5696 = vsel %vm2376, %v5127, %v5312
    %v5697 = vsel %vm2378, %v5696, %v5500
    %v5698 = vsel %vm2380, %v5697, %v5688
    %v5699 = vld [vmem:[#allocation10] sm:$0xff]
    %v5700 = vld [vmem:[#allocation10 + $0x8] sm:$0xff]
    %v5701 = vld [vmem:[#allocation10 + $0x10] sm:$0xff]
    %v5702 = vld [vmem:[#allocation10 + $0x18] sm:$0xff]
    %v5703 = vld [vmem:[#allocation10 + $0x20] sm:$0xff]
    %v5704 = vld [vmem:[#allocation10 + $0x28] sm:$0xff]
    %v5705 = vld [vmem:[#allocation10 + $0x30] sm:$0xff]
    %v5706 = vld [vmem:[#allocation10 + $0x38] sm:$0xff]
    %v5707 = vld [vmem:[#allocation10 + $0x40] sm:$0xff]
    %v5708 = vld [vmem:[#allocation10 + $0x48] sm:$0xff]
    %v5709 = vld [vmem:[#allocation10 + $0x50] sm:$0xff]
    %v5710 = vld [vmem:[#allocation10 + $0x58] sm:$0xff]
    %v5711 = vld [vmem:[#allocation10 + $0x60] sm:$0xff]
    %v5712 = vld [vmem:[#allocation10 + $0x68] sm:$0xff]
    %v5713 = vld [vmem:[#allocation10 + $0x70] sm:$0xff]
    %v5714 = vld [vmem:[#allocation10 + $0x78] sm:$0xff]
    %v5715 = vld [vmem:[#allocation10 + $0x80] sm:$0xff]
    %v5716 = vld [vmem:[#allocation10 + $0x88] sm:$0xff]
    %v5717 = vld [vmem:[#allocation10 + $0x90] sm:$0xff]
    %v5718 = vld [vmem:[#allocation10 + $0x98] sm:$0xff]
    %v5719 = vld [vmem:[#allocation10 + $0xa0] sm:$0xff]
    %v5720 = vld [vmem:[#allocation10 + $0xa8] sm:$0xff]
    %v5721 = vld [vmem:[#allocation10 + $0xb0] sm:$0xff]
    %v5722 = vld [vmem:[#allocation10 + $0xb8] sm:$0xff]
    %v5723 = vld [vmem:[#allocation10 + $0xc0] sm:$0xff]
    %v5724 = vld [vmem:[#allocation10 + $0xc8] sm:$0xff]
    %v5725 = vld [vmem:[#allocation10 + $0xd0] sm:$0xff]
    %v5726 = vld [vmem:[#allocation10 + $0xd8] sm:$0xff]
    %v5727 = vld [vmem:[#allocation10 + $0xe0] sm:$0xff]
    %v5728 = vld [vmem:[#allocation10 + $0xe8] sm:$0xff]
    %v5729 = vld [vmem:[#allocation10 + $0xf0] sm:$0xff]
    %v5730 = vld [vmem:[#allocation10 + $0xf8] sm:$0xff]
    %v5731 = vld [vmem:[%s13] sm:$0x3]
    %v5733 = vlaneseq
    %v5734 = vshrl.u32 %v5733, 7
    %v5735 = vsub.s32 0, %v5734
    %v5736 = vrot.slane %v5731, %v5735
    %v5737 = vlaneseq
    %v5738 = vshrl.u32 %v5737, 7
    %v5739 = vsub.s32 1, %v5738
    %v5740 = vrot.slane %v5731, %v5739
    %5743 = vmatprep.subr.mxu0 %v5700
    %5744 = vmatpush1.msra.mxu0 %v5699
    %5745 = vmatprep.subr.mxu0 %v5702
    %5746 = vmatpush1.msra.mxu0 %v5701
    %5747 = vmatprep.subr.mxu0 %v5704
    %5748 = vmatpush1.msra.mxu0 %v5703
    %5749 = vmatprep.subr.mxu0 %v5706
    %5750 = vmatpush1.msra.mxu0 %v5705
    %5751 = vmatprep.subr.mxu0 %v5708
    %5752 = vmatpush1.msra.mxu0 %v5707
    %5753 = vmatprep.subr.mxu0 %v5710
    %5754 = vmatpush1.msra.mxu0 %v5709
    %5755 = vmatprep.subr.mxu0 %v5712
    %5756 = vmatpush1.msra.mxu0 %v5711
    %5757 = vmatprep.subr.mxu0 %v5714
    %5758 = vmatpush1.msra.mxu0 %v5713
    %5759 = vmatprep.subr.mxu0 %v5716
    %5760 = vmatpush1.msra.mxu0 %v5715
    %5761 = vmatprep.subr.mxu0 %v5718
    %5762 = vmatpush1.msra.mxu0 %v5717
    %5763 = vmatprep.subr.mxu0 %v5720
    %5764 = vmatpush1.msra.mxu0 %v5719
    %5765 = vmatprep.subr.mxu0 %v5722
    %5766 = vmatpush1.msra.mxu0 %v5721
    %5767 = vmatprep.subr.mxu0 %v5724
    %5768 = vmatpush1.msra.mxu0 %v5723
    %5769 = vmatprep.subr.mxu0 %v5726
    %5770 = vmatpush1.msra.mxu0 %v5725
    %5771 = vmatprep.subr.mxu0 %v5728
    %5772 = vmatpush1.msra.mxu0 %v5727
    %5773 = vmatprep.subr.mxu0 %v5730
    %5774 = vmatpush1.msra.mxu0 %v5729
    %5775 = vmatprep.subr.mxu0 0.0
    %5776 = vmatpush1.msra.mxu0 0.0
    %5777 = vmatprep.subr.mxu0 0.0
    %5778 = vmatpush1.msra.mxu0 0.0
    %5779 = vmatprep.subr.mxu0 0.0
    %5780 = vmatpush1.msra.mxu0 0.0
    %5781 = vmatprep.subr.mxu0 0.0
    %5782 = vmatpush1.msra.mxu0 0.0
    %5783 = vmatprep.subr.mxu0 0.0
    %5784 = vmatpush1.msra.mxu0 0.0
    %5785 = vmatprep.subr.mxu0 0.0
    %5786 = vmatpush1.msra.mxu0 0.0
    %5787 = vmatprep.subr.mxu0 0.0
    %5788 = vmatpush1.msra.mxu0 0.0
    %5789 = vmatprep.subr.mxu0 0.0
    %5790 = vmatpush1.msra.mxu0 0.0
    %5791 = vmatprep.subr.mxu0 0.0
    %5792 = vmatpush1.msra.mxu0 0.0
    %5793 = vmatprep.subr.mxu0 0.0
    %5794 = vmatpush1.msra.mxu0 0.0
    %5795 = vmatprep.subr.mxu0 0.0
    %5796 = vmatpush1.msra.mxu0 0.0
    %5797 = vmatprep.subr.mxu0 0.0
    %5798 = vmatpush1.msra.mxu0 0.0
    %5799 = vmatprep.subr.mxu0 0.0
    %5800 = vmatpush1.msra.mxu0 0.0
    %5801 = vmatprep.subr.mxu0 0.0
    %5802 = vmatpush1.msra.mxu0 0.0
    %5803 = vmatprep.subr.mxu0 0.0
    %5804 = vmatpush1.msra.mxu0 0.0
    %5805 = vmatprep.subr.mxu0 0.0
    %5806 = vmatpush1.msra.mxu0 0.0
    %5807 = vmatprep.mubr.f32.mxu0 0.0
    %5808 = vmatmul.mubr.f32.gmra.mrb[0].mxu0 %v5695
    %v5809 = vpop.f32.mrb[0].mxu0
    %v5810 = vadd.f32 %v5736, %v5809
    %v5811 = vpop.f32.mrb[0].mxu0
    %v5812 = vadd.f32 %v5740, %v5811
    %5813 = vmatprep.mubr.f32.mxu0 0.0
    %5814 = vmatmul.mubr.f32.gmra.mrb[0].mxu0 %v5698
    %v5815 = vpop.f32.mrb[0].mxu0
    %v5816 = vadd.f32 %v5736, %v5815
    %v5817 = vpop.f32.mrb[0].mxu0
    %v5818 = vadd.f32 %v5740, %v5817
    %5819 = vdwg.mxu0
    %v5820 = vadd.f32 %v5810, %v5816
    %v5821 = vrot.slane %v5820, 4
    %v5822 = vadd.f32 %v5820, %v5821
    %v5823 = vrot.slane %v5822, 2
    %v5824 = vadd.f32 %v5822, %v5823
    %v5825 = vrot.slane %v5824, 1
    %v5826 = vadd.f32 %v5824, %v5825
    %v5827 = vadd.f32 %v5812, %v5818
    %v5828 = vrot.slane %v5827, 4
    %v5829 = vadd.f32 %v5827, %v5828
    %v5830 = vrot.slane %v5829, 2
    %v5831 = vadd.f32 %v5829, %v5830
    %v5832 = vrot.slane %v5831, 1
    %v5833 = vadd.f32 %v5831, %v5832
    %v5834 = vmul.f32 %v5826, %v213
    %v5835 = vmul.f32 %v5833, %v213
    %v5836 = vsub.f32 %v5810, %v5834
    %v5837 = vsub.f32 %v5812, %v5835
    %v5838 = vsub.f32 %v5816, %v5834
    %v5839 = vsub.f32 %v5818, %v5835
    %v5840 = vmul.f32 %v5836, %v5836
    %v5841 = vmul.f32 %v5837, %v5837
    %v5842 = vmul.f32 %v5838, %v5838
    %v5843 = vmul.f32 %v5839, %v5839
    %v5844 = vadd.f32 %v5840, %v5842
    %v5845 = vrot.slane %v5844, 4
    %v5846 = vadd.f32 %v5844, %v5845
    %v5847 = vrot.slane %v5846, 2
    %v5848 = vadd.f32 %v5846, %v5847
    %v5849 = vrot.slane %v5848, 1
    %v5850 = vadd.f32 %v5848, %v5849
    %v5851 = vadd.f32 %v5841, %v5843
    %v5852 = vrot.slane %v5851, 4
    %v5853 = vadd.f32 %v5851, %v5852
    %v5854 = vrot.slane %v5853, 2
    %v5855 = vadd.f32 %v5853, %v5854
    %v5856 = vrot.slane %v5855, 1
    %v5857 = vadd.f32 %v5855, %v5856
    %v5858 = vmul.f32 %v5850, %v213
    %v5859 = vmul.f32 %v5857, %v213
    %v5860 = vadd.f32 %v5858, 1e-05
    %v5861 = vadd.f32 %v5859, 1e-05
    %v5862 = vrsqrt.pop %v5860
    %v5863 = vrsqrt.pop %v5861
    %v5864 = vmul.f32 %v5836, %v5862
    %v5865 = vmul.f32 %v5837, %v5863
    %v5866 = vmul.f32 %v5838, %v5862
    %v5867 = vmul.f32 %v5839, %v5863
    %v5868 = vmax.f32 %v5864, 0.0
    %v5869 = vmax.f32 %v5865, 0.0
    %v5870 = vmax.f32 %v5866, 0.0
    %v5871 = vmax.f32 %v5867, 0.0
    %v5872 = vld [vmem:[#allocation12] sm:$0xff]
    %v5873 = vld [vmem:[#allocation12 + $0x8] sm:$0xff]
    %v5874 = vld [vmem:[#allocation12 + $0x10] sm:$0xff]
    %v5875 = vld [vmem:[#allocation12 + $0x18] sm:$0xff]
    %v5876 = vld [vmem:[#allocation12 + $0x20] sm:$0xff]
    %v5877 = vld [vmem:[#allocation12 + $0x28] sm:$0xff]
    %v5878 = vld [vmem:[#allocation12 + $0x30] sm:$0xff]
    %v5879 = vld [vmem:[#allocation12 + $0x38] sm:$0xff]
    %v5880 = vld [vmem:[#allocation12 + $0x40] sm:$0xff]
    %v5881 = vld [vmem:[#allocation12 + $0x48] sm:$0xff]
    %v5882 = vld [vmem:[#allocation12 + $0x50] sm:$0xff]
    %v5883 = vld [vmem:[#allocation12 + $0x58] sm:$0xff]
    %v5884 = vld [vmem:[#allocation12 + $0x60] sm:$0xff]
    %v5885 = vld [vmem:[#allocation12 + $0x68] sm:$0xff]
    %v5886 = vld [vmem:[#allocation12 + $0x70] sm:$0xff]
    %v5887 = vld [vmem:[#allocation12 + $0x78] sm:$0xff]
    %v5888 = vld [vmem:[#allocation12 + $0x80] sm:$0xff]
    %v5889 = vld [vmem:[#allocation12 + $0x88] sm:$0xff]
    %v5890 = vld [vmem:[#allocation12 + $0x90] sm:$0xff]
    %v5891 = vld [vmem:[#allocation12 + $0x98] sm:$0xff]
    %v5892 = vld [vmem:[#allocation12 + $0xa0] sm:$0xff]
    %v5893 = vld [vmem:[#allocation12 + $0xa8] sm:$0xff]
    %v5894 = vld [vmem:[#allocation12 + $0xb0] sm:$0xff]
    %v5895 = vld [vmem:[#allocation12 + $0xb8] sm:$0xff]
    %v5896 = vld [vmem:[#allocation12 + $0xc0] sm:$0xff]
    %v5897 = vld [vmem:[#allocation12 + $0xc8] sm:$0xff]
    %v5898 = vld [vmem:[#allocation12 + $0xd0] sm:$0xff]
    %v5899 = vld [vmem:[#allocation12 + $0xd8] sm:$0xff]
    %v5900 = vld [vmem:[#allocation12 + $0xe0] sm:$0xff]
    %v5901 = vld [vmem:[#allocation12 + $0xe8] sm:$0xff]
    %v5902 = vld [vmem:[#allocation12 + $0xf0] sm:$0xff]
    %v5903 = vld [vmem:[#allocation12 + $0xf8] sm:$0xff]
    %v5904 = vld [vmem:[%s15] sm:$0x1]
    %v5906 = vlaneseq
    %v5907 = vshrl.u32 %v5906, 7
    %v5908 = vsub.s32 0, %v5907
    %v5909 = vrot.slane %v5904, %v5908
    %5911 = vmatprep.subr.mxu0 0.0
    %5912 = vmatpush1.msra.mxu0 %v5872
    %5913 = vmatprep.subr.mxu0 0.0
    %5914 = vmatpush1.msra.mxu0 %v5873
    %5915 = vmatprep.subr.mxu0 0.0
    %5916 = vmatpush1.msra.mxu0 %v5874
    %5917 = vmatprep.subr.mxu0 0.0
    %5918 = vmatpush1.msra.mxu0 %v5875
    %5919 = vmatprep.subr.mxu0 0.0
    %5920 = vmatpush1.msra.mxu0 %v5876
    %5921 = vmatprep.subr.mxu0 0.0
    %5922 = vmatpush1.msra.mxu0 %v5877
    %5923 = vmatprep.subr.mxu0 0.0
    %5924 = vmatpush1.msra.mxu0 %v5878
    %5925 = vmatprep.subr.mxu0 0.0
    %5926 = vmatpush1.msra.mxu0 %v5879
    %5927 = vmatprep.subr.mxu0 0.0
    %5928 = vmatpush1.msra.mxu0 %v5880
    %5929 = vmatprep.subr.mxu0 0.0
    %5930 = vmatpush1.msra.mxu0 %v5881
    %5931 = vmatprep.subr.mxu0 0.0
    %5932 = vmatpush1.msra.mxu0 %v5882
    %5933 = vmatprep.subr.mxu0 0.0
    %5934 = vmatpush1.msra.mxu0 %v5883
    %5935 = vmatprep.subr.mxu0 0.0
    %5936 = vmatpush1.msra.mxu0 %v5884
    %5937 = vmatprep.subr.mxu0 0.0
    %5938 = vmatpush1.msra.mxu0 %v5885
    %5939 = vmatprep.subr.mxu0 0.0
    %5940 = vmatpush1.msra.mxu0 %v5886
    %5941 = vmatprep.subr.mxu0 0.0
    %5942 = vmatpush1.msra.mxu0 %v5887
    %5943 = vmatprep.subr.mxu0 0.0
    %5944 = vmatpush1.msra.mxu0 %v5888
    %5945 = vmatprep.subr.mxu0 0.0
    %5946 = vmatpush1.msra.mxu0 %v5889
    %5947 = vmatprep.subr.mxu0 0.0
    %5948 = vmatpush1.msra.mxu0 %v5890
    %5949 = vmatprep.subr.mxu0 0.0
    %5950 = vmatpush1.msra.mxu0 %v5891
    %5951 = vmatprep.subr.mxu0 0.0
    %5952 = vmatpush1.msra.mxu0 %v5892
    %5953 = vmatprep.subr.mxu0 0.0
    %5954 = vmatpush1.msra.mxu0 %v5893
    %5955 = vmatprep.subr.mxu0 0.0
    %5956 = vmatpush1.msra.mxu0 %v5894
    %5957 = vmatprep.subr.mxu0 0.0
    %5958 = vmatpush1.msra.mxu0 %v5895
    %5959 = vmatprep.subr.mxu0 0.0
    %5960 = vmatpush1.msra.mxu0 %v5896
    %5961 = vmatprep.subr.mxu0 0.0
    %5962 = vmatpush1.msra.mxu0 %v5897
    %5963 = vmatprep.subr.mxu0 0.0
    %5964 = vmatpush1.msra.mxu0 %v5898
    %5965 = vmatprep.subr.mxu0 0.0
    %5966 = vmatpush1.msra.mxu0 %v5899
    %5967 = vmatprep.subr.mxu0 0.0
    %5968 = vmatpush1.msra.mxu0 %v5900
    %5969 = vmatprep.subr.mxu0 0.0
    %5970 = vmatpush1.msra.mxu0 %v5901
    %5971 = vmatprep.subr.mxu0 0.0
    %5972 = vmatpush1.msra.mxu0 %v5902
    %5973 = vmatprep.subr.mxu0 0.0
    %5974 = vmatpush1.msra.mxu0 %v5903
    %5975 = vmatprep.mubr.f32.mxu0 %v5869
    %5976 = vmatmul.mubr.f32.gmra.mrb[0].mxu0 %v5868
    %v5977 = vpop.f32.mrb[0].mxu0
    %v5978 = vadd.f32 %v5909, %v5977
    %v5979 = vpop.f32.mrb[0].mxu0
    %5980 = vmatprep.mubr.f32.mxu0 %v5871
    %5981 = vmatmul.mubr.f32.gmra.mrb[0].mxu0 %v5870
    %v5982 = vpop.f32.mrb[0].mxu0
    %v5983 = vadd.f32 %v5909, %v5982
    %v5984 = vpop.f32.mrb[0].mxu0
    %5985 = vdwg.mxu0
    %5986 = vst [vmem:[%s16] sm:$0xff] %v5978
    %5987 = vst [vmem:[%s16 + $0x8] sm:$0xff] %v5983
    // Predicated region
    $region94: #{rl_model_forward.1} parent=1 // pred_check
      _
    $region95: #{rl_model_forward.1} parent=1 // pred_check_branch
      %5989 = sbr.rel (0) target = $region97
    $region96: #{rl_model_forward.1} parent=1 // pred_region
      _
    $region97: #{rl_model_forward.1} parent=1 // pred_fallthru
      _
    // Predicated region
    $region98: #{rl_model_forward.1} parent=1 // pred_check
      _
    $region99: #{rl_model_forward.1} parent=1 // pred_check_branch
      %5991 = sbr.rel (0) target = $region101
    $region100: #{rl_model_forward.1} parent=1 // pred_region
      _
    $region101: #{rl_model_forward.1} parent=1 // pred_fallthru
      _
    // Predicated region
    $region102: #{rl_model_forward.1} parent=1 // pred_check
      _
    $region103: #{rl_model_forward.1} parent=1 // pred_check_branch
      %5993 = sbr.rel (0) target = $region105
    $region104: #{rl_model_forward.1} parent=1 // pred_region
      _
    $region105: #{rl_model_forward.1} parent=1 // pred_fallthru
      _
    // Predicated region
    $region106: #{rl_model_forward.1} parent=1 // pred_check
      _
    $region107: #{rl_model_forward.1} parent=1 // pred_check_branch
      %5995 = sbr.rel (0) target = $region109
    $region108: #{rl_model_forward.1} parent=1 // pred_region
      _
    $region109: #{rl_model_forward.1} parent=1 // pred_fallthru
      _
    // Predicated region
    $region110: #{rl_model_forward.1} parent=1 // pred_check
      _
    $region111: #{rl_model_forward.1} parent=1 // pred_check_branch
      %5997 = sbr.rel (0) target = $region113
    $region112: #{rl_model_forward.1} parent=1 // pred_region
      _
    $region113: #{rl_model_forward.1} parent=1 // pred_fallthru
      _
    // Predicated region
    $region114: #{rl_model_forward.1} parent=1 // pred_check
      _
    $region115: #{rl_model_forward.1} parent=1 // pred_check_branch
      %5999 = sbr.rel (0) target = $region117
    $region116: #{rl_model_forward.1} parent=1 // pred_region
      _
    $region117: #{rl_model_forward.1} parent=1 // pred_fallthru
      _
    %6000 = vsyncpa [#allocation3], 1
    %6001 = vsyncpa [#allocation5], 1
    %6002 = vsyncpa [#allocation8], 1
    %6003 = vsyncpa [#allocation11], 1

</llo_original>
